<compile_context>
chip_gen: v6e
topology: v6e:2x2x1
jax: 0.10.0
libtpu: 0.0.40
codegen_flags: <defaults>
</compile_context>

<pallas_src>
import numpy as np
import jax
import jax.numpy as jnp
from jax import lax
from jax.experimental import pallas as pl
from jax.experimental.pallas import tpu as pltpu

# ----- module hyper-parameters (from the PyTorch __init__) -----
NUM_CHANNELS = 1          # unbound in the source module; pick 1
C1 = 8                    # conv1 output channels
C2 = 8                    # conv2 output channels
KH1, KW1 = 10, 2          # conv1 kernel (height, width)
KH2, KW2 = 8, 5           # conv2 kernel (height, width)
NEG_SLOPE = 0.2
BN_EPS = 1e-5

# small test shapes
N, H, W = 2, 16, 16
H2, W2 = H // 2, W // 2   # after MaxPool2d((2, 2))
HO, WO = H // 4, W // 2   # after MaxPool2d((2, 1))

# every stage works on the SAME flattened lane layout l = n*H*W + h*W + w
L1 = N * H * W            # 512 lanes (4 full vregs wide)


def _same_pads(k):
    # PyTorch padding='same' (stride 1): pad_before = (k-1)//2, pad_after = rest
    t = k - 1
    return t // 2, t - t // 2


PH1T, PH1B = _same_pads(KH1)   # (4, 5)
PW1L, PW1R = _same_pads(KW1)   # (0, 1)
PH2T, PH2B = _same_pads(KH2)   # (3, 4)
PW2L, PW2R = _same_pads(KW2)   # (2, 2)

# tap offsets (dh, dw) relative to the output pixel, in PyTorch weight order
TAPS1 = [(kh - PH1T, kw - PW1L) for kh in range(KH1) for kw in range(KW1)]
TAPS2 = [(kh - PH2T, kw - PW2L) for kh in range(KH2) for kw in range(KW2)]

K1P = 24                  # conv1 im2col rows padded 20 -> 24 (multiple of 8)

# stage-1 input is zero-padded (in the wrapper) along the flat lane axis so that
# every conv1 tap is an in-bounds static-offset lane load: x_pad[:, XBASE+l] = x[:, l]
XBASE = 128
XPADW = 768               # >= XBASE + L1 + max shift (5*W + 1 = 81)
# all intermediate maps are staged in ONE zero-padded VMEM scratch
PBASE = 128               # >= max negative conv2 shift (3*2*W + 2*2 = 100)
PPADW = 896               # >= PBASE + L1 + max positive conv2 shift (4*2*W + 4 = 132)


def _tap_masks(taps, hs, ws, nb):
    """mask[t, l] = 1 iff lane l's tap-t source pixel lies inside the (hs, ws) image."""
    lane = np.arange(nb * hs * ws)
    h = (lane % (hs * ws)) // ws
    w = lane % ws
    rows = []
    for dh, dw in taps:
        ok = (h + dh >= 0) & (h + dh < hs) & (w + dw >= 0) & (w + dw < ws)
        rows.append(ok)
    return np.stack(rows).astype(np.float32)


def _tap_masks_pooled(taps, hs, ws, nb, ph, pw):
    """conv2 tap masks on the UNCOMPACTED stage-1 lane grid: lane l carries the
    pooled pixel (h//ph, w//pw); tap (dh, dw) is valid iff that pooled source
    stays inside the (hs//ph, ws//pw) pooled image."""
    lane = np.arange(nb * hs * ws)
    h = (lane % (hs * ws)) // ws
    w = lane % ws
    i, j = h // ph, w // pw
    ho, wo = hs // ph, ws // pw
    rows = []
    for dh, dw in taps:
        ok = (i + dh >= 0) & (i + dh < ho) & (j + dw >= 0) & (j + dw < wo)
        rows.append(ok)
    return np.stack(rows).astype(np.float32)


_MASK1 = _tap_masks(TAPS1, H, W, N)               # (20, 512)
_MASK2 = _tap_masks_pooled(TAPS2, H, W, N, 2, 2)  # (40, 512)


def _cnn_kernel(xp_ref, w1t_ref, s1_ref, b1_ref, w2t_ref, s2_ref, b2_ref,
                m1_ref, m2_ref, o_ref, patch1_ref, patch2_ref, ps_ref):
    f32 = jnp.float32
    hi = jax.lax.Precision.HIGHEST

    def lrelu(y):
        return jnp.where(y > 0, y, NEG_SLOPE * y)

    # ---- stage 1: Conv2d(1->8, (10,2), 'same', bias=False) on the MXU ----------
    # im2col: 20 masked, statically-shifted rows of x -> (24, 512) scratch, then
    # one (8,24)x(24,512) matmul (offloads the old VPU MAC loop onto the MXU).
    m1f = m1_ref[...].astype(f32)                             # (20, 512) 0/1, bf16->f32
    patch1_ref[16:K1P, :] = jnp.zeros((K1P - 16, L1), f32)    # zero the 4 pad rows
    for t, (dh, dw) in enumerate(TAPS1):                      # NUM_CHANNELS == 1
        off = XBASE + dh * W + dw
        patch1_ref[t:t + 1, :] = xp_ref[:, off:off + L1] * m1f[t:t + 1, :]
    y1 = jnp.dot(w1t_ref[...], patch1_ref[...], precision=hi,
                 preferred_element_type=f32)                  # (C1, 512)
    # BatchNorm (eval-mode, folded) + LeakyReLU(0.2)
    y1 = lrelu(y1 * s1_ref[...] + b1_ref[...])

    # ---- MaxPool2d((2, 2)) as shift-max on the uncompacted 512-lane layout -----
    # Stage y1 into the zero-haloed scratch, take the max of the 4 window
    # candidates via static lane shifts; the pooled value for (n, i, j) then
    # lives at lane n*H*W + 2i*W + 2j (other lanes carry junk and are never used).
    ps_ref[...] = jnp.zeros_like(ps_ref)                      # zero halo once
    ps_ref[:, PBASE:PBASE + L1] = y1
    m = jnp.maximum(
        jnp.maximum(ps_ref[:, PBASE + 0:PBASE + 0 + L1],
                    ps_ref[:, PBASE + 1:PBASE + 1 + L1]),
        jnp.maximum(ps_ref[:, PBASE + W:PBASE + W + L1],
                    ps_ref[:, PBASE + W + 1:PBASE + W + 1 + L1]))   # (C1, 512)
    ps_ref[:, PBASE:PBASE + L1] = m                           # halo stays zero

    # ---- stage 2: Conv2d(8->8, (8,5), 'same') as im2col + ONE MXU matmul -------
    # On the uncompacted layout a pooled-grid tap (dh, dw) is the static lane
    # offset 2*dh*W + 2*dw; out-of-image taps are zeroed by the bf16 0/1 mask.
    m2f = m2_ref[...].astype(f32)                             # (40, 512) 0/1, bf16->f32
    for t, (dh, dw) in enumerate(TAPS2):
        off = PBASE + 2 * dh * W + 2 * dw
        patch2_ref[t * C1:(t + 1) * C1, :] = (
            ps_ref[:, off:off + L1] * m2f[t:t + 1, :])        # (C1, 512) patch block
    y2 = jnp.dot(w2t_ref[...], patch2_ref[...], precision=hi,
                 preferred_element_type=f32)                  # (C2, 512)
    y2 = lrelu(y2 * s2_ref[...] + b2_ref[...])

    # ---- MaxPool2d((2, 1)) as a single shift-max; lane-dense (8, 512) output ---
    ps_ref[:, PBASE:PBASE + L1] = y2                          # halo beyond is still zero
    o_ref[...] = jnp.maximum(ps_ref[:, PBASE:PBASE + L1],
                             ps_ref[:, PBASE + 2 * W:PBASE + 2 * W + L1])


def cnn_forward(x_nchw, w1_hwio, scale1, shift1, w2_hwio, scale2, shift2):
    """x: (N, NUM_CHANNELS, H, W) f32  ->  (N, 8, H//4, W//2) f32 (PyTorch NCHW)."""
    # channels -> sublanes, flattened (n, h, w) -> lanes, plus a zero halo so every
    # conv1 tap is an in-bounds static-offset lane load inside the kernel.
    x_flat = jnp.transpose(x_nchw, (1, 0, 2, 3)).reshape(NUM_CHANNELS, L1)
    x_pad = jnp.pad(x_flat.astype(jnp.float32),
                    ((0, 0), (XBASE, XPADW - XBASE - L1)))

    w1t = w1_hwio.reshape(KH1 * KW1 * NUM_CHANNELS, C1).T.astype(jnp.float32)
    w1t = jnp.pad(w1t, ((0, 0), (0, K1P - KH1 * KW1 * NUM_CHANNELS)))   # (8, 24)
    w2t = w2_hwio.reshape(KH2 * KW2 * C1, C2).T.astype(jnp.float32)     # (8, 320)
    s1 = scale1.reshape(C1, 1).astype(jnp.float32)
    b1 = shift1.reshape(C1, 1).astype(jnp.float32)
    s2 = scale2.reshape(C2, 1).astype(jnp.float32)
    b2 = shift2.reshape(C2, 1).astype(jnp.float32)

    # 0/1 tap masks, stored narrow (bf16 is lossless for 0/1) to halve constant DMA
    m1 = jnp.asarray(_MASK1, dtype=jnp.bfloat16)              # (20, 512)
    m2 = jnp.asarray(_MASK2, dtype=jnp.bfloat16)              # (40, 512)

    grid_spec = pltpu.PrefetchScalarGridSpec(
        num_scalar_prefetch=0,
        grid=(1,),                                 # whole (tiny) batch in one step
        in_specs=[
            pl.BlockSpec((NUM_CHANNELS, XPADW), lambda i: (0, 0)),
            pl.BlockSpec((C1, K1P), lambda i: (0, 0)),
            pl.BlockSpec((C1, 1), lambda i: (0, 0)),
            pl.BlockSpec((C1, 1), lambda i: (0, 0)),
            pl.BlockSpec((C2, KH2 * KW2 * C1), lambda i: (0, 0)),
            pl.BlockSpec((C2, 1), lambda i: (0, 0)),
            pl.BlockSpec((C2, 1), lambda i: (0, 0)),
            pl.BlockSpec((KH1 * KW1, L1), lambda i: (0, 0)),
            pl.BlockSpec((KH2 * KW2, L1), lambda i: (0, 0)),
        ],
        out_specs=pl.BlockSpec((C2, L1), lambda i: (0, 0)),
        scratch_shapes=[
            pltpu.VMEM((K1P, L1), jnp.float32),                # conv1 im2col patches
            pltpu.VMEM((KH2 * KW2 * C1, L1), jnp.float32),     # conv2 im2col patches
            pltpu.VMEM((C1, PPADW), jnp.float32),              # zero-haloed staging map
        ],
    )

    out2d = pl.pallas_call(
        _cnn_kernel,
        out_shape=jax.ShapeDtypeStruct((C2, L1), jnp.float32),
        grid_spec=grid_spec,
        compiler_params=pltpu.CompilerParams(dimension_semantics=("arbitrary",)),
    )(x_pad, w1t, s1, b1, w2t, s2, b2, m1, m2)

    # valid outputs live at lanes n*H*W + 4*ho*W + 2*wo of the uncompacted slab;
    # the strided compaction is a free reshape/slice in XLA.
    out = out2d.reshape(C2, N, H, W)[:, :, ::4, ::2]           # (C2, N, HO, WO)
    return jnp.transpose(out, (1, 0, 2, 3))                    # NCHW


def reference(x, w1, g1, be1, m1, v1, w2, g2, be2, m2, v2):
    """Pure-JAX reference of the PyTorch forward (eval-mode BatchNorm)."""
    dn = ('NCHW', 'HWIO', 'NCHW')
    hi = lax.Precision.HIGHEST

    def bn(y, g, be, m, v):
        inv = (g / jnp.sqrt(v + BN_EPS)).reshape(1, -1, 1, 1)
        return (y - m.reshape(1, -1, 1, 1)) * inv + be.reshape(1, -1, 1, 1)

    def lrelu(y):
        return jnp.where(y > 0, y, NEG_SLOPE * y)

    y = lax.conv_general_dilated(x, w1, (1, 1), ((PH1T, PH1B), (PW1L, PW1R)),
                                 dimension_numbers=dn, precision=hi)
    y = lrelu(bn(y, g1, be1, m1, v1))
    y = lax.reduce_window(y, -jnp.inf, lax.max, (1, 1, 2, 2), (1, 1, 2, 2), 'VALID')
    y = lax.conv_general_dilated(y, w2, (1, 1), ((PH2T, PH2B), (PW2L, PW2R)),
                                 dimension_numbers=dn, precision=hi)
    y = lrelu(bn(y, g2, be2, m2, v2))
    y = lax.reduce_window(y, -jnp.inf, lax.max, (1, 1, 2, 1), (1, 1, 2, 1), 'VALID')
    return y


if __name__ == "__main__":
    key = jax.random.PRNGKey(0)
    ks = jax.random.split(key, 11)

    # deterministic inputs / parameters
    x = jax.random.normal(ks[0], (N, NUM_CHANNELS, H, W), jnp.float32)
    w1 = jax.random.normal(ks[1], (KH1, KW1, NUM_CHANNELS, C1), jnp.float32) * 0.2  # HWIO
    w2 = jax.random.normal(ks[2], (KH2, KW2, C1, C2), jnp.float32) * 0.1            # HWIO
    g1 = jax.random.uniform(ks[3], (C1,), jnp.float32, 0.5, 1.5)   # BN1 gamma
    be1 = jax.random.normal(ks[4], (C1,), jnp.float32) * 0.1       # BN1 beta
    mu1 = jax.random.normal(ks[5], (C1,), jnp.float32) * 0.1       # BN1 running mean
    v1 = jax.random.uniform(ks[6], (C1,), jnp.float32, 0.5, 1.5)   # BN1 running var
    g2 = jax.random.uniform(ks[7], (C2,), jnp.float32, 0.5, 1.5)
    be2 = jax.random.normal(ks[8], (C2,), jnp.float32) * 0.1
    mu2 = jax.random.normal(ks[9], (C2,), jnp.float32) * 0.1
    v2 = jax.random.uniform(ks[10], (C2,), jnp.float32, 0.5, 1.5)

    # fold eval-mode BatchNorm into per-channel scale/shift for the kernel
    scale1 = g1 / jnp.sqrt(v1 + BN_EPS)
    shift1 = be1 - mu1 * scale1
    scale2 = g2 / jnp.sqrt(v2 + BN_EPS)
    shift2 = be2 - mu2 * scale2

    out = jax.block_until_ready(
        cnn_forward(x, w1, scale1, shift1, w2, scale2, shift2))
    assert out.shape == (N, C2, HO, WO), out.shape

    ref = jax.block_until_ready(
        reference(x, w1, g1, be1, mu1, v1, w2, g2, be2, mu2, v2))
    assert jnp.allclose(out, ref, rtol=5e-3, atol=5e-3), \
        float(jnp.max(jnp.abs(out - ref)))

    print("KERNEL_OK")
</pallas_src>

<mosaic_0001>
module attributes {stable_mosaic.version = 11 : i64} {
  func.func @_cnn_kernel(%arg0: i32, %arg1: memref<1x768xf32, #tpu.memory_space<vmem>>, %arg2: memref<8x24xf32, #tpu.memory_space<vmem>>, %arg3: memref<8x1xf32, #tpu.memory_space<vmem>>, %arg4: memref<8x1xf32, #tpu.memory_space<vmem>>, %arg5: memref<8x320xf32, #tpu.memory_space<vmem>>, %arg6: memref<8x1xf32, #tpu.memory_space<vmem>>, %arg7: memref<8x1xf32, #tpu.memory_space<vmem>>, %arg8: memref<20x512xbf16, #tpu.memory_space<vmem>>, %arg9: memref<40x512xbf16, #tpu.memory_space<vmem>>, %arg10: memref<8x512xf32, #tpu.memory_space<vmem>>, %arg11: memref<24x512xf32, #tpu.memory_space<vmem>>, %arg12: memref<320x512xf32, #tpu.memory_space<vmem>>, %arg13: memref<8x896xf32, #tpu.memory_space<vmem>>) attributes {dimension_semantics = [#tpu.dimension_semantics<arbitrary>], iteration_bounds = array<i64: 1>, scalar_prefetch = 0 : i64, scratch_operands = 3 : i64, tpu.core_type = #tpu.core_type<tc>, window_params = [{pipeline_mode = #tpu.pipeline_mode<synchronous>, transform_indices = @transform_0, window_bounds = array<i64: 1, 768>}, {pipeline_mode = #tpu.pipeline_mode<synchronous>, transform_indices = @transform_1, window_bounds = array<i64: 8, 24>}, {pipeline_mode = #tpu.pipeline_mode<synchronous>, transform_indices = @transform_2, window_bounds = array<i64: 8, 1>}, {pipeline_mode = #tpu.pipeline_mode<synchronous>, transform_indices = @transform_3, window_bounds = array<i64: 8, 1>}, {pipeline_mode = #tpu.pipeline_mode<synchronous>, transform_indices = @transform_4, window_bounds = array<i64: 8, 320>}, {pipeline_mode = #tpu.pipeline_mode<synchronous>, transform_indices = @transform_5, window_bounds = array<i64: 8, 1>}, {pipeline_mode = #tpu.pipeline_mode<synchronous>, transform_indices = @transform_6, window_bounds = array<i64: 8, 1>}, {pipeline_mode = #tpu.pipeline_mode<synchronous>, transform_indices = @transform_7, window_bounds = array<i64: 20, 512>}, {pipeline_mode = #tpu.pipeline_mode<synchronous>, transform_indices = @transform_8, window_bounds = array<i64: 40, 512>}, {pipeline_mode = #tpu.pipeline_mode<synchronous>, transform_indices = @transform_9, window_bounds = array<i64: 8, 512>}]} {
    %c0 = arith.constant 0 : index
    %c0_0 = arith.constant 0 : index
    %0 = vector.load %arg8[%c0, %c0_0] : memref<20x512xbf16, #tpu.memory_space<vmem>>, vector<20x512xbf16>
    %1 = arith.extf %0 : vector<20x512xbf16> to vector<20x512xf32>
    %cst = arith.constant 0.000000e+00 : f32
    %2 = vector.broadcast %cst : f32 to vector<8x512xf32>
    %c16 = arith.constant 16 : index
    %c0_1 = arith.constant 0 : index
    %3 = vector.load %arg11[%c16, %c0_1] : memref<24x512xf32, #tpu.memory_space<vmem>>, vector<8x512xf32>
    tpu.vector_store %arg11[%c16, %c0_1], %2 {strides = array<i32>} : memref<24x512xf32, #tpu.memory_space<vmem>>, vector<8x512xf32>,
    %c0_2 = arith.constant 0 : index
    %c64 = arith.constant 64 : index
    %4 = vector.load %arg1[%c0_2, %c64] : memref<1x768xf32, #tpu.memory_space<vmem>>, vector<1x512xf32>
    %5 = vector.extract_strided_slice %1 {offsets = [0, 0], sizes = [1, 512], strides = [1, 1]} : vector<20x512xf32> to vector<1x512xf32>
    %6 = arith.mulf %4, %5 : vector<1x512xf32>
    %c0_3 = arith.constant 0 : index
    %c0_4 = arith.constant 0 : index
    %7 = vector.load %arg11[%c0_3, %c0_4] : memref<24x512xf32, #tpu.memory_space<vmem>>, vector<1x512xf32>
    tpu.vector_store %arg11[%c0_3, %c0_4], %6 {strides = array<i32>} : memref<24x512xf32, #tpu.memory_space<vmem>>, vector<1x512xf32>,
    %c0_5 = arith.constant 0 : index
    %c65 = arith.constant 65 : index
    %8 = vector.load %arg1[%c0_5, %c65] : memref<1x768xf32, #tpu.memory_space<vmem>>, vector<1x512xf32>
    %9 = vector.extract_strided_slice %1 {offsets = [1, 0], sizes = [1, 512], strides = [1, 1]} : vector<20x512xf32> to vector<1x512xf32>
    %10 = arith.mulf %8, %9 : vector<1x512xf32>
    %c1 = arith.constant 1 : index
    %c0_6 = arith.constant 0 : index
    %11 = vector.load %arg11[%c1, %c0_6] : memref<24x512xf32, #tpu.memory_space<vmem>>, vector<1x512xf32>
    tpu.vector_store %arg11[%c1, %c0_6], %10 {strides = array<i32>} : memref<24x512xf32, #tpu.memory_space<vmem>>, vector<1x512xf32>,
    %c0_7 = arith.constant 0 : index
    %c80 = arith.constant 80 : index
    %12 = vector.load %arg1[%c0_7, %c80] : memref<1x768xf32, #tpu.memory_space<vmem>>, vector<1x512xf32>
    %13 = vector.extract_strided_slice %1 {offsets = [2, 0], sizes = [1, 512], strides = [1, 1]} : vector<20x512xf32> to vector<1x512xf32>
    %14 = arith.mulf %12, %13 : vector<1x512xf32>
    %c2 = arith.constant 2 : index
    %c0_8 = arith.constant 0 : index
    %15 = vector.load %arg11[%c2, %c0_8] : memref<24x512xf32, #tpu.memory_space<vmem>>, vector<1x512xf32>
    tpu.vector_store %arg11[%c2, %c0_8], %14 {strides = array<i32>} : memref<24x512xf32, #tpu.memory_space<vmem>>, vector<1x512xf32>,
    %c0_9 = arith.constant 0 : index
    %c81 = arith.constant 81 : index
    %16 = vector.load %arg1[%c0_9, %c81] : memref<1x768xf32, #tpu.memory_space<vmem>>, vector<1x512xf32>
    %17 = vector.extract_strided_slice %1 {offsets = [3, 0], sizes = [1, 512], strides = [1, 1]} : vector<20x512xf32> to vector<1x512xf32>
    %18 = arith.mulf %16, %17 : vector<1x512xf32>
    %c3 = arith.constant 3 : index
    %c0_10 = arith.constant 0 : index
    %19 = vector.load %arg11[%c3, %c0_10] : memref<24x512xf32, #tpu.memory_space<vmem>>, vector<1x512xf32>
    tpu.vector_store %arg11[%c3, %c0_10], %18 {strides = array<i32>} : memref<24x512xf32, #tpu.memory_space<vmem>>, vector<1x512xf32>,
    %c0_11 = arith.constant 0 : index
    %c96 = arith.constant 96 : index
    %20 = vector.load %arg1[%c0_11, %c96] : memref<1x768xf32, #tpu.memory_space<vmem>>, vector<1x512xf32>
    %21 = vector.extract_strided_slice %1 {offsets = [4, 0], sizes = [1, 512], strides = [1, 1]} : vector<20x512xf32> to vector<1x512xf32>
    %22 = arith.mulf %20, %21 : vector<1x512xf32>
    %c4 = arith.constant 4 : index
    %c0_12 = arith.constant 0 : index
    %23 = vector.load %arg11[%c4, %c0_12] : memref<24x512xf32, #tpu.memory_space<vmem>>, vector<1x512xf32>
    tpu.vector_store %arg11[%c4, %c0_12], %22 {strides = array<i32>} : memref<24x512xf32, #tpu.memory_space<vmem>>, vector<1x512xf32>,
    %c0_13 = arith.constant 0 : index
    %c97 = arith.constant 97 : index
    %24 = vector.load %arg1[%c0_13, %c97] : memref<1x768xf32, #tpu.memory_space<vmem>>, vector<1x512xf32>
    %25 = vector.extract_strided_slice %1 {offsets = [5, 0], sizes = [1, 512], strides = [1, 1]} : vector<20x512xf32> to vector<1x512xf32>
    %26 = arith.mulf %24, %25 : vector<1x512xf32>
    %c5 = arith.constant 5 : index
    %c0_14 = arith.constant 0 : index
    %27 = vector.load %arg11[%c5, %c0_14] : memref<24x512xf32, #tpu.memory_space<vmem>>, vector<1x512xf32>
    tpu.vector_store %arg11[%c5, %c0_14], %26 {strides = array<i32>} : memref<24x512xf32, #tpu.memory_space<vmem>>, vector<1x512xf32>,
    %c0_15 = arith.constant 0 : index
    %c112 = arith.constant 112 : index
    %28 = vector.load %arg1[%c0_15, %c112] : memref<1x768xf32, #tpu.memory_space<vmem>>, vector<1x512xf32>
    %29 = vector.extract_strided_slice %1 {offsets = [6, 0], sizes = [1, 512], strides = [1, 1]} : vector<20x512xf32> to vector<1x512xf32>
    %30 = arith.mulf %28, %29 : vector<1x512xf32>
    %c6 = arith.constant 6 : index
    %c0_16 = arith.constant 0 : index
    %31 = vector.load %arg11[%c6, %c0_16] : memref<24x512xf32, #tpu.memory_space<vmem>>, vector<1x512xf32>
    tpu.vector_store %arg11[%c6, %c0_16], %30 {strides = array<i32>} : memref<24x512xf32, #tpu.memory_space<vmem>>, vector<1x512xf32>,
    %c0_17 = arith.constant 0 : index
    %c113 = arith.constant 113 : index
    %32 = vector.load %arg1[%c0_17, %c113] : memref<1x768xf32, #tpu.memory_space<vmem>>, vector<1x512xf32>
    %33 = vector.extract_strided_slice %1 {offsets = [7, 0], sizes = [1, 512], strides = [1, 1]} : vector<20x512xf32> to vector<1x512xf32>
    %34 = arith.mulf %32, %33 : vector<1x512xf32>
    %c7 = arith.constant 7 : index
    %c0_18 = arith.constant 0 : index
    %35 = vector.load %arg11[%c7, %c0_18] : memref<24x512xf32, #tpu.memory_space<vmem>>, vector<1x512xf32>
    tpu.vector_store %arg11[%c7, %c0_18], %34 {strides = array<i32>} : memref<24x512xf32, #tpu.memory_space<vmem>>, vector<1x512xf32>,
    %c0_19 = arith.constant 0 : index
    %c128 = arith.constant 128 : index
    %36 = vector.load %arg1[%c0_19, %c128] : memref<1x768xf32, #tpu.memory_space<vmem>>, vector<1x512xf32>
    %37 = vector.extract_strided_slice %1 {offsets = [8, 0], sizes = [1, 512], strides = [1, 1]} : vector<20x512xf32> to vector<1x512xf32>
    %38 = arith.mulf %36, %37 : vector<1x512xf32>
    %c8 = arith.constant 8 : index
    %c0_20 = arith.constant 0 : index
    %39 = vector.load %arg11[%c8, %c0_20] : memref<24x512xf32, #tpu.memory_space<vmem>>, vector<1x512xf32>
    tpu.vector_store %arg11[%c8, %c0_20], %38 {strides = array<i32>} : memref<24x512xf32, #tpu.memory_space<vmem>>, vector<1x512xf32>,
    %c0_21 = arith.constant 0 : index
    %c129 = arith.constant 129 : index
    %40 = vector.load %arg1[%c0_21, %c129] : memref<1x768xf32, #tpu.memory_space<vmem>>, vector<1x512xf32>
    %41 = vector.extract_strided_slice %1 {offsets = [9, 0], sizes = [1, 512], strides = [1, 1]} : vector<20x512xf32> to vector<1x512xf32>
    %42 = arith.mulf %40, %41 : vector<1x512xf32>
    %c9 = arith.constant 9 : index
    %c0_22 = arith.constant 0 : index
    %43 = vector.load %arg11[%c9, %c0_22] : memref<24x512xf32, #tpu.memory_space<vmem>>, vector<1x512xf32>
    tpu.vector_store %arg11[%c9, %c0_22], %42 {strides = array<i32>} : memref<24x512xf32, #tpu.memory_space<vmem>>, vector<1x512xf32>,
    %c0_23 = arith.constant 0 : index
    %c144 = arith.constant 144 : index
    %44 = vector.load %arg1[%c0_23, %c144] : memref<1x768xf32, #tpu.memory_space<vmem>>, vector<1x512xf32>
    %45 = vector.extract_strided_slice %1 {offsets = [10, 0], sizes = [1, 512], strides = [1, 1]} : vector<20x512xf32> to vector<1x512xf32>
    %46 = arith.mulf %44, %45 : vector<1x512xf32>
    %c10 = arith.constant 10 : index
    %c0_24 = arith.constant 0 : index
    %47 = vector.load %arg11[%c10, %c0_24] : memref<24x512xf32, #tpu.memory_space<vmem>>, vector<1x512xf32>
    tpu.vector_store %arg11[%c10, %c0_24], %46 {strides = array<i32>} : memref<24x512xf32, #tpu.memory_space<vmem>>, vector<1x512xf32>,
    %c0_25 = arith.constant 0 : index
    %c145 = arith.constant 145 : index
    %48 = vector.load %arg1[%c0_25, %c145] : memref<1x768xf32, #tpu.memory_space<vmem>>, vector<1x512xf32>
    %49 = vector.extract_strided_slice %1 {offsets = [11, 0], sizes = [1, 512], strides = [1, 1]} : vector<20x512xf32> to vector<1x512xf32>
    %50 = arith.mulf %48, %49 : vector<1x512xf32>
    %c11 = arith.constant 11 : index
    %c0_26 = arith.constant 0 : index
    %51 = vector.load %arg11[%c11, %c0_26] : memref<24x512xf32, #tpu.memory_space<vmem>>, vector<1x512xf32>
    tpu.vector_store %arg11[%c11, %c0_26], %50 {strides = array<i32>} : memref<24x512xf32, #tpu.memory_space<vmem>>, vector<1x512xf32>,
    %c0_27 = arith.constant 0 : index
    %c160 = arith.constant 160 : index
    %52 = vector.load %arg1[%c0_27, %c160] : memref<1x768xf32, #tpu.memory_space<vmem>>, vector<1x512xf32>
    %53 = vector.extract_strided_slice %1 {offsets = [12, 0], sizes = [1, 512], strides = [1, 1]} : vector<20x512xf32> to vector<1x512xf32>
    %54 = arith.mulf %52, %53 : vector<1x512xf32>
    %c12 = arith.constant 12 : index
    %c0_28 = arith.constant 0 : index
    %55 = vector.load %arg11[%c12, %c0_28] : memref<24x512xf32, #tpu.memory_space<vmem>>, vector<1x512xf32>
    tpu.vector_store %arg11[%c12, %c0_28], %54 {strides = array<i32>} : memref<24x512xf32, #tpu.memory_space<vmem>>, vector<1x512xf32>,
    %c0_29 = arith.constant 0 : index
    %c161 = arith.constant 161 : index
    %56 = vector.load %arg1[%c0_29, %c161] : memref<1x768xf32, #tpu.memory_space<vmem>>, vector<1x512xf32>
    %57 = vector.extract_strided_slice %1 {offsets = [13, 0], sizes = [1, 512], strides = [1, 1]} : vector<20x512xf32> to vector<1x512xf32>
    %58 = arith.mulf %56, %57 : vector<1x512xf32>
    %c13 = arith.constant 13 : index
    %c0_30 = arith.constant 0 : index
    %59 = vector.load %arg11[%c13, %c0_30] : memref<24x512xf32, #tpu.memory_space<vmem>>, vector<1x512xf32>
    tpu.vector_store %arg11[%c13, %c0_30], %58 {strides = array<i32>} : memref<24x512xf32, #tpu.memory_space<vmem>>, vector<1x512xf32>,
    %c0_31 = arith.constant 0 : index
    %c176 = arith.constant 176 : index
    %60 = vector.load %arg1[%c0_31, %c176] : memref<1x768xf32, #tpu.memory_space<vmem>>, vector<1x512xf32>
    %61 = vector.extract_strided_slice %1 {offsets = [14, 0], sizes = [1, 512], strides = [1, 1]} : vector<20x512xf32> to vector<1x512xf32>
    %62 = arith.mulf %60, %61 : vector<1x512xf32>
    %c14 = arith.constant 14 : index
    %c0_32 = arith.constant 0 : index
    %63 = vector.load %arg11[%c14, %c0_32] : memref<24x512xf32, #tpu.memory_space<vmem>>, vector<1x512xf32>
    tpu.vector_store %arg11[%c14, %c0_32], %62 {strides = array<i32>} : memref<24x512xf32, #tpu.memory_space<vmem>>, vector<1x512xf32>,
    %c0_33 = arith.constant 0 : index
    %c177 = arith.constant 177 : index
    %64 = vector.load %arg1[%c0_33, %c177] : memref<1x768xf32, #tpu.memory_space<vmem>>, vector<1x512xf32>
    %65 = vector.extract_strided_slice %1 {offsets = [15, 0], sizes = [1, 512], strides = [1, 1]} : vector<20x512xf32> to vector<1x512xf32>
    %66 = arith.mulf %64, %65 : vector<1x512xf32>
    %c15 = arith.constant 15 : index
    %c0_34 = arith.constant 0 : index
    %67 = vector.load %arg11[%c15, %c0_34] : memref<24x512xf32, #tpu.memory_space<vmem>>, vector<1x512xf32>
    tpu.vector_store %arg11[%c15, %c0_34], %66 {strides = array<i32>} : memref<24x512xf32, #tpu.memory_space<vmem>>, vector<1x512xf32>,
    %c0_35 = arith.constant 0 : index
    %c192 = arith.constant 192 : index
    %68 = vector.load %arg1[%c0_35, %c192] : memref<1x768xf32, #tpu.memory_space<vmem>>, vector<1x512xf32>
    %69 = vector.extract_strided_slice %1 {offsets = [16, 0], sizes = [1, 512], strides = [1, 1]} : vector<20x512xf32> to vector<1x512xf32>
    %70 = arith.mulf %68, %69 : vector<1x512xf32>
    %c16_36 = arith.constant 16 : index
    %c0_37 = arith.constant 0 : index
    %71 = vector.load %arg11[%c16_36, %c0_37] : memref<24x512xf32, #tpu.memory_space<vmem>>, vector<1x512xf32>
    tpu.vector_store %arg11[%c16_36, %c0_37], %70 {strides = array<i32>} : memref<24x512xf32, #tpu.memory_space<vmem>>, vector<1x512xf32>,
    %c0_38 = arith.constant 0 : index
    %c193 = arith.constant 193 : index
    %72 = vector.load %arg1[%c0_38, %c193] : memref<1x768xf32, #tpu.memory_space<vmem>>, vector<1x512xf32>
    %73 = vector.extract_strided_slice %1 {offsets = [17, 0], sizes = [1, 512], strides = [1, 1]} : vector<20x512xf32> to vector<1x512xf32>
    %74 = arith.mulf %72, %73 : vector<1x512xf32>
    %c17 = arith.constant 17 : index
    %c0_39 = arith.constant 0 : index
    %75 = vector.load %arg11[%c17, %c0_39] : memref<24x512xf32, #tpu.memory_space<vmem>>, vector<1x512xf32>
    tpu.vector_store %arg11[%c17, %c0_39], %74 {strides = array<i32>} : memref<24x512xf32, #tpu.memory_space<vmem>>, vector<1x512xf32>,
    %c0_40 = arith.constant 0 : index
    %c208 = arith.constant 208 : index
    %76 = vector.load %arg1[%c0_40, %c208] : memref<1x768xf32, #tpu.memory_space<vmem>>, vector<1x512xf32>
    %77 = vector.extract_strided_slice %1 {offsets = [18, 0], sizes = [1, 512], strides = [1, 1]} : vector<20x512xf32> to vector<1x512xf32>
    %78 = arith.mulf %76, %77 : vector<1x512xf32>
    %c18 = arith.constant 18 : index
    %c0_41 = arith.constant 0 : index
    %79 = vector.load %arg11[%c18, %c0_41] : memref<24x512xf32, #tpu.memory_space<vmem>>, vector<1x512xf32>
    tpu.vector_store %arg11[%c18, %c0_41], %78 {strides = array<i32>} : memref<24x512xf32, #tpu.memory_space<vmem>>, vector<1x512xf32>,
    %c0_42 = arith.constant 0 : index
    %c209 = arith.constant 209 : index
    %80 = vector.load %arg1[%c0_42, %c209] : memref<1x768xf32, #tpu.memory_space<vmem>>, vector<1x512xf32>
    %81 = vector.extract_strided_slice %1 {offsets = [19, 0], sizes = [1, 512], strides = [1, 1]} : vector<20x512xf32> to vector<1x512xf32>
    %82 = arith.mulf %80, %81 : vector<1x512xf32>
    %c19 = arith.constant 19 : index
    %c0_43 = arith.constant 0 : index
    %83 = vector.load %arg11[%c19, %c0_43] : memref<24x512xf32, #tpu.memory_space<vmem>>, vector<1x512xf32>
    tpu.vector_store %arg11[%c19, %c0_43], %82 {strides = array<i32>} : memref<24x512xf32, #tpu.memory_space<vmem>>, vector<1x512xf32>,
    %c0_44 = arith.constant 0 : index
    %c0_45 = arith.constant 0 : index
    %84 = vector.load %arg2[%c0_44, %c0_45] : memref<8x24xf32, #tpu.memory_space<vmem>>, vector<8x24xf32>
    %c0_46 = arith.constant 0 : index
    %c0_47 = arith.constant 0 : index
    %85 = vector.load %arg11[%c0_46, %c0_47] : memref<24x512xf32, #tpu.memory_space<vmem>>, vector<24x512xf32>
    %cst_48 = arith.constant dense<0.000000e+00> : vector<8x512xf32>
    %86 = tpu.matmul %84, %85, %cst_48 {dimension_numbers = #tpu.dot_dimension_numbers<[1], [0], [0], [1], [0, 0, 1, 1], [], []>, precision = #tpu.contract_precision<fp32>} : vector<8x24xf32>, vector<24x512xf32>, vector<8x512xf32> -> vector<8x512xf32>
    %c0_49 = arith.constant 0 : index
    %c0_50 = arith.constant 0 : index
    %87 = vector.load %arg3[%c0_49, %c0_50] : memref<8x1xf32, #tpu.memory_space<vmem>>, vector<8x1xf32>
    %88 = vector.broadcast %87 : vector<8x1xf32> to vector<8x512xf32>
    %89 = arith.mulf %86, %88 : vector<8x512xf32>
    %c0_51 = arith.constant 0 : index
    %c0_52 = arith.constant 0 : index
    %90 = vector.load %arg4[%c0_51, %c0_52] : memref<8x1xf32, #tpu.memory_space<vmem>>, vector<8x1xf32>
    %91 = vector.broadcast %90 : vector<8x1xf32> to vector<8x512xf32>
    %92 = arith.addf %89, %91 : vector<8x512xf32>
    %cst_53 = arith.constant 0.000000e+00 : f32
    %93 = vector.broadcast %cst_53 : f32 to vector<8x512xf32>
    %94 = arith.cmpf ogt, %92, %93 : vector<8x512xf32>
    %cst_54 = arith.constant 2.000000e-01 : f32
    %95 = vector.broadcast %cst_54 : f32 to vector<8x512xf32>
    %96 = arith.mulf %95, %92 : vector<8x512xf32>
    %97 = arith.select %94, %92, %96 : vector<8x512xi1>, vector<8x512xf32>
    %cst_55 = arith.constant 0.000000e+00 : f32
    %98 = vector.broadcast %cst_55 : f32 to vector<8x896xf32>
    %c0_56 = arith.constant 0 : index
    %c0_57 = arith.constant 0 : index
    %99 = vector.load %arg13[%c0_56, %c0_57] : memref<8x896xf32, #tpu.memory_space<vmem>>, vector<8x896xf32>
    tpu.vector_store %arg13[%c0_56, %c0_57], %98 {strides = array<i32>} : memref<8x896xf32, #tpu.memory_space<vmem>>, vector<8x896xf32>,
    %c0_58 = arith.constant 0 : index
    %c128_59 = arith.constant 128 : index
    %100 = vector.load %arg13[%c0_58, %c128_59] : memref<8x896xf32, #tpu.memory_space<vmem>>, vector<8x512xf32>
    tpu.vector_store %arg13[%c0_58, %c128_59], %97 {strides = array<i32>} : memref<8x896xf32, #tpu.memory_space<vmem>>, vector<8x512xf32>,
    %c0_60 = arith.constant 0 : index
    %c128_61 = arith.constant 128 : index
    %101 = vector.load %arg13[%c0_60, %c128_61] : memref<8x896xf32, #tpu.memory_space<vmem>>, vector<8x512xf32>
    %c0_62 = arith.constant 0 : index
    %c129_63 = arith.constant 129 : index
    %102 = vector.load %arg13[%c0_62, %c129_63] : memref<8x896xf32, #tpu.memory_space<vmem>>, vector<8x512xf32>
    %103 = arith.maximumf %101, %102 : vector<8x512xf32>
    %c0_64 = arith.constant 0 : index
    %c144_65 = arith.constant 144 : index
    %104 = vector.load %arg13[%c0_64, %c144_65] : memref<8x896xf32, #tpu.memory_space<vmem>>, vector<8x512xf32>
    %c0_66 = arith.constant 0 : index
    %c145_67 = arith.constant 145 : index
    %105 = vector.load %arg13[%c0_66, %c145_67] : memref<8x896xf32, #tpu.memory_space<vmem>>, vector<8x512xf32>
    %106 = arith.maximumf %104, %105 : vector<8x512xf32>
    %107 = arith.maximumf %103, %106 : vector<8x512xf32>
    %c0_68 = arith.constant 0 : index
    %c128_69 = arith.constant 128 : index
    %108 = vector.load %arg13[%c0_68, %c128_69] : memref<8x896xf32, #tpu.memory_space<vmem>>, vector<8x512xf32>
    tpu.vector_store %arg13[%c0_68, %c128_69], %107 {strides = array<i32>} : memref<8x896xf32, #tpu.memory_space<vmem>>, vector<8x512xf32>,
    %c0_70 = arith.constant 0 : index
    %c0_71 = arith.constant 0 : index
    %109 = vector.load %arg9[%c0_70, %c0_71] : memref<40x512xbf16, #tpu.memory_space<vmem>>, vector<40x512xbf16>
    %110 = arith.extf %109 : vector<40x512xbf16> to vector<40x512xf32>
    %c0_72 = arith.constant 0 : index
    %c28 = arith.constant 28 : index
    %111 = vector.load %arg13[%c0_72, %c28] : memref<8x896xf32, #tpu.memory_space<vmem>>, vector<8x512xf32>
    %112 = vector.extract_strided_slice %110 {offsets = [0, 0], sizes = [1, 512], strides = [1, 1]} : vector<40x512xf32> to vector<1x512xf32>
    %113 = vector.broadcast %112 : vector<1x512xf32> to vector<8x512xf32>
    %114 = arith.mulf %111, %113 : vector<8x512xf32>
    %c0_73 = arith.constant 0 : index
    %c0_74 = arith.constant 0 : index
    %115 = vector.load %arg12[%c0_73, %c0_74] : memref<320x512xf32, #tpu.memory_space<vmem>>, vector<8x512xf32>
    tpu.vector_store %arg12[%c0_73, %c0_74], %114 {strides = array<i32>} : memref<320x512xf32, #tpu.memory_space<vmem>>, vector<8x512xf32>,
    %c0_75 = arith.constant 0 : index
    %c30 = arith.constant 30 : index
    %116 = vector.load %arg13[%c0_75, %c30] : memref<8x896xf32, #tpu.memory_space<vmem>>, vector<8x512xf32>
    %117 = vector.extract_strided_slice %110 {offsets = [1, 0], sizes = [1, 512], strides = [1, 1]} : vector<40x512xf32> to vector<1x512xf32>
    %118 = vector.broadcast %117 : vector<1x512xf32> to vector<8x512xf32>
    %119 = arith.mulf %116, %118 : vector<8x512xf32>
    %c8_76 = arith.constant 8 : index
    %c0_77 = arith.constant 0 : index
    %120 = vector.load %arg12[%c8_76, %c0_77] : memref<320x512xf32, #tpu.memory_space<vmem>>, vector<8x512xf32>
    tpu.vector_store %arg12[%c8_76, %c0_77], %119 {strides = array<i32>} : memref<320x512xf32, #tpu.memory_space<vmem>>, vector<8x512xf32>,
    %c0_78 = arith.constant 0 : index
    %c32 = arith.constant 32 : index
    %121 = vector.load %arg13[%c0_78, %c32] : memref<8x896xf32, #tpu.memory_space<vmem>>, vector<8x512xf32>
    %122 = vector.extract_strided_slice %110 {offsets = [2, 0], sizes = [1, 512], strides = [1, 1]} : vector<40x512xf32> to vector<1x512xf32>
    %123 = vector.broadcast %122 : vector<1x512xf32> to vector<8x512xf32>
    %124 = arith.mulf %121, %123 : vector<8x512xf32>
    %c16_79 = arith.constant 16 : index
    %c0_80 = arith.constant 0 : index
    %125 = vector.load %arg12[%c16_79, %c0_80] : memref<320x512xf32, #tpu.memory_space<vmem>>, vector<8x512xf32>
    tpu.vector_store %arg12[%c16_79, %c0_80], %124 {strides = array<i32>} : memref<320x512xf32, #tpu.memory_space<vmem>>, vector<8x512xf32>,
    %c0_81 = arith.constant 0 : index
    %c34 = arith.constant 34 : index
    %126 = vector.load %arg13[%c0_81, %c34] : memref<8x896xf32, #tpu.memory_space<vmem>>, vector<8x512xf32>
    %127 = vector.extract_strided_slice %110 {offsets = [3, 0], sizes = [1, 512], strides = [1, 1]} : vector<40x512xf32> to vector<1x512xf32>
    %128 = vector.broadcast %127 : vector<1x512xf32> to vector<8x512xf32>
    %129 = arith.mulf %126, %128 : vector<8x512xf32>
    %c24 = arith.constant 24 : index
    %c0_82 = arith.constant 0 : index
    %130 = vector.load %arg12[%c24, %c0_82] : memref<320x512xf32, #tpu.memory_space<vmem>>, vector<8x512xf32>
    tpu.vector_store %arg12[%c24, %c0_82], %129 {strides = array<i32>} : memref<320x512xf32, #tpu.memory_space<vmem>>, vector<8x512xf32>,
    %c0_83 = arith.constant 0 : index
    %c36 = arith.constant 36 : index
    %131 = vector.load %arg13[%c0_83, %c36] : memref<8x896xf32, #tpu.memory_space<vmem>>, vector<8x512xf32>
    %132 = vector.extract_strided_slice %110 {offsets = [4, 0], sizes = [1, 512], strides = [1, 1]} : vector<40x512xf32> to vector<1x512xf32>
    %133 = vector.broadcast %132 : vector<1x512xf32> to vector<8x512xf32>
    %134 = arith.mulf %131, %133 : vector<8x512xf32>
    %c32_84 = arith.constant 32 : index
    %c0_85 = arith.constant 0 : index
    %135 = vector.load %arg12[%c32_84, %c0_85] : memref<320x512xf32, #tpu.memory_space<vmem>>, vector<8x512xf32>
    tpu.vector_store %arg12[%c32_84, %c0_85], %134 {strides = array<i32>} : memref<320x512xf32, #tpu.memory_space<vmem>>, vector<8x512xf32>,
    %c0_86 = arith.constant 0 : index
    %c60 = arith.constant 60 : index
    %136 = vector.load %arg13[%c0_86, %c60] : memref<8x896xf32, #tpu.memory_space<vmem>>, vector<8x512xf32>
    %137 = vector.extract_strided_slice %110 {offsets = [5, 0], sizes = [1, 512], strides = [1, 1]} : vector<40x512xf32> to vector<1x512xf32>
    %138 = vector.broadcast %137 : vector<1x512xf32> to vector<8x512xf32>
    %139 = arith.mulf %136, %138 : vector<8x512xf32>
    %c40 = arith.constant 40 : index
    %c0_87 = arith.constant 0 : index
    %140 = vector.load %arg12[%c40, %c0_87] : memref<320x512xf32, #tpu.memory_space<vmem>>, vector<8x512xf32>
    tpu.vector_store %arg12[%c40, %c0_87], %139 {strides = array<i32>} : memref<320x512xf32, #tpu.memory_space<vmem>>, vector<8x512xf32>,
    %c0_88 = arith.constant 0 : index
    %c62 = arith.constant 62 : index
    %141 = vector.load %arg13[%c0_88, %c62] : memref<8x896xf32, #tpu.memory_space<vmem>>, vector<8x512xf32>
    %142 = vector.extract_strided_slice %110 {offsets = [6, 0], sizes = [1, 512], strides = [1, 1]} : vector<40x512xf32> to vector<1x512xf32>
    %143 = vector.broadcast %142 : vector<1x512xf32> to vector<8x512xf32>
    %144 = arith.mulf %141, %143 : vector<8x512xf32>
    %c48 = arith.constant 48 : index
    %c0_89 = arith.constant 0 : index
    %145 = vector.load %arg12[%c48, %c0_89] : memref<320x512xf32, #tpu.memory_space<vmem>>, vector<8x512xf32>
    tpu.vector_store %arg12[%c48, %c0_89], %144 {strides = array<i32>} : memref<320x512xf32, #tpu.memory_space<vmem>>, vector<8x512xf32>,
    %c0_90 = arith.constant 0 : index
    %c64_91 = arith.constant 64 : index
    %146 = vector.load %arg13[%c0_90, %c64_91] : memref<8x896xf32, #tpu.memory_space<vmem>>, vector<8x512xf32>
    %147 = vector.extract_strided_slice %110 {offsets = [7, 0], sizes = [1, 512], strides = [1, 1]} : vector<40x512xf32> to vector<1x512xf32>
    %148 = vector.broadcast %147 : vector<1x512xf32> to vector<8x512xf32>
    %149 = arith.mulf %146, %148 : vector<8x512xf32>
    %c56 = arith.constant 56 : index
    %c0_92 = arith.constant 0 : index
    %150 = vector.load %arg12[%c56, %c0_92] : memref<320x512xf32, #tpu.memory_space<vmem>>, vector<8x512xf32>
    tpu.vector_store %arg12[%c56, %c0_92], %149 {strides = array<i32>} : memref<320x512xf32, #tpu.memory_space<vmem>>, vector<8x512xf32>,
    %c0_93 = arith.constant 0 : index
    %c66 = arith.constant 66 : index
    %151 = vector.load %arg13[%c0_93, %c66] : memref<8x896xf32, #tpu.memory_space<vmem>>, vector<8x512xf32>
    %152 = vector.extract_strided_slice %110 {offsets = [8, 0], sizes = [1, 512], strides = [1, 1]} : vector<40x512xf32> to vector<1x512xf32>
    %153 = vector.broadcast %152 : vector<1x512xf32> to vector<8x512xf32>
    %154 = arith.mulf %151, %153 : vector<8x512xf32>
    %c64_94 = arith.constant 64 : index
    %c0_95 = arith.constant 0 : index
    %155 = vector.load %arg12[%c64_94, %c0_95] : memref<320x512xf32, #tpu.memory_space<vmem>>, vector<8x512xf32>
    tpu.vector_store %arg12[%c64_94, %c0_95], %154 {strides = array<i32>} : memref<320x512xf32, #tpu.memory_space<vmem>>, vector<8x512xf32>,
    %c0_96 = arith.constant 0 : index
    %c68 = arith.constant 68 : index
    %156 = vector.load %arg13[%c0_96, %c68] : memref<8x896xf32, #tpu.memory_space<vmem>>, vector<8x512xf32>
    %157 = vector.extract_strided_slice %110 {offsets = [9, 0], sizes = [1, 512], strides = [1, 1]} : vector<40x512xf32> to vector<1x512xf32>
    %158 = vector.broadcast %157 : vector<1x512xf32> to vector<8x512xf32>
    %159 = arith.mulf %156, %158 : vector<8x512xf32>
    %c72 = arith.constant 72 : index
    %c0_97 = arith.constant 0 : index
    %160 = vector.load %arg12[%c72, %c0_97] : memref<320x512xf32, #tpu.memory_space<vmem>>, vector<8x512xf32>
    tpu.vector_store %arg12[%c72, %c0_97], %159 {strides = array<i32>} : memref<320x512xf32, #tpu.memory_space<vmem>>, vector<8x512xf32>,
    %c0_98 = arith.constant 0 : index
    %c92 = arith.constant 92 : index
    %161 = vector.load %arg13[%c0_98, %c92] : memref<8x896xf32, #tpu.memory_space<vmem>>, vector<8x512xf32>
    %162 = vector.extract_strided_slice %110 {offsets = [10, 0], sizes = [1, 512], strides = [1, 1]} : vector<40x512xf32> to vector<1x512xf32>
    %163 = vector.broadcast %162 : vector<1x512xf32> to vector<8x512xf32>
    %164 = arith.mulf %161, %163 : vector<8x512xf32>
    %c80_99 = arith.constant 80 : index
    %c0_100 = arith.constant 0 : index
    %165 = vector.load %arg12[%c80_99, %c0_100] : memref<320x512xf32, #tpu.memory_space<vmem>>, vector<8x512xf32>
    tpu.vector_store %arg12[%c80_99, %c0_100], %164 {strides = array<i32>} : memref<320x512xf32, #tpu.memory_space<vmem>>, vector<8x512xf32>,
    %c0_101 = arith.constant 0 : index
    %c94 = arith.constant 94 : index
    %166 = vector.load %arg13[%c0_101, %c94] : memref<8x896xf32, #tpu.memory_space<vmem>>, vector<8x512xf32>
    %167 = vector.extract_strided_slice %110 {offsets = [11, 0], sizes = [1, 512], strides = [1, 1]} : vector<40x512xf32> to vector<1x512xf32>
    %168 = vector.broadcast %167 : vector<1x512xf32> to vector<8x512xf32>
    %169 = arith.mulf %166, %168 : vector<8x512xf32>
    %c88 = arith.constant 88 : index
    %c0_102 = arith.constant 0 : index
    %170 = vector.load %arg12[%c88, %c0_102] : memref<320x512xf32, #tpu.memory_space<vmem>>, vector<8x512xf32>
    tpu.vector_store %arg12[%c88, %c0_102], %169 {strides = array<i32>} : memref<320x512xf32, #tpu.memory_space<vmem>>, vector<8x512xf32>,
    %c0_103 = arith.constant 0 : index
    %c96_104 = arith.constant 96 : index
    %171 = vector.load %arg13[%c0_103, %c96_104] : memref<8x896xf32, #tpu.memory_space<vmem>>, vector<8x512xf32>
    %172 = vector.extract_strided_slice %110 {offsets = [12, 0], sizes = [1, 512], strides = [1, 1]} : vector<40x512xf32> to vector<1x512xf32>
    %173 = vector.broadcast %172 : vector<1x512xf32> to vector<8x512xf32>
    %174 = arith.mulf %171, %173 : vector<8x512xf32>
    %c96_105 = arith.constant 96 : index
    %c0_106 = arith.constant 0 : index
    %175 = vector.load %arg12[%c96_105, %c0_106] : memref<320x512xf32, #tpu.memory_space<vmem>>, vector<8x512xf32>
    tpu.vector_store %arg12[%c96_105, %c0_106], %174 {strides = array<i32>} : memref<320x512xf32, #tpu.memory_space<vmem>>, vector<8x512xf32>,
    %c0_107 = arith.constant 0 : index
    %c98 = arith.constant 98 : index
    %176 = vector.load %arg13[%c0_107, %c98] : memref<8x896xf32, #tpu.memory_space<vmem>>, vector<8x512xf32>
    %177 = vector.extract_strided_slice %110 {offsets = [13, 0], sizes = [1, 512], strides = [1, 1]} : vector<40x512xf32> to vector<1x512xf32>
    %178 = vector.broadcast %177 : vector<1x512xf32> to vector<8x512xf32>
    %179 = arith.mulf %176, %178 : vector<8x512xf32>
    %c104 = arith.constant 104 : index
    %c0_108 = arith.constant 0 : index
    %180 = vector.load %arg12[%c104, %c0_108] : memref<320x512xf32, #tpu.memory_space<vmem>>, vector<8x512xf32>
    tpu.vector_store %arg12[%c104, %c0_108], %179 {strides = array<i32>} : memref<320x512xf32, #tpu.memory_space<vmem>>, vector<8x512xf32>,
    %c0_109 = arith.constant 0 : index
    %c100 = arith.constant 100 : index
    %181 = vector.load %arg13[%c0_109, %c100] : memref<8x896xf32, #tpu.memory_space<vmem>>, vector<8x512xf32>
    %182 = vector.extract_strided_slice %110 {offsets = [14, 0], sizes = [1, 512], strides = [1, 1]} : vector<40x512xf32> to vector<1x512xf32>
    %183 = vector.broadcast %182 : vector<1x512xf32> to vector<8x512xf32>
    %184 = arith.mulf %181, %183 : vector<8x512xf32>
    %c112_110 = arith.constant 112 : index
    %c0_111 = arith.constant 0 : index
    %185 = vector.load %arg12[%c112_110, %c0_111] : memref<320x512xf32, #tpu.memory_space<vmem>>, vector<8x512xf32>
    tpu.vector_store %arg12[%c112_110, %c0_111], %184 {strides = array<i32>} : memref<320x512xf32, #tpu.memory_space<vmem>>, vector<8x512xf32>,
    %c0_112 = arith.constant 0 : index
    %c124 = arith.constant 124 : index
    %186 = vector.load %arg13[%c0_112, %c124] : memref<8x896xf32, #tpu.memory_space<vmem>>, vector<8x512xf32>
    %187 = vector.extract_strided_slice %110 {offsets = [15, 0], sizes = [1, 512], strides = [1, 1]} : vector<40x512xf32> to vector<1x512xf32>
    %188 = vector.broadcast %187 : vector<1x512xf32> to vector<8x512xf32>
    %189 = arith.mulf %186, %188 : vector<8x512xf32>
    %c120 = arith.constant 120 : index
    %c0_113 = arith.constant 0 : index
    %190 = vector.load %arg12[%c120, %c0_113] : memref<320x512xf32, #tpu.memory_space<vmem>>, vector<8x512xf32>
    tpu.vector_store %arg12[%c120, %c0_113], %189 {strides = array<i32>} : memref<320x512xf32, #tpu.memory_space<vmem>>, vector<8x512xf32>,
    %c0_114 = arith.constant 0 : index
    %c126 = arith.constant 126 : index
    %191 = vector.load %arg13[%c0_114, %c126] : memref<8x896xf32, #tpu.memory_space<vmem>>, vector<8x512xf32>
    %192 = vector.extract_strided_slice %110 {offsets = [16, 0], sizes = [1, 512], strides = [1, 1]} : vector<40x512xf32> to vector<1x512xf32>
    %193 = vector.broadcast %192 : vector<1x512xf32> to vector<8x512xf32>
    %194 = arith.mulf %191, %193 : vector<8x512xf32>
    %c128_115 = arith.constant 128 : index
    %c0_116 = arith.constant 0 : index
    %195 = vector.load %arg12[%c128_115, %c0_116] : memref<320x512xf32, #tpu.memory_space<vmem>>, vector<8x512xf32>
    tpu.vector_store %arg12[%c128_115, %c0_116], %194 {strides = array<i32>} : memref<320x512xf32, #tpu.memory_space<vmem>>, vector<8x512xf32>,
    %c0_117 = arith.constant 0 : index
    %c128_118 = arith.constant 128 : index
    %196 = vector.load %arg13[%c0_117, %c128_118] : memref<8x896xf32, #tpu.memory_space<vmem>>, vector<8x512xf32>
    %197 = vector.extract_strided_slice %110 {offsets = [17, 0], sizes = [1, 512], strides = [1, 1]} : vector<40x512xf32> to vector<1x512xf32>
    %198 = vector.broadcast %197 : vector<1x512xf32> to vector<8x512xf32>
    %199 = arith.mulf %196, %198 : vector<8x512xf32>
    %c136 = arith.constant 136 : index
    %c0_119 = arith.constant 0 : index
    %200 = vector.load %arg12[%c136, %c0_119] : memref<320x512xf32, #tpu.memory_space<vmem>>, vector<8x512xf32>
    tpu.vector_store %arg12[%c136, %c0_119], %199 {strides = array<i32>} : memref<320x512xf32, #tpu.memory_space<vmem>>, vector<8x512xf32>,
    %c0_120 = arith.constant 0 : index
    %c130 = arith.constant 130 : index
    %201 = vector.load %arg13[%c0_120, %c130] : memref<8x896xf32, #tpu.memory_space<vmem>>, vector<8x512xf32>
    %202 = vector.extract_strided_slice %110 {offsets = [18, 0], sizes = [1, 512], strides = [1, 1]} : vector<40x512xf32> to vector<1x512xf32>
    %203 = vector.broadcast %202 : vector<1x512xf32> to vector<8x512xf32>
    %204 = arith.mulf %201, %203 : vector<8x512xf32>
    %c144_121 = arith.constant 144 : index
    %c0_122 = arith.constant 0 : index
    %205 = vector.load %arg12[%c144_121, %c0_122] : memref<320x512xf32, #tpu.memory_space<vmem>>, vector<8x512xf32>
    tpu.vector_store %arg12[%c144_121, %c0_122], %204 {strides = array<i32>} : memref<320x512xf32, #tpu.memory_space<vmem>>, vector<8x512xf32>,
    %c0_123 = arith.constant 0 : index
    %c132 = arith.constant 132 : index
    %206 = vector.load %arg13[%c0_123, %c132] : memref<8x896xf32, #tpu.memory_space<vmem>>, vector<8x512xf32>
    %207 = vector.extract_strided_slice %110 {offsets = [19, 0], sizes = [1, 512], strides = [1, 1]} : vector<40x512xf32> to vector<1x512xf32>
    %208 = vector.broadcast %207 : vector<1x512xf32> to vector<8x512xf32>
    %209 = arith.mulf %206, %208 : vector<8x512xf32>
    %c152 = arith.constant 152 : index
    %c0_124 = arith.constant 0 : index
    %210 = vector.load %arg12[%c152, %c0_124] : memref<320x512xf32, #tpu.memory_space<vmem>>, vector<8x512xf32>
    tpu.vector_store %arg12[%c152, %c0_124], %209 {strides = array<i32>} : memref<320x512xf32, #tpu.memory_space<vmem>>, vector<8x512xf32>,
    %c0_125 = arith.constant 0 : index
    %c156 = arith.constant 156 : index
    %211 = vector.load %arg13[%c0_125, %c156] : memref<8x896xf32, #tpu.memory_space<vmem>>, vector<8x512xf32>
    %212 = vector.extract_strided_slice %110 {offsets = [20, 0], sizes = [1, 512], strides = [1, 1]} : vector<40x512xf32> to vector<1x512xf32>
    %213 = vector.broadcast %212 : vector<1x512xf32> to vector<8x512xf32>
    %214 = arith.mulf %211, %213 : vector<8x512xf32>
    %c160_126 = arith.constant 160 : index
    %c0_127 = arith.constant 0 : index
    %215 = vector.load %arg12[%c160_126, %c0_127] : memref<320x512xf32, #tpu.memory_space<vmem>>, vector<8x512xf32>
    tpu.vector_store %arg12[%c160_126, %c0_127], %214 {strides = array<i32>} : memref<320x512xf32, #tpu.memory_space<vmem>>, vector<8x512xf32>,
    %c0_128 = arith.constant 0 : index
    %c158 = arith.constant 158 : index
    %216 = vector.load %arg13[%c0_128, %c158] : memref<8x896xf32, #tpu.memory_space<vmem>>, vector<8x512xf32>
    %217 = vector.extract_strided_slice %110 {offsets = [21, 0], sizes = [1, 512], strides = [1, 1]} : vector<40x512xf32> to vector<1x512xf32>
    %218 = vector.broadcast %217 : vector<1x512xf32> to vector<8x512xf32>
    %219 = arith.mulf %216, %218 : vector<8x512xf32>
    %c168 = arith.constant 168 : index
    %c0_129 = arith.constant 0 : index
    %220 = vector.load %arg12[%c168, %c0_129] : memref<320x512xf32, #tpu.memory_space<vmem>>, vector<8x512xf32>
    tpu.vector_store %arg12[%c168, %c0_129], %219 {strides = array<i32>} : memref<320x512xf32, #tpu.memory_space<vmem>>, vector<8x512xf32>,
    %c0_130 = arith.constant 0 : index
    %c160_131 = arith.constant 160 : index
    %221 = vector.load %arg13[%c0_130, %c160_131] : memref<8x896xf32, #tpu.memory_space<vmem>>, vector<8x512xf32>
    %222 = vector.extract_strided_slice %110 {offsets = [22, 0], sizes = [1, 512], strides = [1, 1]} : vector<40x512xf32> to vector<1x512xf32>
    %223 = vector.broadcast %222 : vector<1x512xf32> to vector<8x512xf32>
    %224 = arith.mulf %221, %223 : vector<8x512xf32>
    %c176_132 = arith.constant 176 : index
    %c0_133 = arith.constant 0 : index
    %225 = vector.load %arg12[%c176_132, %c0_133] : memref<320x512xf32, #tpu.memory_space<vmem>>, vector<8x512xf32>
    tpu.vector_store %arg12[%c176_132, %c0_133], %224 {strides = array<i32>} : memref<320x512xf32, #tpu.memory_space<vmem>>, vector<8x512xf32>,
    %c0_134 = arith.constant 0 : index
    %c162 = arith.constant 162 : index
    %226 = vector.load %arg13[%c0_134, %c162] : memref<8x896xf32, #tpu.memory_space<vmem>>, vector<8x512xf32>
    %227 = vector.extract_strided_slice %110 {offsets = [23, 0], sizes = [1, 512], strides = [1, 1]} : vector<40x512xf32> to vector<1x512xf32>
    %228 = vector.broadcast %227 : vector<1x512xf32> to vector<8x512xf32>
    %229 = arith.mulf %226, %228 : vector<8x512xf32>
    %c184 = arith.constant 184 : index
    %c0_135 = arith.constant 0 : index
    %230 = vector.load %arg12[%c184, %c0_135] : memref<320x512xf32, #tpu.memory_space<vmem>>, vector<8x512xf32>
    tpu.vector_store %arg12[%c184, %c0_135], %229 {strides = array<i32>} : memref<320x512xf32, #tpu.memory_space<vmem>>, vector<8x512xf32>,
    %c0_136 = arith.constant 0 : index
    %c164 = arith.constant 164 : index
    %231 = vector.load %arg13[%c0_136, %c164] : memref<8x896xf32, #tpu.memory_space<vmem>>, vector<8x512xf32>
    %232 = vector.extract_strided_slice %110 {offsets = [24, 0], sizes = [1, 512], strides = [1, 1]} : vector<40x512xf32> to vector<1x512xf32>
    %233 = vector.broadcast %232 : vector<1x512xf32> to vector<8x512xf32>
    %234 = arith.mulf %231, %233 : vector<8x512xf32>
    %c192_137 = arith.constant 192 : index
    %c0_138 = arith.constant 0 : index
    %235 = vector.load %arg12[%c192_137, %c0_138] : memref<320x512xf32, #tpu.memory_space<vmem>>, vector<8x512xf32>
    tpu.vector_store %arg12[%c192_137, %c0_138], %234 {strides = array<i32>} : memref<320x512xf32, #tpu.memory_space<vmem>>, vector<8x512xf32>,
    %c0_139 = arith.constant 0 : index
    %c188 = arith.constant 188 : index
    %236 = vector.load %arg13[%c0_139, %c188] : memref<8x896xf32, #tpu.memory_space<vmem>>, vector<8x512xf32>
    %237 = vector.extract_strided_slice %110 {offsets = [25, 0], sizes = [1, 512], strides = [1, 1]} : vector<40x512xf32> to vector<1x512xf32>
    %238 = vector.broadcast %237 : vector<1x512xf32> to vector<8x512xf32>
    %239 = arith.mulf %236, %238 : vector<8x512xf32>
    %c200 = arith.constant 200 : index
    %c0_140 = arith.constant 0 : index
    %240 = vector.load %arg12[%c200, %c0_140] : memref<320x512xf32, #tpu.memory_space<vmem>>, vector<8x512xf32>
    tpu.vector_store %arg12[%c200, %c0_140], %239 {strides = array<i32>} : memref<320x512xf32, #tpu.memory_space<vmem>>, vector<8x512xf32>,
    %c0_141 = arith.constant 0 : index
    %c190 = arith.constant 190 : index
    %241 = vector.load %arg13[%c0_141, %c190] : memref<8x896xf32, #tpu.memory_space<vmem>>, vector<8x512xf32>
    %242 = vector.extract_strided_slice %110 {offsets = [26, 0], sizes = [1, 512], strides = [1, 1]} : vector<40x512xf32> to vector<1x512xf32>
    %243 = vector.broadcast %242 : vector<1x512xf32> to vector<8x512xf32>
    %244 = arith.mulf %241, %243 : vector<8x512xf32>
    %c208_142 = arith.constant 208 : index
    %c0_143 = arith.constant 0 : index
    %245 = vector.load %arg12[%c208_142, %c0_143] : memref<320x512xf32, #tpu.memory_space<vmem>>, vector<8x512xf32>
    tpu.vector_store %arg12[%c208_142, %c0_143], %244 {strides = array<i32>} : memref<320x512xf32, #tpu.memory_space<vmem>>, vector<8x512xf32>,
    %c0_144 = arith.constant 0 : index
    %c192_145 = arith.constant 192 : index
    %246 = vector.load %arg13[%c0_144, %c192_145] : memref<8x896xf32, #tpu.memory_space<vmem>>, vector<8x512xf32>
    %247 = vector.extract_strided_slice %110 {offsets = [27, 0], sizes = [1, 512], strides = [1, 1]} : vector<40x512xf32> to vector<1x512xf32>
    %248 = vector.broadcast %247 : vector<1x512xf32> to vector<8x512xf32>
    %249 = arith.mulf %246, %248 : vector<8x512xf32>
    %c216 = arith.constant 216 : index
    %c0_146 = arith.constant 0 : index
    %250 = vector.load %arg12[%c216, %c0_146] : memref<320x512xf32, #tpu.memory_space<vmem>>, vector<8x512xf32>
    tpu.vector_store %arg12[%c216, %c0_146], %249 {strides = array<i32>} : memref<320x512xf32, #tpu.memory_space<vmem>>, vector<8x512xf32>,
    %c0_147 = arith.constant 0 : index
    %c194 = arith.constant 194 : index
    %251 = vector.load %arg13[%c0_147, %c194] : memref<8x896xf32, #tpu.memory_space<vmem>>, vector<8x512xf32>
    %252 = vector.extract_strided_slice %110 {offsets = [28, 0], sizes = [1, 512], strides = [1, 1]} : vector<40x512xf32> to vector<1x512xf32>
    %253 = vector.broadcast %252 : vector<1x512xf32> to vector<8x512xf32>
    %254 = arith.mulf %251, %253 : vector<8x512xf32>
    %c224 = arith.constant 224 : index
    %c0_148 = arith.constant 0 : index
    %255 = vector.load %arg12[%c224, %c0_148] : memref<320x512xf32, #tpu.memory_space<vmem>>, vector<8x512xf32>
    tpu.vector_store %arg12[%c224, %c0_148], %254 {strides = array<i32>} : memref<320x512xf32, #tpu.memory_space<vmem>>, vector<8x512xf32>,
    %c0_149 = arith.constant 0 : index
    %c196 = arith.constant 196 : index
    %256 = vector.load %arg13[%c0_149, %c196] : memref<8x896xf32, #tpu.memory_space<vmem>>, vector<8x512xf32>
    %257 = vector.extract_strided_slice %110 {offsets = [29, 0], sizes = [1, 512], strides = [1, 1]} : vector<40x512xf32> to vector<1x512xf32>
    %258 = vector.broadcast %257 : vector<1x512xf32> to vector<8x512xf32>
    %259 = arith.mulf %256, %258 : vector<8x512xf32>
    %c232 = arith.constant 232 : index
    %c0_150 = arith.constant 0 : index
    %260 = vector.load %arg12[%c232, %c0_150] : memref<320x512xf32, #tpu.memory_space<vmem>>, vector<8x512xf32>
    tpu.vector_store %arg12[%c232, %c0_150], %259 {strides = array<i32>} : memref<320x512xf32, #tpu.memory_space<vmem>>, vector<8x512xf32>,
    %c0_151 = arith.constant 0 : index
    %c220 = arith.constant 220 : index
    %261 = vector.load %arg13[%c0_151, %c220] : memref<8x896xf32, #tpu.memory_space<vmem>>, vector<8x512xf32>
    %262 = vector.extract_strided_slice %110 {offsets = [30, 0], sizes = [1, 512], strides = [1, 1]} : vector<40x512xf32> to vector<1x512xf32>
    %263 = vector.broadcast %262 : vector<1x512xf32> to vector<8x512xf32>
    %264 = arith.mulf %261, %263 : vector<8x512xf32>
    %c240 = arith.constant 240 : index
    %c0_152 = arith.constant 0 : index
    %265 = vector.load %arg12[%c240, %c0_152] : memref<320x512xf32, #tpu.memory_space<vmem>>, vector<8x512xf32>
    tpu.vector_store %arg12[%c240, %c0_152], %264 {strides = array<i32>} : memref<320x512xf32, #tpu.memory_space<vmem>>, vector<8x512xf32>,
    %c0_153 = arith.constant 0 : index
    %c222 = arith.constant 222 : index
    %266 = vector.load %arg13[%c0_153, %c222] : memref<8x896xf32, #tpu.memory_space<vmem>>, vector<8x512xf32>
    %267 = vector.extract_strided_slice %110 {offsets = [31, 0], sizes = [1, 512], strides = [1, 1]} : vector<40x512xf32> to vector<1x512xf32>
    %268 = vector.broadcast %267 : vector<1x512xf32> to vector<8x512xf32>
    %269 = arith.mulf %266, %268 : vector<8x512xf32>
    %c248 = arith.constant 248 : index
    %c0_154 = arith.constant 0 : index
    %270 = vector.load %arg12[%c248, %c0_154] : memref<320x512xf32, #tpu.memory_space<vmem>>, vector<8x512xf32>
    tpu.vector_store %arg12[%c248, %c0_154], %269 {strides = array<i32>} : memref<320x512xf32, #tpu.memory_space<vmem>>, vector<8x512xf32>,
    %c0_155 = arith.constant 0 : index
    %c224_156 = arith.constant 224 : index
    %271 = vector.load %arg13[%c0_155, %c224_156] : memref<8x896xf32, #tpu.memory_space<vmem>>, vector<8x512xf32>
    %272 = vector.extract_strided_slice %110 {offsets = [32, 0], sizes = [1, 512], strides = [1, 1]} : vector<40x512xf32> to vector<1x512xf32>
    %273 = vector.broadcast %272 : vector<1x512xf32> to vector<8x512xf32>
    %274 = arith.mulf %271, %273 : vector<8x512xf32>
    %c256 = arith.constant 256 : index
    %c0_157 = arith.constant 0 : index
    %275 = vector.load %arg12[%c256, %c0_157] : memref<320x512xf32, #tpu.memory_space<vmem>>, vector<8x512xf32>
    tpu.vector_store %arg12[%c256, %c0_157], %274 {strides = array<i32>} : memref<320x512xf32, #tpu.memory_space<vmem>>, vector<8x512xf32>,
    %c0_158 = arith.constant 0 : index
    %c226 = arith.constant 226 : index
    %276 = vector.load %arg13[%c0_158, %c226] : memref<8x896xf32, #tpu.memory_space<vmem>>, vector<8x512xf32>
    %277 = vector.extract_strided_slice %110 {offsets = [33, 0], sizes = [1, 512], strides = [1, 1]} : vector<40x512xf32> to vector<1x512xf32>
    %278 = vector.broadcast %277 : vector<1x512xf32> to vector<8x512xf32>
    %279 = arith.mulf %276, %278 : vector<8x512xf32>
    %c264 = arith.constant 264 : index
    %c0_159 = arith.constant 0 : index
    %280 = vector.load %arg12[%c264, %c0_159] : memref<320x512xf32, #tpu.memory_space<vmem>>, vector<8x512xf32>
    tpu.vector_store %arg12[%c264, %c0_159], %279 {strides = array<i32>} : memref<320x512xf32, #tpu.memory_space<vmem>>, vector<8x512xf32>,
    %c0_160 = arith.constant 0 : index
    %c228 = arith.constant 228 : index
    %281 = vector.load %arg13[%c0_160, %c228] : memref<8x896xf32, #tpu.memory_space<vmem>>, vector<8x512xf32>
    %282 = vector.extract_strided_slice %110 {offsets = [34, 0], sizes = [1, 512], strides = [1, 1]} : vector<40x512xf32> to vector<1x512xf32>
    %283 = vector.broadcast %282 : vector<1x512xf32> to vector<8x512xf32>
    %284 = arith.mulf %281, %283 : vector<8x512xf32>
    %c272 = arith.constant 272 : index
    %c0_161 = arith.constant 0 : index
    %285 = vector.load %arg12[%c272, %c0_161] : memref<320x512xf32, #tpu.memory_space<vmem>>, vector<8x512xf32>
    tpu.vector_store %arg12[%c272, %c0_161], %284 {strides = array<i32>} : memref<320x512xf32, #tpu.memory_space<vmem>>, vector<8x512xf32>,
    %c0_162 = arith.constant 0 : index
    %c252 = arith.constant 252 : index
    %286 = vector.load %arg13[%c0_162, %c252] : memref<8x896xf32, #tpu.memory_space<vmem>>, vector<8x512xf32>
    %287 = vector.extract_strided_slice %110 {offsets = [35, 0], sizes = [1, 512], strides = [1, 1]} : vector<40x512xf32> to vector<1x512xf32>
    %288 = vector.broadcast %287 : vector<1x512xf32> to vector<8x512xf32>
    %289 = arith.mulf %286, %288 : vector<8x512xf32>
    %c280 = arith.constant 280 : index
    %c0_163 = arith.constant 0 : index
    %290 = vector.load %arg12[%c280, %c0_163] : memref<320x512xf32, #tpu.memory_space<vmem>>, vector<8x512xf32>
    tpu.vector_store %arg12[%c280, %c0_163], %289 {strides = array<i32>} : memref<320x512xf32, #tpu.memory_space<vmem>>, vector<8x512xf32>,
    %c0_164 = arith.constant 0 : index
    %c254 = arith.constant 254 : index
    %291 = vector.load %arg13[%c0_164, %c254] : memref<8x896xf32, #tpu.memory_space<vmem>>, vector<8x512xf32>
    %292 = vector.extract_strided_slice %110 {offsets = [36, 0], sizes = [1, 512], strides = [1, 1]} : vector<40x512xf32> to vector<1x512xf32>
    %293 = vector.broadcast %292 : vector<1x512xf32> to vector<8x512xf32>
    %294 = arith.mulf %291, %293 : vector<8x512xf32>
    %c288 = arith.constant 288 : index
    %c0_165 = arith.constant 0 : index
    %295 = vector.load %arg12[%c288, %c0_165] : memref<320x512xf32, #tpu.memory_space<vmem>>, vector<8x512xf32>
    tpu.vector_store %arg12[%c288, %c0_165], %294 {strides = array<i32>} : memref<320x512xf32, #tpu.memory_space<vmem>>, vector<8x512xf32>,
    %c0_166 = arith.constant 0 : index
    %c256_167 = arith.constant 256 : index
    %296 = vector.load %arg13[%c0_166, %c256_167] : memref<8x896xf32, #tpu.memory_space<vmem>>, vector<8x512xf32>
    %297 = vector.extract_strided_slice %110 {offsets = [37, 0], sizes = [1, 512], strides = [1, 1]} : vector<40x512xf32> to vector<1x512xf32>
    %298 = vector.broadcast %297 : vector<1x512xf32> to vector<8x512xf32>
    %299 = arith.mulf %296, %298 : vector<8x512xf32>
    %c296 = arith.constant 296 : index
    %c0_168 = arith.constant 0 : index
    %300 = vector.load %arg12[%c296, %c0_168] : memref<320x512xf32, #tpu.memory_space<vmem>>, vector<8x512xf32>
    tpu.vector_store %arg12[%c296, %c0_168], %299 {strides = array<i32>} : memref<320x512xf32, #tpu.memory_space<vmem>>, vector<8x512xf32>,
    %c0_169 = arith.constant 0 : index
    %c258 = arith.constant 258 : index
    %301 = vector.load %arg13[%c0_169, %c258] : memref<8x896xf32, #tpu.memory_space<vmem>>, vector<8x512xf32>
    %302 = vector.extract_strided_slice %110 {offsets = [38, 0], sizes = [1, 512], strides = [1, 1]} : vector<40x512xf32> to vector<1x512xf32>
    %303 = vector.broadcast %302 : vector<1x512xf32> to vector<8x512xf32>
    %304 = arith.mulf %301, %303 : vector<8x512xf32>
    %c304 = arith.constant 304 : index
    %c0_170 = arith.constant 0 : index
    %305 = vector.load %arg12[%c304, %c0_170] : memref<320x512xf32, #tpu.memory_space<vmem>>, vector<8x512xf32>
    tpu.vector_store %arg12[%c304, %c0_170], %304 {strides = array<i32>} : memref<320x512xf32, #tpu.memory_space<vmem>>, vector<8x512xf32>,
    %c0_171 = arith.constant 0 : index
    %c260 = arith.constant 260 : index
    %306 = vector.load %arg13[%c0_171, %c260] : memref<8x896xf32, #tpu.memory_space<vmem>>, vector<8x512xf32>
    %307 = vector.extract_strided_slice %110 {offsets = [39, 0], sizes = [1, 512], strides = [1, 1]} : vector<40x512xf32> to vector<1x512xf32>
    %308 = vector.broadcast %307 : vector<1x512xf32> to vector<8x512xf32>
    %309 = arith.mulf %306, %308 : vector<8x512xf32>
    %c312 = arith.constant 312 : index
    %c0_172 = arith.constant 0 : index
    %310 = vector.load %arg12[%c312, %c0_172] : memref<320x512xf32, #tpu.memory_space<vmem>>, vector<8x512xf32>
    tpu.vector_store %arg12[%c312, %c0_172], %309 {strides = array<i32>} : memref<320x512xf32, #tpu.memory_space<vmem>>, vector<8x512xf32>,
    %c0_173 = arith.constant 0 : index
    %c0_174 = arith.constant 0 : index
    %311 = vector.load %arg5[%c0_173, %c0_174] : memref<8x320xf32, #tpu.memory_space<vmem>>, vector<8x320xf32>
    %c0_175 = arith.constant 0 : index
    %c0_176 = arith.constant 0 : index
    %312 = vector.load %arg12[%c0_175, %c0_176] : memref<320x512xf32, #tpu.memory_space<vmem>>, vector<320x512xf32>
    %cst_177 = arith.constant dense<0.000000e+00> : vector<8x512xf32>
    %313 = tpu.matmul %311, %312, %cst_177 {dimension_numbers = #tpu.dot_dimension_numbers<[1], [0], [0], [1], [0, 0, 1, 1], [], []>, precision = #tpu.contract_precision<fp32>} : vector<8x320xf32>, vector<320x512xf32>, vector<8x512xf32> -> vector<8x512xf32>
    %c0_178 = arith.constant 0 : index
    %c0_179 = arith.constant 0 : index
    %314 = vector.load %arg6[%c0_178, %c0_179] : memref<8x1xf32, #tpu.memory_space<vmem>>, vector<8x1xf32>
    %315 = vector.broadcast %314 : vector<8x1xf32> to vector<8x512xf32>
    %316 = arith.mulf %313, %315 : vector<8x512xf32>
    %c0_180 = arith.constant 0 : index
    %c0_181 = arith.constant 0 : index
    %317 = vector.load %arg7[%c0_180, %c0_181] : memref<8x1xf32, #tpu.memory_space<vmem>>, vector<8x1xf32>
    %318 = vector.broadcast %317 : vector<8x1xf32> to vector<8x512xf32>
    %319 = arith.addf %316, %318 : vector<8x512xf32>
    %cst_182 = arith.constant 0.000000e+00 : f32
    %320 = vector.broadcast %cst_182 : f32 to vector<8x512xf32>
    %321 = arith.cmpf ogt, %319, %320 : vector<8x512xf32>
    %cst_183 = arith.constant 2.000000e-01 : f32
    %322 = vector.broadcast %cst_183 : f32 to vector<8x512xf32>
    %323 = arith.mulf %322, %319 : vector<8x512xf32>
    %324 = arith.select %321, %319, %323 : vector<8x512xi1>, vector<8x512xf32>
    %c0_184 = arith.constant 0 : index
    %c128_185 = arith.constant 128 : index
    %325 = vector.load %arg13[%c0_184, %c128_185] : memref<8x896xf32, #tpu.memory_space<vmem>>, vector<8x512xf32>
    tpu.vector_store %arg13[%c0_184, %c128_185], %324 {strides = array<i32>} : memref<8x896xf32, #tpu.memory_space<vmem>>, vector<8x512xf32>,
    %c0_186 = arith.constant 0 : index
    %c128_187 = arith.constant 128 : index
    %326 = vector.load %arg13[%c0_186, %c128_187] : memref<8x896xf32, #tpu.memory_space<vmem>>, vector<8x512xf32>
    %c0_188 = arith.constant 0 : index
    %c160_189 = arith.constant 160 : index
    %327 = vector.load %arg13[%c0_188, %c160_189] : memref<8x896xf32, #tpu.memory_space<vmem>>, vector<8x512xf32>
    %328 = arith.maximumf %326, %327 : vector<8x512xf32>
    %c0_190 = arith.constant 0 : index
    %c0_191 = arith.constant 0 : index
    %329 = vector.load %arg10[%c0_190, %c0_191] : memref<8x512xf32, #tpu.memory_space<vmem>>, vector<8x512xf32>
    tpu.vector_store %arg10[%c0_190, %c0_191], %328 {strides = array<i32>} : memref<8x512xf32, #tpu.memory_space<vmem>>, vector<8x512xf32>,
    return
  }
  func.func @transform_0(%arg0: i32) -> (i32, i32) {
    %c0_i32 = arith.constant 0 : i32
    %c0_i32_0 = arith.constant 0 : i32
    %c0_i32_1 = arith.constant 0 : i32
    return %c0_i32, %c0_i32_0 : i32, i32
  }
  func.func @transform_1(%arg0: i32) -> (i32, i32) {
    %c0_i32 = arith.constant 0 : i32
    %c0_i32_0 = arith.constant 0 : i32
    %c0_i32_1 = arith.constant 0 : i32
    return %c0_i32, %c0_i32_0 : i32, i32
  }
  func.func @transform_2(%arg0: i32) -> (i32, i32) {
    %c0_i32 = arith.constant 0 : i32
    %c0_i32_0 = arith.constant 0 : i32
    %c0_i32_1 = arith.constant 0 : i32
    return %c0_i32, %c0_i32_0 : i32, i32
  }
  func.func @transform_3(%arg0: i32) -> (i32, i32) {
    %c0_i32 = arith.constant 0 : i32
    %c0_i32_0 = arith.constant 0 : i32
    %c0_i32_1 = arith.constant 0 : i32
    return %c0_i32, %c0_i32_0 : i32, i32
  }
  func.func @transform_4(%arg0: i32) -> (i32, i32) {
    %c0_i32 = arith.constant 0 : i32
    %c0_i32_0 = arith.constant 0 : i32
    %c0_i32_1 = arith.constant 0 : i32
    return %c0_i32, %c0_i32_0 : i32, i32
  }
  func.func @transform_5(%arg0: i32) -> (i32, i32) {
    %c0_i32 = arith.constant 0 : i32
    %c0_i32_0 = arith.constant 0 : i32
    %c0_i32_1 = arith.constant 0 : i32
    return %c0_i32, %c0_i32_0 : i32, i32
  }
  func.func @transform_6(%arg0: i32) -> (i32, i32) {
    %c0_i32 = arith.constant 0 : i32
    %c0_i32_0 = arith.constant 0 : i32
    %c0_i32_1 = arith.constant 0 : i32
    return %c0_i32, %c0_i32_0 : i32, i32
  }
  func.func @transform_7(%arg0: i32) -> (i32, i32) {
    %c0_i32 = arith.constant 0 : i32
    %c0_i32_0 = arith.constant 0 : i32
    %c0_i32_1 = arith.constant 0 : i32
    return %c0_i32, %c0_i32_0 : i32, i32
  }
  func.func @transform_8(%arg0: i32) -> (i32, i32) {
    %c0_i32 = arith.constant 0 : i32
    %c0_i32_0 = arith.constant 0 : i32
    %c0_i32_1 = arith.constant 0 : i32
    return %c0_i32, %c0_i32_0 : i32, i32
  }
  func.func @transform_9(%arg0: i32) -> (i32, i32) {
    %c0_i32 = arith.constant 0 : i32
    %c0_i32_0 = arith.constant 0 : i32
    %c0_i32_1 = arith.constant 0 : i32
    return %c0_i32, %c0_i32_0 : i32, i32
  }
}

</mosaic_0001>

<llo_original>
// kernel: tpu_custom_call.1
$region0: #{tpu_custom_call.1}
  #allocation0 [shape = 'u32[]', space=smem, size = 0x4, offset = 0x4, fixed_abs, tag = 'smem constant byte address 0x4 - core index']
  #allocation1 [shape = 'u32[144,128]{1,0:T(1,128)}', space=vmem, size = 0x12000, scoped, tag = 'internal scratch']
  #allocation2 [shape = 'f32[24,512]{1,0:T(8,128)}', space=vmem, size = 0xc000, scoped, tag = 'scratch operand']
  #allocation3 [shape = 'f32[320,512]{1,0:T(8,128)}', space=vmem, size = 0xa0000, scoped, tag = 'scratch operand']
  #allocation4 [shape = 'f32[8,896]{1,0:T(8,128)}', space=vmem, size = 0x7000, scoped, tag = 'scratch operand']
  %s0 = inlined_call_operand.hbm [shape: f32[1,768], index: 0, kind: input, shape index: {}]
  %s1 = inlined_call_operand.hbm [shape: f32[8,24], index: 1, kind: input, shape index: {}]
  %s2 = inlined_call_operand.vmem [shape: f32[8,1], index: 2, kind: input, shape index: {}]
  %s3 = inlined_call_operand.vmem [shape: f32[8,1], index: 3, kind: input, shape index: {}]
  %s4 = inlined_call_operand.hbm [shape: f32[8,320], index: 4, kind: input, shape index: {}]
  %s5 = inlined_call_operand.vmem [shape: f32[8,1], index: 5, kind: input, shape index: {}]
  %s6 = inlined_call_operand.vmem [shape: f32[8,1], index: 6, kind: input, shape index: {}]
  %s7 = inlined_call_operand.vmem [shape: bf16[20,512], index: 7, kind: input, shape index: {}]
  %s8 = inlined_call_operand.hbm [shape: bf16[40,512], index: 8, kind: input, shape index: {}]
  %s9 = inlined_call_operand.hbm [shape: f32[8,512], index: 9, kind: output, shape index: {}]
  %s10 = sld [smem:[#allocation0]]
  $region62: #{tpu_custom_call.1} parent=0
    _
  %s12 = ssub.s32 1, %s10
  %s13 = scalar_select 0, %s12, %s10
  $region1: #{tpu_custom_call.1} parent=0
    #allocation5 [shape = 'u8[3072]{0}', space=vmem, size = 0xc00, scoped, tag = 'input window, operand 0, single buffered']
    #allocation6 [shape = 's32[1]{0}', space=sflag, size = 0x4, scoped, tag = 'scoped memory for tpu_custom_call.1']
    #allocation7 [shape = 's32[1]{0}', space=sflag, size = 0x4, scoped, tag = 'scoped memory for tpu_custom_call.1']
    #allocation8 [shape = 'u8[4096]{0}', space=vmem, size = 0x1000, scoped, tag = 'input window, operand 1, single buffered']
    #allocation9 [shape = 's32[1]{0}', space=sflag, size = 0x4, scoped, tag = 'scoped memory for tpu_custom_call.1']
    #allocation10 [shape = 'u8[12288]{0}', space=vmem, size = 0x3000, scoped, tag = 'input window, operand 4, single buffered']
    #allocation11 [shape = 'u8[40960]{0}', space=vmem, size = 0xa000, scoped, tag = 'input window, operand 8, single buffered']
    #allocation12 [shape = 's32[1]{0}', space=sflag, size = 0x4, scoped, tag = 'scoped memory for tpu_custom_call.1']
    #allocation13 [shape = 'u8[16384]{0}', space=vmem, size = 0x4000, scoped, tag = 'output window, operand 0, single buffered']
    %14 = vsyncpa [#allocation6], 0
    %15 = vsyncpa [#allocation9], 0
    %16 = vsyncpa [#allocation12], 0
    %17 = vsyncpa [#allocation7], 0
    // Predicated region
    $region2: #{tpu_custom_call.1} parent=1 // pred_check
      _
    $region3: #{tpu_custom_call.1} parent=1 // pred_check_branch
      %19 = sbr.rel (0) target = $region5
    $region4: #{tpu_custom_call.1} parent=1 // pred_region
      %s21 = ssub.s32 96, 96
      %22 = vsyncadd [#allocation6], %s21
      %s24 = sshll.u32 [#allocation5], 4
      %s25 = int_to_ptr.vmem [resolvable:$true] %s24
      %27 = dma.hbm_to_vmem [thread:$0]  %s0, 96, %s25, [#allocation6]
    $region5: #{tpu_custom_call.1} parent=1 // pred_fallthru
      _
    // Predicated region
    $region6: #{tpu_custom_call.1} parent=1 // pred_check
      _
    $region7: #{tpu_custom_call.1} parent=1 // pred_check_branch
      %29 = sbr.rel (0) target = $region9
    $region8: #{tpu_custom_call.1} parent=1 // pred_region
      %s31 = ssub.s32 128, 128
      %32 = vsyncadd [#allocation9], %s31
      %s34 = sshll.u32 [#allocation8], 4
      %s35 = int_to_ptr.vmem [resolvable:$true] %s34
      %37 = dma.hbm_to_vmem [thread:$0]  %s1, 128, %s35, [#allocation9]
    $region9: #{tpu_custom_call.1} parent=1 // pred_fallthru
      _
    // Predicated region
    $region10: #{tpu_custom_call.1} parent=1 // pred_check
      _
    $region11: #{tpu_custom_call.1} parent=1 // pred_check_branch
      %39 = sbr.rel (0) target = $region13
    $region12: #{tpu_custom_call.1} parent=1 // pred_region
      _
    $region13: #{tpu_custom_call.1} parent=1 // pred_fallthru
      _
    // Predicated region
    $region14: #{tpu_custom_call.1} parent=1 // pred_check
      _
    $region15: #{tpu_custom_call.1} parent=1 // pred_check_branch
      %41 = sbr.rel (0) target = $region17
    $region16: #{tpu_custom_call.1} parent=1 // pred_region
      _
    $region17: #{tpu_custom_call.1} parent=1 // pred_fallthru
      _
    // Predicated region
    $region18: #{tpu_custom_call.1} parent=1 // pred_check
      _
    $region19: #{tpu_custom_call.1} parent=1 // pred_check_branch
      %43 = sbr.rel (0) target = $region21
    $region20: #{tpu_custom_call.1} parent=1 // pred_region
      %s45 = ssub.s32 384, 384
      %46 = vsyncadd [#allocation9], %s45
      %s48 = sshll.u32 [#allocation10], 4
      %s49 = int_to_ptr.vmem [resolvable:$true] %s48
      %51 = dma.hbm_to_vmem [thread:$0]  %s4, 384, %s49, [#allocation9]
    $region21: #{tpu_custom_call.1} parent=1 // pred_fallthru
      _
    // Predicated region
    $region22: #{tpu_custom_call.1} parent=1 // pred_check
      _
    $region23: #{tpu_custom_call.1} parent=1 // pred_check_branch
      %53 = sbr.rel (0) target = $region25
    $region24: #{tpu_custom_call.1} parent=1 // pred_region
      _
    $region25: #{tpu_custom_call.1} parent=1 // pred_fallthru
      _
    // Predicated region
    $region26: #{tpu_custom_call.1} parent=1 // pred_check
      _
    $region27: #{tpu_custom_call.1} parent=1 // pred_check_branch
      %55 = sbr.rel (0) target = $region29
    $region28: #{tpu_custom_call.1} parent=1 // pred_region
      _
    $region29: #{tpu_custom_call.1} parent=1 // pred_fallthru
      _
    // Predicated region
    $region30: #{tpu_custom_call.1} parent=1 // pred_check
      _
    $region31: #{tpu_custom_call.1} parent=1 // pred_check_branch
      %57 = sbr.rel (0) target = $region33
    $region32: #{tpu_custom_call.1} parent=1 // pred_region
      _
    $region33: #{tpu_custom_call.1} parent=1 // pred_fallthru
      _
    // Predicated region
    $region34: #{tpu_custom_call.1} parent=1 // pred_check
      _
    $region35: #{tpu_custom_call.1} parent=1 // pred_check_branch
      %59 = sbr.rel (0) target = $region37
    $region36: #{tpu_custom_call.1} parent=1 // pred_region
      %s61 = ssub.s32 1280, 1280
      %62 = vsyncadd [#allocation12], %s61
      %s63 = sshll.u32 [#allocation11], 4
      %s64 = int_to_ptr.vmem [resolvable:$true] %s63
      %69 = dma.hbm_to_vmem [thread:$0]  %s8, 1280, %s64, [#allocation12], 256, 256, 16
    $region37: #{tpu_custom_call.1} parent=1 // pred_fallthru
      _
    // Predicated region
    $region38: #{tpu_custom_call.1} parent=1 // pred_check
      _
    $region39: #{tpu_custom_call.1} parent=1 // pred_check_branch
      %71 = sbr.rel (0) target = $region41
    $region40: #{tpu_custom_call.1} parent=1 // pred_region
      %72 = dma.done [#allocation6], 96
    $region41: #{tpu_custom_call.1} parent=1 // pred_fallthru
      _
    // Predicated region
    $region42: #{tpu_custom_call.1} parent=1 // pred_check
      _
    $region43: #{tpu_custom_call.1} parent=1 // pred_check_branch
      %74 = sbr.rel (0) target = $region45
    $region44: #{tpu_custom_call.1} parent=1 // pred_region
      %75 = dma.done [#allocation9], 128
    $region45: #{tpu_custom_call.1} parent=1 // pred_fallthru
      _
    // Predicated region
    $region46: #{tpu_custom_call.1} parent=1 // pred_check
      _
    $region47: #{tpu_custom_call.1} parent=1 // pred_check_branch
      %77 = sbr.rel (0) target = $region49
    $region48: #{tpu_custom_call.1} parent=1 // pred_region
      %78 = dma.done [#allocation9], 384
    $region49: #{tpu_custom_call.1} parent=1 // pred_fallthru
      _
    // Predicated region
    $region50: #{tpu_custom_call.1} parent=1 // pred_check
      _
    $region51: #{tpu_custom_call.1} parent=1 // pred_check_branch
      %80 = sbr.rel (0) target = $region53
    $region52: #{tpu_custom_call.1} parent=1 // pred_region
      %81 = dma.done [#allocation12], 1280
    $region53: #{tpu_custom_call.1} parent=1 // pred_fallthru
      _
    %v82 = vld [vmem:[%s7] sm:$0xff]
    %v83 = vld [vmem:[%s7 + $0x8] sm:$0xff]
    %v84 = vld [vmem:[%s7 + $0x10] sm:$0xff]
    %v85 = vld [vmem:[%s7 + $0x18] sm:$0xff]
    %v86 = vld [vmem:[%s7 + $0x20] sm:$0x33]
    %v87 = vld [vmem:[%s7 + $0x28] sm:$0x33]
    %v88 = vunpack.c.l.bf16 %v82
    %v89 = vunpack.c.h.bf16 %v82
    %v90 = vunpack.c.l.bf16 %v83
    %v91 = vunpack.c.h.bf16 %v83
    %v92 = vunpack.c.l.bf16 %v84
    %v93 = vunpack.c.h.bf16 %v84
    %v94 = vunpack.c.l.bf16 %v85
    %v95 = vunpack.c.h.bf16 %v85
    %v96 = vunpack.c.l.bf16 %v86
    %v97 = vunpack.c.h.bf16 %v86
    %v98 = vunpack.c.l.bf16 %v87
    %v99 = vunpack.c.h.bf16 %v87
    %100 = vst [vmem:[#allocation2 + $0x40] sm:$0xff] 0.0
    %101 = vst [vmem:[#allocation2 + $0x48] sm:$0xff] 0.0
    %102 = vst [vmem:[#allocation2 + $0x50] sm:$0xff] 0.0
    %103 = vst [vmem:[#allocation2 + $0x58] sm:$0xff] 0.0
    %v104 = vld [vmem:[#allocation5] sm:$0x1f]
    %v109 = vcombine.low %v88, %v89
    %v110 = vcombine.low %v90, %v91
    %v112 = vunpack.c.l.s4 1966171168
    %v113 = vunpack.c.0.s8 %v112
    %v114 = vlaneseq
    %v115 = vshrl.u32 %v114, 7
    %v116 = vsub.s32 %v113, %v115
    %v117 = vrot.slane %v109, %v116
    %v119 = vunpack.c.l.s4 1966171168
    %v120 = vunpack.c.0.s8 %v119
    %v121 = vlaneseq
    %v122 = vshrl.u32 %v121, 7
    %v123 = vsub.s32 %v120, %v122
    %v124 = vrot.slane %v110, %v123
    %v125 = vcombine.low %v117, %v124
    %v127 = vunpack.c.l.s4 1966171168
    %v128 = vunpack.c.0.s8 %v127
    %v129 = vlaneseq
    %v130 = vshrl.u32 %v129, 7
    %v131 = vsub.s32 %v128, %v130
    %v132 = vrot.slane %v125, %v131
    %133 = vrot.lane.b32.xlu0 %v132, 64
    %v134 = vpop.permute.xlu0 %133
    %v135 = vrot.slane %v134, 7
    %vm136 = vcmask 523264
    %v137 = vsel %vm136, %v135, %v134
    %v139 = vmul.f32 %v104, %v137
    %141 = vrot.lane.b32.xlu0 %v139, 64
    %v142 = vpop.permute.xlu0 %141
    %v143 = vrot.slane %v142, 1
    %v144 = vsel %vm136, %v142, %v143
    %v146 = vlaneseq
    %vm147 = vcmp.ge.s32.totalorder %v146, 0
    %vm148 = vcmp.lt.s32.totalorder %v146, 512
    %vm149 = vmand %vm147, %vm148
    %150 = vst.msk [vmem:[#allocation2] ss:$8 sm:$0xf] %vm149, %v144
    %151 = vst.msk [vmem:[#allocation2] ss:$8 sm:$0x0] %vm149, %v144
    %v152 = vld [vmem:[#allocation5] sm:$0x1f]
    %v153 = vcombine.high %v117, %v124
    %v155 = vunpack.c.l.s4 1966171168
    %v156 = vunpack.c.0.s8 %v155
    %v157 = vlaneseq
    %v158 = vshrl.u32 %v157, 7
    %v159 = vsub.s32 %v156, %v158
    %v160 = vrot.slane %v153, %v159
    %161 = vrot.lane.b32.xlu0 %v160, 65
    %v162 = vpop.permute.xlu0 %161
    %v163 = vrot.slane %v162, 7
    %vm164 = vcmask 531456
    %v165 = vsel %vm164, %v163, %v162
    %v167 = vmul.f32 %v152, %v165
    %169 = vrot.lane.b32.xlu0 %v167, 63
    %v170 = vpop.permute.xlu0 %169
    %v171 = vrot.slane %v170, 1
    %vm172 = vcmask 515072
    %v173 = vsel %vm172, %v170, %v171
    %s175 = scalar_lea.vmem [#allocation2], 1
    %176 = vst.msk [vmem:[%s175] ss:$8 sm:$0xf] %vm149, %v173
    %177 = vst.msk [vmem:[%s175] ss:$8 sm:$0x0] %vm149, %v173
    %v178 = vld [vmem:[#allocation5] sm:$0x1f]
    %v179 = vcombine.high %v132, %v132
    %180 = vrot.lane.b32.xlu0 %v179, 80
    %v181 = vpop.permute.xlu0 %180
    %v182 = vrot.slane %v181, 7
    %vm183 = vcmask 654336
    %v184 = vsel %vm183, %v182, %v181
    %v186 = vmul.f32 %v178, %v184
    %188 = vrot.lane.b32.xlu0 %v186, 48
    %v189 = vpop.permute.xlu0 %188
    %v190 = vrot.slane %v189, 1
    %vm191 = vcmask 392192
    %v192 = vsel %vm191, %v189, %v190
    %s194 = scalar_lea.vmem [#allocation2], 2
    %195 = vst.msk [vmem:[%s194] ss:$8 sm:$0xf] %vm149, %v192
    %196 = vst.msk [vmem:[%s194] ss:$8 sm:$0x0] %vm149, %v192
    %v197 = vld [vmem:[#allocation5] sm:$0x1f]
    %v198 = vcombine.high %v160, %v160
    %199 = vrot.lane.b32.xlu0 %v198, 81
    %v200 = vpop.permute.xlu0 %199
    %v201 = vrot.slane %v200, 7
    %vm202 = vcmask 662528
    %v203 = vsel %vm202, %v201, %v200
    %v205 = vmul.f32 %v197, %v203
    %207 = vrot.lane.b32.xlu0 %v205, 47
    %v208 = vpop.permute.xlu0 %207
    %v209 = vrot.slane %v208, 1
    %vm210 = vcmask 384000
    %v211 = vsel %vm210, %v208, %v209
    %s213 = scalar_lea.vmem [#allocation2], 3
    %214 = vst.msk [vmem:[%s213] ss:$8 sm:$0xf] %vm149, %v211
    %215 = vst.msk [vmem:[%s213] ss:$8 sm:$0x0] %vm149, %v211
    %v216 = vld [vmem:[#allocation5] sm:$0x1f]
    %v217 = vcombine.high %v88, %v89
    %v218 = vcombine.high %v90, %v91
    %v220 = vunpack.c.l.s4 1966171168
    %v221 = vunpack.c.0.s8 %v220
    %v222 = vlaneseq
    %v223 = vshrl.u32 %v222, 7
    %v224 = vsub.s32 %v221, %v223
    %v225 = vrot.slane %v217, %v224
    %v227 = vunpack.c.l.s4 1966171168
    %v228 = vunpack.c.0.s8 %v227
    %v229 = vlaneseq
    %v230 = vshrl.u32 %v229, 7
    %v231 = vsub.s32 %v228, %v230
    %v232 = vrot.slane %v218, %v231
    %v233 = vcombine.low %v225, %v232
    %v235 = vunpack.c.l.s4 1966171168
    %v236 = vunpack.c.0.s8 %v235
    %v237 = vlaneseq
    %v238 = vshrl.u32 %v237, 7
    %v239 = vsub.s32 %v236, %v238
    %v240 = vrot.slane %v233, %v239
    %241 = vrot.lane.b32.xlu0 %v240, 96
    %v242 = vpop.permute.xlu0 %241
    %v243 = vrot.slane %v242, 7
    %vm244 = vcmask 785408
    %v245 = vsel %vm244, %v243, %v242
    %v247 = vmul.f32 %v216, %v245
    %249 = vrot.lane.b32.xlu0 %v247, 32
    %v250 = vpop.permute.xlu0 %249
    %v251 = vrot.slane %v250, 1
    %vm252 = vcmask 261120
    %v253 = vsel %vm252, %v250, %v251
    %s255 = scalar_lea.vmem [#allocation2], 4
    %256 = vst.msk [vmem:[%s255] ss:$8 sm:$0xf] %vm149, %v253
    %257 = vst.msk [vmem:[%s255] ss:$8 sm:$0x0] %vm149, %v253
    %v258 = vld [vmem:[#allocation5] sm:$0x1f]
    %v259 = vcombine.high %v225, %v232
    %v261 = vunpack.c.l.s4 1966171168
    %v262 = vunpack.c.0.s8 %v261
    %v263 = vlaneseq
    %v264 = vshrl.u32 %v263, 7
    %v265 = vsub.s32 %v262, %v264
    %v266 = vrot.slane %v259, %v265
    %267 = vrot.lane.b32.xlu0 %v266, 97
    %v268 = vpop.permute.xlu0 %267
    %v269 = vrot.slane %v268, 7
    %vm270 = vcmask 793600
    %v271 = vsel %vm270, %v269, %v268
    %v273 = vmul.f32 %v258, %v271
    %275 = vrot.lane.b32.xlu0 %v273, 31
    %v276 = vpop.permute.xlu0 %275
    %v277 = vrot.slane %v276, 1
    %vm278 = vcmask 252928
    %v279 = vsel %vm278, %v276, %v277
    %s281 = scalar_lea.vmem [#allocation2], 5
    %282 = vst.msk [vmem:[%s281] ss:$8 sm:$0xf] %vm149, %v279
    %283 = vst.msk [vmem:[%s281] ss:$8 sm:$0x0] %vm149, %v279
    %v284 = vld [vmem:[#allocation5] sm:$0x1f]
    %v285 = vcombine.high %v240, %v240
    %286 = vrot.lane.b32.xlu0 %v285, 112
    %v287 = vpop.permute.xlu0 %286
    %v288 = vrot.slane %v287, 7
    %vm289 = vcmask 916480
    %v290 = vsel %vm289, %v288, %v287
    %v292 = vmul.f32 %v284, %v290
    %294 = vrot.lane.b32.xlu0 %v292, 16
    %v295 = vpop.permute.xlu0 %294
    %v296 = vrot.slane %v295, 1
    %vm297 = vcmask 130048
    %v298 = vsel %vm297, %v295, %v296
    %s300 = scalar_lea.vmem [#allocation2], 6
    %301 = vst.msk [vmem:[%s300] ss:$8 sm:$0xf] %vm149, %v298
    %302 = vst.msk [vmem:[%s300] ss:$8 sm:$0x0] %vm149, %v298
    %v303 = vld [vmem:[#allocation5] sm:$0x1f]
    %v304 = vcombine.high %v266, %v266
    %305 = vrot.lane.b32.xlu0 %v304, 113
    %v306 = vpop.permute.xlu0 %305
    %v307 = vrot.slane %v306, 7
    %vm308 = vcmask 924672
    %v309 = vsel %vm308, %v307, %v306
    %v311 = vmul.f32 %v303, %v309
    %313 = vrot.lane.b32.xlu0 %v311, 15
    %v314 = vpop.permute.xlu0 %313
    %v315 = vrot.slane %v314, 1
    %vm316 = vcmask 121856
    %v317 = vsel %vm316, %v314, %v315
    %s319 = scalar_lea.vmem [#allocation2], 7
    %320 = vst.msk [vmem:[%s319] ss:$8 sm:$0xf] %vm149, %v317
    %321 = vst.msk [vmem:[%s319] ss:$8 sm:$0x0] %vm149, %v317
    %v322 = vld [vmem:[#allocation5 + $0x1] sm:$0xf]
    %v327 = vcombine.low %v92, %v93
    %v328 = vcombine.low %v94, %v95
    %v330 = vunpack.c.l.s4 1966171168
    %v331 = vunpack.c.0.s8 %v330
    %v332 = vlaneseq
    %v333 = vshrl.u32 %v332, 7
    %v334 = vsub.s32 %v331, %v333
    %v335 = vrot.slane %v327, %v334
    %v337 = vunpack.c.l.s4 1966171168
    %v338 = vunpack.c.0.s8 %v337
    %v339 = vlaneseq
    %v340 = vshrl.u32 %v339, 7
    %v341 = vsub.s32 %v338, %v340
    %v342 = vrot.slane %v328, %v341
    %v343 = vcombine.low %v335, %v342
    %v345 = vunpack.c.l.s4 1966171168
    %v346 = vunpack.c.0.s8 %v345
    %v347 = vlaneseq
    %v348 = vshrl.u32 %v347, 7
    %v349 = vsub.s32 %v346, %v348
    %v350 = vrot.slane %v343, %v349
    %v352 = vmul.f32 %v322, %v350
    %s353 = scalar_lea.vmem [#allocation2], 32
    %354 = vst.msk [vmem:[%s353] ss:$8 sm:$0xf] %vm149, %v352
    %355 = vst.msk [vmem:[%s353] ss:$8 sm:$0x0] %vm149, %v352
    %v356 = vld [vmem:[#allocation5 + $0x1] sm:$0x1f]
    %v357 = vcombine.high %v335, %v342
    %v359 = vunpack.c.l.s4 1966171168
    %v360 = vunpack.c.0.s8 %v359
    %v361 = vlaneseq
    %v362 = vshrl.u32 %v361, 7
    %v363 = vsub.s32 %v360, %v362
    %v364 = vrot.slane %v357, %v363
    %365 = vrot.lane.b32.xlu0 %v364, 1
    %v366 = vpop.permute.xlu0 %365
    %v367 = vrot.slane %v366, 7
    %vm368 = vcmask 7168
    %v369 = vsel %vm368, %v367, %v366
    %v371 = vmul.f32 %v356, %v369
    %373 = vrot.lane.b32.xlu0 %v371, 127
    %v374 = vpop.permute.xlu0 %373
    %v375 = vrot.slane %v374, 1
    %vm376 = vcmask 1039360
    %v377 = vsel %vm376, %v374, %v375
    %s379 = scalar_lea.vmem [#allocation2], 33
    %380 = vst.msk [vmem:[%s379] ss:$8 sm:$0xf] %vm149, %v377
    %381 = vst.msk [vmem:[%s379] ss:$8 sm:$0x0] %vm149, %v377
    %v382 = vld [vmem:[#allocation5 + $0x1] sm:$0x1f]
    %v383 = vcombine.high %v350, %v350
    %384 = vrot.lane.b32.xlu0 %v383, 16
    %v385 = vpop.permute.xlu0 %384
    %v386 = vrot.slane %v385, 7
    %v387 = vsel %vm297, %v386, %v385
    %v389 = vmul.f32 %v382, %v387
    %391 = vrot.lane.b32.xlu0 %v389, 112
    %v392 = vpop.permute.xlu0 %391
    %v393 = vrot.slane %v392, 1
    %v394 = vsel %vm289, %v392, %v393
    %s396 = scalar_lea.vmem [#allocation2], 34
    %397 = vst.msk [vmem:[%s396] ss:$8 sm:$0xf] %vm149, %v394
    %398 = vst.msk [vmem:[%s396] ss:$8 sm:$0x0] %vm149, %v394
    %v399 = vld [vmem:[#allocation5 + $0x1] sm:$0x1f]
    %v400 = vcombine.high %v364, %v364
    %401 = vrot.lane.b32.xlu0 %v400, 17
    %v402 = vpop.permute.xlu0 %401
    %v403 = vrot.slane %v402, 7
    %vm404 = vcmask 138240
    %v405 = vsel %vm404, %v403, %v402
    %v407 = vmul.f32 %v399, %v405
    %409 = vrot.lane.b32.xlu0 %v407, 111
    %v410 = vpop.permute.xlu0 %409
    %v411 = vrot.slane %v410, 1
    %vm412 = vcmask 908288
    %v413 = vsel %vm412, %v410, %v411
    %s415 = scalar_lea.vmem [#allocation2], 35
    %416 = vst.msk [vmem:[%s415] ss:$8 sm:$0xf] %vm149, %v413
    %417 = vst.msk [vmem:[%s415] ss:$8 sm:$0x0] %vm149, %v413
    %v418 = vld [vmem:[#allocation5 + $0x1] sm:$0x1f]
    %v419 = vcombine.high %v92, %v93
    %v420 = vcombine.high %v94, %v95
    %v422 = vunpack.c.l.s4 1966171168
    %v423 = vunpack.c.0.s8 %v422
    %v424 = vlaneseq
    %v425 = vshrl.u32 %v424, 7
    %v426 = vsub.s32 %v423, %v425
    %v427 = vrot.slane %v419, %v426
    %v429 = vunpack.c.l.s4 1966171168
    %v430 = vunpack.c.0.s8 %v429
    %v431 = vlaneseq
    %v432 = vshrl.u32 %v431, 7
    %v433 = vsub.s32 %v430, %v432
    %v434 = vrot.slane %v420, %v433
    %v435 = vcombine.low %v427, %v434
    %v437 = vunpack.c.l.s4 1966171168
    %v438 = vunpack.c.0.s8 %v437
    %v439 = vlaneseq
    %v440 = vshrl.u32 %v439, 7
    %v441 = vsub.s32 %v438, %v440
    %v442 = vrot.slane %v435, %v441
    %443 = vrot.lane.b32.xlu0 %v442, 32
    %v444 = vpop.permute.xlu0 %443
    %v445 = vrot.slane %v444, 7
    %v446 = vsel %vm252, %v445, %v444
    %v448 = vmul.f32 %v418, %v446
    %450 = vrot.lane.b32.xlu0 %v448, 96
    %v451 = vpop.permute.xlu0 %450
    %v452 = vrot.slane %v451, 1
    %v453 = vsel %vm244, %v451, %v452
    %s455 = scalar_lea.vmem [#allocation2], 36
    %456 = vst.msk [vmem:[%s455] ss:$8 sm:$0xf] %vm149, %v453
    %457 = vst.msk [vmem:[%s455] ss:$8 sm:$0x0] %vm149, %v453
    %v458 = vld [vmem:[#allocation5 + $0x1] sm:$0x1f]
    %v459 = vcombine.high %v427, %v434
    %v461 = vunpack.c.l.s4 1966171168
    %v462 = vunpack.c.0.s8 %v461
    %v463 = vlaneseq
    %v464 = vshrl.u32 %v463, 7
    %v465 = vsub.s32 %v462, %v464
    %v466 = vrot.slane %v459, %v465
    %467 = vrot.lane.b32.xlu0 %v466, 33
    %v468 = vpop.permute.xlu0 %467
    %v469 = vrot.slane %v468, 7
    %vm470 = vcmask 269312
    %v471 = vsel %vm470, %v469, %v468
    %v473 = vmul.f32 %v458, %v471
    %475 = vrot.lane.b32.xlu0 %v473, 95
    %v476 = vpop.permute.xlu0 %475
    %v477 = vrot.slane %v476, 1
    %vm478 = vcmask 777216
    %v479 = vsel %vm478, %v476, %v477
    %s481 = scalar_lea.vmem [#allocation2], 37
    %482 = vst.msk [vmem:[%s481] ss:$8 sm:$0xf] %vm149, %v479
    %483 = vst.msk [vmem:[%s481] ss:$8 sm:$0x0] %vm149, %v479
    %v484 = vld [vmem:[#allocation5 + $0x1] sm:$0x1f]
    %v485 = vcombine.high %v442, %v442
    %486 = vrot.lane.b32.xlu0 %v485, 48
    %v487 = vpop.permute.xlu0 %486
    %v488 = vrot.slane %v487, 7
    %v489 = vsel %vm191, %v488, %v487
    %v491 = vmul.f32 %v484, %v489
    %493 = vrot.lane.b32.xlu0 %v491, 80
    %v494 = vpop.permute.xlu0 %493
    %v495 = vrot.slane %v494, 1
    %v496 = vsel %vm183, %v494, %v495
    %s498 = scalar_lea.vmem [#allocation2], 38
    %499 = vst.msk [vmem:[%s498] ss:$8 sm:$0xf] %vm149, %v496
    %500 = vst.msk [vmem:[%s498] ss:$8 sm:$0x0] %vm149, %v496
    %v501 = vld [vmem:[#allocation5 + $0x1] sm:$0x1f]
    %v502 = vcombine.high %v466, %v466
    %503 = vrot.lane.b32.xlu0 %v502, 49
    %v504 = vpop.permute.xlu0 %503
    %v505 = vrot.slane %v504, 7
    %vm506 = vcmask 400384
    %v507 = vsel %vm506, %v505, %v504
    %v509 = vmul.f32 %v501, %v507
    %511 = vrot.lane.b32.xlu0 %v509, 79
    %v512 = vpop.permute.xlu0 %511
    %v513 = vrot.slane %v512, 1
    %vm514 = vcmask 646144
    %v515 = vsel %vm514, %v512, %v513
    %s517 = scalar_lea.vmem [#allocation2], 39
    %518 = vst.msk [vmem:[%s517] ss:$8 sm:$0xf] %vm149, %v515
    %519 = vst.msk [vmem:[%s517] ss:$8 sm:$0x0] %vm149, %v515
    %v520 = vld [vmem:[#allocation5 + $0x1] sm:$0x1f]
    %v525 = vcombine.low %v96, %v97
    %v526 = vcombine.low %v98, %v99
    %v528 = vunpack.c.l.s4 1966171168
    %v529 = vunpack.c.0.s8 %v528
    %v530 = vlaneseq
    %v531 = vshrl.u32 %v530, 7
    %v532 = vsub.s32 %v529, %v531
    %v533 = vrot.slane %v525, %v532
    %v535 = vunpack.c.l.s4 1966171168
    %v536 = vunpack.c.0.s8 %v535
    %v537 = vlaneseq
    %v538 = vshrl.u32 %v537, 7
    %v539 = vsub.s32 %v536, %v538
    %v540 = vrot.slane %v526, %v539
    %v541 = vcombine.low %v533, %v540
    %v543 = vunpack.c.l.s4 1966171168
    %v544 = vunpack.c.0.s8 %v543
    %v545 = vlaneseq
    %v546 = vshrl.u32 %v545, 7
    %v547 = vsub.s32 %v544, %v546
    %v548 = vrot.slane %v541, %v547
    %549 = vrot.lane.b32.xlu0 %v548, 64
    %v550 = vpop.permute.xlu0 %549
    %v551 = vrot.slane %v550, 7
    %v552 = vsel %vm136, %v551, %v550
    %v554 = vmul.f32 %v520, %v552
    %556 = vrot.lane.b32.xlu0 %v554, 64
    %v557 = vpop.permute.xlu0 %556
    %v558 = vrot.slane %v557, 1
    %v559 = vsel %vm136, %v557, %v558
    %s561 = scalar_lea.vmem [#allocation2], 64
    %562 = vst.msk [vmem:[%s561] ss:$8 sm:$0xf] %vm149, %v559
    %563 = vst.msk [vmem:[%s561] ss:$8 sm:$0x0] %vm149, %v559
    %v564 = vld [vmem:[#allocation5 + $0x1] sm:$0x1f]
    %v565 = vcombine.high %v533, %v540
    %v567 = vunpack.c.l.s4 1966171168
    %v568 = vunpack.c.0.s8 %v567
    %v569 = vlaneseq
    %v570 = vshrl.u32 %v569, 7
    %v571 = vsub.s32 %v568, %v570
    %v572 = vrot.slane %v565, %v571
    %573 = vrot.lane.b32.xlu0 %v572, 65
    %v574 = vpop.permute.xlu0 %573
    %v575 = vrot.slane %v574, 7
    %v576 = vsel %vm164, %v575, %v574
    %v578 = vmul.f32 %v564, %v576
    %580 = vrot.lane.b32.xlu0 %v578, 63
    %v581 = vpop.permute.xlu0 %580
    %v582 = vrot.slane %v581, 1
    %v583 = vsel %vm172, %v581, %v582
    %s585 = scalar_lea.vmem [#allocation2], 65
    %586 = vst.msk [vmem:[%s585] ss:$8 sm:$0xf] %vm149, %v583
    %587 = vst.msk [vmem:[%s585] ss:$8 sm:$0x0] %vm149, %v583
    %v588 = vld [vmem:[#allocation5 + $0x1] sm:$0x1f]
    %v589 = vcombine.high %v548, %v548
    %590 = vrot.lane.b32.xlu0 %v589, 80
    %v591 = vpop.permute.xlu0 %590
    %v592 = vrot.slane %v591, 7
    %v593 = vsel %vm183, %v592, %v591
    %v595 = vmul.f32 %v588, %v593
    %597 = vrot.lane.b32.xlu0 %v595, 48
    %v598 = vpop.permute.xlu0 %597
    %v599 = vrot.slane %v598, 1
    %v600 = vsel %vm191, %v598, %v599
    %s602 = scalar_lea.vmem [#allocation2], 66
    %603 = vst.msk [vmem:[%s602] ss:$8 sm:$0xf] %vm149, %v600
    %604 = vst.msk [vmem:[%s602] ss:$8 sm:$0x0] %vm149, %v600
    %v605 = vld [vmem:[#allocation5 + $0x1] sm:$0x1f]
    %v606 = vcombine.high %v572, %v572
    %607 = vrot.lane.b32.xlu0 %v606, 81
    %v608 = vpop.permute.xlu0 %607
    %v609 = vrot.slane %v608, 7
    %v610 = vsel %vm202, %v609, %v608
    %v612 = vmul.f32 %v605, %v610
    %614 = vrot.lane.b32.xlu0 %v612, 47
    %v615 = vpop.permute.xlu0 %614
    %v616 = vrot.slane %v615, 1
    %v617 = vsel %vm210, %v615, %v616
    %s619 = scalar_lea.vmem [#allocation2], 67
    %620 = vst.msk [vmem:[%s619] ss:$8 sm:$0xf] %vm149, %v617
    %621 = vst.msk [vmem:[%s619] ss:$8 sm:$0x0] %vm149, %v617
    %v622 = vld [vmem:[#allocation8] sm:$0xff]
    %v623 = vld [vmem:[#allocation2] sm:$0xff]
    %v624 = vld [vmem:[#allocation2 + $0x8] sm:$0xff]
    %v625 = vld [vmem:[#allocation2 + $0x10] sm:$0xff]
    %v626 = vld [vmem:[#allocation2 + $0x18] sm:$0xff]
    %v627 = vld [vmem:[#allocation2 + $0x20] sm:$0xff]
    %v628 = vld [vmem:[#allocation2 + $0x28] sm:$0xff]
    %v629 = vld [vmem:[#allocation2 + $0x30] sm:$0xff]
    %v630 = vld [vmem:[#allocation2 + $0x38] sm:$0xff]
    %v631 = vld [vmem:[#allocation2 + $0x40] sm:$0xff]
    %v632 = vld [vmem:[#allocation2 + $0x48] sm:$0xff]
    %v633 = vld [vmem:[#allocation2 + $0x50] sm:$0xff]
    %v634 = vld [vmem:[#allocation2 + $0x58] sm:$0xff]
    %vm635 = vcmask 195584
    %v637 = vsel %vm635, %v622, 0
    %639 = vmatprep.subr.mxu0 0.0
    %640 = vmatpush1.msra.mxu0 0.0
    %641 = vmatprep.subr.mxu0 0.0
    %642 = vmatpush1.msra.mxu0 0.0
    %643 = vmatprep.subr.mxu0 0.0
    %644 = vmatpush1.msra.mxu0 0.0
    %645 = vmatprep.subr.mxu0 0.0
    %646 = vmatpush1.msra.mxu0 0.0
    %647 = vmatprep.subr.mxu0 0.0
    %648 = vmatpush1.msra.mxu0 0.0
    %649 = vmatprep.subr.mxu0 0.0
    %650 = vmatpush1.msra.mxu0 0.0
    %651 = vmatprep.subr.mxu0 0.0
    %652 = vmatpush1.msra.mxu0 0.0
    %653 = vmatprep.subr.mxu0 0.0
    %654 = vmatpush1.msra.mxu0 0.0
    %655 = vmatprep.subr.mxu0 0.0
    %656 = vmatpush1.msra.mxu0 0.0
    %657 = vmatprep.subr.mxu0 0.0
    %658 = vmatpush1.msra.mxu0 0.0
    %659 = vmatprep.subr.mxu0 0.0
    %660 = vmatpush1.msra.mxu0 0.0
    %661 = vmatprep.subr.mxu0 0.0
    %662 = vmatpush1.msra.mxu0 0.0
    %663 = vmatprep.subr.mxu0 0.0
    %664 = vmatpush1.msra.mxu0 0.0
    %v665 = vand.u32 %v632, 4294901760
    %666 = vmatprep.subr.mxu0 %v665
    %v667 = vand.u32 %v631, 4294901760
    %668 = vmatpush1.msra.mxu0 %v667
    %v669 = vand.u32 %v628, 4294901760
    %670 = vmatprep.subr.mxu0 %v669
    %v671 = vand.u32 %v627, 4294901760
    %672 = vmatpush1.msra.mxu0 %v671
    %v673 = vand.u32 %v624, 4294901760
    %674 = vmatprep.subr.mxu0 %v673
    %v675 = vand.u32 %v623, 4294901760
    %676 = vmatpush1.msra.mxu0 %v675
    %677 = vmatprep.subr.mxu0 0.0
    %678 = vmatpush2.msra.mxu0 0.0
    %679 = vmatprep.subr.mxu0 0.0
    %680 = vmatpush2.msra.mxu0 0.0
    %681 = vmatprep.subr.mxu0 0.0
    %682 = vmatpush2.msra.mxu0 0.0
    %683 = vmatprep.subr.mxu0 0.0
    %684 = vmatpush2.msra.mxu0 0.0
    %685 = vmatprep.subr.mxu0 0.0
    %686 = vmatpush2.msra.mxu0 0.0
    %687 = vmatprep.subr.mxu0 0.0
    %688 = vmatpush2.msra.mxu0 0.0
    %689 = vmatprep.subr.mxu0 0.0
    %690 = vmatpush2.msra.mxu0 0.0
    %691 = vmatprep.subr.mxu0 0.0
    %692 = vmatpush2.msra.mxu0 0.0
    %693 = vmatprep.subr.mxu0 0.0
    %694 = vmatpush2.msra.mxu0 0.0
    %695 = vmatprep.subr.mxu0 0.0
    %696 = vmatpush2.msra.mxu0 0.0
    %697 = vmatprep.subr.mxu0 0.0
    %698 = vmatpush2.msra.mxu0 0.0
    %699 = vmatprep.subr.mxu0 0.0
    %700 = vmatpush2.msra.mxu0 0.0
    %701 = vmatprep.subr.mxu0 0.0
    %702 = vmatpush2.msra.mxu0 0.0
    %703 = vmatprep.subr.mxu0 0.0
    %704 = vmatpush2.msra.mxu0 0.0
    %705 = vmatprep.subr.mxu0 0.0
    %706 = vmatpush2.msra.mxu0 0.0
    %707 = vmatprep.subr.mxu0 0.0
    %708 = vmatpush2.msra.mxu0 0.0
    %709 = vmatprep.mubr.f32.mxu0 0.0
    %v710 = vand.u32 %v637, 4294901760
    %v711 = vsub.f32 %v637, %v710
    %v712 = vand.u32 %v711, 4294901760
    %v713 = vsub.f32 %v711, %v712
    %v714 = vand.u32 %v713, 4294901760
    %715 = vmatmul.mubr.f32.gmra.mxu0 %v714
    %v716 = vpop.f32.mrf.mxu0
    %v717 = vadd.f32 0.0, %v716
    %v718 = vpop.f32.mrf.mxu0
    %v719 = vadd.f32 0.0, %v718
    %720 = vdwg.mxu0
    %721 = vmatprep.subr.mxu0 0.0
    %722 = vmatpush1.msra.mxu0 0.0
    %723 = vmatprep.subr.mxu0 0.0
    %724 = vmatpush1.msra.mxu0 0.0
    %725 = vmatprep.subr.mxu0 0.0
    %726 = vmatpush1.msra.mxu0 0.0
    %727 = vmatprep.subr.mxu0 0.0
    %728 = vmatpush1.msra.mxu0 0.0
    %729 = vmatprep.subr.mxu0 0.0
    %730 = vmatpush1.msra.mxu0 0.0
    %731 = vmatprep.subr.mxu0 0.0
    %732 = vmatpush1.msra.mxu0 0.0
    %733 = vmatprep.subr.mxu0 0.0
    %734 = vmatpush1.msra.mxu0 0.0
    %735 = vmatprep.subr.mxu0 0.0
    %736 = vmatpush1.msra.mxu0 0.0
    %737 = vmatprep.subr.mxu0 0.0
    %738 = vmatpush1.msra.mxu0 0.0
    %739 = vmatprep.subr.mxu0 0.0
    %740 = vmatpush1.msra.mxu0 0.0
    %741 = vmatprep.subr.mxu0 0.0
    %742 = vmatpush1.msra.mxu0 0.0
    %743 = vmatprep.subr.mxu0 0.0
    %744 = vmatpush1.msra.mxu0 0.0
    %745 = vmatprep.subr.mxu0 0.0
    %746 = vmatpush1.msra.mxu0 0.0
    %v747 = vand.u32 %v632, 4294901760
    %v748 = vsub.f32 %v632, %v747
    %v749 = vand.u32 %v748, 4294901760
    %v750 = vsub.f32 %v748, %v749
    %v751 = vand.u32 %v750, 4294901760
    %752 = vmatprep.subr.mxu0 %v751
    %v753 = vand.u32 %v631, 4294901760
    %v754 = vsub.f32 %v631, %v753
    %v755 = vand.u32 %v754, 4294901760
    %v756 = vsub.f32 %v754, %v755
    %v757 = vand.u32 %v756, 4294901760
    %758 = vmatpush1.msra.mxu0 %v757
    %v759 = vand.u32 %v628, 4294901760
    %v760 = vsub.f32 %v628, %v759
    %v761 = vand.u32 %v760, 4294901760
    %v762 = vsub.f32 %v760, %v761
    %v763 = vand.u32 %v762, 4294901760
    %764 = vmatprep.subr.mxu0 %v763
    %v765 = vand.u32 %v627, 4294901760
    %v766 = vsub.f32 %v627, %v765
    %v767 = vand.u32 %v766, 4294901760
    %v768 = vsub.f32 %v766, %v767
    %v769 = vand.u32 %v768, 4294901760
    %770 = vmatpush1.msra.mxu0 %v769
    %v771 = vand.u32 %v624, 4294901760
    %v772 = vsub.f32 %v624, %v771
    %v773 = vand.u32 %v772, 4294901760
    %v774 = vsub.f32 %v772, %v773
    %v775 = vand.u32 %v774, 4294901760
    %776 = vmatprep.subr.mxu0 %v775
    %v777 = vand.u32 %v623, 4294901760
    %v778 = vsub.f32 %v623, %v777
    %v779 = vand.u32 %v778, 4294901760
    %v780 = vsub.f32 %v778, %v779
    %v781 = vand.u32 %v780, 4294901760
    %782 = vmatpush1.msra.mxu0 %v781
    %783 = vmatprep.subr.mxu0 0.0
    %784 = vmatpush2.msra.mxu0 0.0
    %785 = vmatprep.subr.mxu0 0.0
    %786 = vmatpush2.msra.mxu0 0.0
    %787 = vmatprep.subr.mxu0 0.0
    %788 = vmatpush2.msra.mxu0 0.0
    %789 = vmatprep.subr.mxu0 0.0
    %790 = vmatpush2.msra.mxu0 0.0
    %791 = vmatprep.subr.mxu0 0.0
    %792 = vmatpush2.msra.mxu0 0.0
    %793 = vmatprep.subr.mxu0 0.0
    %794 = vmatpush2.msra.mxu0 0.0
    %795 = vmatprep.subr.mxu0 0.0
    %796 = vmatpush2.msra.mxu0 0.0
    %797 = vmatprep.subr.mxu0 0.0
    %798 = vmatpush2.msra.mxu0 0.0
    %799 = vmatprep.subr.mxu0 0.0
    %800 = vmatpush2.msra.mxu0 0.0
    %801 = vmatprep.subr.mxu0 0.0
    %802 = vmatpush2.msra.mxu0 0.0
    %803 = vmatprep.subr.mxu0 0.0
    %804 = vmatpush2.msra.mxu0 0.0
    %805 = vmatprep.subr.mxu0 0.0
    %806 = vmatpush2.msra.mxu0 0.0
    %807 = vmatprep.subr.mxu0 0.0
    %808 = vmatpush2.msra.mxu0 0.0
    %809 = vmatprep.subr.mxu0 0.0
    %810 = vmatpush2.msra.mxu0 0.0
    %811 = vmatprep.subr.mxu0 0.0
    %812 = vmatpush2.msra.mxu0 0.0
    %813 = vmatprep.subr.mxu0 0.0
    %814 = vmatpush2.msra.mxu0 0.0
    %815 = vmatprep.mubr.f32.mxu0 0.0
    %v816 = vand.u32 %v637, 4294901760
    %817 = vmatmul.mubr.f32.gmra.mxu0 %v816
    %v818 = vpop.f32.mrf.mxu0
    %v819 = vadd.f32 %v717, %v818
    %v820 = vpop.f32.mrf.mxu0
    %v821 = vadd.f32 %v719, %v820
    %822 = vdwg.mxu0
    %823 = vmatprep.subr.mxu0 0.0
    %824 = vmatpush1.msra.mxu0 0.0
    %825 = vmatprep.subr.mxu0 0.0
    %826 = vmatpush1.msra.mxu0 0.0
    %827 = vmatprep.subr.mxu0 0.0
    %828 = vmatpush1.msra.mxu0 0.0
    %829 = vmatprep.subr.mxu0 0.0
    %830 = vmatpush1.msra.mxu0 0.0
    %831 = vmatprep.subr.mxu0 0.0
    %832 = vmatpush1.msra.mxu0 0.0
    %833 = vmatprep.subr.mxu0 0.0
    %834 = vmatpush1.msra.mxu0 0.0
    %835 = vmatprep.subr.mxu0 0.0
    %836 = vmatpush1.msra.mxu0 0.0
    %837 = vmatprep.subr.mxu0 0.0
    %838 = vmatpush1.msra.mxu0 0.0
    %839 = vmatprep.subr.mxu0 0.0
    %840 = vmatpush1.msra.mxu0 0.0
    %841 = vmatprep.subr.mxu0 0.0
    %842 = vmatpush1.msra.mxu0 0.0
    %843 = vmatprep.subr.mxu0 0.0
    %844 = vmatpush1.msra.mxu0 0.0
    %845 = vmatprep.subr.mxu0 0.0
    %846 = vmatpush1.msra.mxu0 0.0
    %847 = vmatprep.subr.mxu0 0.0
    %848 = vmatpush1.msra.mxu0 0.0
    %v849 = vand.u32 %v632, 4294901760
    %v850 = vsub.f32 %v632, %v849
    %851 = vmatprep.subr.mxu0 %v850
    %v852 = vand.u32 %v631, 4294901760
    %v853 = vsub.f32 %v631, %v852
    %854 = vmatpush1.msra.mxu0 %v853
    %v855 = vand.u32 %v628, 4294901760
    %v856 = vsub.f32 %v628, %v855
    %857 = vmatprep.subr.mxu0 %v856
    %v858 = vand.u32 %v627, 4294901760
    %v859 = vsub.f32 %v627, %v858
    %860 = vmatpush1.msra.mxu0 %v859
    %v861 = vand.u32 %v624, 4294901760
    %v862 = vsub.f32 %v624, %v861
    %863 = vmatprep.subr.mxu0 %v862
    %v864 = vand.u32 %v623, 4294901760
    %v865 = vsub.f32 %v623, %v864
    %866 = vmatpush1.msra.mxu0 %v865
    %867 = vmatprep.subr.mxu0 0.0
    %868 = vmatpush2.msra.mxu0 0.0
    %869 = vmatprep.subr.mxu0 0.0
    %870 = vmatpush2.msra.mxu0 0.0
    %871 = vmatprep.subr.mxu0 0.0
    %872 = vmatpush2.msra.mxu0 0.0
    %873 = vmatprep.subr.mxu0 0.0
    %874 = vmatpush2.msra.mxu0 0.0
    %875 = vmatprep.subr.mxu0 0.0
    %876 = vmatpush2.msra.mxu0 0.0
    %877 = vmatprep.subr.mxu0 0.0
    %878 = vmatpush2.msra.mxu0 0.0
    %879 = vmatprep.subr.mxu0 0.0
    %880 = vmatpush2.msra.mxu0 0.0
    %881 = vmatprep.subr.mxu0 0.0
    %882 = vmatpush2.msra.mxu0 0.0
    %883 = vmatprep.subr.mxu0 0.0
    %884 = vmatpush2.msra.mxu0 0.0
    %885 = vmatprep.subr.mxu0 0.0
    %886 = vmatpush2.msra.mxu0 0.0
    %887 = vmatprep.subr.mxu0 0.0
    %888 = vmatpush2.msra.mxu0 0.0
    %889 = vmatprep.subr.mxu0 0.0
    %890 = vmatpush2.msra.mxu0 0.0
    %891 = vmatprep.subr.mxu0 0.0
    %892 = vmatpush2.msra.mxu0 0.0
    %893 = vmatprep.subr.mxu0 0.0
    %894 = vmatpush2.msra.mxu0 0.0
    %895 = vmatprep.subr.mxu0 0.0
    %896 = vmatpush2.msra.mxu0 0.0
    %897 = vmatprep.subr.mxu0 0.0
    %898 = vmatpush2.msra.mxu0 0.0
    %899 = vmatprep.mubr.f32.mxu0 0.0
    %v900 = vand.u32 %v637, 4294901760
    %v901 = vsub.f32 %v637, %v900
    %902 = vmatmul.mubr.f32.gmra.mxu0 %v901
    %v903 = vpop.f32.mrf.mxu0
    %v904 = vadd.f32 %v819, %v903
    %v905 = vpop.f32.mrf.mxu0
    %v906 = vadd.f32 %v821, %v905
    %907 = vdwg.mxu0
    %908 = vmatprep.subr.mxu0 0.0
    %909 = vmatpush1.msra.mxu0 0.0
    %910 = vmatprep.subr.mxu0 0.0
    %911 = vmatpush1.msra.mxu0 0.0
    %912 = vmatprep.subr.mxu0 0.0
    %913 = vmatpush1.msra.mxu0 0.0
    %914 = vmatprep.subr.mxu0 0.0
    %915 = vmatpush1.msra.mxu0 0.0
    %916 = vmatprep.subr.mxu0 0.0
    %917 = vmatpush1.msra.mxu0 0.0
    %918 = vmatprep.subr.mxu0 0.0
    %919 = vmatpush1.msra.mxu0 0.0
    %920 = vmatprep.subr.mxu0 0.0
    %921 = vmatpush1.msra.mxu0 0.0
    %922 = vmatprep.subr.mxu0 0.0
    %923 = vmatpush1.msra.mxu0 0.0
    %924 = vmatprep.subr.mxu0 0.0
    %925 = vmatpush1.msra.mxu0 0.0
    %926 = vmatprep.subr.mxu0 0.0
    %927 = vmatpush1.msra.mxu0 0.0
    %928 = vmatprep.subr.mxu0 0.0
    %929 = vmatpush1.msra.mxu0 0.0
    %930 = vmatprep.subr.mxu0 0.0
    %931 = vmatpush1.msra.mxu0 0.0
    %932 = vmatprep.subr.mxu0 0.0
    %933 = vmatpush1.msra.mxu0 0.0
    %v934 = vand.u32 %v632, 4294901760
    %935 = vmatprep.subr.mxu0 %v934
    %v936 = vand.u32 %v631, 4294901760
    %937 = vmatpush1.msra.mxu0 %v936
    %v938 = vand.u32 %v628, 4294901760
    %939 = vmatprep.subr.mxu0 %v938
    %v940 = vand.u32 %v627, 4294901760
    %941 = vmatpush1.msra.mxu0 %v940
    %v942 = vand.u32 %v624, 4294901760
    %943 = vmatprep.subr.mxu0 %v942
    %v944 = vand.u32 %v623, 4294901760
    %945 = vmatpush1.msra.mxu0 %v944
    %946 = vmatprep.subr.mxu0 0.0
    %947 = vmatpush2.msra.mxu0 0.0
    %948 = vmatprep.subr.mxu0 0.0
    %949 = vmatpush2.msra.mxu0 0.0
    %950 = vmatprep.subr.mxu0 0.0
    %951 = vmatpush2.msra.mxu0 0.0
    %952 = vmatprep.subr.mxu0 0.0
    %953 = vmatpush2.msra.mxu0 0.0
    %954 = vmatprep.subr.mxu0 0.0
    %955 = vmatpush2.msra.mxu0 0.0
    %956 = vmatprep.subr.mxu0 0.0
    %957 = vmatpush2.msra.mxu0 0.0
    %958 = vmatprep.subr.mxu0 0.0
    %959 = vmatpush2.msra.mxu0 0.0
    %960 = vmatprep.subr.mxu0 0.0
    %961 = vmatpush2.msra.mxu0 0.0
    %962 = vmatprep.subr.mxu0 0.0
    %963 = vmatpush2.msra.mxu0 0.0
    %964 = vmatprep.subr.mxu0 0.0
    %965 = vmatpush2.msra.mxu0 0.0
    %966 = vmatprep.subr.mxu0 0.0
    %967 = vmatpush2.msra.mxu0 0.0
    %968 = vmatprep.subr.mxu0 0.0
    %969 = vmatpush2.msra.mxu0 0.0
    %970 = vmatprep.subr.mxu0 0.0
    %971 = vmatpush2.msra.mxu0 0.0
    %972 = vmatprep.subr.mxu0 0.0
    %973 = vmatpush2.msra.mxu0 0.0
    %974 = vmatprep.subr.mxu0 0.0
    %975 = vmatpush2.msra.mxu0 0.0
    %976 = vmatprep.subr.mxu0 0.0
    %977 = vmatpush2.msra.mxu0 0.0
    %978 = vmatprep.mubr.f32.mxu0 0.0
    %v979 = vand.u32 %v637, 4294901760
    %v980 = vsub.f32 %v637, %v979
    %v981 = vand.u32 %v980, 4294901760
    %982 = vmatmul.mubr.f32.gmra.mxu0 %v981
    %v983 = vpop.f32.mrf.mxu0
    %v984 = vadd.f32 %v904, %v983
    %v985 = vpop.f32.mrf.mxu0
    %v986 = vadd.f32 %v906, %v985
    %987 = vdwg.mxu0
    %988 = vmatprep.subr.mxu0 0.0
    %989 = vmatpush1.msra.mxu0 0.0
    %990 = vmatprep.subr.mxu0 0.0
    %991 = vmatpush1.msra.mxu0 0.0
    %992 = vmatprep.subr.mxu0 0.0
    %993 = vmatpush1.msra.mxu0 0.0
    %994 = vmatprep.subr.mxu0 0.0
    %995 = vmatpush1.msra.mxu0 0.0
    %996 = vmatprep.subr.mxu0 0.0
    %997 = vmatpush1.msra.mxu0 0.0
    %998 = vmatprep.subr.mxu0 0.0
    %999 = vmatpush1.msra.mxu0 0.0
    %1000 = vmatprep.subr.mxu0 0.0
    %1001 = vmatpush1.msra.mxu0 0.0
    %1002 = vmatprep.subr.mxu0 0.0
    %1003 = vmatpush1.msra.mxu0 0.0
    %1004 = vmatprep.subr.mxu0 0.0
    %1005 = vmatpush1.msra.mxu0 0.0
    %1006 = vmatprep.subr.mxu0 0.0
    %1007 = vmatpush1.msra.mxu0 0.0
    %1008 = vmatprep.subr.mxu0 0.0
    %1009 = vmatpush1.msra.mxu0 0.0
    %1010 = vmatprep.subr.mxu0 0.0
    %1011 = vmatpush1.msra.mxu0 0.0
    %1012 = vmatprep.subr.mxu0 0.0
    %1013 = vmatpush1.msra.mxu0 0.0
    %v1014 = vand.u32 %v632, 4294901760
    %v1015 = vsub.f32 %v632, %v1014
    %v1016 = vand.u32 %v1015, 4294901760
    %1017 = vmatprep.subr.mxu0 %v1016
    %v1018 = vand.u32 %v631, 4294901760
    %v1019 = vsub.f32 %v631, %v1018
    %v1020 = vand.u32 %v1019, 4294901760
    %1021 = vmatpush1.msra.mxu0 %v1020
    %v1022 = vand.u32 %v628, 4294901760
    %v1023 = vsub.f32 %v628, %v1022
    %v1024 = vand.u32 %v1023, 4294901760
    %1025 = vmatprep.subr.mxu0 %v1024
    %v1026 = vand.u32 %v627, 4294901760
    %v1027 = vsub.f32 %v627, %v1026
    %v1028 = vand.u32 %v1027, 4294901760
    %1029 = vmatpush1.msra.mxu0 %v1028
    %v1030 = vand.u32 %v624, 4294901760
    %v1031 = vsub.f32 %v624, %v1030
    %v1032 = vand.u32 %v1031, 4294901760
    %1033 = vmatprep.subr.mxu0 %v1032
    %v1034 = vand.u32 %v623, 4294901760
    %v1035 = vsub.f32 %v623, %v1034
    %v1036 = vand.u32 %v1035, 4294901760
    %1037 = vmatpush1.msra.mxu0 %v1036
    %1038 = vmatprep.subr.mxu0 0.0
    %1039 = vmatpush2.msra.mxu0 0.0
    %1040 = vmatprep.subr.mxu0 0.0
    %1041 = vmatpush2.msra.mxu0 0.0
    %1042 = vmatprep.subr.mxu0 0.0
    %1043 = vmatpush2.msra.mxu0 0.0
    %1044 = vmatprep.subr.mxu0 0.0
    %1045 = vmatpush2.msra.mxu0 0.0
    %1046 = vmatprep.subr.mxu0 0.0
    %1047 = vmatpush2.msra.mxu0 0.0
    %1048 = vmatprep.subr.mxu0 0.0
    %1049 = vmatpush2.msra.mxu0 0.0
    %1050 = vmatprep.subr.mxu0 0.0
    %1051 = vmatpush2.msra.mxu0 0.0
    %1052 = vmatprep.subr.mxu0 0.0
    %1053 = vmatpush2.msra.mxu0 0.0
    %1054 = vmatprep.subr.mxu0 0.0
    %1055 = vmatpush2.msra.mxu0 0.0
    %1056 = vmatprep.subr.mxu0 0.0
    %1057 = vmatpush2.msra.mxu0 0.0
    %1058 = vmatprep.subr.mxu0 0.0
    %1059 = vmatpush2.msra.mxu0 0.0
    %1060 = vmatprep.subr.mxu0 0.0
    %1061 = vmatpush2.msra.mxu0 0.0
    %1062 = vmatprep.subr.mxu0 0.0
    %1063 = vmatpush2.msra.mxu0 0.0
    %1064 = vmatprep.subr.mxu0 0.0
    %1065 = vmatpush2.msra.mxu0 0.0
    %1066 = vmatprep.subr.mxu0 0.0
    %1067 = vmatpush2.msra.mxu0 0.0
    %1068 = vmatprep.subr.mxu0 0.0
    %1069 = vmatpush2.msra.mxu0 0.0
    %1070 = vmatprep.mubr.f32.mxu0 0.0
    %v1071 = vand.u32 %v637, 4294901760
    %1072 = vmatmul.mubr.f32.gmra.mxu0 %v1071
    %v1073 = vpop.f32.mrf.mxu0
    %v1074 = vadd.f32 %v984, %v1073
    %v1075 = vpop.f32.mrf.mxu0
    %v1076 = vadd.f32 %v986, %v1075
    %1077 = vdwg.mxu0
    %1078 = vmatprep.subr.mxu0 0.0
    %1079 = vmatpush1.msra.mxu0 0.0
    %1080 = vmatprep.subr.mxu0 0.0
    %1081 = vmatpush1.msra.mxu0 0.0
    %1082 = vmatprep.subr.mxu0 0.0
    %1083 = vmatpush1.msra.mxu0 0.0
    %1084 = vmatprep.subr.mxu0 0.0
    %1085 = vmatpush1.msra.mxu0 0.0
    %1086 = vmatprep.subr.mxu0 0.0
    %1087 = vmatpush1.msra.mxu0 0.0
    %1088 = vmatprep.subr.mxu0 0.0
    %1089 = vmatpush1.msra.mxu0 0.0
    %1090 = vmatprep.subr.mxu0 0.0
    %1091 = vmatpush1.msra.mxu0 0.0
    %1092 = vmatprep.subr.mxu0 0.0
    %1093 = vmatpush1.msra.mxu0 0.0
    %1094 = vmatprep.subr.mxu0 0.0
    %1095 = vmatpush1.msra.mxu0 0.0
    %1096 = vmatprep.subr.mxu0 0.0
    %1097 = vmatpush1.msra.mxu0 0.0
    %1098 = vmatprep.subr.mxu0 0.0
    %1099 = vmatpush1.msra.mxu0 0.0
    %1100 = vmatprep.subr.mxu0 0.0
    %1101 = vmatpush1.msra.mxu0 0.0
    %1102 = vmatprep.subr.mxu0 0.0
    %1103 = vmatpush1.msra.mxu0 0.0
    %v1104 = vand.u32 %v632, 4294901760
    %1105 = vmatprep.subr.mxu0 %v1104
    %v1106 = vand.u32 %v631, 4294901760
    %1107 = vmatpush1.msra.mxu0 %v1106
    %v1108 = vand.u32 %v628, 4294901760
    %1109 = vmatprep.subr.mxu0 %v1108
    %v1110 = vand.u32 %v627, 4294901760
    %1111 = vmatpush1.msra.mxu0 %v1110
    %v1112 = vand.u32 %v624, 4294901760
    %1113 = vmatprep.subr.mxu0 %v1112
    %v1114 = vand.u32 %v623, 4294901760
    %1115 = vmatpush1.msra.mxu0 %v1114
    %1116 = vmatprep.subr.mxu0 0.0
    %1117 = vmatpush2.msra.mxu0 0.0
    %1118 = vmatprep.subr.mxu0 0.0
    %1119 = vmatpush2.msra.mxu0 0.0
    %1120 = vmatprep.subr.mxu0 0.0
    %1121 = vmatpush2.msra.mxu0 0.0
    %1122 = vmatprep.subr.mxu0 0.0
    %1123 = vmatpush2.msra.mxu0 0.0
    %1124 = vmatprep.subr.mxu0 0.0
    %1125 = vmatpush2.msra.mxu0 0.0
    %1126 = vmatprep.subr.mxu0 0.0
    %1127 = vmatpush2.msra.mxu0 0.0
    %1128 = vmatprep.subr.mxu0 0.0
    %1129 = vmatpush2.msra.mxu0 0.0
    %1130 = vmatprep.subr.mxu0 0.0
    %1131 = vmatpush2.msra.mxu0 0.0
    %1132 = vmatprep.subr.mxu0 0.0
    %1133 = vmatpush2.msra.mxu0 0.0
    %1134 = vmatprep.subr.mxu0 0.0
    %1135 = vmatpush2.msra.mxu0 0.0
    %1136 = vmatprep.subr.mxu0 0.0
    %1137 = vmatpush2.msra.mxu0 0.0
    %1138 = vmatprep.subr.mxu0 0.0
    %1139 = vmatpush2.msra.mxu0 0.0
    %1140 = vmatprep.subr.mxu0 0.0
    %1141 = vmatpush2.msra.mxu0 0.0
    %1142 = vmatprep.subr.mxu0 0.0
    %1143 = vmatpush2.msra.mxu0 0.0
    %1144 = vmatprep.subr.mxu0 0.0
    %1145 = vmatpush2.msra.mxu0 0.0
    %1146 = vmatprep.subr.mxu0 0.0
    %1147 = vmatpush2.msra.mxu0 0.0
    %1148 = vmatprep.mubr.f32.mxu0 0.0
    %v1149 = vand.u32 %v637, 4294901760
    %1150 = vmatmul.mubr.f32.gmra.mxu0 %v1149
    %v1151 = vpop.f32.mrf.mxu0
    %v1152 = vadd.f32 %v1074, %v1151
    %v1153 = vpop.f32.mrf.mxu0
    %v1154 = vadd.f32 %v1076, %v1153
    %1155 = vdwg.mxu0
    %1156 = vmatprep.subr.mxu0 0.0
    %1157 = vmatpush1.msra.mxu0 0.0
    %1158 = vmatprep.subr.mxu0 0.0
    %1159 = vmatpush1.msra.mxu0 0.0
    %1160 = vmatprep.subr.mxu0 0.0
    %1161 = vmatpush1.msra.mxu0 0.0
    %1162 = vmatprep.subr.mxu0 0.0
    %1163 = vmatpush1.msra.mxu0 0.0
    %1164 = vmatprep.subr.mxu0 0.0
    %1165 = vmatpush1.msra.mxu0 0.0
    %1166 = vmatprep.subr.mxu0 0.0
    %1167 = vmatpush1.msra.mxu0 0.0
    %1168 = vmatprep.subr.mxu0 0.0
    %1169 = vmatpush1.msra.mxu0 0.0
    %1170 = vmatprep.subr.mxu0 0.0
    %1171 = vmatpush1.msra.mxu0 0.0
    %1172 = vmatprep.subr.mxu0 0.0
    %1173 = vmatpush1.msra.mxu0 0.0
    %1174 = vmatprep.subr.mxu0 0.0
    %1175 = vmatpush1.msra.mxu0 0.0
    %1176 = vmatprep.subr.mxu0 0.0
    %1177 = vmatpush1.msra.mxu0 0.0
    %1178 = vmatprep.subr.mxu0 0.0
    %1179 = vmatpush1.msra.mxu0 0.0
    %1180 = vmatprep.subr.mxu0 0.0
    %1181 = vmatpush1.msra.mxu0 0.0
    %v1182 = vand.u32 %v634, 4294901760
    %1183 = vmatprep.subr.mxu0 %v1182
    %v1184 = vand.u32 %v633, 4294901760
    %1185 = vmatpush1.msra.mxu0 %v1184
    %v1186 = vand.u32 %v630, 4294901760
    %1187 = vmatprep.subr.mxu0 %v1186
    %v1188 = vand.u32 %v629, 4294901760
    %1189 = vmatpush1.msra.mxu0 %v1188
    %v1190 = vand.u32 %v626, 4294901760
    %1191 = vmatprep.subr.mxu0 %v1190
    %v1192 = vand.u32 %v625, 4294901760
    %1193 = vmatpush1.msra.mxu0 %v1192
    %1194 = vmatprep.subr.mxu0 0.0
    %1195 = vmatpush2.msra.mxu0 0.0
    %1196 = vmatprep.subr.mxu0 0.0
    %1197 = vmatpush2.msra.mxu0 0.0
    %1198 = vmatprep.subr.mxu0 0.0
    %1199 = vmatpush2.msra.mxu0 0.0
    %1200 = vmatprep.subr.mxu0 0.0
    %1201 = vmatpush2.msra.mxu0 0.0
    %1202 = vmatprep.subr.mxu0 0.0
    %1203 = vmatpush2.msra.mxu0 0.0
    %1204 = vmatprep.subr.mxu0 0.0
    %1205 = vmatpush2.msra.mxu0 0.0
    %1206 = vmatprep.subr.mxu0 0.0
    %1207 = vmatpush2.msra.mxu0 0.0
    %1208 = vmatprep.subr.mxu0 0.0
    %1209 = vmatpush2.msra.mxu0 0.0
    %1210 = vmatprep.subr.mxu0 0.0
    %1211 = vmatpush2.msra.mxu0 0.0
    %1212 = vmatprep.subr.mxu0 0.0
    %1213 = vmatpush2.msra.mxu0 0.0
    %1214 = vmatprep.subr.mxu0 0.0
    %1215 = vmatpush2.msra.mxu0 0.0
    %1216 = vmatprep.subr.mxu0 0.0
    %1217 = vmatpush2.msra.mxu0 0.0
    %1218 = vmatprep.subr.mxu0 0.0
    %1219 = vmatpush2.msra.mxu0 0.0
    %1220 = vmatprep.subr.mxu0 0.0
    %1221 = vmatpush2.msra.mxu0 0.0
    %1222 = vmatprep.subr.mxu0 0.0
    %1223 = vmatpush2.msra.mxu0 0.0
    %1224 = vmatprep.subr.mxu0 0.0
    %1225 = vmatpush2.msra.mxu0 0.0
    %1226 = vmatprep.mubr.f32.mxu0 0.0
    %v1227 = vand.u32 %v637, 4294901760
    %v1228 = vsub.f32 %v637, %v1227
    %v1229 = vand.u32 %v1228, 4294901760
    %v1230 = vsub.f32 %v1228, %v1229
    %v1231 = vand.u32 %v1230, 4294901760
    %1232 = vmatmul.mubr.f32.gmra.mxu0 %v1231
    %v1233 = vpop.f32.mrf.mxu0
    %v1234 = vadd.f32 0.0, %v1233
    %v1235 = vpop.f32.mrf.mxu0
    %v1236 = vadd.f32 0.0, %v1235
    %1237 = vdwg.mxu0
    %1238 = vmatprep.subr.mxu0 0.0
    %1239 = vmatpush1.msra.mxu0 0.0
    %1240 = vmatprep.subr.mxu0 0.0
    %1241 = vmatpush1.msra.mxu0 0.0
    %1242 = vmatprep.subr.mxu0 0.0
    %1243 = vmatpush1.msra.mxu0 0.0
    %1244 = vmatprep.subr.mxu0 0.0
    %1245 = vmatpush1.msra.mxu0 0.0
    %1246 = vmatprep.subr.mxu0 0.0
    %1247 = vmatpush1.msra.mxu0 0.0
    %1248 = vmatprep.subr.mxu0 0.0
    %1249 = vmatpush1.msra.mxu0 0.0
    %1250 = vmatprep.subr.mxu0 0.0
    %1251 = vmatpush1.msra.mxu0 0.0
    %1252 = vmatprep.subr.mxu0 0.0
    %1253 = vmatpush1.msra.mxu0 0.0
    %1254 = vmatprep.subr.mxu0 0.0
    %1255 = vmatpush1.msra.mxu0 0.0
    %1256 = vmatprep.subr.mxu0 0.0
    %1257 = vmatpush1.msra.mxu0 0.0
    %1258 = vmatprep.subr.mxu0 0.0
    %1259 = vmatpush1.msra.mxu0 0.0
    %1260 = vmatprep.subr.mxu0 0.0
    %1261 = vmatpush1.msra.mxu0 0.0
    %1262 = vmatprep.subr.mxu0 0.0
    %1263 = vmatpush1.msra.mxu0 0.0
    %v1264 = vand.u32 %v634, 4294901760
    %v1265 = vsub.f32 %v634, %v1264
    %v1266 = vand.u32 %v1265, 4294901760
    %v1267 = vsub.f32 %v1265, %v1266
    %v1268 = vand.u32 %v1267, 4294901760
    %1269 = vmatprep.subr.mxu0 %v1268
    %v1270 = vand.u32 %v633, 4294901760
    %v1271 = vsub.f32 %v633, %v1270
    %v1272 = vand.u32 %v1271, 4294901760
    %v1273 = vsub.f32 %v1271, %v1272
    %v1274 = vand.u32 %v1273, 4294901760
    %1275 = vmatpush1.msra.mxu0 %v1274
    %v1276 = vand.u32 %v630, 4294901760
    %v1277 = vsub.f32 %v630, %v1276
    %v1278 = vand.u32 %v1277, 4294901760
    %v1279 = vsub.f32 %v1277, %v1278
    %v1280 = vand.u32 %v1279, 4294901760
    %1281 = vmatprep.subr.mxu0 %v1280
    %v1282 = vand.u32 %v629, 4294901760
    %v1283 = vsub.f32 %v629, %v1282
    %v1284 = vand.u32 %v1283, 4294901760
    %v1285 = vsub.f32 %v1283, %v1284
    %v1286 = vand.u32 %v1285, 4294901760
    %1287 = vmatpush1.msra.mxu0 %v1286
    %v1288 = vand.u32 %v626, 4294901760
    %v1289 = vsub.f32 %v626, %v1288
    %v1290 = vand.u32 %v1289, 4294901760
    %v1291 = vsub.f32 %v1289, %v1290
    %v1292 = vand.u32 %v1291, 4294901760
    %1293 = vmatprep.subr.mxu0 %v1292
    %v1294 = vand.u32 %v625, 4294901760
    %v1295 = vsub.f32 %v625, %v1294
    %v1296 = vand.u32 %v1295, 4294901760
    %v1297 = vsub.f32 %v1295, %v1296
    %v1298 = vand.u32 %v1297, 4294901760
    %1299 = vmatpush1.msra.mxu0 %v1298
    %1300 = vmatprep.subr.mxu0 0.0
    %1301 = vmatpush2.msra.mxu0 0.0
    %1302 = vmatprep.subr.mxu0 0.0
    %1303 = vmatpush2.msra.mxu0 0.0
    %1304 = vmatprep.subr.mxu0 0.0
    %1305 = vmatpush2.msra.mxu0 0.0
    %1306 = vmatprep.subr.mxu0 0.0
    %1307 = vmatpush2.msra.mxu0 0.0
    %1308 = vmatprep.subr.mxu0 0.0
    %1309 = vmatpush2.msra.mxu0 0.0
    %1310 = vmatprep.subr.mxu0 0.0
    %1311 = vmatpush2.msra.mxu0 0.0
    %1312 = vmatprep.subr.mxu0 0.0
    %1313 = vmatpush2.msra.mxu0 0.0
    %1314 = vmatprep.subr.mxu0 0.0
    %1315 = vmatpush2.msra.mxu0 0.0
    %1316 = vmatprep.subr.mxu0 0.0
    %1317 = vmatpush2.msra.mxu0 0.0
    %1318 = vmatprep.subr.mxu0 0.0
    %1319 = vmatpush2.msra.mxu0 0.0
    %1320 = vmatprep.subr.mxu0 0.0
    %1321 = vmatpush2.msra.mxu0 0.0
    %1322 = vmatprep.subr.mxu0 0.0
    %1323 = vmatpush2.msra.mxu0 0.0
    %1324 = vmatprep.subr.mxu0 0.0
    %1325 = vmatpush2.msra.mxu0 0.0
    %1326 = vmatprep.subr.mxu0 0.0
    %1327 = vmatpush2.msra.mxu0 0.0
    %1328 = vmatprep.subr.mxu0 0.0
    %1329 = vmatpush2.msra.mxu0 0.0
    %1330 = vmatprep.subr.mxu0 0.0
    %1331 = vmatpush2.msra.mxu0 0.0
    %1332 = vmatprep.mubr.f32.mxu0 0.0
    %v1333 = vand.u32 %v637, 4294901760
    %1334 = vmatmul.mubr.f32.gmra.mxu0 %v1333
    %v1335 = vpop.f32.mrf.mxu0
    %v1336 = vadd.f32 %v1234, %v1335
    %v1337 = vpop.f32.mrf.mxu0
    %v1338 = vadd.f32 %v1236, %v1337
    %1339 = vdwg.mxu0
    %1340 = vmatprep.subr.mxu0 0.0
    %1341 = vmatpush1.msra.mxu0 0.0
    %1342 = vmatprep.subr.mxu0 0.0
    %1343 = vmatpush1.msra.mxu0 0.0
    %1344 = vmatprep.subr.mxu0 0.0
    %1345 = vmatpush1.msra.mxu0 0.0
    %1346 = vmatprep.subr.mxu0 0.0
    %1347 = vmatpush1.msra.mxu0 0.0
    %1348 = vmatprep.subr.mxu0 0.0
    %1349 = vmatpush1.msra.mxu0 0.0
    %1350 = vmatprep.subr.mxu0 0.0
    %1351 = vmatpush1.msra.mxu0 0.0
    %1352 = vmatprep.subr.mxu0 0.0
    %1353 = vmatpush1.msra.mxu0 0.0
    %1354 = vmatprep.subr.mxu0 0.0
    %1355 = vmatpush1.msra.mxu0 0.0
    %1356 = vmatprep.subr.mxu0 0.0
    %1357 = vmatpush1.msra.mxu0 0.0
    %1358 = vmatprep.subr.mxu0 0.0
    %1359 = vmatpush1.msra.mxu0 0.0
    %1360 = vmatprep.subr.mxu0 0.0
    %1361 = vmatpush1.msra.mxu0 0.0
    %1362 = vmatprep.subr.mxu0 0.0
    %1363 = vmatpush1.msra.mxu0 0.0
    %1364 = vmatprep.subr.mxu0 0.0
    %1365 = vmatpush1.msra.mxu0 0.0
    %v1366 = vand.u32 %v634, 4294901760
    %v1367 = vsub.f32 %v634, %v1366
    %1368 = vmatprep.subr.mxu0 %v1367
    %v1369 = vand.u32 %v633, 4294901760
    %v1370 = vsub.f32 %v633, %v1369
    %1371 = vmatpush1.msra.mxu0 %v1370
    %v1372 = vand.u32 %v630, 4294901760
    %v1373 = vsub.f32 %v630, %v1372
    %1374 = vmatprep.subr.mxu0 %v1373
    %v1375 = vand.u32 %v629, 4294901760
    %v1376 = vsub.f32 %v629, %v1375
    %1377 = vmatpush1.msra.mxu0 %v1376
    %v1378 = vand.u32 %v626, 4294901760
    %v1379 = vsub.f32 %v626, %v1378
    %1380 = vmatprep.subr.mxu0 %v1379
    %v1381 = vand.u32 %v625, 4294901760
    %v1382 = vsub.f32 %v625, %v1381
    %1383 = vmatpush1.msra.mxu0 %v1382
    %1384 = vmatprep.subr.mxu0 0.0
    %1385 = vmatpush2.msra.mxu0 0.0
    %1386 = vmatprep.subr.mxu0 0.0
    %1387 = vmatpush2.msra.mxu0 0.0
    %1388 = vmatprep.subr.mxu0 0.0
    %1389 = vmatpush2.msra.mxu0 0.0
    %1390 = vmatprep.subr.mxu0 0.0
    %1391 = vmatpush2.msra.mxu0 0.0
    %1392 = vmatprep.subr.mxu0 0.0
    %1393 = vmatpush2.msra.mxu0 0.0
    %1394 = vmatprep.subr.mxu0 0.0
    %1395 = vmatpush2.msra.mxu0 0.0
    %1396 = vmatprep.subr.mxu0 0.0
    %1397 = vmatpush2.msra.mxu0 0.0
    %1398 = vmatprep.subr.mxu0 0.0
    %1399 = vmatpush2.msra.mxu0 0.0
    %1400 = vmatprep.subr.mxu0 0.0
    %1401 = vmatpush2.msra.mxu0 0.0
    %1402 = vmatprep.subr.mxu0 0.0
    %1403 = vmatpush2.msra.mxu0 0.0
    %1404 = vmatprep.subr.mxu0 0.0
    %1405 = vmatpush2.msra.mxu0 0.0
    %1406 = vmatprep.subr.mxu0 0.0
    %1407 = vmatpush2.msra.mxu0 0.0
    %1408 = vmatprep.subr.mxu0 0.0
    %1409 = vmatpush2.msra.mxu0 0.0
    %1410 = vmatprep.subr.mxu0 0.0
    %1411 = vmatpush2.msra.mxu0 0.0
    %1412 = vmatprep.subr.mxu0 0.0
    %1413 = vmatpush2.msra.mxu0 0.0
    %1414 = vmatprep.subr.mxu0 0.0
    %1415 = vmatpush2.msra.mxu0 0.0
    %1416 = vmatprep.mubr.f32.mxu0 0.0
    %v1417 = vand.u32 %v637, 4294901760
    %v1418 = vsub.f32 %v637, %v1417
    %1419 = vmatmul.mubr.f32.gmra.mxu0 %v1418
    %v1420 = vpop.f32.mrf.mxu0
    %v1421 = vadd.f32 %v1336, %v1420
    %v1422 = vpop.f32.mrf.mxu0
    %v1423 = vadd.f32 %v1338, %v1422
    %1424 = vdwg.mxu0
    %1425 = vmatprep.subr.mxu0 0.0
    %1426 = vmatpush1.msra.mxu0 0.0
    %1427 = vmatprep.subr.mxu0 0.0
    %1428 = vmatpush1.msra.mxu0 0.0
    %1429 = vmatprep.subr.mxu0 0.0
    %1430 = vmatpush1.msra.mxu0 0.0
    %1431 = vmatprep.subr.mxu0 0.0
    %1432 = vmatpush1.msra.mxu0 0.0
    %1433 = vmatprep.subr.mxu0 0.0
    %1434 = vmatpush1.msra.mxu0 0.0
    %1435 = vmatprep.subr.mxu0 0.0
    %1436 = vmatpush1.msra.mxu0 0.0
    %1437 = vmatprep.subr.mxu0 0.0
    %1438 = vmatpush1.msra.mxu0 0.0
    %1439 = vmatprep.subr.mxu0 0.0
    %1440 = vmatpush1.msra.mxu0 0.0
    %1441 = vmatprep.subr.mxu0 0.0
    %1442 = vmatpush1.msra.mxu0 0.0
    %1443 = vmatprep.subr.mxu0 0.0
    %1444 = vmatpush1.msra.mxu0 0.0
    %1445 = vmatprep.subr.mxu0 0.0
    %1446 = vmatpush1.msra.mxu0 0.0
    %1447 = vmatprep.subr.mxu0 0.0
    %1448 = vmatpush1.msra.mxu0 0.0
    %1449 = vmatprep.subr.mxu0 0.0
    %1450 = vmatpush1.msra.mxu0 0.0
    %v1451 = vand.u32 %v634, 4294901760
    %1452 = vmatprep.subr.mxu0 %v1451
    %v1453 = vand.u32 %v633, 4294901760
    %1454 = vmatpush1.msra.mxu0 %v1453
    %v1455 = vand.u32 %v630, 4294901760
    %1456 = vmatprep.subr.mxu0 %v1455
    %v1457 = vand.u32 %v629, 4294901760
    %1458 = vmatpush1.msra.mxu0 %v1457
    %v1459 = vand.u32 %v626, 4294901760
    %1460 = vmatprep.subr.mxu0 %v1459
    %v1461 = vand.u32 %v625, 4294901760
    %1462 = vmatpush1.msra.mxu0 %v1461
    %1463 = vmatprep.subr.mxu0 0.0
    %1464 = vmatpush2.msra.mxu0 0.0
    %1465 = vmatprep.subr.mxu0 0.0
    %1466 = vmatpush2.msra.mxu0 0.0
    %1467 = vmatprep.subr.mxu0 0.0
    %1468 = vmatpush2.msra.mxu0 0.0
    %1469 = vmatprep.subr.mxu0 0.0
    %1470 = vmatpush2.msra.mxu0 0.0
    %1471 = vmatprep.subr.mxu0 0.0
    %1472 = vmatpush2.msra.mxu0 0.0
    %1473 = vmatprep.subr.mxu0 0.0
    %1474 = vmatpush2.msra.mxu0 0.0
    %1475 = vmatprep.subr.mxu0 0.0
    %1476 = vmatpush2.msra.mxu0 0.0
    %1477 = vmatprep.subr.mxu0 0.0
    %1478 = vmatpush2.msra.mxu0 0.0
    %1479 = vmatprep.subr.mxu0 0.0
    %1480 = vmatpush2.msra.mxu0 0.0
    %1481 = vmatprep.subr.mxu0 0.0
    %1482 = vmatpush2.msra.mxu0 0.0
    %1483 = vmatprep.subr.mxu0 0.0
    %1484 = vmatpush2.msra.mxu0 0.0
    %1485 = vmatprep.subr.mxu0 0.0
    %1486 = vmatpush2.msra.mxu0 0.0
    %1487 = vmatprep.subr.mxu0 0.0
    %1488 = vmatpush2.msra.mxu0 0.0
    %1489 = vmatprep.subr.mxu0 0.0
    %1490 = vmatpush2.msra.mxu0 0.0
    %1491 = vmatprep.subr.mxu0 0.0
    %1492 = vmatpush2.msra.mxu0 0.0
    %1493 = vmatprep.subr.mxu0 0.0
    %1494 = vmatpush2.msra.mxu0 0.0
    %1495 = vmatprep.mubr.f32.mxu0 0.0
    %v1496 = vand.u32 %v637, 4294901760
    %v1497 = vsub.f32 %v637, %v1496
    %v1498 = vand.u32 %v1497, 4294901760
    %1499 = vmatmul.mubr.f32.gmra.mxu0 %v1498
    %v1500 = vpop.f32.mrf.mxu0
    %v1501 = vadd.f32 %v1421, %v1500
    %v1502 = vpop.f32.mrf.mxu0
    %v1503 = vadd.f32 %v1423, %v1502
    %1504 = vdwg.mxu0
    %1505 = vmatprep.subr.mxu0 0.0
    %1506 = vmatpush1.msra.mxu0 0.0
    %1507 = vmatprep.subr.mxu0 0.0
    %1508 = vmatpush1.msra.mxu0 0.0
    %1509 = vmatprep.subr.mxu0 0.0
    %1510 = vmatpush1.msra.mxu0 0.0
    %1511 = vmatprep.subr.mxu0 0.0
    %1512 = vmatpush1.msra.mxu0 0.0
    %1513 = vmatprep.subr.mxu0 0.0
    %1514 = vmatpush1.msra.mxu0 0.0
    %1515 = vmatprep.subr.mxu0 0.0
    %1516 = vmatpush1.msra.mxu0 0.0
    %1517 = vmatprep.subr.mxu0 0.0
    %1518 = vmatpush1.msra.mxu0 0.0
    %1519 = vmatprep.subr.mxu0 0.0
    %1520 = vmatpush1.msra.mxu0 0.0
    %1521 = vmatprep.subr.mxu0 0.0
    %1522 = vmatpush1.msra.mxu0 0.0
    %1523 = vmatprep.subr.mxu0 0.0
    %1524 = vmatpush1.msra.mxu0 0.0
    %1525 = vmatprep.subr.mxu0 0.0
    %1526 = vmatpush1.msra.mxu0 0.0
    %1527 = vmatprep.subr.mxu0 0.0
    %1528 = vmatpush1.msra.mxu0 0.0
    %1529 = vmatprep.subr.mxu0 0.0
    %1530 = vmatpush1.msra.mxu0 0.0
    %v1531 = vand.u32 %v634, 4294901760
    %v1532 = vsub.f32 %v634, %v1531
    %v1533 = vand.u32 %v1532, 4294901760
    %1534 = vmatprep.subr.mxu0 %v1533
    %v1535 = vand.u32 %v633, 4294901760
    %v1536 = vsub.f32 %v633, %v1535
    %v1537 = vand.u32 %v1536, 4294901760
    %1538 = vmatpush1.msra.mxu0 %v1537
    %v1539 = vand.u32 %v630, 4294901760
    %v1540 = vsub.f32 %v630, %v1539
    %v1541 = vand.u32 %v1540, 4294901760
    %1542 = vmatprep.subr.mxu0 %v1541
    %v1543 = vand.u32 %v629, 4294901760
    %v1544 = vsub.f32 %v629, %v1543
    %v1545 = vand.u32 %v1544, 4294901760
    %1546 = vmatpush1.msra.mxu0 %v1545
    %v1547 = vand.u32 %v626, 4294901760
    %v1548 = vsub.f32 %v626, %v1547
    %v1549 = vand.u32 %v1548, 4294901760
    %1550 = vmatprep.subr.mxu0 %v1549
    %v1551 = vand.u32 %v625, 4294901760
    %v1552 = vsub.f32 %v625, %v1551
    %v1553 = vand.u32 %v1552, 4294901760
    %1554 = vmatpush1.msra.mxu0 %v1553
    %1555 = vmatprep.subr.mxu0 0.0
    %1556 = vmatpush2.msra.mxu0 0.0
    %1557 = vmatprep.subr.mxu0 0.0
    %1558 = vmatpush2.msra.mxu0 0.0
    %1559 = vmatprep.subr.mxu0 0.0
    %1560 = vmatpush2.msra.mxu0 0.0
    %1561 = vmatprep.subr.mxu0 0.0
    %1562 = vmatpush2.msra.mxu0 0.0
    %1563 = vmatprep.subr.mxu0 0.0
    %1564 = vmatpush2.msra.mxu0 0.0
    %1565 = vmatprep.subr.mxu0 0.0
    %1566 = vmatpush2.msra.mxu0 0.0
    %1567 = vmatprep.subr.mxu0 0.0
    %1568 = vmatpush2.msra.mxu0 0.0
    %1569 = vmatprep.subr.mxu0 0.0
    %1570 = vmatpush2.msra.mxu0 0.0
    %1571 = vmatprep.subr.mxu0 0.0
    %1572 = vmatpush2.msra.mxu0 0.0
    %1573 = vmatprep.subr.mxu0 0.0
    %1574 = vmatpush2.msra.mxu0 0.0
    %1575 = vmatprep.subr.mxu0 0.0
    %1576 = vmatpush2.msra.mxu0 0.0
    %1577 = vmatprep.subr.mxu0 0.0
    %1578 = vmatpush2.msra.mxu0 0.0
    %1579 = vmatprep.subr.mxu0 0.0
    %1580 = vmatpush2.msra.mxu0 0.0
    %1581 = vmatprep.subr.mxu0 0.0
    %1582 = vmatpush2.msra.mxu0 0.0
    %1583 = vmatprep.subr.mxu0 0.0
    %1584 = vmatpush2.msra.mxu0 0.0
    %1585 = vmatprep.subr.mxu0 0.0
    %1586 = vmatpush2.msra.mxu0 0.0
    %1587 = vmatprep.mubr.f32.mxu0 0.0
    %v1588 = vand.u32 %v637, 4294901760
    %1589 = vmatmul.mubr.f32.gmra.mxu0 %v1588
    %v1590 = vpop.f32.mrf.mxu0
    %v1591 = vadd.f32 %v1501, %v1590
    %v1592 = vpop.f32.mrf.mxu0
    %v1593 = vadd.f32 %v1503, %v1592
    %1594 = vdwg.mxu0
    %1595 = vmatprep.subr.mxu0 0.0
    %1596 = vmatpush1.msra.mxu0 0.0
    %1597 = vmatprep.subr.mxu0 0.0
    %1598 = vmatpush1.msra.mxu0 0.0
    %1599 = vmatprep.subr.mxu0 0.0
    %1600 = vmatpush1.msra.mxu0 0.0
    %1601 = vmatprep.subr.mxu0 0.0
    %1602 = vmatpush1.msra.mxu0 0.0
    %1603 = vmatprep.subr.mxu0 0.0
    %1604 = vmatpush1.msra.mxu0 0.0
    %1605 = vmatprep.subr.mxu0 0.0
    %1606 = vmatpush1.msra.mxu0 0.0
    %1607 = vmatprep.subr.mxu0 0.0
    %1608 = vmatpush1.msra.mxu0 0.0
    %1609 = vmatprep.subr.mxu0 0.0
    %1610 = vmatpush1.msra.mxu0 0.0
    %1611 = vmatprep.subr.mxu0 0.0
    %1612 = vmatpush1.msra.mxu0 0.0
    %1613 = vmatprep.subr.mxu0 0.0
    %1614 = vmatpush1.msra.mxu0 0.0
    %1615 = vmatprep.subr.mxu0 0.0
    %1616 = vmatpush1.msra.mxu0 0.0
    %1617 = vmatprep.subr.mxu0 0.0
    %1618 = vmatpush1.msra.mxu0 0.0
    %1619 = vmatprep.subr.mxu0 0.0
    %1620 = vmatpush1.msra.mxu0 0.0
    %v1621 = vand.u32 %v634, 4294901760
    %1622 = vmatprep.subr.mxu0 %v1621
    %v1623 = vand.u32 %v633, 4294901760
    %1624 = vmatpush1.msra.mxu0 %v1623
    %v1625 = vand.u32 %v630, 4294901760
    %1626 = vmatprep.subr.mxu0 %v1625
    %v1627 = vand.u32 %v629, 4294901760
    %1628 = vmatpush1.msra.mxu0 %v1627
    %v1629 = vand.u32 %v626, 4294901760
    %1630 = vmatprep.subr.mxu0 %v1629
    %v1631 = vand.u32 %v625, 4294901760
    %1632 = vmatpush1.msra.mxu0 %v1631
    %1633 = vmatprep.subr.mxu0 0.0
    %1634 = vmatpush2.msra.mxu0 0.0
    %1635 = vmatprep.subr.mxu0 0.0
    %1636 = vmatpush2.msra.mxu0 0.0
    %1637 = vmatprep.subr.mxu0 0.0
    %1638 = vmatpush2.msra.mxu0 0.0
    %1639 = vmatprep.subr.mxu0 0.0
    %1640 = vmatpush2.msra.mxu0 0.0
    %1641 = vmatprep.subr.mxu0 0.0
    %1642 = vmatpush2.msra.mxu0 0.0
    %1643 = vmatprep.subr.mxu0 0.0
    %1644 = vmatpush2.msra.mxu0 0.0
    %1645 = vmatprep.subr.mxu0 0.0
    %1646 = vmatpush2.msra.mxu0 0.0
    %1647 = vmatprep.subr.mxu0 0.0
    %1648 = vmatpush2.msra.mxu0 0.0
    %1649 = vmatprep.subr.mxu0 0.0
    %1650 = vmatpush2.msra.mxu0 0.0
    %1651 = vmatprep.subr.mxu0 0.0
    %1652 = vmatpush2.msra.mxu0 0.0
    %1653 = vmatprep.subr.mxu0 0.0
    %1654 = vmatpush2.msra.mxu0 0.0
    %1655 = vmatprep.subr.mxu0 0.0
    %1656 = vmatpush2.msra.mxu0 0.0
    %1657 = vmatprep.subr.mxu0 0.0
    %1658 = vmatpush2.msra.mxu0 0.0
    %1659 = vmatprep.subr.mxu0 0.0
    %1660 = vmatpush2.msra.mxu0 0.0
    %1661 = vmatprep.subr.mxu0 0.0
    %1662 = vmatpush2.msra.mxu0 0.0
    %1663 = vmatprep.subr.mxu0 0.0
    %1664 = vmatpush2.msra.mxu0 0.0
    %1665 = vmatprep.mubr.f32.mxu0 0.0
    %v1666 = vand.u32 %v637, 4294901760
    %1667 = vmatmul.mubr.f32.gmra.mxu0 %v1666
    %v1668 = vpop.f32.mrf.mxu0
    %v1669 = vadd.f32 %v1591, %v1668
    %v1670 = vpop.f32.mrf.mxu0
    %v1671 = vadd.f32 %v1593, %v1670
    %1672 = vdwg.mxu0
    %v1673 = vld [vmem:[%s2] sm:$0xff]
    %1675 = vset.pattern.permute.xlu0 0
    %1676 = vperm.xlu0 %1675, %v1673
    %v1677 = vpop.permute.xlu0 %1676
    %v1679 = vmul.f32 %v1152, %v1677
    %v1680 = vmul.f32 %v1154, %v1677
    %v1681 = vmul.f32 %v1669, %v1677
    %v1682 = vmul.f32 %v1671, %v1677
    %v1683 = vld [vmem:[%s3] sm:$0xff]
    %1685 = vset.pattern.permute.xlu0 0
    %1686 = vperm.xlu0 %1685, %v1683
    %v1687 = vpop.permute.xlu0 %1686
    %v1689 = vadd.f32 %v1679, %v1687
    %v1690 = vadd.f32 %v1680, %v1687
    %v1691 = vadd.f32 %v1681, %v1687
    %v1692 = vadd.f32 %v1682, %v1687
    %vm1693 = vcmp.gt.f32.partialorder %v1689, 0.0
    %vm1694 = vcmp.gt.f32.partialorder %v1690, 0.0
    %vm1695 = vcmp.gt.f32.partialorder %v1691, 0.0
    %vm1696 = vcmp.gt.f32.partialorder %v1692, 0.0
    %v1697 = vmul.f32 %v1689, 0.2
    %v1698 = vmul.f32 %v1690, 0.2
    %v1699 = vmul.f32 %v1691, 0.2
    %v1700 = vmul.f32 %v1692, 0.2
    %v1701 = vsel %vm1693, %v1689, %v1697
    %v1702 = vsel %vm1694, %v1690, %v1698
    %v1703 = vsel %vm1695, %v1691, %v1699
    %v1704 = vsel %vm1696, %v1692, %v1700
    %1705 = vst [vmem:[#allocation4] sm:$0xff] 0.0
    %1706 = vst [vmem:[#allocation4 + $0x8] sm:$0xff] 0.0
    %1707 = vst [vmem:[#allocation4 + $0x10] sm:$0xff] 0.0
    %1708 = vst [vmem:[#allocation4 + $0x18] sm:$0xff] 0.0
    %1709 = vst [vmem:[#allocation4 + $0x20] sm:$0xff] 0.0
    %1710 = vst [vmem:[#allocation4 + $0x28] sm:$0xff] 0.0
    %1711 = vst [vmem:[#allocation4 + $0x30] sm:$0xff] 0.0
    %1712 = vst [vmem:[#allocation4 + $0x8] sm:$0xff] %v1701
    %1713 = vst [vmem:[#allocation4 + $0x10] sm:$0xff] %v1702
    %1714 = vst [vmem:[#allocation4 + $0x18] sm:$0xff] %v1703
    %1715 = vst [vmem:[#allocation4 + $0x20] sm:$0xff] %v1704
    %v1716 = vld [vmem:[#allocation4 + $0x8] sm:$0xff]
    %v1717 = vld [vmem:[#allocation4 + $0x10] sm:$0xff]
    %v1718 = vld [vmem:[#allocation4 + $0x18] sm:$0xff]
    %v1719 = vld [vmem:[#allocation4 + $0x20] sm:$0xff]
    %v1720 = vld [vmem:[#allocation4 + $0x28] sm:$0xff]
    %1726 = vrot.lane.b32.xlu0 %v1716, 127
    %v1727 = vpop.permute.xlu0 %1726
    %1728 = vrot.lane.b32.xlu0 %v1717, 127
    %v1729 = vpop.permute.xlu0 %1728
    %1730 = vrot.lane.b32.xlu0 %v1718, 127
    %v1731 = vpop.permute.xlu0 %1730
    %1732 = vrot.lane.b32.xlu0 %v1719, 127
    %v1733 = vpop.permute.xlu0 %1732
    %1734 = vrot.lane.b32.xlu0 %v1720, 127
    %v1735 = vpop.permute.xlu0 %1734
    %v1736 = vsel %vm376, %v1727, %v1729
    %v1737 = vsel %vm376, %v1729, %v1731
    %v1738 = vsel %vm376, %v1731, %v1733
    %v1739 = vsel %vm376, %v1733, %v1735
    %v1744 = vmax.f32 %v1716, %v1736
    %v1745 = vmax.f32 %v1717, %v1737
    %v1746 = vmax.f32 %v1718, %v1738
    %v1747 = vmax.f32 %v1719, %v1739
    %v1749 = vmax.f32 %v1720, %v1735
    %1755 = vrot.lane.b32.xlu0 %v1744, 112
    %v1756 = vpop.permute.xlu0 %1755
    %1757 = vrot.lane.b32.xlu0 %v1745, 112
    %v1758 = vpop.permute.xlu0 %1757
    %1759 = vrot.lane.b32.xlu0 %v1746, 112
    %v1760 = vpop.permute.xlu0 %1759
    %1761 = vrot.lane.b32.xlu0 %v1747, 112
    %v1762 = vpop.permute.xlu0 %1761
    %1763 = vrot.lane.b32.xlu0 %v1749, 112
    %v1764 = vpop.permute.xlu0 %1763
    %v1765 = vsel %vm289, %v1756, %v1758
    %v1766 = vsel %vm289, %v1758, %v1760
    %v1767 = vsel %vm289, %v1760, %v1762
    %v1768 = vsel %vm289, %v1762, %v1764
    %v1773 = vmax.f32 %v1744, %v1765
    %v1774 = vmax.f32 %v1745, %v1766
    %v1775 = vmax.f32 %v1746, %v1767
    %v1776 = vmax.f32 %v1747, %v1768
    %1777 = vst [vmem:[#allocation4 + $0x8] sm:$0xff] %v1773
    %1778 = vst [vmem:[#allocation4 + $0x10] sm:$0xff] %v1774
    %1779 = vst [vmem:[#allocation4 + $0x18] sm:$0xff] %v1775
    %1780 = vst [vmem:[#allocation4 + $0x20] sm:$0xff] %v1776
    %v1781 = vld [vmem:[#allocation11] sm:$0xff]
    %v1782 = vld [vmem:[#allocation11 + $0x8] sm:$0xff]
    %v1783 = vld [vmem:[#allocation11 + $0x10] sm:$0xff]
    %v1784 = vld [vmem:[#allocation11 + $0x18] sm:$0xff]
    %v1785 = vld [vmem:[#allocation11 + $0x20] sm:$0xff]
    %v1786 = vld [vmem:[#allocation11 + $0x28] sm:$0xff]
    %v1787 = vld [vmem:[#allocation11 + $0x30] sm:$0xff]
    %v1788 = vld [vmem:[#allocation11 + $0x38] sm:$0xff]
    %v1789 = vld [vmem:[#allocation11 + $0x40] sm:$0xff]
    %v1790 = vld [vmem:[#allocation11 + $0x48] sm:$0xff]
    %v1791 = vunpack.c.l.bf16 %v1781
    %v1792 = vunpack.c.h.bf16 %v1781
    %v1793 = vunpack.c.l.bf16 %v1782
    %v1794 = vunpack.c.h.bf16 %v1782
    %v1795 = vunpack.c.l.bf16 %v1783
    %v1796 = vunpack.c.h.bf16 %v1783
    %v1797 = vunpack.c.l.bf16 %v1784
    %v1798 = vunpack.c.h.bf16 %v1784
    %v1799 = vunpack.c.l.bf16 %v1785
    %v1800 = vunpack.c.h.bf16 %v1785
    %v1801 = vunpack.c.l.bf16 %v1786
    %v1802 = vunpack.c.h.bf16 %v1786
    %v1803 = vunpack.c.l.bf16 %v1787
    %v1804 = vunpack.c.h.bf16 %v1787
    %v1805 = vunpack.c.l.bf16 %v1788
    %v1806 = vunpack.c.h.bf16 %v1788
    %v1807 = vunpack.c.l.bf16 %v1789
    %v1808 = vunpack.c.h.bf16 %v1789
    %v1809 = vunpack.c.l.bf16 %v1790
    %v1810 = vunpack.c.h.bf16 %v1790
    %v1811 = vld [vmem:[#allocation4] sm:$0xff]
    %v1812 = vld [vmem:[#allocation4 + $0x8] sm:$0xff]
    %v1813 = vld [vmem:[#allocation4 + $0x10] sm:$0xff]
    %v1814 = vld [vmem:[#allocation4 + $0x18] sm:$0xff]
    %v1815 = vld [vmem:[#allocation4 + $0x20] sm:$0xff]
    %v1816 = vlaneseq
    %v1817 = vshrl.u32 %v1816, 7
    %v1818 = vsub.s32 0, %v1817
    %v1819 = vrot.slane %v1791, %v1818
    %v1820 = vlaneseq
    %v1821 = vshrl.u32 %v1820, 7
    %v1822 = vsub.s32 0, %v1821
    %v1823 = vrot.slane %v1792, %v1822
    %v1824 = vlaneseq
    %v1825 = vshrl.u32 %v1824, 7
    %v1826 = vsub.s32 0, %v1825
    %v1827 = vrot.slane %v1793, %v1826
    %v1828 = vlaneseq
    %v1829 = vshrl.u32 %v1828, 7
    %v1830 = vsub.s32 0, %v1829
    %v1831 = vrot.slane %v1794, %v1830
    %1836 = vrot.lane.b32.xlu0 %v1819, 28
    %v1837 = vpop.permute.xlu0 %1836
    %1838 = vrot.lane.b32.xlu0 %v1823, 28
    %v1839 = vpop.permute.xlu0 %1838
    %1840 = vrot.lane.b32.xlu0 %v1827, 28
    %v1841 = vpop.permute.xlu0 %1840
    %1842 = vrot.lane.b32.xlu0 %v1831, 28
    %v1843 = vpop.permute.xlu0 %1842
    %vm1844 = vcmask 228352
    %v1845 = vsel %vm1844, %v1837, %v1839
    %v1846 = vsel %vm1844, %v1839, %v1841
    %v1847 = vsel %vm1844, %v1841, %v1843
    %v1853 = vmul.f32 %v1811, %v1837
    %v1854 = vmul.f32 %v1812, %v1845
    %v1855 = vmul.f32 %v1813, %v1846
    %v1856 = vmul.f32 %v1814, %v1847
    %v1857 = vmul.f32 %v1815, %v1843
    %1863 = vrot.lane.b32.xlu0 %v1853, 100
    %v1864 = vpop.permute.xlu0 %1863
    %1865 = vrot.lane.b32.xlu0 %v1854, 100
    %v1866 = vpop.permute.xlu0 %1865
    %1867 = vrot.lane.b32.xlu0 %v1855, 100
    %v1868 = vpop.permute.xlu0 %1867
    %1869 = vrot.lane.b32.xlu0 %v1856, 100
    %v1870 = vpop.permute.xlu0 %1869
    %1871 = vrot.lane.b32.xlu0 %v1857, 100
    %v1872 = vpop.permute.xlu0 %1871
    %vm1873 = vcmask 818176
    %v1874 = vsel %vm1873, %v1864, %v1866
    %v1875 = vsel %vm1873, %v1866, %v1868
    %v1876 = vsel %vm1873, %v1868, %v1870
    %v1877 = vsel %vm1873, %v1870, %v1872
    %1882 = vst [vmem:[#allocation3] sm:$0xff] %v1874
    %1883 = vst [vmem:[#allocation3 + $0x8] sm:$0xff] %v1875
    %1884 = vst [vmem:[#allocation3 + $0x10] sm:$0xff] %v1876
    %1885 = vst [vmem:[#allocation3 + $0x18] sm:$0xff] %v1877
    %v1886 = vld [vmem:[#allocation4] sm:$0xff]
    %v1887 = vld [vmem:[#allocation4 + $0x8] sm:$0xff]
    %v1888 = vld [vmem:[#allocation4 + $0x10] sm:$0xff]
    %v1889 = vld [vmem:[#allocation4 + $0x18] sm:$0xff]
    %v1890 = vld [vmem:[#allocation4 + $0x20] sm:$0xff]
    %v1891 = vlaneseq
    %v1892 = vshrl.u32 %v1891, 7
    %v1893 = vsub.s32 1, %v1892
    %v1894 = vrot.slane %v1791, %v1893
    %v1895 = vlaneseq
    %v1896 = vshrl.u32 %v1895, 7
    %v1897 = vsub.s32 1, %v1896
    %v1898 = vrot.slane %v1792, %v1897
    %v1899 = vlaneseq
    %v1900 = vshrl.u32 %v1899, 7
    %v1901 = vsub.s32 1, %v1900
    %v1902 = vrot.slane %v1793, %v1901
    %v1903 = vlaneseq
    %v1904 = vshrl.u32 %v1903, 7
    %v1905 = vsub.s32 1, %v1904
    %v1906 = vrot.slane %v1794, %v1905
    %1911 = vrot.lane.b32.xlu0 %v1894, 30
    %v1912 = vpop.permute.xlu0 %1911
    %1913 = vrot.lane.b32.xlu0 %v1898, 30
    %v1914 = vpop.permute.xlu0 %1913
    %1915 = vrot.lane.b32.xlu0 %v1902, 30
    %v1916 = vpop.permute.xlu0 %1915
    %1917 = vrot.lane.b32.xlu0 %v1906, 30
    %v1918 = vpop.permute.xlu0 %1917
    %vm1919 = vcmask 244736
    %v1920 = vsel %vm1919, %v1912, %v1914
    %v1921 = vsel %vm1919, %v1914, %v1916
    %v1922 = vsel %vm1919, %v1916, %v1918
    %v1928 = vmul.f32 %v1886, %v1912
    %v1929 = vmul.f32 %v1887, %v1920
    %v1930 = vmul.f32 %v1888, %v1921
    %v1931 = vmul.f32 %v1889, %v1922
    %v1932 = vmul.f32 %v1890, %v1918
    %1938 = vrot.lane.b32.xlu0 %v1928, 98
    %v1939 = vpop.permute.xlu0 %1938
    %1940 = vrot.lane.b32.xlu0 %v1929, 98
    %v1941 = vpop.permute.xlu0 %1940
    %1942 = vrot.lane.b32.xlu0 %v1930, 98
    %v1943 = vpop.permute.xlu0 %1942
    %1944 = vrot.lane.b32.xlu0 %v1931, 98
    %v1945 = vpop.permute.xlu0 %1944
    %1946 = vrot.lane.b32.xlu0 %v1932, 98
    %v1947 = vpop.permute.xlu0 %1946
    %vm1948 = vcmask 801792
    %v1949 = vsel %vm1948, %v1939, %v1941
    %v1950 = vsel %vm1948, %v1941, %v1943
    %v1951 = vsel %vm1948, %v1943, %v1945
    %v1952 = vsel %vm1948, %v1945, %v1947
    %1957 = vst [vmem:[#allocation3 + $0x20] sm:$0xff] %v1949
    %1958 = vst [vmem:[#allocation3 + $0x28] sm:$0xff] %v1950
    %1959 = vst [vmem:[#allocation3 + $0x30] sm:$0xff] %v1951
    %1960 = vst [vmem:[#allocation3 + $0x38] sm:$0xff] %v1952
    %v1961 = vld [vmem:[#allocation4] sm:$0xff]
    %v1962 = vld [vmem:[#allocation4 + $0x8] sm:$0xff]
    %v1963 = vld [vmem:[#allocation4 + $0x10] sm:$0xff]
    %v1964 = vld [vmem:[#allocation4 + $0x18] sm:$0xff]
    %v1965 = vld [vmem:[#allocation4 + $0x20] sm:$0xff]
    %v1966 = vlaneseq
    %v1967 = vshrl.u32 %v1966, 7
    %v1968 = vsub.s32 2, %v1967
    %v1969 = vrot.slane %v1791, %v1968
    %v1970 = vlaneseq
    %v1971 = vshrl.u32 %v1970, 7
    %v1972 = vsub.s32 2, %v1971
    %v1973 = vrot.slane %v1792, %v1972
    %v1974 = vlaneseq
    %v1975 = vshrl.u32 %v1974, 7
    %v1976 = vsub.s32 2, %v1975
    %v1977 = vrot.slane %v1793, %v1976
    %v1978 = vlaneseq
    %v1979 = vshrl.u32 %v1978, 7
    %v1980 = vsub.s32 2, %v1979
    %v1981 = vrot.slane %v1794, %v1980
    %1986 = vrot.lane.b32.xlu0 %v1969, 32
    %v1987 = vpop.permute.xlu0 %1986
    %1988 = vrot.lane.b32.xlu0 %v1973, 32
    %v1989 = vpop.permute.xlu0 %1988
    %1990 = vrot.lane.b32.xlu0 %v1977, 32
    %v1991 = vpop.permute.xlu0 %1990
    %1992 = vrot.lane.b32.xlu0 %v1981, 32
    %v1993 = vpop.permute.xlu0 %1992
    %v1994 = vsel %vm252, %v1987, %v1989
    %v1995 = vsel %vm252, %v1989, %v1991
    %v1996 = vsel %vm252, %v1991, %v1993
    %v2002 = vmul.f32 %v1961, %v1987
    %v2003 = vmul.f32 %v1962, %v1994
    %v2004 = vmul.f32 %v1963, %v1995
    %v2005 = vmul.f32 %v1964, %v1996
    %v2006 = vmul.f32 %v1965, %v1993
    %2012 = vrot.lane.b32.xlu0 %v2002, 96
    %v2013 = vpop.permute.xlu0 %2012
    %2014 = vrot.lane.b32.xlu0 %v2003, 96
    %v2015 = vpop.permute.xlu0 %2014
    %2016 = vrot.lane.b32.xlu0 %v2004, 96
    %v2017 = vpop.permute.xlu0 %2016
    %2018 = vrot.lane.b32.xlu0 %v2005, 96
    %v2019 = vpop.permute.xlu0 %2018
    %2020 = vrot.lane.b32.xlu0 %v2006, 96
    %v2021 = vpop.permute.xlu0 %2020
    %v2022 = vsel %vm244, %v2013, %v2015
    %v2023 = vsel %vm244, %v2015, %v2017
    %v2024 = vsel %vm244, %v2017, %v2019
    %v2025 = vsel %vm244, %v2019, %v2021
    %2030 = vst [vmem:[#allocation3 + $0x40] sm:$0xff] %v2022
    %2031 = vst [vmem:[#allocation3 + $0x48] sm:$0xff] %v2023
    %2032 = vst [vmem:[#allocation3 + $0x50] sm:$0xff] %v2024
    %2033 = vst [vmem:[#allocation3 + $0x58] sm:$0xff] %v2025
    %v2034 = vld [vmem:[#allocation4] sm:$0xff]
    %v2035 = vld [vmem:[#allocation4 + $0x8] sm:$0xff]
    %v2036 = vld [vmem:[#allocation4 + $0x10] sm:$0xff]
    %v2037 = vld [vmem:[#allocation4 + $0x18] sm:$0xff]
    %v2038 = vld [vmem:[#allocation4 + $0x20] sm:$0xff]
    %v2039 = vlaneseq
    %v2040 = vshrl.u32 %v2039, 7
    %v2041 = vsub.s32 3, %v2040
    %v2042 = vrot.slane %v1791, %v2041
    %v2043 = vlaneseq
    %v2044 = vshrl.u32 %v2043, 7
    %v2045 = vsub.s32 3, %v2044
    %v2046 = vrot.slane %v1792, %v2045
    %v2047 = vlaneseq
    %v2048 = vshrl.u32 %v2047, 7
    %v2049 = vsub.s32 3, %v2048
    %v2050 = vrot.slane %v1793, %v2049
    %v2051 = vlaneseq
    %v2052 = vshrl.u32 %v2051, 7
    %v2053 = vsub.s32 3, %v2052
    %v2054 = vrot.slane %v1794, %v2053
    %2059 = vrot.lane.b32.xlu0 %v2042, 34
    %v2060 = vpop.permute.xlu0 %2059
    %2061 = vrot.lane.b32.xlu0 %v2046, 34
    %v2062 = vpop.permute.xlu0 %2061
    %2063 = vrot.lane.b32.xlu0 %v2050, 34
    %v2064 = vpop.permute.xlu0 %2063
    %2065 = vrot.lane.b32.xlu0 %v2054, 34
    %v2066 = vpop.permute.xlu0 %2065
    %vm2067 = vcmask 277504
    %v2068 = vsel %vm2067, %v2060, %v2062
    %v2069 = vsel %vm2067, %v2062, %v2064
    %v2070 = vsel %vm2067, %v2064, %v2066
    %v2076 = vmul.f32 %v2034, %v2060
    %v2077 = vmul.f32 %v2035, %v2068
    %v2078 = vmul.f32 %v2036, %v2069
    %v2079 = vmul.f32 %v2037, %v2070
    %v2080 = vmul.f32 %v2038, %v2066
    %2086 = vrot.lane.b32.xlu0 %v2076, 94
    %v2087 = vpop.permute.xlu0 %2086
    %2088 = vrot.lane.b32.xlu0 %v2077, 94
    %v2089 = vpop.permute.xlu0 %2088
    %2090 = vrot.lane.b32.xlu0 %v2078, 94
    %v2091 = vpop.permute.xlu0 %2090
    %2092 = vrot.lane.b32.xlu0 %v2079, 94
    %v2093 = vpop.permute.xlu0 %2092
    %2094 = vrot.lane.b32.xlu0 %v2080, 94
    %v2095 = vpop.permute.xlu0 %2094
    %vm2096 = vcmask 769024
    %v2097 = vsel %vm2096, %v2087, %v2089
    %v2098 = vsel %vm2096, %v2089, %v2091
    %v2099 = vsel %vm2096, %v2091, %v2093
    %v2100 = vsel %vm2096, %v2093, %v2095
    %2105 = vst [vmem:[#allocation3 + $0x60] sm:$0xff] %v2097
    %2106 = vst [vmem:[#allocation3 + $0x68] sm:$0xff] %v2098
    %2107 = vst [vmem:[#allocation3 + $0x70] sm:$0xff] %v2099
    %2108 = vst [vmem:[#allocation3 + $0x78] sm:$0xff] %v2100
    %v2109 = vld [vmem:[#allocation4] sm:$0xff]
    %v2110 = vld [vmem:[#allocation4 + $0x8] sm:$0xff]
    %v2111 = vld [vmem:[#allocation4 + $0x10] sm:$0xff]
    %v2112 = vld [vmem:[#allocation4 + $0x18] sm:$0xff]
    %v2113 = vld [vmem:[#allocation4 + $0x20] sm:$0xff]
    %v2114 = vlaneseq
    %v2115 = vshrl.u32 %v2114, 7
    %v2116 = vsub.s32 4, %v2115
    %v2117 = vrot.slane %v1791, %v2116
    %v2118 = vlaneseq
    %v2119 = vshrl.u32 %v2118, 7
    %v2120 = vsub.s32 4, %v2119
    %v2121 = vrot.slane %v1792, %v2120
    %v2122 = vlaneseq
    %v2123 = vshrl.u32 %v2122, 7
    %v2124 = vsub.s32 4, %v2123
    %v2125 = vrot.slane %v1793, %v2124
    %v2126 = vlaneseq
    %v2127 = vshrl.u32 %v2126, 7
    %v2128 = vsub.s32 4, %v2127
    %v2129 = vrot.slane %v1794, %v2128
    %2134 = vrot.lane.b32.xlu0 %v2117, 36
    %v2135 = vpop.permute.xlu0 %2134
    %2136 = vrot.lane.b32.xlu0 %v2121, 36
    %v2137 = vpop.permute.xlu0 %2136
    %2138 = vrot.lane.b32.xlu0 %v2125, 36
    %v2139 = vpop.permute.xlu0 %2138
    %2140 = vrot.lane.b32.xlu0 %v2129, 36
    %v2141 = vpop.permute.xlu0 %2140
    %vm2142 = vcmask 293888
    %v2143 = vsel %vm2142, %v2135, %v2137
    %v2144 = vsel %vm2142, %v2137, %v2139
    %v2145 = vsel %vm2142, %v2139, %v2141
    %v2151 = vmul.f32 %v2109, %v2135
    %v2152 = vmul.f32 %v2110, %v2143
    %v2153 = vmul.f32 %v2111, %v2144
    %v2154 = vmul.f32 %v2112, %v2145
    %v2155 = vmul.f32 %v2113, %v2141
    %2161 = vrot.lane.b32.xlu0 %v2151, 92
    %v2162 = vpop.permute.xlu0 %2161
    %2163 = vrot.lane.b32.xlu0 %v2152, 92
    %v2164 = vpop.permute.xlu0 %2163
    %2165 = vrot.lane.b32.xlu0 %v2153, 92
    %v2166 = vpop.permute.xlu0 %2165
    %2167 = vrot.lane.b32.xlu0 %v2154, 92
    %v2168 = vpop.permute.xlu0 %2167
    %2169 = vrot.lane.b32.xlu0 %v2155, 92
    %v2170 = vpop.permute.xlu0 %2169
    %vm2171 = vcmask 752640
    %v2172 = vsel %vm2171, %v2162, %v2164
    %v2173 = vsel %vm2171, %v2164, %v2166
    %v2174 = vsel %vm2171, %v2166, %v2168
    %v2175 = vsel %vm2171, %v2168, %v2170
    %2180 = vst [vmem:[#allocation3 + $0x80] sm:$0xff] %v2172
    %2181 = vst [vmem:[#allocation3 + $0x88] sm:$0xff] %v2173
    %2182 = vst [vmem:[#allocation3 + $0x90] sm:$0xff] %v2174
    %2183 = vst [vmem:[#allocation3 + $0x98] sm:$0xff] %v2175
    %v2184 = vld [vmem:[#allocation4] sm:$0xff]
    %v2185 = vld [vmem:[#allocation4 + $0x8] sm:$0xff]
    %v2186 = vld [vmem:[#allocation4 + $0x10] sm:$0xff]
    %v2187 = vld [vmem:[#allocation4 + $0x18] sm:$0xff]
    %v2188 = vld [vmem:[#allocation4 + $0x20] sm:$0xff]
    %v2189 = vlaneseq
    %v2190 = vshrl.u32 %v2189, 7
    %v2191 = vsub.s32 5, %v2190
    %v2192 = vrot.slane %v1791, %v2191
    %v2193 = vlaneseq
    %v2194 = vshrl.u32 %v2193, 7
    %v2195 = vsub.s32 5, %v2194
    %v2196 = vrot.slane %v1792, %v2195
    %v2197 = vlaneseq
    %v2198 = vshrl.u32 %v2197, 7
    %v2199 = vsub.s32 5, %v2198
    %v2200 = vrot.slane %v1793, %v2199
    %v2201 = vlaneseq
    %v2202 = vshrl.u32 %v2201, 7
    %v2203 = vsub.s32 5, %v2202
    %v2204 = vrot.slane %v1794, %v2203
    %2209 = vrot.lane.b32.xlu0 %v2192, 60
    %v2210 = vpop.permute.xlu0 %2209
    %2211 = vrot.lane.b32.xlu0 %v2196, 60
    %v2212 = vpop.permute.xlu0 %2211
    %2213 = vrot.lane.b32.xlu0 %v2200, 60
    %v2214 = vpop.permute.xlu0 %2213
    %2215 = vrot.lane.b32.xlu0 %v2204, 60
    %v2216 = vpop.permute.xlu0 %2215
    %vm2217 = vcmask 490496
    %v2218 = vsel %vm2217, %v2210, %v2212
    %v2219 = vsel %vm2217, %v2212, %v2214
    %v2220 = vsel %vm2217, %v2214, %v2216
    %v2226 = vmul.f32 %v2184, %v2210
    %v2227 = vmul.f32 %v2185, %v2218
    %v2228 = vmul.f32 %v2186, %v2219
    %v2229 = vmul.f32 %v2187, %v2220
    %v2230 = vmul.f32 %v2188, %v2216
    %2236 = vrot.lane.b32.xlu0 %v2226, 68
    %v2237 = vpop.permute.xlu0 %2236
    %2238 = vrot.lane.b32.xlu0 %v2227, 68
    %v2239 = vpop.permute.xlu0 %2238
    %2240 = vrot.lane.b32.xlu0 %v2228, 68
    %v2241 = vpop.permute.xlu0 %2240
    %2242 = vrot.lane.b32.xlu0 %v2229, 68
    %v2243 = vpop.permute.xlu0 %2242
    %2244 = vrot.lane.b32.xlu0 %v2230, 68
    %v2245 = vpop.permute.xlu0 %2244
    %vm2246 = vcmask 556032
    %v2247 = vsel %vm2246, %v2237, %v2239
    %v2248 = vsel %vm2246, %v2239, %v2241
    %v2249 = vsel %vm2246, %v2241, %v2243
    %v2250 = vsel %vm2246, %v2243, %v2245
    %2255 = vst [vmem:[#allocation3 + $0xa0] sm:$0xff] %v2247
    %2256 = vst [vmem:[#allocation3 + $0xa8] sm:$0xff] %v2248
    %2257 = vst [vmem:[#allocation3 + $0xb0] sm:$0xff] %v2249
    %2258 = vst [vmem:[#allocation3 + $0xb8] sm:$0xff] %v2250
    %v2259 = vld [vmem:[#allocation4] sm:$0xff]
    %v2260 = vld [vmem:[#allocation4 + $0x8] sm:$0xff]
    %v2261 = vld [vmem:[#allocation4 + $0x10] sm:$0xff]
    %v2262 = vld [vmem:[#allocation4 + $0x18] sm:$0xff]
    %v2263 = vld [vmem:[#allocation4 + $0x20] sm:$0xff]
    %v2264 = vlaneseq
    %v2265 = vshrl.u32 %v2264, 7
    %v2266 = vsub.s32 6, %v2265
    %v2267 = vrot.slane %v1791, %v2266
    %v2268 = vlaneseq
    %v2269 = vshrl.u32 %v2268, 7
    %v2270 = vsub.s32 6, %v2269
    %v2271 = vrot.slane %v1792, %v2270
    %v2272 = vlaneseq
    %v2273 = vshrl.u32 %v2272, 7
    %v2274 = vsub.s32 6, %v2273
    %v2275 = vrot.slane %v1793, %v2274
    %v2276 = vlaneseq
    %v2277 = vshrl.u32 %v2276, 7
    %v2278 = vsub.s32 6, %v2277
    %v2279 = vrot.slane %v1794, %v2278
    %2284 = vrot.lane.b32.xlu0 %v2267, 62
    %v2285 = vpop.permute.xlu0 %2284
    %2286 = vrot.lane.b32.xlu0 %v2271, 62
    %v2287 = vpop.permute.xlu0 %2286
    %2288 = vrot.lane.b32.xlu0 %v2275, 62
    %v2289 = vpop.permute.xlu0 %2288
    %2290 = vrot.lane.b32.xlu0 %v2279, 62
    %v2291 = vpop.permute.xlu0 %2290
    %vm2292 = vcmask 506880
    %v2293 = vsel %vm2292, %v2285, %v2287
    %v2294 = vsel %vm2292, %v2287, %v2289
    %v2295 = vsel %vm2292, %v2289, %v2291
    %v2301 = vmul.f32 %v2259, %v2285
    %v2302 = vmul.f32 %v2260, %v2293
    %v2303 = vmul.f32 %v2261, %v2294
    %v2304 = vmul.f32 %v2262, %v2295
    %v2305 = vmul.f32 %v2263, %v2291
    %2311 = vrot.lane.b32.xlu0 %v2301, 66
    %v2312 = vpop.permute.xlu0 %2311
    %2313 = vrot.lane.b32.xlu0 %v2302, 66
    %v2314 = vpop.permute.xlu0 %2313
    %2315 = vrot.lane.b32.xlu0 %v2303, 66
    %v2316 = vpop.permute.xlu0 %2315
    %2317 = vrot.lane.b32.xlu0 %v2304, 66
    %v2318 = vpop.permute.xlu0 %2317
    %2319 = vrot.lane.b32.xlu0 %v2305, 66
    %v2320 = vpop.permute.xlu0 %2319
    %vm2321 = vcmask 539648
    %v2322 = vsel %vm2321, %v2312, %v2314
    %v2323 = vsel %vm2321, %v2314, %v2316
    %v2324 = vsel %vm2321, %v2316, %v2318
    %v2325 = vsel %vm2321, %v2318, %v2320
    %2330 = vst [vmem:[#allocation3 + $0xc0] sm:$0xff] %v2322
    %2331 = vst [vmem:[#allocation3 + $0xc8] sm:$0xff] %v2323
    %2332 = vst [vmem:[#allocation3 + $0xd0] sm:$0xff] %v2324
    %2333 = vst [vmem:[#allocation3 + $0xd8] sm:$0xff] %v2325
    %v2334 = vld [vmem:[#allocation4] sm:$0xff]
    %v2335 = vld [vmem:[#allocation4 + $0x8] sm:$0xff]
    %v2336 = vld [vmem:[#allocation4 + $0x10] sm:$0xff]
    %v2337 = vld [vmem:[#allocation4 + $0x18] sm:$0xff]
    %v2338 = vld [vmem:[#allocation4 + $0x20] sm:$0xff]
    %v2339 = vlaneseq
    %v2340 = vshrl.u32 %v2339, 7
    %v2341 = vsub.s32 7, %v2340
    %v2342 = vrot.slane %v1791, %v2341
    %v2343 = vlaneseq
    %v2344 = vshrl.u32 %v2343, 7
    %v2345 = vsub.s32 7, %v2344
    %v2346 = vrot.slane %v1792, %v2345
    %v2347 = vlaneseq
    %v2348 = vshrl.u32 %v2347, 7
    %v2349 = vsub.s32 7, %v2348
    %v2350 = vrot.slane %v1793, %v2349
    %v2351 = vlaneseq
    %v2352 = vshrl.u32 %v2351, 7
    %v2353 = vsub.s32 7, %v2352
    %v2354 = vrot.slane %v1794, %v2353
    %2359 = vrot.lane.b32.xlu0 %v2342, 64
    %v2360 = vpop.permute.xlu0 %2359
    %2361 = vrot.lane.b32.xlu0 %v2346, 64
    %v2362 = vpop.permute.xlu0 %2361
    %2363 = vrot.lane.b32.xlu0 %v2350, 64
    %v2364 = vpop.permute.xlu0 %2363
    %2365 = vrot.lane.b32.xlu0 %v2354, 64
    %v2366 = vpop.permute.xlu0 %2365
    %v2367 = vsel %vm136, %v2360, %v2362
    %v2368 = vsel %vm136, %v2362, %v2364
    %v2369 = vsel %vm136, %v2364, %v2366
    %v2375 = vmul.f32 %v2334, %v2360
    %v2376 = vmul.f32 %v2335, %v2367
    %v2377 = vmul.f32 %v2336, %v2368
    %v2378 = vmul.f32 %v2337, %v2369
    %v2379 = vmul.f32 %v2338, %v2366
    %2385 = vrot.lane.b32.xlu0 %v2375, 64
    %v2386 = vpop.permute.xlu0 %2385
    %2387 = vrot.lane.b32.xlu0 %v2376, 64
    %v2388 = vpop.permute.xlu0 %2387
    %2389 = vrot.lane.b32.xlu0 %v2377, 64
    %v2390 = vpop.permute.xlu0 %2389
    %2391 = vrot.lane.b32.xlu0 %v2378, 64
    %v2392 = vpop.permute.xlu0 %2391
    %2393 = vrot.lane.b32.xlu0 %v2379, 64
    %v2394 = vpop.permute.xlu0 %2393
    %v2395 = vsel %vm136, %v2386, %v2388
    %v2396 = vsel %vm136, %v2388, %v2390
    %v2397 = vsel %vm136, %v2390, %v2392
    %v2398 = vsel %vm136, %v2392, %v2394
    %2403 = vst [vmem:[#allocation3 + $0xe0] sm:$0xff] %v2395
    %2404 = vst [vmem:[#allocation3 + $0xe8] sm:$0xff] %v2396
    %2405 = vst [vmem:[#allocation3 + $0xf0] sm:$0xff] %v2397
    %2406 = vst [vmem:[#allocation3 + $0xf8] sm:$0xff] %v2398
    %v2407 = vld [vmem:[#allocation4] sm:$0xff]
    %v2408 = vld [vmem:[#allocation4 + $0x8] sm:$0xff]
    %v2409 = vld [vmem:[#allocation4 + $0x10] sm:$0xff]
    %v2410 = vld [vmem:[#allocation4 + $0x18] sm:$0xff]
    %v2411 = vld [vmem:[#allocation4 + $0x20] sm:$0xff]
    %v2412 = vlaneseq
    %v2413 = vshrl.u32 %v2412, 7
    %v2414 = vsub.s32 0, %v2413
    %v2415 = vrot.slane %v1795, %v2414
    %v2416 = vlaneseq
    %v2417 = vshrl.u32 %v2416, 7
    %v2418 = vsub.s32 0, %v2417
    %v2419 = vrot.slane %v1796, %v2418
    %v2420 = vlaneseq
    %v2421 = vshrl.u32 %v2420, 7
    %v2422 = vsub.s32 0, %v2421
    %v2423 = vrot.slane %v1797, %v2422
    %v2424 = vlaneseq
    %v2425 = vshrl.u32 %v2424, 7
    %v2426 = vsub.s32 0, %v2425
    %v2427 = vrot.slane %v1798, %v2426
    %2432 = vrot.lane.b32.xlu0 %v2415, 66
    %v2433 = vpop.permute.xlu0 %2432
    %2434 = vrot.lane.b32.xlu0 %v2419, 66
    %v2435 = vpop.permute.xlu0 %2434
    %2436 = vrot.lane.b32.xlu0 %v2423, 66
    %v2437 = vpop.permute.xlu0 %2436
    %2438 = vrot.lane.b32.xlu0 %v2427, 66
    %v2439 = vpop.permute.xlu0 %2438
    %v2440 = vsel %vm2321, %v2433, %v2435
    %v2441 = vsel %vm2321, %v2435, %v2437
    %v2442 = vsel %vm2321, %v2437, %v2439
    %v2448 = vmul.f32 %v2407, %v2433
    %v2449 = vmul.f32 %v2408, %v2440
    %v2450 = vmul.f32 %v2409, %v2441
    %v2451 = vmul.f32 %v2410, %v2442
    %v2452 = vmul.f32 %v2411, %v2439
    %2458 = vrot.lane.b32.xlu0 %v2448, 62
    %v2459 = vpop.permute.xlu0 %2458
    %2460 = vrot.lane.b32.xlu0 %v2449, 62
    %v2461 = vpop.permute.xlu0 %2460
    %2462 = vrot.lane.b32.xlu0 %v2450, 62
    %v2463 = vpop.permute.xlu0 %2462
    %2464 = vrot.lane.b32.xlu0 %v2451, 62
    %v2465 = vpop.permute.xlu0 %2464
    %2466 = vrot.lane.b32.xlu0 %v2452, 62
    %v2467 = vpop.permute.xlu0 %2466
    %v2468 = vsel %vm2292, %v2459, %v2461
    %v2469 = vsel %vm2292, %v2461, %v2463
    %v2470 = vsel %vm2292, %v2463, %v2465
    %v2471 = vsel %vm2292, %v2465, %v2467
    %2476 = vst [vmem:[#allocation3 + $0x100] sm:$0xff] %v2468
    %2477 = vst [vmem:[#allocation3 + $0x108] sm:$0xff] %v2469
    %2478 = vst [vmem:[#allocation3 + $0x110] sm:$0xff] %v2470
    %2479 = vst [vmem:[#allocation3 + $0x118] sm:$0xff] %v2471
    %v2480 = vld [vmem:[#allocation4] sm:$0xff]
    %v2481 = vld [vmem:[#allocation4 + $0x8] sm:$0xff]
    %v2482 = vld [vmem:[#allocation4 + $0x10] sm:$0xff]
    %v2483 = vld [vmem:[#allocation4 + $0x18] sm:$0xff]
    %v2484 = vld [vmem:[#allocation4 + $0x20] sm:$0xff]
    %v2485 = vlaneseq
    %v2486 = vshrl.u32 %v2485, 7
    %v2487 = vsub.s32 1, %v2486
    %v2488 = vrot.slane %v1795, %v2487
    %v2489 = vlaneseq
    %v2490 = vshrl.u32 %v2489, 7
    %v2491 = vsub.s32 1, %v2490
    %v2492 = vrot.slane %v1796, %v2491
    %v2493 = vlaneseq
    %v2494 = vshrl.u32 %v2493, 7
    %v2495 = vsub.s32 1, %v2494
    %v2496 = vrot.slane %v1797, %v2495
    %v2497 = vlaneseq
    %v2498 = vshrl.u32 %v2497, 7
    %v2499 = vsub.s32 1, %v2498
    %v2500 = vrot.slane %v1798, %v2499
    %2505 = vrot.lane.b32.xlu0 %v2488, 68
    %v2506 = vpop.permute.xlu0 %2505
    %2507 = vrot.lane.b32.xlu0 %v2492, 68
    %v2508 = vpop.permute.xlu0 %2507
    %2509 = vrot.lane.b32.xlu0 %v2496, 68
    %v2510 = vpop.permute.xlu0 %2509
    %2511 = vrot.lane.b32.xlu0 %v2500, 68
    %v2512 = vpop.permute.xlu0 %2511
    %v2513 = vsel %vm2246, %v2506, %v2508
    %v2514 = vsel %vm2246, %v2508, %v2510
    %v2515 = vsel %vm2246, %v2510, %v2512
    %v2521 = vmul.f32 %v2480, %v2506
    %v2522 = vmul.f32 %v2481, %v2513
    %v2523 = vmul.f32 %v2482, %v2514
    %v2524 = vmul.f32 %v2483, %v2515
    %v2525 = vmul.f32 %v2484, %v2512
    %2531 = vrot.lane.b32.xlu0 %v2521, 60
    %v2532 = vpop.permute.xlu0 %2531
    %2533 = vrot.lane.b32.xlu0 %v2522, 60
    %v2534 = vpop.permute.xlu0 %2533
    %2535 = vrot.lane.b32.xlu0 %v2523, 60
    %v2536 = vpop.permute.xlu0 %2535
    %2537 = vrot.lane.b32.xlu0 %v2524, 60
    %v2538 = vpop.permute.xlu0 %2537
    %2539 = vrot.lane.b32.xlu0 %v2525, 60
    %v2540 = vpop.permute.xlu0 %2539
    %v2541 = vsel %vm2217, %v2532, %v2534
    %v2542 = vsel %vm2217, %v2534, %v2536
    %v2543 = vsel %vm2217, %v2536, %v2538
    %v2544 = vsel %vm2217, %v2538, %v2540
    %2549 = vst [vmem:[#allocation3 + $0x120] sm:$0xff] %v2541
    %2550 = vst [vmem:[#allocation3 + $0x128] sm:$0xff] %v2542
    %2551 = vst [vmem:[#allocation3 + $0x130] sm:$0xff] %v2543
    %2552 = vst [vmem:[#allocation3 + $0x138] sm:$0xff] %v2544
    %v2553 = vld [vmem:[#allocation4] sm:$0xff]
    %v2554 = vld [vmem:[#allocation4 + $0x8] sm:$0xff]
    %v2555 = vld [vmem:[#allocation4 + $0x10] sm:$0xff]
    %v2556 = vld [vmem:[#allocation4 + $0x18] sm:$0xff]
    %v2557 = vld [vmem:[#allocation4 + $0x20] sm:$0xff]
    %v2558 = vlaneseq
    %v2559 = vshrl.u32 %v2558, 7
    %v2560 = vsub.s32 2, %v2559
    %v2561 = vrot.slane %v1795, %v2560
    %v2562 = vlaneseq
    %v2563 = vshrl.u32 %v2562, 7
    %v2564 = vsub.s32 2, %v2563
    %v2565 = vrot.slane %v1796, %v2564
    %v2566 = vlaneseq
    %v2567 = vshrl.u32 %v2566, 7
    %v2568 = vsub.s32 2, %v2567
    %v2569 = vrot.slane %v1797, %v2568
    %v2570 = vlaneseq
    %v2571 = vshrl.u32 %v2570, 7
    %v2572 = vsub.s32 2, %v2571
    %v2573 = vrot.slane %v1798, %v2572
    %2578 = vrot.lane.b32.xlu0 %v2561, 92
    %v2579 = vpop.permute.xlu0 %2578
    %2580 = vrot.lane.b32.xlu0 %v2565, 92
    %v2581 = vpop.permute.xlu0 %2580
    %2582 = vrot.lane.b32.xlu0 %v2569, 92
    %v2583 = vpop.permute.xlu0 %2582
    %2584 = vrot.lane.b32.xlu0 %v2573, 92
    %v2585 = vpop.permute.xlu0 %2584
    %v2586 = vsel %vm2171, %v2579, %v2581
    %v2587 = vsel %vm2171, %v2581, %v2583
    %v2588 = vsel %vm2171, %v2583, %v2585
    %v2594 = vmul.f32 %v2553, %v2579
    %v2595 = vmul.f32 %v2554, %v2586
    %v2596 = vmul.f32 %v2555, %v2587
    %v2597 = vmul.f32 %v2556, %v2588
    %v2598 = vmul.f32 %v2557, %v2585
    %2604 = vrot.lane.b32.xlu0 %v2594, 36
    %v2605 = vpop.permute.xlu0 %2604
    %2606 = vrot.lane.b32.xlu0 %v2595, 36
    %v2607 = vpop.permute.xlu0 %2606
    %2608 = vrot.lane.b32.xlu0 %v2596, 36
    %v2609 = vpop.permute.xlu0 %2608
    %2610 = vrot.lane.b32.xlu0 %v2597, 36
    %v2611 = vpop.permute.xlu0 %2610
    %2612 = vrot.lane.b32.xlu0 %v2598, 36
    %v2613 = vpop.permute.xlu0 %2612
    %v2614 = vsel %vm2142, %v2605, %v2607
    %v2615 = vsel %vm2142, %v2607, %v2609
    %v2616 = vsel %vm2142, %v2609, %v2611
    %v2617 = vsel %vm2142, %v2611, %v2613
    %2622 = vst [vmem:[#allocation3 + $0x140] sm:$0xff] %v2614
    %2623 = vst [vmem:[#allocation3 + $0x148] sm:$0xff] %v2615
    %2624 = vst [vmem:[#allocation3 + $0x150] sm:$0xff] %v2616
    %2625 = vst [vmem:[#allocation3 + $0x158] sm:$0xff] %v2617
    %v2626 = vld [vmem:[#allocation4] sm:$0xff]
    %v2627 = vld [vmem:[#allocation4 + $0x8] sm:$0xff]
    %v2628 = vld [vmem:[#allocation4 + $0x10] sm:$0xff]
    %v2629 = vld [vmem:[#allocation4 + $0x18] sm:$0xff]
    %v2630 = vld [vmem:[#allocation4 + $0x20] sm:$0xff]
    %v2631 = vlaneseq
    %v2632 = vshrl.u32 %v2631, 7
    %v2633 = vsub.s32 3, %v2632
    %v2634 = vrot.slane %v1795, %v2633
    %v2635 = vlaneseq
    %v2636 = vshrl.u32 %v2635, 7
    %v2637 = vsub.s32 3, %v2636
    %v2638 = vrot.slane %v1796, %v2637
    %v2639 = vlaneseq
    %v2640 = vshrl.u32 %v2639, 7
    %v2641 = vsub.s32 3, %v2640
    %v2642 = vrot.slane %v1797, %v2641
    %v2643 = vlaneseq
    %v2644 = vshrl.u32 %v2643, 7
    %v2645 = vsub.s32 3, %v2644
    %v2646 = vrot.slane %v1798, %v2645
    %2651 = vrot.lane.b32.xlu0 %v2634, 94
    %v2652 = vpop.permute.xlu0 %2651
    %2653 = vrot.lane.b32.xlu0 %v2638, 94
    %v2654 = vpop.permute.xlu0 %2653
    %2655 = vrot.lane.b32.xlu0 %v2642, 94
    %v2656 = vpop.permute.xlu0 %2655
    %2657 = vrot.lane.b32.xlu0 %v2646, 94
    %v2658 = vpop.permute.xlu0 %2657
    %v2659 = vsel %vm2096, %v2652, %v2654
    %v2660 = vsel %vm2096, %v2654, %v2656
    %v2661 = vsel %vm2096, %v2656, %v2658
    %v2667 = vmul.f32 %v2626, %v2652
    %v2668 = vmul.f32 %v2627, %v2659
    %v2669 = vmul.f32 %v2628, %v2660
    %v2670 = vmul.f32 %v2629, %v2661
    %v2671 = vmul.f32 %v2630, %v2658
    %2677 = vrot.lane.b32.xlu0 %v2667, 34
    %v2678 = vpop.permute.xlu0 %2677
    %2679 = vrot.lane.b32.xlu0 %v2668, 34
    %v2680 = vpop.permute.xlu0 %2679
    %2681 = vrot.lane.b32.xlu0 %v2669, 34
    %v2682 = vpop.permute.xlu0 %2681
    %2683 = vrot.lane.b32.xlu0 %v2670, 34
    %v2684 = vpop.permute.xlu0 %2683
    %2685 = vrot.lane.b32.xlu0 %v2671, 34
    %v2686 = vpop.permute.xlu0 %2685
    %v2687 = vsel %vm2067, %v2678, %v2680
    %v2688 = vsel %vm2067, %v2680, %v2682
    %v2689 = vsel %vm2067, %v2682, %v2684
    %v2690 = vsel %vm2067, %v2684, %v2686
    %2695 = vst [vmem:[#allocation3 + $0x160] sm:$0xff] %v2687
    %2696 = vst [vmem:[#allocation3 + $0x168] sm:$0xff] %v2688
    %2697 = vst [vmem:[#allocation3 + $0x170] sm:$0xff] %v2689
    %2698 = vst [vmem:[#allocation3 + $0x178] sm:$0xff] %v2690
    %v2699 = vld [vmem:[#allocation4] sm:$0xff]
    %v2700 = vld [vmem:[#allocation4 + $0x8] sm:$0xff]
    %v2701 = vld [vmem:[#allocation4 + $0x10] sm:$0xff]
    %v2702 = vld [vmem:[#allocation4 + $0x18] sm:$0xff]
    %v2703 = vld [vmem:[#allocation4 + $0x20] sm:$0xff]
    %v2704 = vlaneseq
    %v2705 = vshrl.u32 %v2704, 7
    %v2706 = vsub.s32 4, %v2705
    %v2707 = vrot.slane %v1795, %v2706
    %v2708 = vlaneseq
    %v2709 = vshrl.u32 %v2708, 7
    %v2710 = vsub.s32 4, %v2709
    %v2711 = vrot.slane %v1796, %v2710
    %v2712 = vlaneseq
    %v2713 = vshrl.u32 %v2712, 7
    %v2714 = vsub.s32 4, %v2713
    %v2715 = vrot.slane %v1797, %v2714
    %v2716 = vlaneseq
    %v2717 = vshrl.u32 %v2716, 7
    %v2718 = vsub.s32 4, %v2717
    %v2719 = vrot.slane %v1798, %v2718
    %2724 = vrot.lane.b32.xlu0 %v2707, 96
    %v2725 = vpop.permute.xlu0 %2724
    %2726 = vrot.lane.b32.xlu0 %v2711, 96
    %v2727 = vpop.permute.xlu0 %2726
    %2728 = vrot.lane.b32.xlu0 %v2715, 96
    %v2729 = vpop.permute.xlu0 %2728
    %2730 = vrot.lane.b32.xlu0 %v2719, 96
    %v2731 = vpop.permute.xlu0 %2730
    %v2732 = vsel %vm244, %v2725, %v2727
    %v2733 = vsel %vm244, %v2727, %v2729
    %v2734 = vsel %vm244, %v2729, %v2731
    %v2740 = vmul.f32 %v2699, %v2725
    %v2741 = vmul.f32 %v2700, %v2732
    %v2742 = vmul.f32 %v2701, %v2733
    %v2743 = vmul.f32 %v2702, %v2734
    %v2744 = vmul.f32 %v2703, %v2731
    %2750 = vrot.lane.b32.xlu0 %v2740, 32
    %v2751 = vpop.permute.xlu0 %2750
    %2752 = vrot.lane.b32.xlu0 %v2741, 32
    %v2753 = vpop.permute.xlu0 %2752
    %2754 = vrot.lane.b32.xlu0 %v2742, 32
    %v2755 = vpop.permute.xlu0 %2754
    %2756 = vrot.lane.b32.xlu0 %v2743, 32
    %v2757 = vpop.permute.xlu0 %2756
    %2758 = vrot.lane.b32.xlu0 %v2744, 32
    %v2759 = vpop.permute.xlu0 %2758
    %v2760 = vsel %vm252, %v2751, %v2753
    %v2761 = vsel %vm252, %v2753, %v2755
    %v2762 = vsel %vm252, %v2755, %v2757
    %v2763 = vsel %vm252, %v2757, %v2759
    %2768 = vst [vmem:[#allocation3 + $0x180] sm:$0xff] %v2760
    %2769 = vst [vmem:[#allocation3 + $0x188] sm:$0xff] %v2761
    %2770 = vst [vmem:[#allocation3 + $0x190] sm:$0xff] %v2762
    %2771 = vst [vmem:[#allocation3 + $0x198] sm:$0xff] %v2763
    %v2772 = vld [vmem:[#allocation4] sm:$0xff]
    %v2773 = vld [vmem:[#allocation4 + $0x8] sm:$0xff]
    %v2774 = vld [vmem:[#allocation4 + $0x10] sm:$0xff]
    %v2775 = vld [vmem:[#allocation4 + $0x18] sm:$0xff]
    %v2776 = vld [vmem:[#allocation4 + $0x20] sm:$0xff]
    %v2777 = vlaneseq
    %v2778 = vshrl.u32 %v2777, 7
    %v2779 = vsub.s32 5, %v2778
    %v2780 = vrot.slane %v1795, %v2779
    %v2781 = vlaneseq
    %v2782 = vshrl.u32 %v2781, 7
    %v2783 = vsub.s32 5, %v2782
    %v2784 = vrot.slane %v1796, %v2783
    %v2785 = vlaneseq
    %v2786 = vshrl.u32 %v2785, 7
    %v2787 = vsub.s32 5, %v2786
    %v2788 = vrot.slane %v1797, %v2787
    %v2789 = vlaneseq
    %v2790 = vshrl.u32 %v2789, 7
    %v2791 = vsub.s32 5, %v2790
    %v2792 = vrot.slane %v1798, %v2791
    %2797 = vrot.lane.b32.xlu0 %v2780, 98
    %v2798 = vpop.permute.xlu0 %2797
    %2799 = vrot.lane.b32.xlu0 %v2784, 98
    %v2800 = vpop.permute.xlu0 %2799
    %2801 = vrot.lane.b32.xlu0 %v2788, 98
    %v2802 = vpop.permute.xlu0 %2801
    %2803 = vrot.lane.b32.xlu0 %v2792, 98
    %v2804 = vpop.permute.xlu0 %2803
    %v2805 = vsel %vm1948, %v2798, %v2800
    %v2806 = vsel %vm1948, %v2800, %v2802
    %v2807 = vsel %vm1948, %v2802, %v2804
    %v2813 = vmul.f32 %v2772, %v2798
    %v2814 = vmul.f32 %v2773, %v2805
    %v2815 = vmul.f32 %v2774, %v2806
    %v2816 = vmul.f32 %v2775, %v2807
    %v2817 = vmul.f32 %v2776, %v2804
    %2823 = vrot.lane.b32.xlu0 %v2813, 30
    %v2824 = vpop.permute.xlu0 %2823
    %2825 = vrot.lane.b32.xlu0 %v2814, 30
    %v2826 = vpop.permute.xlu0 %2825
    %2827 = vrot.lane.b32.xlu0 %v2815, 30
    %v2828 = vpop.permute.xlu0 %2827
    %2829 = vrot.lane.b32.xlu0 %v2816, 30
    %v2830 = vpop.permute.xlu0 %2829
    %2831 = vrot.lane.b32.xlu0 %v2817, 30
    %v2832 = vpop.permute.xlu0 %2831
    %v2833 = vsel %vm1919, %v2824, %v2826
    %v2834 = vsel %vm1919, %v2826, %v2828
    %v2835 = vsel %vm1919, %v2828, %v2830
    %v2836 = vsel %vm1919, %v2830, %v2832
    %2841 = vst [vmem:[#allocation3 + $0x1a0] sm:$0xff] %v2833
    %2842 = vst [vmem:[#allocation3 + $0x1a8] sm:$0xff] %v2834
    %2843 = vst [vmem:[#allocation3 + $0x1b0] sm:$0xff] %v2835
    %2844 = vst [vmem:[#allocation3 + $0x1b8] sm:$0xff] %v2836
    %v2845 = vld [vmem:[#allocation4] sm:$0xff]
    %v2846 = vld [vmem:[#allocation4 + $0x8] sm:$0xff]
    %v2847 = vld [vmem:[#allocation4 + $0x10] sm:$0xff]
    %v2848 = vld [vmem:[#allocation4 + $0x18] sm:$0xff]
    %v2849 = vld [vmem:[#allocation4 + $0x20] sm:$0xff]
    %v2850 = vlaneseq
    %v2851 = vshrl.u32 %v2850, 7
    %v2852 = vsub.s32 6, %v2851
    %v2853 = vrot.slane %v1795, %v2852
    %v2854 = vlaneseq
    %v2855 = vshrl.u32 %v2854, 7
    %v2856 = vsub.s32 6, %v2855
    %v2857 = vrot.slane %v1796, %v2856
    %v2858 = vlaneseq
    %v2859 = vshrl.u32 %v2858, 7
    %v2860 = vsub.s32 6, %v2859
    %v2861 = vrot.slane %v1797, %v2860
    %v2862 = vlaneseq
    %v2863 = vshrl.u32 %v2862, 7
    %v2864 = vsub.s32 6, %v2863
    %v2865 = vrot.slane %v1798, %v2864
    %2870 = vrot.lane.b32.xlu0 %v2853, 100
    %v2871 = vpop.permute.xlu0 %2870
    %2872 = vrot.lane.b32.xlu0 %v2857, 100
    %v2873 = vpop.permute.xlu0 %2872
    %2874 = vrot.lane.b32.xlu0 %v2861, 100
    %v2875 = vpop.permute.xlu0 %2874
    %2876 = vrot.lane.b32.xlu0 %v2865, 100
    %v2877 = vpop.permute.xlu0 %2876
    %v2878 = vsel %vm1873, %v2871, %v2873
    %v2879 = vsel %vm1873, %v2873, %v2875
    %v2880 = vsel %vm1873, %v2875, %v2877
    %v2886 = vmul.f32 %v2845, %v2871
    %v2887 = vmul.f32 %v2846, %v2878
    %v2888 = vmul.f32 %v2847, %v2879
    %v2889 = vmul.f32 %v2848, %v2880
    %v2890 = vmul.f32 %v2849, %v2877
    %2896 = vrot.lane.b32.xlu0 %v2886, 28
    %v2897 = vpop.permute.xlu0 %2896
    %2898 = vrot.lane.b32.xlu0 %v2887, 28
    %v2899 = vpop.permute.xlu0 %2898
    %2900 = vrot.lane.b32.xlu0 %v2888, 28
    %v2901 = vpop.permute.xlu0 %2900
    %2902 = vrot.lane.b32.xlu0 %v2889, 28
    %v2903 = vpop.permute.xlu0 %2902
    %2904 = vrot.lane.b32.xlu0 %v2890, 28
    %v2905 = vpop.permute.xlu0 %2904
    %v2906 = vsel %vm1844, %v2897, %v2899
    %v2907 = vsel %vm1844, %v2899, %v2901
    %v2908 = vsel %vm1844, %v2901, %v2903
    %v2909 = vsel %vm1844, %v2903, %v2905
    %2914 = vst [vmem:[#allocation3 + $0x1c0] sm:$0xff] %v2906
    %2915 = vst [vmem:[#allocation3 + $0x1c8] sm:$0xff] %v2907
    %2916 = vst [vmem:[#allocation3 + $0x1d0] sm:$0xff] %v2908
    %2917 = vst [vmem:[#allocation3 + $0x1d8] sm:$0xff] %v2909
    %v2918 = vld [vmem:[#allocation4] sm:$0xff]
    %v2919 = vld [vmem:[#allocation4 + $0x8] sm:$0xff]
    %v2920 = vld [vmem:[#allocation4 + $0x10] sm:$0xff]
    %v2921 = vld [vmem:[#allocation4 + $0x18] sm:$0xff]
    %v2922 = vld [vmem:[#allocation4 + $0x20] sm:$0xff]
    %v2923 = vlaneseq
    %v2924 = vshrl.u32 %v2923, 7
    %v2925 = vsub.s32 7, %v2924
    %v2926 = vrot.slane %v1795, %v2925
    %v2927 = vlaneseq
    %v2928 = vshrl.u32 %v2927, 7
    %v2929 = vsub.s32 7, %v2928
    %v2930 = vrot.slane %v1796, %v2929
    %v2931 = vlaneseq
    %v2932 = vshrl.u32 %v2931, 7
    %v2933 = vsub.s32 7, %v2932
    %v2934 = vrot.slane %v1797, %v2933
    %v2935 = vlaneseq
    %v2936 = vshrl.u32 %v2935, 7
    %v2937 = vsub.s32 7, %v2936
    %v2938 = vrot.slane %v1798, %v2937
    %2943 = vrot.lane.b32.xlu0 %v2926, 124
    %v2944 = vpop.permute.xlu0 %2943
    %2945 = vrot.lane.b32.xlu0 %v2930, 124
    %v2946 = vpop.permute.xlu0 %2945
    %2947 = vrot.lane.b32.xlu0 %v2934, 124
    %v2948 = vpop.permute.xlu0 %2947
    %2949 = vrot.lane.b32.xlu0 %v2938, 124
    %v2950 = vpop.permute.xlu0 %2949
    %vm2951 = vcmask 1014784
    %v2952 = vsel %vm2951, %v2944, %v2946
    %v2953 = vsel %vm2951, %v2946, %v2948
    %v2954 = vsel %vm2951, %v2948, %v2950
    %v2960 = vmul.f32 %v2918, %v2944
    %v2961 = vmul.f32 %v2919, %v2952
    %v2962 = vmul.f32 %v2920, %v2953
    %v2963 = vmul.f32 %v2921, %v2954
    %v2964 = vmul.f32 %v2922, %v2950
    %2970 = vrot.lane.b32.xlu0 %v2960, 4
    %v2971 = vpop.permute.xlu0 %2970
    %2972 = vrot.lane.b32.xlu0 %v2961, 4
    %v2973 = vpop.permute.xlu0 %2972
    %2974 = vrot.lane.b32.xlu0 %v2962, 4
    %v2975 = vpop.permute.xlu0 %2974
    %2976 = vrot.lane.b32.xlu0 %v2963, 4
    %v2977 = vpop.permute.xlu0 %2976
    %2978 = vrot.lane.b32.xlu0 %v2964, 4
    %v2979 = vpop.permute.xlu0 %2978
    %vm2980 = vcmask 31744
    %v2981 = vsel %vm2980, %v2971, %v2973
    %v2982 = vsel %vm2980, %v2973, %v2975
    %v2983 = vsel %vm2980, %v2975, %v2977
    %v2984 = vsel %vm2980, %v2977, %v2979
    %2989 = vst [vmem:[#allocation3 + $0x1e0] sm:$0xff] %v2981
    %2990 = vst [vmem:[#allocation3 + $0x1e8] sm:$0xff] %v2982
    %2991 = vst [vmem:[#allocation3 + $0x1f0] sm:$0xff] %v2983
    %2992 = vst [vmem:[#allocation3 + $0x1f8] sm:$0xff] %v2984
    %v2993 = vld [vmem:[#allocation4] sm:$0xff]
    %v2994 = vld [vmem:[#allocation4 + $0x8] sm:$0xff]
    %v2995 = vld [vmem:[#allocation4 + $0x10] sm:$0xff]
    %v2996 = vld [vmem:[#allocation4 + $0x18] sm:$0xff]
    %v2997 = vld [vmem:[#allocation4 + $0x20] sm:$0xff]
    %v2998 = vlaneseq
    %v2999 = vshrl.u32 %v2998, 7
    %v3000 = vsub.s32 0, %v2999
    %v3001 = vrot.slane %v1799, %v3000
    %v3002 = vlaneseq
    %v3003 = vshrl.u32 %v3002, 7
    %v3004 = vsub.s32 0, %v3003
    %v3005 = vrot.slane %v1800, %v3004
    %v3006 = vlaneseq
    %v3007 = vshrl.u32 %v3006, 7
    %v3008 = vsub.s32 0, %v3007
    %v3009 = vrot.slane %v1801, %v3008
    %v3010 = vlaneseq
    %v3011 = vshrl.u32 %v3010, 7
    %v3012 = vsub.s32 0, %v3011
    %v3013 = vrot.slane %v1802, %v3012
    %3018 = vrot.lane.b32.xlu0 %v3001, 126
    %v3019 = vpop.permute.xlu0 %3018
    %3020 = vrot.lane.b32.xlu0 %v3005, 126
    %v3021 = vpop.permute.xlu0 %3020
    %3022 = vrot.lane.b32.xlu0 %v3009, 126
    %v3023 = vpop.permute.xlu0 %3022
    %3024 = vrot.lane.b32.xlu0 %v3013, 126
    %v3025 = vpop.permute.xlu0 %3024
    %vm3026 = vcmask 1031168
    %v3027 = vsel %vm3026, %v3019, %v3021
    %v3028 = vsel %vm3026, %v3021, %v3023
    %v3029 = vsel %vm3026, %v3023, %v3025
    %v3035 = vmul.f32 %v2993, %v3019
    %v3036 = vmul.f32 %v2994, %v3027
    %v3037 = vmul.f32 %v2995, %v3028
    %v3038 = vmul.f32 %v2996, %v3029
    %v3039 = vmul.f32 %v2997, %v3025
    %3045 = vrot.lane.b32.xlu0 %v3035, 2
    %v3046 = vpop.permute.xlu0 %3045
    %3047 = vrot.lane.b32.xlu0 %v3036, 2
    %v3048 = vpop.permute.xlu0 %3047
    %3049 = vrot.lane.b32.xlu0 %v3037, 2
    %v3050 = vpop.permute.xlu0 %3049
    %3051 = vrot.lane.b32.xlu0 %v3038, 2
    %v3052 = vpop.permute.xlu0 %3051
    %3053 = vrot.lane.b32.xlu0 %v3039, 2
    %v3054 = vpop.permute.xlu0 %3053
    %vm3055 = vcmask 15360
    %v3056 = vsel %vm3055, %v3046, %v3048
    %v3057 = vsel %vm3055, %v3048, %v3050
    %v3058 = vsel %vm3055, %v3050, %v3052
    %v3059 = vsel %vm3055, %v3052, %v3054
    %3064 = vst [vmem:[#allocation3 + $0x200] sm:$0xff] %v3056
    %3065 = vst [vmem:[#allocation3 + $0x208] sm:$0xff] %v3057
    %3066 = vst [vmem:[#allocation3 + $0x210] sm:$0xff] %v3058
    %3067 = vst [vmem:[#allocation3 + $0x218] sm:$0xff] %v3059
    %v3068 = vld [vmem:[#allocation4 + $0x8] sm:$0xff]
    %v3069 = vld [vmem:[#allocation4 + $0x10] sm:$0xff]
    %v3070 = vld [vmem:[#allocation4 + $0x18] sm:$0xff]
    %v3071 = vld [vmem:[#allocation4 + $0x20] sm:$0xff]
    %v3072 = vlaneseq
    %v3073 = vshrl.u32 %v3072, 7
    %v3074 = vsub.s32 1, %v3073
    %v3075 = vrot.slane %v1799, %v3074
    %v3076 = vlaneseq
    %v3077 = vshrl.u32 %v3076, 7
    %v3078 = vsub.s32 1, %v3077
    %v3079 = vrot.slane %v1800, %v3078
    %v3080 = vlaneseq
    %v3081 = vshrl.u32 %v3080, 7
    %v3082 = vsub.s32 1, %v3081
    %v3083 = vrot.slane %v1801, %v3082
    %v3084 = vlaneseq
    %v3085 = vshrl.u32 %v3084, 7
    %v3086 = vsub.s32 1, %v3085
    %v3087 = vrot.slane %v1802, %v3086
    %v3088 = vmul.f32 %v3068, %v3075
    %v3089 = vmul.f32 %v3069, %v3079
    %v3090 = vmul.f32 %v3070, %v3083
    %v3091 = vmul.f32 %v3071, %v3087
    %3092 = vst [vmem:[#allocation3 + $0x220] sm:$0xff] %v3088
    %3093 = vst [vmem:[#allocation3 + $0x228] sm:$0xff] %v3089
    %3094 = vst [vmem:[#allocation3 + $0x230] sm:$0xff] %v3090
    %3095 = vst [vmem:[#allocation3 + $0x238] sm:$0xff] %v3091
    %v3096 = vld [vmem:[#allocation4 + $0x8] sm:$0xff]
    %v3097 = vld [vmem:[#allocation4 + $0x10] sm:$0xff]
    %v3098 = vld [vmem:[#allocation4 + $0x18] sm:$0xff]
    %v3099 = vld [vmem:[#allocation4 + $0x20] sm:$0xff]
    %v3100 = vld [vmem:[#allocation4 + $0x28] sm:$0xff]
    %v3101 = vlaneseq
    %v3102 = vshrl.u32 %v3101, 7
    %v3103 = vsub.s32 2, %v3102
    %v3104 = vrot.slane %v1799, %v3103
    %v3105 = vlaneseq
    %v3106 = vshrl.u32 %v3105, 7
    %v3107 = vsub.s32 2, %v3106
    %v3108 = vrot.slane %v1800, %v3107
    %v3109 = vlaneseq
    %v3110 = vshrl.u32 %v3109, 7
    %v3111 = vsub.s32 2, %v3110
    %v3112 = vrot.slane %v1801, %v3111
    %v3113 = vlaneseq
    %v3114 = vshrl.u32 %v3113, 7
    %v3115 = vsub.s32 2, %v3114
    %v3116 = vrot.slane %v1802, %v3115
    %3121 = vrot.lane.b32.xlu0 %v3104, 2
    %v3122 = vpop.permute.xlu0 %3121
    %3123 = vrot.lane.b32.xlu0 %v3108, 2
    %v3124 = vpop.permute.xlu0 %3123
    %3125 = vrot.lane.b32.xlu0 %v3112, 2
    %v3126 = vpop.permute.xlu0 %3125
    %3127 = vrot.lane.b32.xlu0 %v3116, 2
    %v3128 = vpop.permute.xlu0 %3127
    %v3129 = vsel %vm3055, %v3122, %v3124
    %v3130 = vsel %vm3055, %v3124, %v3126
    %v3131 = vsel %vm3055, %v3126, %v3128
    %v3137 = vmul.f32 %v3096, %v3122
    %v3138 = vmul.f32 %v3097, %v3129
    %v3139 = vmul.f32 %v3098, %v3130
    %v3140 = vmul.f32 %v3099, %v3131
    %v3141 = vmul.f32 %v3100, %v3128
    %3147 = vrot.lane.b32.xlu0 %v3137, 126
    %v3148 = vpop.permute.xlu0 %3147
    %3149 = vrot.lane.b32.xlu0 %v3138, 126
    %v3150 = vpop.permute.xlu0 %3149
    %3151 = vrot.lane.b32.xlu0 %v3139, 126
    %v3152 = vpop.permute.xlu0 %3151
    %3153 = vrot.lane.b32.xlu0 %v3140, 126
    %v3154 = vpop.permute.xlu0 %3153
    %3155 = vrot.lane.b32.xlu0 %v3141, 126
    %v3156 = vpop.permute.xlu0 %3155
    %v3157 = vsel %vm3026, %v3148, %v3150
    %v3158 = vsel %vm3026, %v3150, %v3152
    %v3159 = vsel %vm3026, %v3152, %v3154
    %v3160 = vsel %vm3026, %v3154, %v3156
    %3165 = vst [vmem:[#allocation3 + $0x240] sm:$0xff] %v3157
    %3166 = vst [vmem:[#allocation3 + $0x248] sm:$0xff] %v3158
    %3167 = vst [vmem:[#allocation3 + $0x250] sm:$0xff] %v3159
    %3168 = vst [vmem:[#allocation3 + $0x258] sm:$0xff] %v3160
    %v3169 = vld [vmem:[#allocation4 + $0x8] sm:$0xff]
    %v3170 = vld [vmem:[#allocation4 + $0x10] sm:$0xff]
    %v3171 = vld [vmem:[#allocation4 + $0x18] sm:$0xff]
    %v3172 = vld [vmem:[#allocation4 + $0x20] sm:$0xff]
    %v3173 = vld [vmem:[#allocation4 + $0x28] sm:$0xff]
    %v3174 = vlaneseq
    %v3175 = vshrl.u32 %v3174, 7
    %v3176 = vsub.s32 3, %v3175
    %v3177 = vrot.slane %v1799, %v3176
    %v3178 = vlaneseq
    %v3179 = vshrl.u32 %v3178, 7
    %v3180 = vsub.s32 3, %v3179
    %v3181 = vrot.slane %v1800, %v3180
    %v3182 = vlaneseq
    %v3183 = vshrl.u32 %v3182, 7
    %v3184 = vsub.s32 3, %v3183
    %v3185 = vrot.slane %v1801, %v3184
    %v3186 = vlaneseq
    %v3187 = vshrl.u32 %v3186, 7
    %v3188 = vsub.s32 3, %v3187
    %v3189 = vrot.slane %v1802, %v3188
    %3194 = vrot.lane.b32.xlu0 %v3177, 4
    %v3195 = vpop.permute.xlu0 %3194
    %3196 = vrot.lane.b32.xlu0 %v3181, 4
    %v3197 = vpop.permute.xlu0 %3196
    %3198 = vrot.lane.b32.xlu0 %v3185, 4
    %v3199 = vpop.permute.xlu0 %3198
    %3200 = vrot.lane.b32.xlu0 %v3189, 4
    %v3201 = vpop.permute.xlu0 %3200
    %v3202 = vsel %vm2980, %v3195, %v3197
    %v3203 = vsel %vm2980, %v3197, %v3199
    %v3204 = vsel %vm2980, %v3199, %v3201
    %v3210 = vmul.f32 %v3169, %v3195
    %v3211 = vmul.f32 %v3170, %v3202
    %v3212 = vmul.f32 %v3171, %v3203
    %v3213 = vmul.f32 %v3172, %v3204
    %v3214 = vmul.f32 %v3173, %v3201
    %3220 = vrot.lane.b32.xlu0 %v3210, 124
    %v3221 = vpop.permute.xlu0 %3220
    %3222 = vrot.lane.b32.xlu0 %v3211, 124
    %v3223 = vpop.permute.xlu0 %3222
    %3224 = vrot.lane.b32.xlu0 %v3212, 124
    %v3225 = vpop.permute.xlu0 %3224
    %3226 = vrot.lane.b32.xlu0 %v3213, 124
    %v3227 = vpop.permute.xlu0 %3226
    %3228 = vrot.lane.b32.xlu0 %v3214, 124
    %v3229 = vpop.permute.xlu0 %3228
    %v3230 = vsel %vm2951, %v3221, %v3223
    %v3231 = vsel %vm2951, %v3223, %v3225
    %v3232 = vsel %vm2951, %v3225, %v3227
    %v3233 = vsel %vm2951, %v3227, %v3229
    %3238 = vst [vmem:[#allocation3 + $0x260] sm:$0xff] %v3230
    %3239 = vst [vmem:[#allocation3 + $0x268] sm:$0xff] %v3231
    %3240 = vst [vmem:[#allocation3 + $0x270] sm:$0xff] %v3232
    %3241 = vst [vmem:[#allocation3 + $0x278] sm:$0xff] %v3233
    %v3242 = vld [vmem:[#allocation4 + $0x8] sm:$0xff]
    %v3243 = vld [vmem:[#allocation4 + $0x10] sm:$0xff]
    %v3244 = vld [vmem:[#allocation4 + $0x18] sm:$0xff]
    %v3245 = vld [vmem:[#allocation4 + $0x20] sm:$0xff]
    %v3246 = vld [vmem:[#allocation4 + $0x28] sm:$0xff]
    %v3247 = vlaneseq
    %v3248 = vshrl.u32 %v3247, 7
    %v3249 = vsub.s32 4, %v3248
    %v3250 = vrot.slane %v1799, %v3249
    %v3251 = vlaneseq
    %v3252 = vshrl.u32 %v3251, 7
    %v3253 = vsub.s32 4, %v3252
    %v3254 = vrot.slane %v1800, %v3253
    %v3255 = vlaneseq
    %v3256 = vshrl.u32 %v3255, 7
    %v3257 = vsub.s32 4, %v3256
    %v3258 = vrot.slane %v1801, %v3257
    %v3259 = vlaneseq
    %v3260 = vshrl.u32 %v3259, 7
    %v3261 = vsub.s32 4, %v3260
    %v3262 = vrot.slane %v1802, %v3261
    %3267 = vrot.lane.b32.xlu0 %v3250, 28
    %v3268 = vpop.permute.xlu0 %3267
    %3269 = vrot.lane.b32.xlu0 %v3254, 28
    %v3270 = vpop.permute.xlu0 %3269
    %3271 = vrot.lane.b32.xlu0 %v3258, 28
    %v3272 = vpop.permute.xlu0 %3271
    %3273 = vrot.lane.b32.xlu0 %v3262, 28
    %v3274 = vpop.permute.xlu0 %3273
    %v3275 = vsel %vm1844, %v3268, %v3270
    %v3276 = vsel %vm1844, %v3270, %v3272
    %v3277 = vsel %vm1844, %v3272, %v3274
    %v3283 = vmul.f32 %v3242, %v3268
    %v3284 = vmul.f32 %v3243, %v3275
    %v3285 = vmul.f32 %v3244, %v3276
    %v3286 = vmul.f32 %v3245, %v3277
    %v3287 = vmul.f32 %v3246, %v3274
    %3293 = vrot.lane.b32.xlu0 %v3283, 100
    %v3294 = vpop.permute.xlu0 %3293
    %3295 = vrot.lane.b32.xlu0 %v3284, 100
    %v3296 = vpop.permute.xlu0 %3295
    %3297 = vrot.lane.b32.xlu0 %v3285, 100
    %v3298 = vpop.permute.xlu0 %3297
    %3299 = vrot.lane.b32.xlu0 %v3286, 100
    %v3300 = vpop.permute.xlu0 %3299
    %3301 = vrot.lane.b32.xlu0 %v3287, 100
    %v3302 = vpop.permute.xlu0 %3301
    %v3303 = vsel %vm1873, %v3294, %v3296
    %v3304 = vsel %vm1873, %v3296, %v3298
    %v3305 = vsel %vm1873, %v3298, %v3300
    %v3306 = vsel %vm1873, %v3300, %v3302
    %3311 = vst [vmem:[#allocation3 + $0x280] sm:$0xff] %v3303
    %3312 = vst [vmem:[#allocation3 + $0x288] sm:$0xff] %v3304
    %3313 = vst [vmem:[#allocation3 + $0x290] sm:$0xff] %v3305
    %3314 = vst [vmem:[#allocation3 + $0x298] sm:$0xff] %v3306
    %v3315 = vld [vmem:[#allocation4 + $0x8] sm:$0xff]
    %v3316 = vld [vmem:[#allocation4 + $0x10] sm:$0xff]
    %v3317 = vld [vmem:[#allocation4 + $0x18] sm:$0xff]
    %v3318 = vld [vmem:[#allocation4 + $0x20] sm:$0xff]
    %v3319 = vld [vmem:[#allocation4 + $0x28] sm:$0xff]
    %v3320 = vlaneseq
    %v3321 = vshrl.u32 %v3320, 7
    %v3322 = vsub.s32 5, %v3321
    %v3323 = vrot.slane %v1799, %v3322
    %v3324 = vlaneseq
    %v3325 = vshrl.u32 %v3324, 7
    %v3326 = vsub.s32 5, %v3325
    %v3327 = vrot.slane %v1800, %v3326
    %v3328 = vlaneseq
    %v3329 = vshrl.u32 %v3328, 7
    %v3330 = vsub.s32 5, %v3329
    %v3331 = vrot.slane %v1801, %v3330
    %v3332 = vlaneseq
    %v3333 = vshrl.u32 %v3332, 7
    %v3334 = vsub.s32 5, %v3333
    %v3335 = vrot.slane %v1802, %v3334
    %3340 = vrot.lane.b32.xlu0 %v3323, 30
    %v3341 = vpop.permute.xlu0 %3340
    %3342 = vrot.lane.b32.xlu0 %v3327, 30
    %v3343 = vpop.permute.xlu0 %3342
    %3344 = vrot.lane.b32.xlu0 %v3331, 30
    %v3345 = vpop.permute.xlu0 %3344
    %3346 = vrot.lane.b32.xlu0 %v3335, 30
    %v3347 = vpop.permute.xlu0 %3346
    %v3348 = vsel %vm1919, %v3341, %v3343
    %v3349 = vsel %vm1919, %v3343, %v3345
    %v3350 = vsel %vm1919, %v3345, %v3347
    %v3356 = vmul.f32 %v3315, %v3341
    %v3357 = vmul.f32 %v3316, %v3348
    %v3358 = vmul.f32 %v3317, %v3349
    %v3359 = vmul.f32 %v3318, %v3350
    %v3360 = vmul.f32 %v3319, %v3347
    %3366 = vrot.lane.b32.xlu0 %v3356, 98
    %v3367 = vpop.permute.xlu0 %3366
    %3368 = vrot.lane.b32.xlu0 %v3357, 98
    %v3369 = vpop.permute.xlu0 %3368
    %3370 = vrot.lane.b32.xlu0 %v3358, 98
    %v3371 = vpop.permute.xlu0 %3370
    %3372 = vrot.lane.b32.xlu0 %v3359, 98
    %v3373 = vpop.permute.xlu0 %3372
    %3374 = vrot.lane.b32.xlu0 %v3360, 98
    %v3375 = vpop.permute.xlu0 %3374
    %v3376 = vsel %vm1948, %v3367, %v3369
    %v3377 = vsel %vm1948, %v3369, %v3371
    %v3378 = vsel %vm1948, %v3371, %v3373
    %v3379 = vsel %vm1948, %v3373, %v3375
    %3384 = vst [vmem:[#allocation3 + $0x2a0] sm:$0xff] %v3376
    %3385 = vst [vmem:[#allocation3 + $0x2a8] sm:$0xff] %v3377
    %3386 = vst [vmem:[#allocation3 + $0x2b0] sm:$0xff] %v3378
    %3387 = vst [vmem:[#allocation3 + $0x2b8] sm:$0xff] %v3379
    %v3388 = vld [vmem:[#allocation4 + $0x8] sm:$0xff]
    %v3389 = vld [vmem:[#allocation4 + $0x10] sm:$0xff]
    %v3390 = vld [vmem:[#allocation4 + $0x18] sm:$0xff]
    %v3391 = vld [vmem:[#allocation4 + $0x20] sm:$0xff]
    %v3392 = vld [vmem:[#allocation4 + $0x28] sm:$0xff]
    %v3393 = vlaneseq
    %v3394 = vshrl.u32 %v3393, 7
    %v3395 = vsub.s32 6, %v3394
    %v3396 = vrot.slane %v1799, %v3395
    %v3397 = vlaneseq
    %v3398 = vshrl.u32 %v3397, 7
    %v3399 = vsub.s32 6, %v3398
    %v3400 = vrot.slane %v1800, %v3399
    %v3401 = vlaneseq
    %v3402 = vshrl.u32 %v3401, 7
    %v3403 = vsub.s32 6, %v3402
    %v3404 = vrot.slane %v1801, %v3403
    %v3405 = vlaneseq
    %v3406 = vshrl.u32 %v3405, 7
    %v3407 = vsub.s32 6, %v3406
    %v3408 = vrot.slane %v1802, %v3407
    %3413 = vrot.lane.b32.xlu0 %v3396, 32
    %v3414 = vpop.permute.xlu0 %3413
    %3415 = vrot.lane.b32.xlu0 %v3400, 32
    %v3416 = vpop.permute.xlu0 %3415
    %3417 = vrot.lane.b32.xlu0 %v3404, 32
    %v3418 = vpop.permute.xlu0 %3417
    %3419 = vrot.lane.b32.xlu0 %v3408, 32
    %v3420 = vpop.permute.xlu0 %3419
    %v3421 = vsel %vm252, %v3414, %v3416
    %v3422 = vsel %vm252, %v3416, %v3418
    %v3423 = vsel %vm252, %v3418, %v3420
    %v3429 = vmul.f32 %v3388, %v3414
    %v3430 = vmul.f32 %v3389, %v3421
    %v3431 = vmul.f32 %v3390, %v3422
    %v3432 = vmul.f32 %v3391, %v3423
    %v3433 = vmul.f32 %v3392, %v3420
    %3439 = vrot.lane.b32.xlu0 %v3429, 96
    %v3440 = vpop.permute.xlu0 %3439
    %3441 = vrot.lane.b32.xlu0 %v3430, 96
    %v3442 = vpop.permute.xlu0 %3441
    %3443 = vrot.lane.b32.xlu0 %v3431, 96
    %v3444 = vpop.permute.xlu0 %3443
    %3445 = vrot.lane.b32.xlu0 %v3432, 96
    %v3446 = vpop.permute.xlu0 %3445
    %3447 = vrot.lane.b32.xlu0 %v3433, 96
    %v3448 = vpop.permute.xlu0 %3447
    %v3449 = vsel %vm244, %v3440, %v3442
    %v3450 = vsel %vm244, %v3442, %v3444
    %v3451 = vsel %vm244, %v3444, %v3446
    %v3452 = vsel %vm244, %v3446, %v3448
    %3457 = vst [vmem:[#allocation3 + $0x2c0] sm:$0xff] %v3449
    %3458 = vst [vmem:[#allocation3 + $0x2c8] sm:$0xff] %v3450
    %3459 = vst [vmem:[#allocation3 + $0x2d0] sm:$0xff] %v3451
    %3460 = vst [vmem:[#allocation3 + $0x2d8] sm:$0xff] %v3452
    %v3461 = vld [vmem:[#allocation4 + $0x8] sm:$0xff]
    %v3462 = vld [vmem:[#allocation4 + $0x10] sm:$0xff]
    %v3463 = vld [vmem:[#allocation4 + $0x18] sm:$0xff]
    %v3464 = vld [vmem:[#allocation4 + $0x20] sm:$0xff]
    %v3465 = vld [vmem:[#allocation4 + $0x28] sm:$0xff]
    %v3466 = vlaneseq
    %v3467 = vshrl.u32 %v3466, 7
    %v3468 = vsub.s32 7, %v3467
    %v3469 = vrot.slane %v1799, %v3468
    %v3470 = vlaneseq
    %v3471 = vshrl.u32 %v3470, 7
    %v3472 = vsub.s32 7, %v3471
    %v3473 = vrot.slane %v1800, %v3472
    %v3474 = vlaneseq
    %v3475 = vshrl.u32 %v3474, 7
    %v3476 = vsub.s32 7, %v3475
    %v3477 = vrot.slane %v1801, %v3476
    %v3478 = vlaneseq
    %v3479 = vshrl.u32 %v3478, 7
    %v3480 = vsub.s32 7, %v3479
    %v3481 = vrot.slane %v1802, %v3480
    %3486 = vrot.lane.b32.xlu0 %v3469, 34
    %v3487 = vpop.permute.xlu0 %3486
    %3488 = vrot.lane.b32.xlu0 %v3473, 34
    %v3489 = vpop.permute.xlu0 %3488
    %3490 = vrot.lane.b32.xlu0 %v3477, 34
    %v3491 = vpop.permute.xlu0 %3490
    %3492 = vrot.lane.b32.xlu0 %v3481, 34
    %v3493 = vpop.permute.xlu0 %3492
    %v3494 = vsel %vm2067, %v3487, %v3489
    %v3495 = vsel %vm2067, %v3489, %v3491
    %v3496 = vsel %vm2067, %v3491, %v3493
    %v3502 = vmul.f32 %v3461, %v3487
    %v3503 = vmul.f32 %v3462, %v3494
    %v3504 = vmul.f32 %v3463, %v3495
    %v3505 = vmul.f32 %v3464, %v3496
    %v3506 = vmul.f32 %v3465, %v3493
    %3512 = vrot.lane.b32.xlu0 %v3502, 94
    %v3513 = vpop.permute.xlu0 %3512
    %3514 = vrot.lane.b32.xlu0 %v3503, 94
    %v3515 = vpop.permute.xlu0 %3514
    %3516 = vrot.lane.b32.xlu0 %v3504, 94
    %v3517 = vpop.permute.xlu0 %3516
    %3518 = vrot.lane.b32.xlu0 %v3505, 94
    %v3519 = vpop.permute.xlu0 %3518
    %3520 = vrot.lane.b32.xlu0 %v3506, 94
    %v3521 = vpop.permute.xlu0 %3520
    %v3522 = vsel %vm2096, %v3513, %v3515
    %v3523 = vsel %vm2096, %v3515, %v3517
    %v3524 = vsel %vm2096, %v3517, %v3519
    %v3525 = vsel %vm2096, %v3519, %v3521
    %3530 = vst [vmem:[#allocation3 + $0x2e0] sm:$0xff] %v3522
    %3531 = vst [vmem:[#allocation3 + $0x2e8] sm:$0xff] %v3523
    %3532 = vst [vmem:[#allocation3 + $0x2f0] sm:$0xff] %v3524
    %3533 = vst [vmem:[#allocation3 + $0x2f8] sm:$0xff] %v3525
    %v3534 = vld [vmem:[#allocation4 + $0x8] sm:$0xff]
    %v3535 = vld [vmem:[#allocation4 + $0x10] sm:$0xff]
    %v3536 = vld [vmem:[#allocation4 + $0x18] sm:$0xff]
    %v3537 = vld [vmem:[#allocation4 + $0x20] sm:$0xff]
    %v3538 = vld [vmem:[#allocation4 + $0x28] sm:$0xff]
    %v3539 = vlaneseq
    %v3540 = vshrl.u32 %v3539, 7
    %v3541 = vsub.s32 0, %v3540
    %v3542 = vrot.slane %v1803, %v3541
    %v3543 = vlaneseq
    %v3544 = vshrl.u32 %v3543, 7
    %v3545 = vsub.s32 0, %v3544
    %v3546 = vrot.slane %v1804, %v3545
    %v3547 = vlaneseq
    %v3548 = vshrl.u32 %v3547, 7
    %v3549 = vsub.s32 0, %v3548
    %v3550 = vrot.slane %v1805, %v3549
    %v3551 = vlaneseq
    %v3552 = vshrl.u32 %v3551, 7
    %v3553 = vsub.s32 0, %v3552
    %v3554 = vrot.slane %v1806, %v3553
    %3559 = vrot.lane.b32.xlu0 %v3542, 36
    %v3560 = vpop.permute.xlu0 %3559
    %3561 = vrot.lane.b32.xlu0 %v3546, 36
    %v3562 = vpop.permute.xlu0 %3561
    %3563 = vrot.lane.b32.xlu0 %v3550, 36
    %v3564 = vpop.permute.xlu0 %3563
    %3565 = vrot.lane.b32.xlu0 %v3554, 36
    %v3566 = vpop.permute.xlu0 %3565
    %v3567 = vsel %vm2142, %v3560, %v3562
    %v3568 = vsel %vm2142, %v3562, %v3564
    %v3569 = vsel %vm2142, %v3564, %v3566
    %v3575 = vmul.f32 %v3534, %v3560
    %v3576 = vmul.f32 %v3535, %v3567
    %v3577 = vmul.f32 %v3536, %v3568
    %v3578 = vmul.f32 %v3537, %v3569
    %v3579 = vmul.f32 %v3538, %v3566
    %3585 = vrot.lane.b32.xlu0 %v3575, 92
    %v3586 = vpop.permute.xlu0 %3585
    %3587 = vrot.lane.b32.xlu0 %v3576, 92
    %v3588 = vpop.permute.xlu0 %3587
    %3589 = vrot.lane.b32.xlu0 %v3577, 92
    %v3590 = vpop.permute.xlu0 %3589
    %3591 = vrot.lane.b32.xlu0 %v3578, 92
    %v3592 = vpop.permute.xlu0 %3591
    %3593 = vrot.lane.b32.xlu0 %v3579, 92
    %v3594 = vpop.permute.xlu0 %3593
    %v3595 = vsel %vm2171, %v3586, %v3588
    %v3596 = vsel %vm2171, %v3588, %v3590
    %v3597 = vsel %vm2171, %v3590, %v3592
    %v3598 = vsel %vm2171, %v3592, %v3594
    %3603 = vst [vmem:[#allocation3 + $0x300] sm:$0xff] %v3595
    %3604 = vst [vmem:[#allocation3 + $0x308] sm:$0xff] %v3596
    %3605 = vst [vmem:[#allocation3 + $0x310] sm:$0xff] %v3597
    %3606 = vst [vmem:[#allocation3 + $0x318] sm:$0xff] %v3598
    %v3607 = vld [vmem:[#allocation4 + $0x8] sm:$0xff]
    %v3608 = vld [vmem:[#allocation4 + $0x10] sm:$0xff]
    %v3609 = vld [vmem:[#allocation4 + $0x18] sm:$0xff]
    %v3610 = vld [vmem:[#allocation4 + $0x20] sm:$0xff]
    %v3611 = vld [vmem:[#allocation4 + $0x28] sm:$0xff]
    %v3612 = vlaneseq
    %v3613 = vshrl.u32 %v3612, 7
    %v3614 = vsub.s32 1, %v3613
    %v3615 = vrot.slane %v1803, %v3614
    %v3616 = vlaneseq
    %v3617 = vshrl.u32 %v3616, 7
    %v3618 = vsub.s32 1, %v3617
    %v3619 = vrot.slane %v1804, %v3618
    %v3620 = vlaneseq
    %v3621 = vshrl.u32 %v3620, 7
    %v3622 = vsub.s32 1, %v3621
    %v3623 = vrot.slane %v1805, %v3622
    %v3624 = vlaneseq
    %v3625 = vshrl.u32 %v3624, 7
    %v3626 = vsub.s32 1, %v3625
    %v3627 = vrot.slane %v1806, %v3626
    %3632 = vrot.lane.b32.xlu0 %v3615, 60
    %v3633 = vpop.permute.xlu0 %3632
    %3634 = vrot.lane.b32.xlu0 %v3619, 60
    %v3635 = vpop.permute.xlu0 %3634
    %3636 = vrot.lane.b32.xlu0 %v3623, 60
    %v3637 = vpop.permute.xlu0 %3636
    %3638 = vrot.lane.b32.xlu0 %v3627, 60
    %v3639 = vpop.permute.xlu0 %3638
    %v3640 = vsel %vm2217, %v3633, %v3635
    %v3641 = vsel %vm2217, %v3635, %v3637
    %v3642 = vsel %vm2217, %v3637, %v3639
    %v3648 = vmul.f32 %v3607, %v3633
    %v3649 = vmul.f32 %v3608, %v3640
    %v3650 = vmul.f32 %v3609, %v3641
    %v3651 = vmul.f32 %v3610, %v3642
    %v3652 = vmul.f32 %v3611, %v3639
    %3658 = vrot.lane.b32.xlu0 %v3648, 68
    %v3659 = vpop.permute.xlu0 %3658
    %3660 = vrot.lane.b32.xlu0 %v3649, 68
    %v3661 = vpop.permute.xlu0 %3660
    %3662 = vrot.lane.b32.xlu0 %v3650, 68
    %v3663 = vpop.permute.xlu0 %3662
    %3664 = vrot.lane.b32.xlu0 %v3651, 68
    %v3665 = vpop.permute.xlu0 %3664
    %3666 = vrot.lane.b32.xlu0 %v3652, 68
    %v3667 = vpop.permute.xlu0 %3666
    %v3668 = vsel %vm2246, %v3659, %v3661
    %v3669 = vsel %vm2246, %v3661, %v3663
    %v3670 = vsel %vm2246, %v3663, %v3665
    %v3671 = vsel %vm2246, %v3665, %v3667
    %3676 = vst [vmem:[#allocation3 + $0x320] sm:$0xff] %v3668
    %3677 = vst [vmem:[#allocation3 + $0x328] sm:$0xff] %v3669
    %3678 = vst [vmem:[#allocation3 + $0x330] sm:$0xff] %v3670
    %3679 = vst [vmem:[#allocation3 + $0x338] sm:$0xff] %v3671
    %v3680 = vld [vmem:[#allocation4 + $0x8] sm:$0xff]
    %v3681 = vld [vmem:[#allocation4 + $0x10] sm:$0xff]
    %v3682 = vld [vmem:[#allocation4 + $0x18] sm:$0xff]
    %v3683 = vld [vmem:[#allocation4 + $0x20] sm:$0xff]
    %v3684 = vld [vmem:[#allocation4 + $0x28] sm:$0xff]
    %v3685 = vlaneseq
    %v3686 = vshrl.u32 %v3685, 7
    %v3687 = vsub.s32 2, %v3686
    %v3688 = vrot.slane %v1803, %v3687
    %v3689 = vlaneseq
    %v3690 = vshrl.u32 %v3689, 7
    %v3691 = vsub.s32 2, %v3690
    %v3692 = vrot.slane %v1804, %v3691
    %v3693 = vlaneseq
    %v3694 = vshrl.u32 %v3693, 7
    %v3695 = vsub.s32 2, %v3694
    %v3696 = vrot.slane %v1805, %v3695
    %v3697 = vlaneseq
    %v3698 = vshrl.u32 %v3697, 7
    %v3699 = vsub.s32 2, %v3698
    %v3700 = vrot.slane %v1806, %v3699
    %3705 = vrot.lane.b32.xlu0 %v3688, 62
    %v3706 = vpop.permute.xlu0 %3705
    %3707 = vrot.lane.b32.xlu0 %v3692, 62
    %v3708 = vpop.permute.xlu0 %3707
    %3709 = vrot.lane.b32.xlu0 %v3696, 62
    %v3710 = vpop.permute.xlu0 %3709
    %3711 = vrot.lane.b32.xlu0 %v3700, 62
    %v3712 = vpop.permute.xlu0 %3711
    %v3713 = vsel %vm2292, %v3706, %v3708
    %v3714 = vsel %vm2292, %v3708, %v3710
    %v3715 = vsel %vm2292, %v3710, %v3712
    %v3721 = vmul.f32 %v3680, %v3706
    %v3722 = vmul.f32 %v3681, %v3713
    %v3723 = vmul.f32 %v3682, %v3714
    %v3724 = vmul.f32 %v3683, %v3715
    %v3725 = vmul.f32 %v3684, %v3712
    %3731 = vrot.lane.b32.xlu0 %v3721, 66
    %v3732 = vpop.permute.xlu0 %3731
    %3733 = vrot.lane.b32.xlu0 %v3722, 66
    %v3734 = vpop.permute.xlu0 %3733
    %3735 = vrot.lane.b32.xlu0 %v3723, 66
    %v3736 = vpop.permute.xlu0 %3735
    %3737 = vrot.lane.b32.xlu0 %v3724, 66
    %v3738 = vpop.permute.xlu0 %3737
    %3739 = vrot.lane.b32.xlu0 %v3725, 66
    %v3740 = vpop.permute.xlu0 %3739
    %v3741 = vsel %vm2321, %v3732, %v3734
    %v3742 = vsel %vm2321, %v3734, %v3736
    %v3743 = vsel %vm2321, %v3736, %v3738
    %v3744 = vsel %vm2321, %v3738, %v3740
    %3749 = vst [vmem:[#allocation3 + $0x340] sm:$0xff] %v3741
    %3750 = vst [vmem:[#allocation3 + $0x348] sm:$0xff] %v3742
    %3751 = vst [vmem:[#allocation3 + $0x350] sm:$0xff] %v3743
    %3752 = vst [vmem:[#allocation3 + $0x358] sm:$0xff] %v3744
    %v3753 = vld [vmem:[#allocation4 + $0x8] sm:$0xff]
    %v3754 = vld [vmem:[#allocation4 + $0x10] sm:$0xff]
    %v3755 = vld [vmem:[#allocation4 + $0x18] sm:$0xff]
    %v3756 = vld [vmem:[#allocation4 + $0x20] sm:$0xff]
    %v3757 = vld [vmem:[#allocation4 + $0x28] sm:$0xff]
    %v3758 = vlaneseq
    %v3759 = vshrl.u32 %v3758, 7
    %v3760 = vsub.s32 3, %v3759
    %v3761 = vrot.slane %v1803, %v3760
    %v3762 = vlaneseq
    %v3763 = vshrl.u32 %v3762, 7
    %v3764 = vsub.s32 3, %v3763
    %v3765 = vrot.slane %v1804, %v3764
    %v3766 = vlaneseq
    %v3767 = vshrl.u32 %v3766, 7
    %v3768 = vsub.s32 3, %v3767
    %v3769 = vrot.slane %v1805, %v3768
    %v3770 = vlaneseq
    %v3771 = vshrl.u32 %v3770, 7
    %v3772 = vsub.s32 3, %v3771
    %v3773 = vrot.slane %v1806, %v3772
    %3778 = vrot.lane.b32.xlu0 %v3761, 64
    %v3779 = vpop.permute.xlu0 %3778
    %3780 = vrot.lane.b32.xlu0 %v3765, 64
    %v3781 = vpop.permute.xlu0 %3780
    %3782 = vrot.lane.b32.xlu0 %v3769, 64
    %v3783 = vpop.permute.xlu0 %3782
    %3784 = vrot.lane.b32.xlu0 %v3773, 64
    %v3785 = vpop.permute.xlu0 %3784
    %v3786 = vsel %vm136, %v3779, %v3781
    %v3787 = vsel %vm136, %v3781, %v3783
    %v3788 = vsel %vm136, %v3783, %v3785
    %v3794 = vmul.f32 %v3753, %v3779
    %v3795 = vmul.f32 %v3754, %v3786
    %v3796 = vmul.f32 %v3755, %v3787
    %v3797 = vmul.f32 %v3756, %v3788
    %v3798 = vmul.f32 %v3757, %v3785
    %3804 = vrot.lane.b32.xlu0 %v3794, 64
    %v3805 = vpop.permute.xlu0 %3804
    %3806 = vrot.lane.b32.xlu0 %v3795, 64
    %v3807 = vpop.permute.xlu0 %3806
    %3808 = vrot.lane.b32.xlu0 %v3796, 64
    %v3809 = vpop.permute.xlu0 %3808
    %3810 = vrot.lane.b32.xlu0 %v3797, 64
    %v3811 = vpop.permute.xlu0 %3810
    %3812 = vrot.lane.b32.xlu0 %v3798, 64
    %v3813 = vpop.permute.xlu0 %3812
    %v3814 = vsel %vm136, %v3805, %v3807
    %v3815 = vsel %vm136, %v3807, %v3809
    %v3816 = vsel %vm136, %v3809, %v3811
    %v3817 = vsel %vm136, %v3811, %v3813
    %3822 = vst [vmem:[#allocation3 + $0x360] sm:$0xff] %v3814
    %3823 = vst [vmem:[#allocation3 + $0x368] sm:$0xff] %v3815
    %3824 = vst [vmem:[#allocation3 + $0x370] sm:$0xff] %v3816
    %3825 = vst [vmem:[#allocation3 + $0x378] sm:$0xff] %v3817
    %v3826 = vld [vmem:[#allocation4 + $0x8] sm:$0xff]
    %v3827 = vld [vmem:[#allocation4 + $0x10] sm:$0xff]
    %v3828 = vld [vmem:[#allocation4 + $0x18] sm:$0xff]
    %v3829 = vld [vmem:[#allocation4 + $0x20] sm:$0xff]
    %v3830 = vld [vmem:[#allocation4 + $0x28] sm:$0xff]
    %v3831 = vlaneseq
    %v3832 = vshrl.u32 %v3831, 7
    %v3833 = vsub.s32 4, %v3832
    %v3834 = vrot.slane %v1803, %v3833
    %v3835 = vlaneseq
    %v3836 = vshrl.u32 %v3835, 7
    %v3837 = vsub.s32 4, %v3836
    %v3838 = vrot.slane %v1804, %v3837
    %v3839 = vlaneseq
    %v3840 = vshrl.u32 %v3839, 7
    %v3841 = vsub.s32 4, %v3840
    %v3842 = vrot.slane %v1805, %v3841
    %v3843 = vlaneseq
    %v3844 = vshrl.u32 %v3843, 7
    %v3845 = vsub.s32 4, %v3844
    %v3846 = vrot.slane %v1806, %v3845
    %3851 = vrot.lane.b32.xlu0 %v3834, 66
    %v3852 = vpop.permute.xlu0 %3851
    %3853 = vrot.lane.b32.xlu0 %v3838, 66
    %v3854 = vpop.permute.xlu0 %3853
    %3855 = vrot.lane.b32.xlu0 %v3842, 66
    %v3856 = vpop.permute.xlu0 %3855
    %3857 = vrot.lane.b32.xlu0 %v3846, 66
    %v3858 = vpop.permute.xlu0 %3857
    %v3859 = vsel %vm2321, %v3852, %v3854
    %v3860 = vsel %vm2321, %v3854, %v3856
    %v3861 = vsel %vm2321, %v3856, %v3858
    %v3867 = vmul.f32 %v3826, %v3852
    %v3868 = vmul.f32 %v3827, %v3859
    %v3869 = vmul.f32 %v3828, %v3860
    %v3870 = vmul.f32 %v3829, %v3861
    %v3871 = vmul.f32 %v3830, %v3858
    %3877 = vrot.lane.b32.xlu0 %v3867, 62
    %v3878 = vpop.permute.xlu0 %3877
    %3879 = vrot.lane.b32.xlu0 %v3868, 62
    %v3880 = vpop.permute.xlu0 %3879
    %3881 = vrot.lane.b32.xlu0 %v3869, 62
    %v3882 = vpop.permute.xlu0 %3881
    %3883 = vrot.lane.b32.xlu0 %v3870, 62
    %v3884 = vpop.permute.xlu0 %3883
    %3885 = vrot.lane.b32.xlu0 %v3871, 62
    %v3886 = vpop.permute.xlu0 %3885
    %v3887 = vsel %vm2292, %v3878, %v3880
    %v3888 = vsel %vm2292, %v3880, %v3882
    %v3889 = vsel %vm2292, %v3882, %v3884
    %v3890 = vsel %vm2292, %v3884, %v3886
    %3895 = vst [vmem:[#allocation3 + $0x380] sm:$0xff] %v3887
    %3896 = vst [vmem:[#allocation3 + $0x388] sm:$0xff] %v3888
    %3897 = vst [vmem:[#allocation3 + $0x390] sm:$0xff] %v3889
    %3898 = vst [vmem:[#allocation3 + $0x398] sm:$0xff] %v3890
    %v3899 = vld [vmem:[#allocation4 + $0x8] sm:$0xff]
    %v3900 = vld [vmem:[#allocation4 + $0x10] sm:$0xff]
    %v3901 = vld [vmem:[#allocation4 + $0x18] sm:$0xff]
    %v3902 = vld [vmem:[#allocation4 + $0x20] sm:$0xff]
    %v3903 = vld [vmem:[#allocation4 + $0x28] sm:$0xff]
    %v3904 = vlaneseq
    %v3905 = vshrl.u32 %v3904, 7
    %v3906 = vsub.s32 5, %v3905
    %v3907 = vrot.slane %v1803, %v3906
    %v3908 = vlaneseq
    %v3909 = vshrl.u32 %v3908, 7
    %v3910 = vsub.s32 5, %v3909
    %v3911 = vrot.slane %v1804, %v3910
    %v3912 = vlaneseq
    %v3913 = vshrl.u32 %v3912, 7
    %v3914 = vsub.s32 5, %v3913
    %v3915 = vrot.slane %v1805, %v3914
    %v3916 = vlaneseq
    %v3917 = vshrl.u32 %v3916, 7
    %v3918 = vsub.s32 5, %v3917
    %v3919 = vrot.slane %v1806, %v3918
    %3924 = vrot.lane.b32.xlu0 %v3907, 68
    %v3925 = vpop.permute.xlu0 %3924
    %3926 = vrot.lane.b32.xlu0 %v3911, 68
    %v3927 = vpop.permute.xlu0 %3926
    %3928 = vrot.lane.b32.xlu0 %v3915, 68
    %v3929 = vpop.permute.xlu0 %3928
    %3930 = vrot.lane.b32.xlu0 %v3919, 68
    %v3931 = vpop.permute.xlu0 %3930
    %v3932 = vsel %vm2246, %v3925, %v3927
    %v3933 = vsel %vm2246, %v3927, %v3929
    %v3934 = vsel %vm2246, %v3929, %v3931
    %v3940 = vmul.f32 %v3899, %v3925
    %v3941 = vmul.f32 %v3900, %v3932
    %v3942 = vmul.f32 %v3901, %v3933
    %v3943 = vmul.f32 %v3902, %v3934
    %v3944 = vmul.f32 %v3903, %v3931
    %3950 = vrot.lane.b32.xlu0 %v3940, 60
    %v3951 = vpop.permute.xlu0 %3950
    %3952 = vrot.lane.b32.xlu0 %v3941, 60
    %v3953 = vpop.permute.xlu0 %3952
    %3954 = vrot.lane.b32.xlu0 %v3942, 60
    %v3955 = vpop.permute.xlu0 %3954
    %3956 = vrot.lane.b32.xlu0 %v3943, 60
    %v3957 = vpop.permute.xlu0 %3956
    %3958 = vrot.lane.b32.xlu0 %v3944, 60
    %v3959 = vpop.permute.xlu0 %3958
    %v3960 = vsel %vm2217, %v3951, %v3953
    %v3961 = vsel %vm2217, %v3953, %v3955
    %v3962 = vsel %vm2217, %v3955, %v3957
    %v3963 = vsel %vm2217, %v3957, %v3959
    %3968 = vst [vmem:[#allocation3 + $0x3a0] sm:$0xff] %v3960
    %3969 = vst [vmem:[#allocation3 + $0x3a8] sm:$0xff] %v3961
    %3970 = vst [vmem:[#allocation3 + $0x3b0] sm:$0xff] %v3962
    %3971 = vst [vmem:[#allocation3 + $0x3b8] sm:$0xff] %v3963
    %v3972 = vld [vmem:[#allocation4 + $0x8] sm:$0xff]
    %v3973 = vld [vmem:[#allocation4 + $0x10] sm:$0xff]
    %v3974 = vld [vmem:[#allocation4 + $0x18] sm:$0xff]
    %v3975 = vld [vmem:[#allocation4 + $0x20] sm:$0xff]
    %v3976 = vld [vmem:[#allocation4 + $0x28] sm:$0xff]
    %v3977 = vlaneseq
    %v3978 = vshrl.u32 %v3977, 7
    %v3979 = vsub.s32 6, %v3978
    %v3980 = vrot.slane %v1803, %v3979
    %v3981 = vlaneseq
    %v3982 = vshrl.u32 %v3981, 7
    %v3983 = vsub.s32 6, %v3982
    %v3984 = vrot.slane %v1804, %v3983
    %v3985 = vlaneseq
    %v3986 = vshrl.u32 %v3985, 7
    %v3987 = vsub.s32 6, %v3986
    %v3988 = vrot.slane %v1805, %v3987
    %v3989 = vlaneseq
    %v3990 = vshrl.u32 %v3989, 7
    %v3991 = vsub.s32 6, %v3990
    %v3992 = vrot.slane %v1806, %v3991
    %3997 = vrot.lane.b32.xlu0 %v3980, 92
    %v3998 = vpop.permute.xlu0 %3997
    %3999 = vrot.lane.b32.xlu0 %v3984, 92
    %v4000 = vpop.permute.xlu0 %3999
    %4001 = vrot.lane.b32.xlu0 %v3988, 92
    %v4002 = vpop.permute.xlu0 %4001
    %4003 = vrot.lane.b32.xlu0 %v3992, 92
    %v4004 = vpop.permute.xlu0 %4003
    %v4005 = vsel %vm2171, %v3998, %v4000
    %v4006 = vsel %vm2171, %v4000, %v4002
    %v4007 = vsel %vm2171, %v4002, %v4004
    %v4013 = vmul.f32 %v3972, %v3998
    %v4014 = vmul.f32 %v3973, %v4005
    %v4015 = vmul.f32 %v3974, %v4006
    %v4016 = vmul.f32 %v3975, %v4007
    %v4017 = vmul.f32 %v3976, %v4004
    %4023 = vrot.lane.b32.xlu0 %v4013, 36
    %v4024 = vpop.permute.xlu0 %4023
    %4025 = vrot.lane.b32.xlu0 %v4014, 36
    %v4026 = vpop.permute.xlu0 %4025
    %4027 = vrot.lane.b32.xlu0 %v4015, 36
    %v4028 = vpop.permute.xlu0 %4027
    %4029 = vrot.lane.b32.xlu0 %v4016, 36
    %v4030 = vpop.permute.xlu0 %4029
    %4031 = vrot.lane.b32.xlu0 %v4017, 36
    %v4032 = vpop.permute.xlu0 %4031
    %v4033 = vsel %vm2142, %v4024, %v4026
    %v4034 = vsel %vm2142, %v4026, %v4028
    %v4035 = vsel %vm2142, %v4028, %v4030
    %v4036 = vsel %vm2142, %v4030, %v4032
    %4041 = vst [vmem:[#allocation3 + $0x3c0] sm:$0xff] %v4033
    %4042 = vst [vmem:[#allocation3 + $0x3c8] sm:$0xff] %v4034
    %4043 = vst [vmem:[#allocation3 + $0x3d0] sm:$0xff] %v4035
    %4044 = vst [vmem:[#allocation3 + $0x3d8] sm:$0xff] %v4036
    %v4045 = vld [vmem:[#allocation4 + $0x8] sm:$0xff]
    %v4046 = vld [vmem:[#allocation4 + $0x10] sm:$0xff]
    %v4047 = vld [vmem:[#allocation4 + $0x18] sm:$0xff]
    %v4048 = vld [vmem:[#allocation4 + $0x20] sm:$0xff]
    %v4049 = vld [vmem:[#allocation4 + $0x28] sm:$0xff]
    %v4050 = vlaneseq
    %v4051 = vshrl.u32 %v4050, 7
    %v4052 = vsub.s32 7, %v4051
    %v4053 = vrot.slane %v1803, %v4052
    %v4054 = vlaneseq
    %v4055 = vshrl.u32 %v4054, 7
    %v4056 = vsub.s32 7, %v4055
    %v4057 = vrot.slane %v1804, %v4056
    %v4058 = vlaneseq
    %v4059 = vshrl.u32 %v4058, 7
    %v4060 = vsub.s32 7, %v4059
    %v4061 = vrot.slane %v1805, %v4060
    %v4062 = vlaneseq
    %v4063 = vshrl.u32 %v4062, 7
    %v4064 = vsub.s32 7, %v4063
    %v4065 = vrot.slane %v1806, %v4064
    %4070 = vrot.lane.b32.xlu0 %v4053, 94
    %v4071 = vpop.permute.xlu0 %4070
    %4072 = vrot.lane.b32.xlu0 %v4057, 94
    %v4073 = vpop.permute.xlu0 %4072
    %4074 = vrot.lane.b32.xlu0 %v4061, 94
    %v4075 = vpop.permute.xlu0 %4074
    %4076 = vrot.lane.b32.xlu0 %v4065, 94
    %v4077 = vpop.permute.xlu0 %4076
    %v4078 = vsel %vm2096, %v4071, %v4073
    %v4079 = vsel %vm2096, %v4073, %v4075
    %v4080 = vsel %vm2096, %v4075, %v4077
    %v4086 = vmul.f32 %v4045, %v4071
    %v4087 = vmul.f32 %v4046, %v4078
    %v4088 = vmul.f32 %v4047, %v4079
    %v4089 = vmul.f32 %v4048, %v4080
    %v4090 = vmul.f32 %v4049, %v4077
    %4096 = vrot.lane.b32.xlu0 %v4086, 34
    %v4097 = vpop.permute.xlu0 %4096
    %4098 = vrot.lane.b32.xlu0 %v4087, 34
    %v4099 = vpop.permute.xlu0 %4098
    %4100 = vrot.lane.b32.xlu0 %v4088, 34
    %v4101 = vpop.permute.xlu0 %4100
    %4102 = vrot.lane.b32.xlu0 %v4089, 34
    %v4103 = vpop.permute.xlu0 %4102
    %4104 = vrot.lane.b32.xlu0 %v4090, 34
    %v4105 = vpop.permute.xlu0 %4104
    %v4106 = vsel %vm2067, %v4097, %v4099
    %v4107 = vsel %vm2067, %v4099, %v4101
    %v4108 = vsel %vm2067, %v4101, %v4103
    %v4109 = vsel %vm2067, %v4103, %v4105
    %4114 = vst [vmem:[#allocation3 + $0x3e0] sm:$0xff] %v4106
    %4115 = vst [vmem:[#allocation3 + $0x3e8] sm:$0xff] %v4107
    %4116 = vst [vmem:[#allocation3 + $0x3f0] sm:$0xff] %v4108
    %4117 = vst [vmem:[#allocation3 + $0x3f8] sm:$0xff] %v4109
    %v4118 = vld [vmem:[#allocation4 + $0x8] sm:$0xff]
    %v4119 = vld [vmem:[#allocation4 + $0x10] sm:$0xff]
    %v4120 = vld [vmem:[#allocation4 + $0x18] sm:$0xff]
    %v4121 = vld [vmem:[#allocation4 + $0x20] sm:$0xff]
    %v4122 = vld [vmem:[#allocation4 + $0x28] sm:$0xff]
    %v4123 = vlaneseq
    %v4124 = vshrl.u32 %v4123, 7
    %v4125 = vsub.s32 0, %v4124
    %v4126 = vrot.slane %v1807, %v4125
    %v4127 = vlaneseq
    %v4128 = vshrl.u32 %v4127, 7
    %v4129 = vsub.s32 0, %v4128
    %v4130 = vrot.slane %v1808, %v4129
    %v4131 = vlaneseq
    %v4132 = vshrl.u32 %v4131, 7
    %v4133 = vsub.s32 0, %v4132
    %v4134 = vrot.slane %v1809, %v4133
    %v4135 = vlaneseq
    %v4136 = vshrl.u32 %v4135, 7
    %v4137 = vsub.s32 0, %v4136
    %v4138 = vrot.slane %v1810, %v4137
    %4143 = vrot.lane.b32.xlu0 %v4126, 96
    %v4144 = vpop.permute.xlu0 %4143
    %4145 = vrot.lane.b32.xlu0 %v4130, 96
    %v4146 = vpop.permute.xlu0 %4145
    %4147 = vrot.lane.b32.xlu0 %v4134, 96
    %v4148 = vpop.permute.xlu0 %4147
    %4149 = vrot.lane.b32.xlu0 %v4138, 96
    %v4150 = vpop.permute.xlu0 %4149
    %v4151 = vsel %vm244, %v4144, %v4146
    %v4152 = vsel %vm244, %v4146, %v4148
    %v4153 = vsel %vm244, %v4148, %v4150
    %v4159 = vmul.f32 %v4118, %v4144
    %v4160 = vmul.f32 %v4119, %v4151
    %v4161 = vmul.f32 %v4120, %v4152
    %v4162 = vmul.f32 %v4121, %v4153
    %v4163 = vmul.f32 %v4122, %v4150
    %4169 = vrot.lane.b32.xlu0 %v4159, 32
    %v4170 = vpop.permute.xlu0 %4169
    %4171 = vrot.lane.b32.xlu0 %v4160, 32
    %v4172 = vpop.permute.xlu0 %4171
    %4173 = vrot.lane.b32.xlu0 %v4161, 32
    %v4174 = vpop.permute.xlu0 %4173
    %4175 = vrot.lane.b32.xlu0 %v4162, 32
    %v4176 = vpop.permute.xlu0 %4175
    %4177 = vrot.lane.b32.xlu0 %v4163, 32
    %v4178 = vpop.permute.xlu0 %4177
    %v4179 = vsel %vm252, %v4170, %v4172
    %v4180 = vsel %vm252, %v4172, %v4174
    %v4181 = vsel %vm252, %v4174, %v4176
    %v4182 = vsel %vm252, %v4176, %v4178
    %4187 = vst [vmem:[#allocation3 + $0x400] sm:$0xff] %v4179
    %4188 = vst [vmem:[#allocation3 + $0x408] sm:$0xff] %v4180
    %4189 = vst [vmem:[#allocation3 + $0x410] sm:$0xff] %v4181
    %4190 = vst [vmem:[#allocation3 + $0x418] sm:$0xff] %v4182
    %v4191 = vld [vmem:[#allocation4 + $0x8] sm:$0xff]
    %v4192 = vld [vmem:[#allocation4 + $0x10] sm:$0xff]
    %v4193 = vld [vmem:[#allocation4 + $0x18] sm:$0xff]
    %v4194 = vld [vmem:[#allocation4 + $0x20] sm:$0xff]
    %v4195 = vld [vmem:[#allocation4 + $0x28] sm:$0xff]
    %v4196 = vlaneseq
    %v4197 = vshrl.u32 %v4196, 7
    %v4198 = vsub.s32 1, %v4197
    %v4199 = vrot.slane %v1807, %v4198
    %v4200 = vlaneseq
    %v4201 = vshrl.u32 %v4200, 7
    %v4202 = vsub.s32 1, %v4201
    %v4203 = vrot.slane %v1808, %v4202
    %v4204 = vlaneseq
    %v4205 = vshrl.u32 %v4204, 7
    %v4206 = vsub.s32 1, %v4205
    %v4207 = vrot.slane %v1809, %v4206
    %v4208 = vlaneseq
    %v4209 = vshrl.u32 %v4208, 7
    %v4210 = vsub.s32 1, %v4209
    %v4211 = vrot.slane %v1810, %v4210
    %4216 = vrot.lane.b32.xlu0 %v4199, 98
    %v4217 = vpop.permute.xlu0 %4216
    %4218 = vrot.lane.b32.xlu0 %v4203, 98
    %v4219 = vpop.permute.xlu0 %4218
    %4220 = vrot.lane.b32.xlu0 %v4207, 98
    %v4221 = vpop.permute.xlu0 %4220
    %4222 = vrot.lane.b32.xlu0 %v4211, 98
    %v4223 = vpop.permute.xlu0 %4222
    %v4224 = vsel %vm1948, %v4217, %v4219
    %v4225 = vsel %vm1948, %v4219, %v4221
    %v4226 = vsel %vm1948, %v4221, %v4223
    %v4232 = vmul.f32 %v4191, %v4217
    %v4233 = vmul.f32 %v4192, %v4224
    %v4234 = vmul.f32 %v4193, %v4225
    %v4235 = vmul.f32 %v4194, %v4226
    %v4236 = vmul.f32 %v4195, %v4223
    %4242 = vrot.lane.b32.xlu0 %v4232, 30
    %v4243 = vpop.permute.xlu0 %4242
    %4244 = vrot.lane.b32.xlu0 %v4233, 30
    %v4245 = vpop.permute.xlu0 %4244
    %4246 = vrot.lane.b32.xlu0 %v4234, 30
    %v4247 = vpop.permute.xlu0 %4246
    %4248 = vrot.lane.b32.xlu0 %v4235, 30
    %v4249 = vpop.permute.xlu0 %4248
    %4250 = vrot.lane.b32.xlu0 %v4236, 30
    %v4251 = vpop.permute.xlu0 %4250
    %v4252 = vsel %vm1919, %v4243, %v4245
    %v4253 = vsel %vm1919, %v4245, %v4247
    %v4254 = vsel %vm1919, %v4247, %v4249
    %v4255 = vsel %vm1919, %v4249, %v4251
    %4260 = vst [vmem:[#allocation3 + $0x420] sm:$0xff] %v4252
    %4261 = vst [vmem:[#allocation3 + $0x428] sm:$0xff] %v4253
    %4262 = vst [vmem:[#allocation3 + $0x430] sm:$0xff] %v4254
    %4263 = vst [vmem:[#allocation3 + $0x438] sm:$0xff] %v4255
    %v4264 = vld [vmem:[#allocation4 + $0x8] sm:$0xff]
    %v4265 = vld [vmem:[#allocation4 + $0x10] sm:$0xff]
    %v4266 = vld [vmem:[#allocation4 + $0x18] sm:$0xff]
    %v4267 = vld [vmem:[#allocation4 + $0x20] sm:$0xff]
    %v4268 = vld [vmem:[#allocation4 + $0x28] sm:$0xff]
    %v4269 = vlaneseq
    %v4270 = vshrl.u32 %v4269, 7
    %v4271 = vsub.s32 2, %v4270
    %v4272 = vrot.slane %v1807, %v4271
    %v4273 = vlaneseq
    %v4274 = vshrl.u32 %v4273, 7
    %v4275 = vsub.s32 2, %v4274
    %v4276 = vrot.slane %v1808, %v4275
    %v4277 = vlaneseq
    %v4278 = vshrl.u32 %v4277, 7
    %v4279 = vsub.s32 2, %v4278
    %v4280 = vrot.slane %v1809, %v4279
    %v4281 = vlaneseq
    %v4282 = vshrl.u32 %v4281, 7
    %v4283 = vsub.s32 2, %v4282
    %v4284 = vrot.slane %v1810, %v4283
    %4289 = vrot.lane.b32.xlu0 %v4272, 100
    %v4290 = vpop.permute.xlu0 %4289
    %4291 = vrot.lane.b32.xlu0 %v4276, 100
    %v4292 = vpop.permute.xlu0 %4291
    %4293 = vrot.lane.b32.xlu0 %v4280, 100
    %v4294 = vpop.permute.xlu0 %4293
    %4295 = vrot.lane.b32.xlu0 %v4284, 100
    %v4296 = vpop.permute.xlu0 %4295
    %v4297 = vsel %vm1873, %v4290, %v4292
    %v4298 = vsel %vm1873, %v4292, %v4294
    %v4299 = vsel %vm1873, %v4294, %v4296
    %v4305 = vmul.f32 %v4264, %v4290
    %v4306 = vmul.f32 %v4265, %v4297
    %v4307 = vmul.f32 %v4266, %v4298
    %v4308 = vmul.f32 %v4267, %v4299
    %v4309 = vmul.f32 %v4268, %v4296
    %4315 = vrot.lane.b32.xlu0 %v4305, 28
    %v4316 = vpop.permute.xlu0 %4315
    %4317 = vrot.lane.b32.xlu0 %v4306, 28
    %v4318 = vpop.permute.xlu0 %4317
    %4319 = vrot.lane.b32.xlu0 %v4307, 28
    %v4320 = vpop.permute.xlu0 %4319
    %4321 = vrot.lane.b32.xlu0 %v4308, 28
    %v4322 = vpop.permute.xlu0 %4321
    %4323 = vrot.lane.b32.xlu0 %v4309, 28
    %v4324 = vpop.permute.xlu0 %4323
    %v4325 = vsel %vm1844, %v4316, %v4318
    %v4326 = vsel %vm1844, %v4318, %v4320
    %v4327 = vsel %vm1844, %v4320, %v4322
    %v4328 = vsel %vm1844, %v4322, %v4324
    %4333 = vst [vmem:[#allocation3 + $0x440] sm:$0xff] %v4325
    %4334 = vst [vmem:[#allocation3 + $0x448] sm:$0xff] %v4326
    %4335 = vst [vmem:[#allocation3 + $0x450] sm:$0xff] %v4327
    %4336 = vst [vmem:[#allocation3 + $0x458] sm:$0xff] %v4328
    %v4337 = vld [vmem:[#allocation4 + $0x8] sm:$0xff]
    %v4338 = vld [vmem:[#allocation4 + $0x10] sm:$0xff]
    %v4339 = vld [vmem:[#allocation4 + $0x18] sm:$0xff]
    %v4340 = vld [vmem:[#allocation4 + $0x20] sm:$0xff]
    %v4341 = vld [vmem:[#allocation4 + $0x28] sm:$0xff]
    %v4342 = vlaneseq
    %v4343 = vshrl.u32 %v4342, 7
    %v4344 = vsub.s32 3, %v4343
    %v4345 = vrot.slane %v1807, %v4344
    %v4346 = vlaneseq
    %v4347 = vshrl.u32 %v4346, 7
    %v4348 = vsub.s32 3, %v4347
    %v4349 = vrot.slane %v1808, %v4348
    %v4350 = vlaneseq
    %v4351 = vshrl.u32 %v4350, 7
    %v4352 = vsub.s32 3, %v4351
    %v4353 = vrot.slane %v1809, %v4352
    %v4354 = vlaneseq
    %v4355 = vshrl.u32 %v4354, 7
    %v4356 = vsub.s32 3, %v4355
    %v4357 = vrot.slane %v1810, %v4356
    %4362 = vrot.lane.b32.xlu0 %v4345, 124
    %v4363 = vpop.permute.xlu0 %4362
    %4364 = vrot.lane.b32.xlu0 %v4349, 124
    %v4365 = vpop.permute.xlu0 %4364
    %4366 = vrot.lane.b32.xlu0 %v4353, 124
    %v4367 = vpop.permute.xlu0 %4366
    %4368 = vrot.lane.b32.xlu0 %v4357, 124
    %v4369 = vpop.permute.xlu0 %4368
    %v4370 = vsel %vm2951, %v4363, %v4365
    %v4371 = vsel %vm2951, %v4365, %v4367
    %v4372 = vsel %vm2951, %v4367, %v4369
    %v4378 = vmul.f32 %v4337, %v4363
    %v4379 = vmul.f32 %v4338, %v4370
    %v4380 = vmul.f32 %v4339, %v4371
    %v4381 = vmul.f32 %v4340, %v4372
    %v4382 = vmul.f32 %v4341, %v4369
    %4388 = vrot.lane.b32.xlu0 %v4378, 4
    %v4389 = vpop.permute.xlu0 %4388
    %4390 = vrot.lane.b32.xlu0 %v4379, 4
    %v4391 = vpop.permute.xlu0 %4390
    %4392 = vrot.lane.b32.xlu0 %v4380, 4
    %v4393 = vpop.permute.xlu0 %4392
    %4394 = vrot.lane.b32.xlu0 %v4381, 4
    %v4395 = vpop.permute.xlu0 %4394
    %4396 = vrot.lane.b32.xlu0 %v4382, 4
    %v4397 = vpop.permute.xlu0 %4396
    %v4398 = vsel %vm2980, %v4389, %v4391
    %v4399 = vsel %vm2980, %v4391, %v4393
    %v4400 = vsel %vm2980, %v4393, %v4395
    %v4401 = vsel %vm2980, %v4395, %v4397
    %4406 = vst [vmem:[#allocation3 + $0x460] sm:$0xff] %v4398
    %4407 = vst [vmem:[#allocation3 + $0x468] sm:$0xff] %v4399
    %4408 = vst [vmem:[#allocation3 + $0x470] sm:$0xff] %v4400
    %4409 = vst [vmem:[#allocation3 + $0x478] sm:$0xff] %v4401
    %v4410 = vld [vmem:[#allocation4 + $0x8] sm:$0xff]
    %v4411 = vld [vmem:[#allocation4 + $0x10] sm:$0xff]
    %v4412 = vld [vmem:[#allocation4 + $0x18] sm:$0xff]
    %v4413 = vld [vmem:[#allocation4 + $0x20] sm:$0xff]
    %v4414 = vld [vmem:[#allocation4 + $0x28] sm:$0xff]
    %v4415 = vlaneseq
    %v4416 = vshrl.u32 %v4415, 7
    %v4417 = vsub.s32 4, %v4416
    %v4418 = vrot.slane %v1807, %v4417
    %v4419 = vlaneseq
    %v4420 = vshrl.u32 %v4419, 7
    %v4421 = vsub.s32 4, %v4420
    %v4422 = vrot.slane %v1808, %v4421
    %v4423 = vlaneseq
    %v4424 = vshrl.u32 %v4423, 7
    %v4425 = vsub.s32 4, %v4424
    %v4426 = vrot.slane %v1809, %v4425
    %v4427 = vlaneseq
    %v4428 = vshrl.u32 %v4427, 7
    %v4429 = vsub.s32 4, %v4428
    %v4430 = vrot.slane %v1810, %v4429
    %4435 = vrot.lane.b32.xlu0 %v4418, 126
    %v4436 = vpop.permute.xlu0 %4435
    %4437 = vrot.lane.b32.xlu0 %v4422, 126
    %v4438 = vpop.permute.xlu0 %4437
    %4439 = vrot.lane.b32.xlu0 %v4426, 126
    %v4440 = vpop.permute.xlu0 %4439
    %4441 = vrot.lane.b32.xlu0 %v4430, 126
    %v4442 = vpop.permute.xlu0 %4441
    %v4443 = vsel %vm3026, %v4436, %v4438
    %v4444 = vsel %vm3026, %v4438, %v4440
    %v4445 = vsel %vm3026, %v4440, %v4442
    %v4451 = vmul.f32 %v4410, %v4436
    %v4452 = vmul.f32 %v4411, %v4443
    %v4453 = vmul.f32 %v4412, %v4444
    %v4454 = vmul.f32 %v4413, %v4445
    %v4455 = vmul.f32 %v4414, %v4442
    %4461 = vrot.lane.b32.xlu0 %v4451, 2
    %v4462 = vpop.permute.xlu0 %4461
    %4463 = vrot.lane.b32.xlu0 %v4452, 2
    %v4464 = vpop.permute.xlu0 %4463
    %4465 = vrot.lane.b32.xlu0 %v4453, 2
    %v4466 = vpop.permute.xlu0 %4465
    %4467 = vrot.lane.b32.xlu0 %v4454, 2
    %v4468 = vpop.permute.xlu0 %4467
    %4469 = vrot.lane.b32.xlu0 %v4455, 2
    %v4470 = vpop.permute.xlu0 %4469
    %v4471 = vsel %vm3055, %v4462, %v4464
    %v4472 = vsel %vm3055, %v4464, %v4466
    %v4473 = vsel %vm3055, %v4466, %v4468
    %v4474 = vsel %vm3055, %v4468, %v4470
    %4479 = vst [vmem:[#allocation3 + $0x480] sm:$0xff] %v4471
    %4480 = vst [vmem:[#allocation3 + $0x488] sm:$0xff] %v4472
    %4481 = vst [vmem:[#allocation3 + $0x490] sm:$0xff] %v4473
    %4482 = vst [vmem:[#allocation3 + $0x498] sm:$0xff] %v4474
    %v4483 = vld [vmem:[#allocation4 + $0x10] sm:$0xff]
    %v4484 = vld [vmem:[#allocation4 + $0x18] sm:$0xff]
    %v4485 = vld [vmem:[#allocation4 + $0x20] sm:$0xff]
    %v4486 = vld [vmem:[#allocation4 + $0x28] sm:$0xff]
    %v4487 = vlaneseq
    %v4488 = vshrl.u32 %v4487, 7
    %v4489 = vsub.s32 5, %v4488
    %v4490 = vrot.slane %v1807, %v4489
    %v4491 = vlaneseq
    %v4492 = vshrl.u32 %v4491, 7
    %v4493 = vsub.s32 5, %v4492
    %v4494 = vrot.slane %v1808, %v4493
    %v4495 = vlaneseq
    %v4496 = vshrl.u32 %v4495, 7
    %v4497 = vsub.s32 5, %v4496
    %v4498 = vrot.slane %v1809, %v4497
    %v4499 = vlaneseq
    %v4500 = vshrl.u32 %v4499, 7
    %v4501 = vsub.s32 5, %v4500
    %v4502 = vrot.slane %v1810, %v4501
    %v4503 = vmul.f32 %v4483, %v4490
    %v4504 = vmul.f32 %v4484, %v4494
    %v4505 = vmul.f32 %v4485, %v4498
    %v4506 = vmul.f32 %v4486, %v4502
    %4507 = vst [vmem:[#allocation3 + $0x4a0] sm:$0xff] %v4503
    %4508 = vst [vmem:[#allocation3 + $0x4a8] sm:$0xff] %v4504
    %4509 = vst [vmem:[#allocation3 + $0x4b0] sm:$0xff] %v4505
    %4510 = vst [vmem:[#allocation3 + $0x4b8] sm:$0xff] %v4506
    %v4511 = vld [vmem:[#allocation4 + $0x10] sm:$0xff]
    %v4512 = vld [vmem:[#allocation4 + $0x18] sm:$0xff]
    %v4513 = vld [vmem:[#allocation4 + $0x20] sm:$0xff]
    %v4514 = vld [vmem:[#allocation4 + $0x28] sm:$0xff]
    %v4515 = vld [vmem:[#allocation4 + $0x30] sm:$0xff]
    %v4516 = vlaneseq
    %v4517 = vshrl.u32 %v4516, 7
    %v4518 = vsub.s32 6, %v4517
    %v4519 = vrot.slane %v1807, %v4518
    %v4520 = vlaneseq
    %v4521 = vshrl.u32 %v4520, 7
    %v4522 = vsub.s32 6, %v4521
    %v4523 = vrot.slane %v1808, %v4522
    %v4524 = vlaneseq
    %v4525 = vshrl.u32 %v4524, 7
    %v4526 = vsub.s32 6, %v4525
    %v4527 = vrot.slane %v1809, %v4526
    %v4528 = vlaneseq
    %v4529 = vshrl.u32 %v4528, 7
    %v4530 = vsub.s32 6, %v4529
    %v4531 = vrot.slane %v1810, %v4530
    %4536 = vrot.lane.b32.xlu0 %v4519, 2
    %v4537 = vpop.permute.xlu0 %4536
    %4538 = vrot.lane.b32.xlu0 %v4523, 2
    %v4539 = vpop.permute.xlu0 %4538
    %4540 = vrot.lane.b32.xlu0 %v4527, 2
    %v4541 = vpop.permute.xlu0 %4540
    %4542 = vrot.lane.b32.xlu0 %v4531, 2
    %v4543 = vpop.permute.xlu0 %4542
    %v4544 = vsel %vm3055, %v4537, %v4539
    %v4545 = vsel %vm3055, %v4539, %v4541
    %v4546 = vsel %vm3055, %v4541, %v4543
    %v4552 = vmul.f32 %v4511, %v4537
    %v4553 = vmul.f32 %v4512, %v4544
    %v4554 = vmul.f32 %v4513, %v4545
    %v4555 = vmul.f32 %v4514, %v4546
    %v4556 = vmul.f32 %v4515, %v4543
    %4562 = vrot.lane.b32.xlu0 %v4552, 126
    %v4563 = vpop.permute.xlu0 %4562
    %4564 = vrot.lane.b32.xlu0 %v4553, 126
    %v4565 = vpop.permute.xlu0 %4564
    %4566 = vrot.lane.b32.xlu0 %v4554, 126
    %v4567 = vpop.permute.xlu0 %4566
    %4568 = vrot.lane.b32.xlu0 %v4555, 126
    %v4569 = vpop.permute.xlu0 %4568
    %4570 = vrot.lane.b32.xlu0 %v4556, 126
    %v4571 = vpop.permute.xlu0 %4570
    %v4572 = vsel %vm3026, %v4563, %v4565
    %v4573 = vsel %vm3026, %v4565, %v4567
    %v4574 = vsel %vm3026, %v4567, %v4569
    %v4575 = vsel %vm3026, %v4569, %v4571
    %4580 = vst [vmem:[#allocation3 + $0x4c0] sm:$0xff] %v4572
    %4581 = vst [vmem:[#allocation3 + $0x4c8] sm:$0xff] %v4573
    %4582 = vst [vmem:[#allocation3 + $0x4d0] sm:$0xff] %v4574
    %4583 = vst [vmem:[#allocation3 + $0x4d8] sm:$0xff] %v4575
    %v4584 = vld [vmem:[#allocation4 + $0x10] sm:$0xff]
    %v4585 = vld [vmem:[#allocation4 + $0x18] sm:$0xff]
    %v4586 = vld [vmem:[#allocation4 + $0x20] sm:$0xff]
    %v4587 = vld [vmem:[#allocation4 + $0x28] sm:$0xff]
    %v4588 = vld [vmem:[#allocation4 + $0x30] sm:$0xff]
    %v4589 = vlaneseq
    %v4590 = vshrl.u32 %v4589, 7
    %v4591 = vsub.s32 7, %v4590
    %v4592 = vrot.slane %v1807, %v4591
    %v4593 = vlaneseq
    %v4594 = vshrl.u32 %v4593, 7
    %v4595 = vsub.s32 7, %v4594
    %v4596 = vrot.slane %v1808, %v4595
    %v4597 = vlaneseq
    %v4598 = vshrl.u32 %v4597, 7
    %v4599 = vsub.s32 7, %v4598
    %v4600 = vrot.slane %v1809, %v4599
    %v4601 = vlaneseq
    %v4602 = vshrl.u32 %v4601, 7
    %v4603 = vsub.s32 7, %v4602
    %v4604 = vrot.slane %v1810, %v4603
    %4609 = vrot.lane.b32.xlu0 %v4592, 4
    %v4610 = vpop.permute.xlu0 %4609
    %4611 = vrot.lane.b32.xlu0 %v4596, 4
    %v4612 = vpop.permute.xlu0 %4611
    %4613 = vrot.lane.b32.xlu0 %v4600, 4
    %v4614 = vpop.permute.xlu0 %4613
    %4615 = vrot.lane.b32.xlu0 %v4604, 4
    %v4616 = vpop.permute.xlu0 %4615
    %v4617 = vsel %vm2980, %v4610, %v4612
    %v4618 = vsel %vm2980, %v4612, %v4614
    %v4619 = vsel %vm2980, %v4614, %v4616
    %v4625 = vmul.f32 %v4584, %v4610
    %v4626 = vmul.f32 %v4585, %v4617
    %v4627 = vmul.f32 %v4586, %v4618
    %v4628 = vmul.f32 %v4587, %v4619
    %v4629 = vmul.f32 %v4588, %v4616
    %4635 = vrot.lane.b32.xlu0 %v4625, 124
    %v4636 = vpop.permute.xlu0 %4635
    %4637 = vrot.lane.b32.xlu0 %v4626, 124
    %v4638 = vpop.permute.xlu0 %4637
    %4639 = vrot.lane.b32.xlu0 %v4627, 124
    %v4640 = vpop.permute.xlu0 %4639
    %4641 = vrot.lane.b32.xlu0 %v4628, 124
    %v4642 = vpop.permute.xlu0 %4641
    %4643 = vrot.lane.b32.xlu0 %v4629, 124
    %v4644 = vpop.permute.xlu0 %4643
    %v4645 = vsel %vm2951, %v4636, %v4638
    %v4646 = vsel %vm2951, %v4638, %v4640
    %v4647 = vsel %vm2951, %v4640, %v4642
    %v4648 = vsel %vm2951, %v4642, %v4644
    %4653 = vst [vmem:[#allocation3 + $0x4e0] sm:$0xff] %v4645
    %4654 = vst [vmem:[#allocation3 + $0x4e8] sm:$0xff] %v4646
    %4655 = vst [vmem:[#allocation3 + $0x4f0] sm:$0xff] %v4647
    %4656 = vst [vmem:[#allocation3 + $0x4f8] sm:$0xff] %v4648
    %v4657 = vld [vmem:[#allocation10] sm:$0xff]
    %v4658 = vld [vmem:[#allocation10 + $0x8] sm:$0xff]
    %v4659 = vld [vmem:[#allocation10 + $0x10] sm:$0xff]
    %v4660 = vld [vmem:[#allocation3] sm:$0xff]
    %v4661 = vld [vmem:[#allocation3 + $0x8] sm:$0xff]
    %v4662 = vld [vmem:[#allocation3 + $0x10] sm:$0xff]
    %v4663 = vld [vmem:[#allocation3 + $0x18] sm:$0xff]
    %v4664 = vld [vmem:[#allocation3 + $0x20] sm:$0xff]
    %v4665 = vld [vmem:[#allocation3 + $0x28] sm:$0xff]
    %v4666 = vld [vmem:[#allocation3 + $0x30] sm:$0xff]
    %v4667 = vld [vmem:[#allocation3 + $0x38] sm:$0xff]
    %v4668 = vld [vmem:[#allocation3 + $0x40] sm:$0xff]
    %v4669 = vld [vmem:[#allocation3 + $0x48] sm:$0xff]
    %v4670 = vld [vmem:[#allocation3 + $0x50] sm:$0xff]
    %v4671 = vld [vmem:[#allocation3 + $0x58] sm:$0xff]
    %v4672 = vld [vmem:[#allocation3 + $0x60] sm:$0xff]
    %v4673 = vld [vmem:[#allocation3 + $0x68] sm:$0xff]
    %v4674 = vld [vmem:[#allocation3 + $0x70] sm:$0xff]
    %v4675 = vld [vmem:[#allocation3 + $0x78] sm:$0xff]
    %v4676 = vld [vmem:[#allocation3 + $0x80] sm:$0xff]
    %v4677 = vld [vmem:[#allocation3 + $0x88] sm:$0xff]
    %v4678 = vld [vmem:[#allocation3 + $0x90] sm:$0xff]
    %v4679 = vld [vmem:[#allocation3 + $0x98] sm:$0xff]
    %v4680 = vld [vmem:[#allocation3 + $0xa0] sm:$0xff]
    %v4681 = vld [vmem:[#allocation3 + $0xa8] sm:$0xff]
    %v4682 = vld [vmem:[#allocation3 + $0xb0] sm:$0xff]
    %v4683 = vld [vmem:[#allocation3 + $0xb8] sm:$0xff]
    %v4684 = vld [vmem:[#allocation3 + $0xc0] sm:$0xff]
    %v4685 = vld [vmem:[#allocation3 + $0xc8] sm:$0xff]
    %v4686 = vld [vmem:[#allocation3 + $0xd0] sm:$0xff]
    %v4687 = vld [vmem:[#allocation3 + $0xd8] sm:$0xff]
    %v4688 = vld [vmem:[#allocation3 + $0xe0] sm:$0xff]
    %v4689 = vld [vmem:[#allocation3 + $0xe8] sm:$0xff]
    %v4690 = vld [vmem:[#allocation3 + $0xf0] sm:$0xff]
    %v4691 = vld [vmem:[#allocation3 + $0xf8] sm:$0xff]
    %v4692 = vld [vmem:[#allocation3 + $0x100] sm:$0xff]
    %v4693 = vld [vmem:[#allocation3 + $0x108] sm:$0xff]
    %v4694 = vld [vmem:[#allocation3 + $0x110] sm:$0xff]
    %v4695 = vld [vmem:[#allocation3 + $0x118] sm:$0xff]
    %v4696 = vld [vmem:[#allocation3 + $0x120] sm:$0xff]
    %v4697 = vld [vmem:[#allocation3 + $0x128] sm:$0xff]
    %v4698 = vld [vmem:[#allocation3 + $0x130] sm:$0xff]
    %v4699 = vld [vmem:[#allocation3 + $0x138] sm:$0xff]
    %v4700 = vld [vmem:[#allocation3 + $0x140] sm:$0xff]
    %v4701 = vld [vmem:[#allocation3 + $0x148] sm:$0xff]
    %v4702 = vld [vmem:[#allocation3 + $0x150] sm:$0xff]
    %v4703 = vld [vmem:[#allocation3 + $0x158] sm:$0xff]
    %v4704 = vld [vmem:[#allocation3 + $0x160] sm:$0xff]
    %v4705 = vld [vmem:[#allocation3 + $0x168] sm:$0xff]
    %v4706 = vld [vmem:[#allocation3 + $0x170] sm:$0xff]
    %v4707 = vld [vmem:[#allocation3 + $0x178] sm:$0xff]
    %v4708 = vld [vmem:[#allocation3 + $0x180] sm:$0xff]
    %v4709 = vld [vmem:[#allocation3 + $0x188] sm:$0xff]
    %v4710 = vld [vmem:[#allocation3 + $0x190] sm:$0xff]
    %v4711 = vld [vmem:[#allocation3 + $0x198] sm:$0xff]
    %v4712 = vld [vmem:[#allocation3 + $0x1a0] sm:$0xff]
    %v4713 = vld [vmem:[#allocation3 + $0x1a8] sm:$0xff]
    %v4714 = vld [vmem:[#allocation3 + $0x1b0] sm:$0xff]
    %v4715 = vld [vmem:[#allocation3 + $0x1b8] sm:$0xff]
    %v4716 = vld [vmem:[#allocation3 + $0x1c0] sm:$0xff]
    %v4717 = vld [vmem:[#allocation3 + $0x1c8] sm:$0xff]
    %v4718 = vld [vmem:[#allocation3 + $0x1d0] sm:$0xff]
    %v4719 = vld [vmem:[#allocation3 + $0x1d8] sm:$0xff]
    %v4720 = vld [vmem:[#allocation3 + $0x1e0] sm:$0xff]
    %v4721 = vld [vmem:[#allocation3 + $0x1e8] sm:$0xff]
    %v4722 = vld [vmem:[#allocation3 + $0x1f0] sm:$0xff]
    %v4723 = vld [vmem:[#allocation3 + $0x1f8] sm:$0xff]
    %v4724 = vld [vmem:[#allocation3 + $0x200] sm:$0xff]
    %v4725 = vld [vmem:[#allocation3 + $0x208] sm:$0xff]
    %v4726 = vld [vmem:[#allocation3 + $0x210] sm:$0xff]
    %v4727 = vld [vmem:[#allocation3 + $0x218] sm:$0xff]
    %v4728 = vld [vmem:[#allocation3 + $0x220] sm:$0xff]
    %v4729 = vld [vmem:[#allocation3 + $0x228] sm:$0xff]
    %v4730 = vld [vmem:[#allocation3 + $0x230] sm:$0xff]
    %v4731 = vld [vmem:[#allocation3 + $0x238] sm:$0xff]
    %v4732 = vld [vmem:[#allocation3 + $0x240] sm:$0xff]
    %v4733 = vld [vmem:[#allocation3 + $0x248] sm:$0xff]
    %v4734 = vld [vmem:[#allocation3 + $0x250] sm:$0xff]
    %v4735 = vld [vmem:[#allocation3 + $0x258] sm:$0xff]
    %v4736 = vld [vmem:[#allocation3 + $0x260] sm:$0xff]
    %v4737 = vld [vmem:[#allocation3 + $0x268] sm:$0xff]
    %v4738 = vld [vmem:[#allocation3 + $0x270] sm:$0xff]
    %v4739 = vld [vmem:[#allocation3 + $0x278] sm:$0xff]
    %v4740 = vld [vmem:[#allocation3 + $0x280] sm:$0xff]
    %v4741 = vld [vmem:[#allocation3 + $0x288] sm:$0xff]
    %v4742 = vld [vmem:[#allocation3 + $0x290] sm:$0xff]
    %v4743 = vld [vmem:[#allocation3 + $0x298] sm:$0xff]
    %v4744 = vld [vmem:[#allocation3 + $0x2a0] sm:$0xff]
    %v4745 = vld [vmem:[#allocation3 + $0x2a8] sm:$0xff]
    %v4746 = vld [vmem:[#allocation3 + $0x2b0] sm:$0xff]
    %v4747 = vld [vmem:[#allocation3 + $0x2b8] sm:$0xff]
    %v4748 = vld [vmem:[#allocation3 + $0x2c0] sm:$0xff]
    %v4749 = vld [vmem:[#allocation3 + $0x2c8] sm:$0xff]
    %v4750 = vld [vmem:[#allocation3 + $0x2d0] sm:$0xff]
    %v4751 = vld [vmem:[#allocation3 + $0x2d8] sm:$0xff]
    %v4752 = vld [vmem:[#allocation3 + $0x2e0] sm:$0xff]
    %v4753 = vld [vmem:[#allocation3 + $0x2e8] sm:$0xff]
    %v4754 = vld [vmem:[#allocation3 + $0x2f0] sm:$0xff]
    %v4755 = vld [vmem:[#allocation3 + $0x2f8] sm:$0xff]
    %v4756 = vld [vmem:[#allocation3 + $0x300] sm:$0xff]
    %v4757 = vld [vmem:[#allocation3 + $0x308] sm:$0xff]
    %v4758 = vld [vmem:[#allocation3 + $0x310] sm:$0xff]
    %v4759 = vld [vmem:[#allocation3 + $0x318] sm:$0xff]
    %v4760 = vld [vmem:[#allocation3 + $0x320] sm:$0xff]
    %v4761 = vld [vmem:[#allocation3 + $0x328] sm:$0xff]
    %v4762 = vld [vmem:[#allocation3 + $0x330] sm:$0xff]
    %v4763 = vld [vmem:[#allocation3 + $0x338] sm:$0xff]
    %v4764 = vld [vmem:[#allocation3 + $0x340] sm:$0xff]
    %v4765 = vld [vmem:[#allocation3 + $0x348] sm:$0xff]
    %v4766 = vld [vmem:[#allocation3 + $0x350] sm:$0xff]
    %v4767 = vld [vmem:[#allocation3 + $0x358] sm:$0xff]
    %v4768 = vld [vmem:[#allocation3 + $0x360] sm:$0xff]
    %v4769 = vld [vmem:[#allocation3 + $0x368] sm:$0xff]
    %v4770 = vld [vmem:[#allocation3 + $0x370] sm:$0xff]
    %v4771 = vld [vmem:[#allocation3 + $0x378] sm:$0xff]
    %v4772 = vld [vmem:[#allocation3 + $0x380] sm:$0xff]
    %v4773 = vld [vmem:[#allocation3 + $0x388] sm:$0xff]
    %v4774 = vld [vmem:[#allocation3 + $0x390] sm:$0xff]
    %v4775 = vld [vmem:[#allocation3 + $0x398] sm:$0xff]
    %v4776 = vld [vmem:[#allocation3 + $0x3a0] sm:$0xff]
    %v4777 = vld [vmem:[#allocation3 + $0x3a8] sm:$0xff]
    %v4778 = vld [vmem:[#allocation3 + $0x3b0] sm:$0xff]
    %v4779 = vld [vmem:[#allocation3 + $0x3b8] sm:$0xff]
    %v4780 = vld [vmem:[#allocation3 + $0x3c0] sm:$0xff]
    %v4781 = vld [vmem:[#allocation3 + $0x3c8] sm:$0xff]
    %v4782 = vld [vmem:[#allocation3 + $0x3d0] sm:$0xff]
    %v4783 = vld [vmem:[#allocation3 + $0x3d8] sm:$0xff]
    %v4784 = vld [vmem:[#allocation3 + $0x3e0] sm:$0xff]
    %v4785 = vld [vmem:[#allocation3 + $0x3e8] sm:$0xff]
    %v4786 = vld [vmem:[#allocation3 + $0x3f0] sm:$0xff]
    %v4787 = vld [vmem:[#allocation3 + $0x3f8] sm:$0xff]
    %v4788 = vld [vmem:[#allocation3 + $0x400] sm:$0xff]
    %v4789 = vld [vmem:[#allocation3 + $0x408] sm:$0xff]
    %v4790 = vld [vmem:[#allocation3 + $0x410] sm:$0xff]
    %v4791 = vld [vmem:[#allocation3 + $0x418] sm:$0xff]
    %v4792 = vld [vmem:[#allocation3 + $0x420] sm:$0xff]
    %v4793 = vld [vmem:[#allocation3 + $0x428] sm:$0xff]
    %v4794 = vld [vmem:[#allocation3 + $0x430] sm:$0xff]
    %v4795 = vld [vmem:[#allocation3 + $0x438] sm:$0xff]
    %v4796 = vld [vmem:[#allocation3 + $0x440] sm:$0xff]
    %v4797 = vld [vmem:[#allocation3 + $0x448] sm:$0xff]
    %v4798 = vld [vmem:[#allocation3 + $0x450] sm:$0xff]
    %v4799 = vld [vmem:[#allocation3 + $0x458] sm:$0xff]
    %v4800 = vld [vmem:[#allocation3 + $0x460] sm:$0xff]
    %v4801 = vld [vmem:[#allocation3 + $0x468] sm:$0xff]
    %v4802 = vld [vmem:[#allocation3 + $0x470] sm:$0xff]
    %v4803 = vld [vmem:[#allocation3 + $0x478] sm:$0xff]
    %v4804 = vld [vmem:[#allocation3 + $0x480] sm:$0xff]
    %v4805 = vld [vmem:[#allocation3 + $0x488] sm:$0xff]
    %v4806 = vld [vmem:[#allocation3 + $0x490] sm:$0xff]
    %v4807 = vld [vmem:[#allocation3 + $0x498] sm:$0xff]
    %v4808 = vld [vmem:[#allocation3 + $0x4a0] sm:$0xff]
    %v4809 = vld [vmem:[#allocation3 + $0x4a8] sm:$0xff]
    %v4810 = vld [vmem:[#allocation3 + $0x4b0] sm:$0xff]
    %v4811 = vld [vmem:[#allocation3 + $0x4b8] sm:$0xff]
    %v4812 = vld [vmem:[#allocation3 + $0x4c0] sm:$0xff]
    %v4813 = vld [vmem:[#allocation3 + $0x4c8] sm:$0xff]
    %v4814 = vld [vmem:[#allocation3 + $0x4d0] sm:$0xff]
    %v4815 = vld [vmem:[#allocation3 + $0x4d8] sm:$0xff]
    %v4816 = vld [vmem:[#allocation3 + $0x4e0] sm:$0xff]
    %v4817 = vld [vmem:[#allocation3 + $0x4e8] sm:$0xff]
    %v4818 = vld [vmem:[#allocation3 + $0x4f0] sm:$0xff]
    %v4819 = vld [vmem:[#allocation3 + $0x4f8] sm:$0xff]
    %v4821 = vsel %vm136, %v4659, 0
    %v4823 = vand.u32 %v4721, 4294901760
    %4824 = vmatprep.subr.mxu0 %v4823
    %v4825 = vand.u32 %v4720, 4294901760
    %4826 = vmatpush1.msra.mxu0 %v4825
    %v4827 = vand.u32 %v4717, 4294901760
    %4828 = vmatprep.subr.mxu0 %v4827
    %v4829 = vand.u32 %v4716, 4294901760
    %4830 = vmatpush1.msra.mxu0 %v4829
    %v4831 = vand.u32 %v4713, 4294901760
    %4832 = vmatprep.subr.mxu0 %v4831
    %v4833 = vand.u32 %v4712, 4294901760
    %4834 = vmatpush1.msra.mxu0 %v4833
    %v4835 = vand.u32 %v4709, 4294901760
    %4836 = vmatprep.subr.mxu0 %v4835
    %v4837 = vand.u32 %v4708, 4294901760
    %4838 = vmatpush1.msra.mxu0 %v4837
    %v4839 = vand.u32 %v4705, 4294901760
    %4840 = vmatprep.subr.mxu0 %v4839
    %v4841 = vand.u32 %v4704, 4294901760
    %4842 = vmatpush1.msra.mxu0 %v4841
    %v4843 = vand.u32 %v4701, 4294901760
    %4844 = vmatprep.subr.mxu0 %v4843
    %v4845 = vand.u32 %v4700, 4294901760
    %4846 = vmatpush1.msra.mxu0 %v4845
    %v4847 = vand.u32 %v4697, 4294901760
    %4848 = vmatprep.subr.mxu0 %v4847
    %v4849 = vand.u32 %v4696, 4294901760
    %4850 = vmatpush1.msra.mxu0 %v4849
    %v4851 = vand.u32 %v4693, 4294901760
    %4852 = vmatprep.subr.mxu0 %v4851
    %v4853 = vand.u32 %v4692, 4294901760
    %4854 = vmatpush1.msra.mxu0 %v4853
    %v4855 = vand.u32 %v4689, 4294901760
    %4856 = vmatprep.subr.mxu0 %v4855
    %v4857 = vand.u32 %v4688, 4294901760
    %4858 = vmatpush1.msra.mxu0 %v4857
    %v4859 = vand.u32 %v4685, 4294901760
    %4860 = vmatprep.subr.mxu0 %v4859
    %v4861 = vand.u32 %v4684, 4294901760
    %4862 = vmatpush1.msra.mxu0 %v4861
    %v4863 = vand.u32 %v4681, 4294901760
    %4864 = vmatprep.subr.mxu0 %v4863
    %v4865 = vand.u32 %v4680, 4294901760
    %4866 = vmatpush1.msra.mxu0 %v4865
    %v4867 = vand.u32 %v4677, 4294901760
    %4868 = vmatprep.subr.mxu0 %v4867
    %v4869 = vand.u32 %v4676, 4294901760
    %4870 = vmatpush1.msra.mxu0 %v4869
    %v4871 = vand.u32 %v4673, 4294901760
    %4872 = vmatprep.subr.mxu0 %v4871
    %v4873 = vand.u32 %v4672, 4294901760
    %4874 = vmatpush1.msra.mxu0 %v4873
    %v4875 = vand.u32 %v4669, 4294901760
    %4876 = vmatprep.subr.mxu0 %v4875
    %v4877 = vand.u32 %v4668, 4294901760
    %4878 = vmatpush1.msra.mxu0 %v4877
    %v4879 = vand.u32 %v4665, 4294901760
    %4880 = vmatprep.subr.mxu0 %v4879
    %v4881 = vand.u32 %v4664, 4294901760
    %4882 = vmatpush1.msra.mxu0 %v4881
    %v4883 = vand.u32 %v4661, 4294901760
    %4884 = vmatprep.subr.mxu0 %v4883
    %v4885 = vand.u32 %v4660, 4294901760
    %4886 = vmatpush1.msra.mxu0 %v4885
    %v4887 = vand.u32 %v4785, 4294901760
    %4888 = vmatprep.subr.mxu0 %v4887
    %v4889 = vand.u32 %v4784, 4294901760
    %4890 = vmatpush2.msra.mxu0 %v4889
    %v4891 = vand.u32 %v4781, 4294901760
    %4892 = vmatprep.subr.mxu0 %v4891
    %v4893 = vand.u32 %v4780, 4294901760
    %4894 = vmatpush2.msra.mxu0 %v4893
    %v4895 = vand.u32 %v4777, 4294901760
    %4896 = vmatprep.subr.mxu0 %v4895
    %v4897 = vand.u32 %v4776, 4294901760
    %4898 = vmatpush2.msra.mxu0 %v4897
    %v4899 = vand.u32 %v4773, 4294901760
    %4900 = vmatprep.subr.mxu0 %v4899
    %v4901 = vand.u32 %v4772, 4294901760
    %4902 = vmatpush2.msra.mxu0 %v4901
    %v4903 = vand.u32 %v4769, 4294901760
    %4904 = vmatprep.subr.mxu0 %v4903
    %v4905 = vand.u32 %v4768, 4294901760
    %4906 = vmatpush2.msra.mxu0 %v4905
    %v4907 = vand.u32 %v4765, 4294901760
    %4908 = vmatprep.subr.mxu0 %v4907
    %v4909 = vand.u32 %v4764, 4294901760
    %4910 = vmatpush2.msra.mxu0 %v4909
    %v4911 = vand.u32 %v4761, 4294901760
    %4912 = vmatprep.subr.mxu0 %v4911
    %v4913 = vand.u32 %v4760, 4294901760
    %4914 = vmatpush2.msra.mxu0 %v4913
    %v4915 = vand.u32 %v4757, 4294901760
    %4916 = vmatprep.subr.mxu0 %v4915
    %v4917 = vand.u32 %v4756, 4294901760
    %4918 = vmatpush2.msra.mxu0 %v4917
    %v4919 = vand.u32 %v4753, 4294901760
    %4920 = vmatprep.subr.mxu0 %v4919
    %v4921 = vand.u32 %v4752, 4294901760
    %4922 = vmatpush2.msra.mxu0 %v4921
    %v4923 = vand.u32 %v4749, 4294901760
    %4924 = vmatprep.subr.mxu0 %v4923
    %v4925 = vand.u32 %v4748, 4294901760
    %4926 = vmatpush2.msra.mxu0 %v4925
    %v4927 = vand.u32 %v4745, 4294901760
    %4928 = vmatprep.subr.mxu0 %v4927
    %v4929 = vand.u32 %v4744, 4294901760
    %4930 = vmatpush2.msra.mxu0 %v4929
    %v4931 = vand.u32 %v4741, 4294901760
    %4932 = vmatprep.subr.mxu0 %v4931
    %v4933 = vand.u32 %v4740, 4294901760
    %4934 = vmatpush2.msra.mxu0 %v4933
    %v4935 = vand.u32 %v4737, 4294901760
    %4936 = vmatprep.subr.mxu0 %v4935
    %v4937 = vand.u32 %v4736, 4294901760
    %4938 = vmatpush2.msra.mxu0 %v4937
    %v4939 = vand.u32 %v4733, 4294901760
    %4940 = vmatprep.subr.mxu0 %v4939
    %v4941 = vand.u32 %v4732, 4294901760
    %4942 = vmatpush2.msra.mxu0 %v4941
    %v4943 = vand.u32 %v4729, 4294901760
    %4944 = vmatprep.subr.mxu0 %v4943
    %v4945 = vand.u32 %v4728, 4294901760
    %4946 = vmatpush2.msra.mxu0 %v4945
    %v4947 = vand.u32 %v4725, 4294901760
    %4948 = vmatprep.subr.mxu0 %v4947
    %v4949 = vand.u32 %v4724, 4294901760
    %4950 = vmatpush2.msra.mxu0 %v4949
    %v4951 = vand.u32 %v4658, 4294901760
    %v4952 = vsub.f32 %v4658, %v4951
    %v4953 = vand.u32 %v4952, 4294901760
    %v4954 = vsub.f32 %v4952, %v4953
    %v4955 = vand.u32 %v4954, 4294901760
    %4956 = vmatprep.mubr.f32.mxu0 %v4955
    %v4957 = vand.u32 %v4657, 4294901760
    %v4958 = vsub.f32 %v4657, %v4957
    %v4959 = vand.u32 %v4958, 4294901760
    %v4960 = vsub.f32 %v4958, %v4959
    %v4961 = vand.u32 %v4960, 4294901760
    %4962 = vmatmul.mubr.f32.gmra.mxu0 %v4961
    %v4963 = vpop.f32.mrf.mxu0
    %v4964 = vadd.f32 0.0, %v4963
    %v4965 = vpop.f32.mrf.mxu0
    %v4966 = vadd.f32 0.0, %v4965
    %4967 = vdwg.mxu0
    %v4968 = vand.u32 %v4721, 4294901760
    %v4969 = vsub.f32 %v4721, %v4968
    %v4970 = vand.u32 %v4969, 4294901760
    %v4971 = vsub.f32 %v4969, %v4970
    %v4972 = vand.u32 %v4971, 4294901760
    %4973 = vmatprep.subr.mxu0 %v4972
    %v4974 = vand.u32 %v4720, 4294901760
    %v4975 = vsub.f32 %v4720, %v4974
    %v4976 = vand.u32 %v4975, 4294901760
    %v4977 = vsub.f32 %v4975, %v4976
    %v4978 = vand.u32 %v4977, 4294901760
    %4979 = vmatpush1.msra.mxu0 %v4978
    %v4980 = vand.u32 %v4717, 4294901760
    %v4981 = vsub.f32 %v4717, %v4980
    %v4982 = vand.u32 %v4981, 4294901760
    %v4983 = vsub.f32 %v4981, %v4982
    %v4984 = vand.u32 %v4983, 4294901760
    %4985 = vmatprep.subr.mxu0 %v4984
    %v4986 = vand.u32 %v4716, 4294901760
    %v4987 = vsub.f32 %v4716, %v4986
    %v4988 = vand.u32 %v4987, 4294901760
    %v4989 = vsub.f32 %v4987, %v4988
    %v4990 = vand.u32 %v4989, 4294901760
    %4991 = vmatpush1.msra.mxu0 %v4990
    %v4992 = vand.u32 %v4713, 4294901760
    %v4993 = vsub.f32 %v4713, %v4992
    %v4994 = vand.u32 %v4993, 4294901760
    %v4995 = vsub.f32 %v4993, %v4994
    %v4996 = vand.u32 %v4995, 4294901760
    %4997 = vmatprep.subr.mxu0 %v4996
    %v4998 = vand.u32 %v4712, 4294901760
    %v4999 = vsub.f32 %v4712, %v4998
    %v5000 = vand.u32 %v4999, 4294901760
    %v5001 = vsub.f32 %v4999, %v5000
    %v5002 = vand.u32 %v5001, 4294901760
    %5003 = vmatpush1.msra.mxu0 %v5002
    %v5004 = vand.u32 %v4709, 4294901760
    %v5005 = vsub.f32 %v4709, %v5004
    %v5006 = vand.u32 %v5005, 4294901760
    %v5007 = vsub.f32 %v5005, %v5006
    %v5008 = vand.u32 %v5007, 4294901760
    %5009 = vmatprep.subr.mxu0 %v5008
    %v5010 = vand.u32 %v4708, 4294901760
    %v5011 = vsub.f32 %v4708, %v5010
    %v5012 = vand.u32 %v5011, 4294901760
    %v5013 = vsub.f32 %v5011, %v5012
    %v5014 = vand.u32 %v5013, 4294901760
    %5015 = vmatpush1.msra.mxu0 %v5014
    %v5016 = vand.u32 %v4705, 4294901760
    %v5017 = vsub.f32 %v4705, %v5016
    %v5018 = vand.u32 %v5017, 4294901760
    %v5019 = vsub.f32 %v5017, %v5018
    %v5020 = vand.u32 %v5019, 4294901760
    %5021 = vmatprep.subr.mxu0 %v5020
    %v5022 = vand.u32 %v4704, 4294901760
    %v5023 = vsub.f32 %v4704, %v5022
    %v5024 = vand.u32 %v5023, 4294901760
    %v5025 = vsub.f32 %v5023, %v5024
    %v5026 = vand.u32 %v5025, 4294901760
    %5027 = vmatpush1.msra.mxu0 %v5026
    %v5028 = vand.u32 %v4701, 4294901760
    %v5029 = vsub.f32 %v4701, %v5028
    %v5030 = vand.u32 %v5029, 4294901760
    %v5031 = vsub.f32 %v5029, %v5030
    %v5032 = vand.u32 %v5031, 4294901760
    %5033 = vmatprep.subr.mxu0 %v5032
    %v5034 = vand.u32 %v4700, 4294901760
    %v5035 = vsub.f32 %v4700, %v5034
    %v5036 = vand.u32 %v5035, 4294901760
    %v5037 = vsub.f32 %v5035, %v5036
    %v5038 = vand.u32 %v5037, 4294901760
    %5039 = vmatpush1.msra.mxu0 %v5038
    %v5040 = vand.u32 %v4697, 4294901760
    %v5041 = vsub.f32 %v4697, %v5040
    %v5042 = vand.u32 %v5041, 4294901760
    %v5043 = vsub.f32 %v5041, %v5042
    %v5044 = vand.u32 %v5043, 4294901760
    %5045 = vmatprep.subr.mxu0 %v5044
    %v5046 = vand.u32 %v4696, 4294901760
    %v5047 = vsub.f32 %v4696, %v5046
    %v5048 = vand.u32 %v5047, 4294901760
    %v5049 = vsub.f32 %v5047, %v5048
    %v5050 = vand.u32 %v5049, 4294901760
    %5051 = vmatpush1.msra.mxu0 %v5050
    %v5052 = vand.u32 %v4693, 4294901760
    %v5053 = vsub.f32 %v4693, %v5052
    %v5054 = vand.u32 %v5053, 4294901760
    %v5055 = vsub.f32 %v5053, %v5054
    %v5056 = vand.u32 %v5055, 4294901760
    %5057 = vmatprep.subr.mxu0 %v5056
    %v5058 = vand.u32 %v4692, 4294901760
    %v5059 = vsub.f32 %v4692, %v5058
    %v5060 = vand.u32 %v5059, 4294901760
    %v5061 = vsub.f32 %v5059, %v5060
    %v5062 = vand.u32 %v5061, 4294901760
    %5063 = vmatpush1.msra.mxu0 %v5062
    %v5064 = vand.u32 %v4689, 4294901760
    %v5065 = vsub.f32 %v4689, %v5064
    %v5066 = vand.u32 %v5065, 4294901760
    %v5067 = vsub.f32 %v5065, %v5066
    %v5068 = vand.u32 %v5067, 4294901760
    %5069 = vmatprep.subr.mxu0 %v5068
    %v5070 = vand.u32 %v4688, 4294901760
    %v5071 = vsub.f32 %v4688, %v5070
    %v5072 = vand.u32 %v5071, 4294901760
    %v5073 = vsub.f32 %v5071, %v5072
    %v5074 = vand.u32 %v5073, 4294901760
    %5075 = vmatpush1.msra.mxu0 %v5074
    %v5076 = vand.u32 %v4685, 4294901760
    %v5077 = vsub.f32 %v4685, %v5076
    %v5078 = vand.u32 %v5077, 4294901760
    %v5079 = vsub.f32 %v5077, %v5078
    %v5080 = vand.u32 %v5079, 4294901760
    %5081 = vmatprep.subr.mxu0 %v5080
    %v5082 = vand.u32 %v4684, 4294901760
    %v5083 = vsub.f32 %v4684, %v5082
    %v5084 = vand.u32 %v5083, 4294901760
    %v5085 = vsub.f32 %v5083, %v5084
    %v5086 = vand.u32 %v5085, 4294901760
    %5087 = vmatpush1.msra.mxu0 %v5086
    %v5088 = vand.u32 %v4681, 4294901760
    %v5089 = vsub.f32 %v4681, %v5088
    %v5090 = vand.u32 %v5089, 4294901760
    %v5091 = vsub.f32 %v5089, %v5090
    %v5092 = vand.u32 %v5091, 4294901760
    %5093 = vmatprep.subr.mxu0 %v5092
    %v5094 = vand.u32 %v4680, 4294901760
    %v5095 = vsub.f32 %v4680, %v5094
    %v5096 = vand.u32 %v5095, 4294901760
    %v5097 = vsub.f32 %v5095, %v5096
    %v5098 = vand.u32 %v5097, 4294901760
    %5099 = vmatpush1.msra.mxu0 %v5098
    %v5100 = vand.u32 %v4677, 4294901760
    %v5101 = vsub.f32 %v4677, %v5100
    %v5102 = vand.u32 %v5101, 4294901760
    %v5103 = vsub.f32 %v5101, %v5102
    %v5104 = vand.u32 %v5103, 4294901760
    %5105 = vmatprep.subr.mxu0 %v5104
    %v5106 = vand.u32 %v4676, 4294901760
    %v5107 = vsub.f32 %v4676, %v5106
    %v5108 = vand.u32 %v5107, 4294901760
    %v5109 = vsub.f32 %v5107, %v5108
    %v5110 = vand.u32 %v5109, 4294901760
    %5111 = vmatpush1.msra.mxu0 %v5110
    %v5112 = vand.u32 %v4673, 4294901760
    %v5113 = vsub.f32 %v4673, %v5112
    %v5114 = vand.u32 %v5113, 4294901760
    %v5115 = vsub.f32 %v5113, %v5114
    %v5116 = vand.u32 %v5115, 4294901760
    %5117 = vmatprep.subr.mxu0 %v5116
    %v5118 = vand.u32 %v4672, 4294901760
    %v5119 = vsub.f32 %v4672, %v5118
    %v5120 = vand.u32 %v5119, 4294901760
    %v5121 = vsub.f32 %v5119, %v5120
    %v5122 = vand.u32 %v5121, 4294901760
    %5123 = vmatpush1.msra.mxu0 %v5122
    %v5124 = vand.u32 %v4669, 4294901760
    %v5125 = vsub.f32 %v4669, %v5124
    %v5126 = vand.u32 %v5125, 4294901760
    %v5127 = vsub.f32 %v5125, %v5126
    %v5128 = vand.u32 %v5127, 4294901760
    %5129 = vmatprep.subr.mxu0 %v5128
    %v5130 = vand.u32 %v4668, 4294901760
    %v5131 = vsub.f32 %v4668, %v5130
    %v5132 = vand.u32 %v5131, 4294901760
    %v5133 = vsub.f32 %v5131, %v5132
    %v5134 = vand.u32 %v5133, 4294901760
    %5135 = vmatpush1.msra.mxu0 %v5134
    %v5136 = vand.u32 %v4665, 4294901760
    %v5137 = vsub.f32 %v4665, %v5136
    %v5138 = vand.u32 %v5137, 4294901760
    %v5139 = vsub.f32 %v5137, %v5138
    %v5140 = vand.u32 %v5139, 4294901760
    %5141 = vmatprep.subr.mxu0 %v5140
    %v5142 = vand.u32 %v4664, 4294901760
    %v5143 = vsub.f32 %v4664, %v5142
    %v5144 = vand.u32 %v5143, 4294901760
    %v5145 = vsub.f32 %v5143, %v5144
    %v5146 = vand.u32 %v5145, 4294901760
    %5147 = vmatpush1.msra.mxu0 %v5146
    %v5148 = vand.u32 %v4661, 4294901760
    %v5149 = vsub.f32 %v4661, %v5148
    %v5150 = vand.u32 %v5149, 4294901760
    %v5151 = vsub.f32 %v5149, %v5150
    %v5152 = vand.u32 %v5151, 4294901760
    %5153 = vmatprep.subr.mxu0 %v5152
    %v5154 = vand.u32 %v4660, 4294901760
    %v5155 = vsub.f32 %v4660, %v5154
    %v5156 = vand.u32 %v5155, 4294901760
    %v5157 = vsub.f32 %v5155, %v5156
    %v5158 = vand.u32 %v5157, 4294901760
    %5159 = vmatpush1.msra.mxu0 %v5158
    %v5160 = vand.u32 %v4785, 4294901760
    %v5161 = vsub.f32 %v4785, %v5160
    %v5162 = vand.u32 %v5161, 4294901760
    %v5163 = vsub.f32 %v5161, %v5162
    %v5164 = vand.u32 %v5163, 4294901760
    %5165 = vmatprep.subr.mxu0 %v5164
    %v5166 = vand.u32 %v4784, 4294901760
    %v5167 = vsub.f32 %v4784, %v5166
    %v5168 = vand.u32 %v5167, 4294901760
    %v5169 = vsub.f32 %v5167, %v5168
    %v5170 = vand.u32 %v5169, 4294901760
    %5171 = vmatpush2.msra.mxu0 %v5170
    %v5172 = vand.u32 %v4781, 4294901760
    %v5173 = vsub.f32 %v4781, %v5172
    %v5174 = vand.u32 %v5173, 4294901760
    %v5175 = vsub.f32 %v5173, %v5174
    %v5176 = vand.u32 %v5175, 4294901760
    %5177 = vmatprep.subr.mxu0 %v5176
    %v5178 = vand.u32 %v4780, 4294901760
    %v5179 = vsub.f32 %v4780, %v5178
    %v5180 = vand.u32 %v5179, 4294901760
    %v5181 = vsub.f32 %v5179, %v5180
    %v5182 = vand.u32 %v5181, 4294901760
    %5183 = vmatpush2.msra.mxu0 %v5182
    %v5184 = vand.u32 %v4777, 4294901760
    %v5185 = vsub.f32 %v4777, %v5184
    %v5186 = vand.u32 %v5185, 4294901760
    %v5187 = vsub.f32 %v5185, %v5186
    %v5188 = vand.u32 %v5187, 4294901760
    %5189 = vmatprep.subr.mxu0 %v5188
    %v5190 = vand.u32 %v4776, 4294901760
    %v5191 = vsub.f32 %v4776, %v5190
    %v5192 = vand.u32 %v5191, 4294901760
    %v5193 = vsub.f32 %v5191, %v5192
    %v5194 = vand.u32 %v5193, 4294901760
    %5195 = vmatpush2.msra.mxu0 %v5194
    %v5196 = vand.u32 %v4773, 4294901760
    %v5197 = vsub.f32 %v4773, %v5196
    %v5198 = vand.u32 %v5197, 4294901760
    %v5199 = vsub.f32 %v5197, %v5198
    %v5200 = vand.u32 %v5199, 4294901760
    %5201 = vmatprep.subr.mxu0 %v5200
    %v5202 = vand.u32 %v4772, 4294901760
    %v5203 = vsub.f32 %v4772, %v5202
    %v5204 = vand.u32 %v5203, 4294901760
    %v5205 = vsub.f32 %v5203, %v5204
    %v5206 = vand.u32 %v5205, 4294901760
    %5207 = vmatpush2.msra.mxu0 %v5206
    %v5208 = vand.u32 %v4769, 4294901760
    %v5209 = vsub.f32 %v4769, %v5208
    %v5210 = vand.u32 %v5209, 4294901760
    %v5211 = vsub.f32 %v5209, %v5210
    %v5212 = vand.u32 %v5211, 4294901760
    %5213 = vmatprep.subr.mxu0 %v5212
    %v5214 = vand.u32 %v4768, 4294901760
    %v5215 = vsub.f32 %v4768, %v5214
    %v5216 = vand.u32 %v5215, 4294901760
    %v5217 = vsub.f32 %v5215, %v5216
    %v5218 = vand.u32 %v5217, 4294901760
    %5219 = vmatpush2.msra.mxu0 %v5218
    %v5220 = vand.u32 %v4765, 4294901760
    %v5221 = vsub.f32 %v4765, %v5220
    %v5222 = vand.u32 %v5221, 4294901760
    %v5223 = vsub.f32 %v5221, %v5222
    %v5224 = vand.u32 %v5223, 4294901760
    %5225 = vmatprep.subr.mxu0 %v5224
    %v5226 = vand.u32 %v4764, 4294901760
    %v5227 = vsub.f32 %v4764, %v5226
    %v5228 = vand.u32 %v5227, 4294901760
    %v5229 = vsub.f32 %v5227, %v5228
    %v5230 = vand.u32 %v5229, 4294901760
    %5231 = vmatpush2.msra.mxu0 %v5230
    %v5232 = vand.u32 %v4761, 4294901760
    %v5233 = vsub.f32 %v4761, %v5232
    %v5234 = vand.u32 %v5233, 4294901760
    %v5235 = vsub.f32 %v5233, %v5234
    %v5236 = vand.u32 %v5235, 4294901760
    %5237 = vmatprep.subr.mxu0 %v5236
    %v5238 = vand.u32 %v4760, 4294901760
    %v5239 = vsub.f32 %v4760, %v5238
    %v5240 = vand.u32 %v5239, 4294901760
    %v5241 = vsub.f32 %v5239, %v5240
    %v5242 = vand.u32 %v5241, 4294901760
    %5243 = vmatpush2.msra.mxu0 %v5242
    %v5244 = vand.u32 %v4757, 4294901760
    %v5245 = vsub.f32 %v4757, %v5244
    %v5246 = vand.u32 %v5245, 4294901760
    %v5247 = vsub.f32 %v5245, %v5246
    %v5248 = vand.u32 %v5247, 4294901760
    %5249 = vmatprep.subr.mxu0 %v5248
    %v5250 = vand.u32 %v4756, 4294901760
    %v5251 = vsub.f32 %v4756, %v5250
    %v5252 = vand.u32 %v5251, 4294901760
    %v5253 = vsub.f32 %v5251, %v5252
    %v5254 = vand.u32 %v5253, 4294901760
    %5255 = vmatpush2.msra.mxu0 %v5254
    %v5256 = vand.u32 %v4753, 4294901760
    %v5257 = vsub.f32 %v4753, %v5256
    %v5258 = vand.u32 %v5257, 4294901760
    %v5259 = vsub.f32 %v5257, %v5258
    %v5260 = vand.u32 %v5259, 4294901760
    %5261 = vmatprep.subr.mxu0 %v5260
    %v5262 = vand.u32 %v4752, 4294901760
    %v5263 = vsub.f32 %v4752, %v5262
    %v5264 = vand.u32 %v5263, 4294901760
    %v5265 = vsub.f32 %v5263, %v5264
    %v5266 = vand.u32 %v5265, 4294901760
    %5267 = vmatpush2.msra.mxu0 %v5266
    %v5268 = vand.u32 %v4749, 4294901760
    %v5269 = vsub.f32 %v4749, %v5268
    %v5270 = vand.u32 %v5269, 4294901760
    %v5271 = vsub.f32 %v5269, %v5270
    %v5272 = vand.u32 %v5271, 4294901760
    %5273 = vmatprep.subr.mxu0 %v5272
    %v5274 = vand.u32 %v4748, 4294901760
    %v5275 = vsub.f32 %v4748, %v5274
    %v5276 = vand.u32 %v5275, 4294901760
    %v5277 = vsub.f32 %v5275, %v5276
    %v5278 = vand.u32 %v5277, 4294901760
    %5279 = vmatpush2.msra.mxu0 %v5278
    %v5280 = vand.u32 %v4745, 4294901760
    %v5281 = vsub.f32 %v4745, %v5280
    %v5282 = vand.u32 %v5281, 4294901760
    %v5283 = vsub.f32 %v5281, %v5282
    %v5284 = vand.u32 %v5283, 4294901760
    %5285 = vmatprep.subr.mxu0 %v5284
    %v5286 = vand.u32 %v4744, 4294901760
    %v5287 = vsub.f32 %v4744, %v5286
    %v5288 = vand.u32 %v5287, 4294901760
    %v5289 = vsub.f32 %v5287, %v5288
    %v5290 = vand.u32 %v5289, 4294901760
    %5291 = vmatpush2.msra.mxu0 %v5290
    %v5292 = vand.u32 %v4741, 4294901760
    %v5293 = vsub.f32 %v4741, %v5292
    %v5294 = vand.u32 %v5293, 4294901760
    %v5295 = vsub.f32 %v5293, %v5294
    %v5296 = vand.u32 %v5295, 4294901760
    %5297 = vmatprep.subr.mxu0 %v5296
    %v5298 = vand.u32 %v4740, 4294901760
    %v5299 = vsub.f32 %v4740, %v5298
    %v5300 = vand.u32 %v5299, 4294901760
    %v5301 = vsub.f32 %v5299, %v5300
    %v5302 = vand.u32 %v5301, 4294901760
    %5303 = vmatpush2.msra.mxu0 %v5302
    %v5304 = vand.u32 %v4737, 4294901760
    %v5305 = vsub.f32 %v4737, %v5304
    %v5306 = vand.u32 %v5305, 4294901760
    %v5307 = vsub.f32 %v5305, %v5306
    %v5308 = vand.u32 %v5307, 4294901760
    %5309 = vmatprep.subr.mxu0 %v5308
    %v5310 = vand.u32 %v4736, 4294901760
    %v5311 = vsub.f32 %v4736, %v5310
    %v5312 = vand.u32 %v5311, 4294901760
    %v5313 = vsub.f32 %v5311, %v5312
    %v5314 = vand.u32 %v5313, 4294901760
    %5315 = vmatpush2.msra.mxu0 %v5314
    %v5316 = vand.u32 %v4733, 4294901760
    %v5317 = vsub.f32 %v4733, %v5316
    %v5318 = vand.u32 %v5317, 4294901760
    %v5319 = vsub.f32 %v5317, %v5318
    %v5320 = vand.u32 %v5319, 4294901760
    %5321 = vmatprep.subr.mxu0 %v5320
    %v5322 = vand.u32 %v4732, 4294901760
    %v5323 = vsub.f32 %v4732, %v5322
    %v5324 = vand.u32 %v5323, 4294901760
    %v5325 = vsub.f32 %v5323, %v5324
    %v5326 = vand.u32 %v5325, 4294901760
    %5327 = vmatpush2.msra.mxu0 %v5326
    %v5328 = vand.u32 %v4729, 4294901760
    %v5329 = vsub.f32 %v4729, %v5328
    %v5330 = vand.u32 %v5329, 4294901760
    %v5331 = vsub.f32 %v5329, %v5330
    %v5332 = vand.u32 %v5331, 4294901760
    %5333 = vmatprep.subr.mxu0 %v5332
    %v5334 = vand.u32 %v4728, 4294901760
    %v5335 = vsub.f32 %v4728, %v5334
    %v5336 = vand.u32 %v5335, 4294901760
    %v5337 = vsub.f32 %v5335, %v5336
    %v5338 = vand.u32 %v5337, 4294901760
    %5339 = vmatpush2.msra.mxu0 %v5338
    %v5340 = vand.u32 %v4725, 4294901760
    %v5341 = vsub.f32 %v4725, %v5340
    %v5342 = vand.u32 %v5341, 4294901760
    %v5343 = vsub.f32 %v5341, %v5342
    %v5344 = vand.u32 %v5343, 4294901760
    %5345 = vmatprep.subr.mxu0 %v5344
    %v5346 = vand.u32 %v4724, 4294901760
    %v5347 = vsub.f32 %v4724, %v5346
    %v5348 = vand.u32 %v5347, 4294901760
    %v5349 = vsub.f32 %v5347, %v5348
    %v5350 = vand.u32 %v5349, 4294901760
    %5351 = vmatpush2.msra.mxu0 %v5350
    %v5352 = vand.u32 %v4658, 4294901760
    %5353 = vmatprep.mubr.f32.mxu0 %v5352
    %v5354 = vand.u32 %v4657, 4294901760
    %5355 = vmatmul.mubr.f32.gmra.mxu0 %v5354
    %v5356 = vpop.f32.mrf.mxu0
    %v5357 = vadd.f32 %v4964, %v5356
    %v5358 = vpop.f32.mrf.mxu0
    %v5359 = vadd.f32 %v4966, %v5358
    %5360 = vdwg.mxu0
    %v5361 = vand.u32 %v4721, 4294901760
    %v5362 = vsub.f32 %v4721, %v5361
    %5363 = vmatprep.subr.mxu0 %v5362
    %v5364 = vand.u32 %v4720, 4294901760
    %v5365 = vsub.f32 %v4720, %v5364
    %5366 = vmatpush1.msra.mxu0 %v5365
    %v5367 = vand.u32 %v4717, 4294901760
    %v5368 = vsub.f32 %v4717, %v5367
    %5369 = vmatprep.subr.mxu0 %v5368
    %v5370 = vand.u32 %v4716, 4294901760
    %v5371 = vsub.f32 %v4716, %v5370
    %5372 = vmatpush1.msra.mxu0 %v5371
    %v5373 = vand.u32 %v4713, 4294901760
    %v5374 = vsub.f32 %v4713, %v5373
    %5375 = vmatprep.subr.mxu0 %v5374
    %v5376 = vand.u32 %v4712, 4294901760
    %v5377 = vsub.f32 %v4712, %v5376
    %5378 = vmatpush1.msra.mxu0 %v5377
    %v5379 = vand.u32 %v4709, 4294901760
    %v5380 = vsub.f32 %v4709, %v5379
    %5381 = vmatprep.subr.mxu0 %v5380
    %v5382 = vand.u32 %v4708, 4294901760
    %v5383 = vsub.f32 %v4708, %v5382
    %5384 = vmatpush1.msra.mxu0 %v5383
    %v5385 = vand.u32 %v4705, 4294901760
    %v5386 = vsub.f32 %v4705, %v5385
    %5387 = vmatprep.subr.mxu0 %v5386
    %v5388 = vand.u32 %v4704, 4294901760
    %v5389 = vsub.f32 %v4704, %v5388
    %5390 = vmatpush1.msra.mxu0 %v5389
    %v5391 = vand.u32 %v4701, 4294901760
    %v5392 = vsub.f32 %v4701, %v5391
    %5393 = vmatprep.subr.mxu0 %v5392
    %v5394 = vand.u32 %v4700, 4294901760
    %v5395 = vsub.f32 %v4700, %v5394
    %5396 = vmatpush1.msra.mxu0 %v5395
    %v5397 = vand.u32 %v4697, 4294901760
    %v5398 = vsub.f32 %v4697, %v5397
    %5399 = vmatprep.subr.mxu0 %v5398
    %v5400 = vand.u32 %v4696, 4294901760
    %v5401 = vsub.f32 %v4696, %v5400
    %5402 = vmatpush1.msra.mxu0 %v5401
    %v5403 = vand.u32 %v4693, 4294901760
    %v5404 = vsub.f32 %v4693, %v5403
    %5405 = vmatprep.subr.mxu0 %v5404
    %v5406 = vand.u32 %v4692, 4294901760
    %v5407 = vsub.f32 %v4692, %v5406
    %5408 = vmatpush1.msra.mxu0 %v5407
    %v5409 = vand.u32 %v4689, 4294901760
    %v5410 = vsub.f32 %v4689, %v5409
    %5411 = vmatprep.subr.mxu0 %v5410
    %v5412 = vand.u32 %v4688, 4294901760
    %v5413 = vsub.f32 %v4688, %v5412
    %5414 = vmatpush1.msra.mxu0 %v5413
    %v5415 = vand.u32 %v4685, 4294901760
    %v5416 = vsub.f32 %v4685, %v5415
    %5417 = vmatprep.subr.mxu0 %v5416
    %v5418 = vand.u32 %v4684, 4294901760
    %v5419 = vsub.f32 %v4684, %v5418
    %5420 = vmatpush1.msra.mxu0 %v5419
    %v5421 = vand.u32 %v4681, 4294901760
    %v5422 = vsub.f32 %v4681, %v5421
    %5423 = vmatprep.subr.mxu0 %v5422
    %v5424 = vand.u32 %v4680, 4294901760
    %v5425 = vsub.f32 %v4680, %v5424
    %5426 = vmatpush1.msra.mxu0 %v5425
    %v5427 = vand.u32 %v4677, 4294901760
    %v5428 = vsub.f32 %v4677, %v5427
    %5429 = vmatprep.subr.mxu0 %v5428
    %v5430 = vand.u32 %v4676, 4294901760
    %v5431 = vsub.f32 %v4676, %v5430
    %5432 = vmatpush1.msra.mxu0 %v5431
    %v5433 = vand.u32 %v4673, 4294901760
    %v5434 = vsub.f32 %v4673, %v5433
    %5435 = vmatprep.subr.mxu0 %v5434
    %v5436 = vand.u32 %v4672, 4294901760
    %v5437 = vsub.f32 %v4672, %v5436
    %5438 = vmatpush1.msra.mxu0 %v5437
    %v5439 = vand.u32 %v4669, 4294901760
    %v5440 = vsub.f32 %v4669, %v5439
    %5441 = vmatprep.subr.mxu0 %v5440
    %v5442 = vand.u32 %v4668, 4294901760
    %v5443 = vsub.f32 %v4668, %v5442
    %5444 = vmatpush1.msra.mxu0 %v5443
    %v5445 = vand.u32 %v4665, 4294901760
    %v5446 = vsub.f32 %v4665, %v5445
    %5447 = vmatprep.subr.mxu0 %v5446
    %v5448 = vand.u32 %v4664, 4294901760
    %v5449 = vsub.f32 %v4664, %v5448
    %5450 = vmatpush1.msra.mxu0 %v5449
    %v5451 = vand.u32 %v4661, 4294901760
    %v5452 = vsub.f32 %v4661, %v5451
    %5453 = vmatprep.subr.mxu0 %v5452
    %v5454 = vand.u32 %v4660, 4294901760
    %v5455 = vsub.f32 %v4660, %v5454
    %5456 = vmatpush1.msra.mxu0 %v5455
    %v5457 = vand.u32 %v4785, 4294901760
    %v5458 = vsub.f32 %v4785, %v5457
    %5459 = vmatprep.subr.mxu0 %v5458
    %v5460 = vand.u32 %v4784, 4294901760
    %v5461 = vsub.f32 %v4784, %v5460
    %5462 = vmatpush2.msra.mxu0 %v5461
    %v5463 = vand.u32 %v4781, 4294901760
    %v5464 = vsub.f32 %v4781, %v5463
    %5465 = vmatprep.subr.mxu0 %v5464
    %v5466 = vand.u32 %v4780, 4294901760
    %v5467 = vsub.f32 %v4780, %v5466
    %5468 = vmatpush2.msra.mxu0 %v5467
    %v5469 = vand.u32 %v4777, 4294901760
    %v5470 = vsub.f32 %v4777, %v5469
    %5471 = vmatprep.subr.mxu0 %v5470
    %v5472 = vand.u32 %v4776, 4294901760
    %v5473 = vsub.f32 %v4776, %v5472
    %5474 = vmatpush2.msra.mxu0 %v5473
    %v5475 = vand.u32 %v4773, 4294901760
    %v5476 = vsub.f32 %v4773, %v5475
    %5477 = vmatprep.subr.mxu0 %v5476
    %v5478 = vand.u32 %v4772, 4294901760
    %v5479 = vsub.f32 %v4772, %v5478
    %5480 = vmatpush2.msra.mxu0 %v5479
    %v5481 = vand.u32 %v4769, 4294901760
    %v5482 = vsub.f32 %v4769, %v5481
    %5483 = vmatprep.subr.mxu0 %v5482
    %v5484 = vand.u32 %v4768, 4294901760
    %v5485 = vsub.f32 %v4768, %v5484
    %5486 = vmatpush2.msra.mxu0 %v5485
    %v5487 = vand.u32 %v4765, 4294901760
    %v5488 = vsub.f32 %v4765, %v5487
    %5489 = vmatprep.subr.mxu0 %v5488
    %v5490 = vand.u32 %v4764, 4294901760
    %v5491 = vsub.f32 %v4764, %v5490
    %5492 = vmatpush2.msra.mxu0 %v5491
    %v5493 = vand.u32 %v4761, 4294901760
    %v5494 = vsub.f32 %v4761, %v5493
    %5495 = vmatprep.subr.mxu0 %v5494
    %v5496 = vand.u32 %v4760, 4294901760
    %v5497 = vsub.f32 %v4760, %v5496
    %5498 = vmatpush2.msra.mxu0 %v5497
    %v5499 = vand.u32 %v4757, 4294901760
    %v5500 = vsub.f32 %v4757, %v5499
    %5501 = vmatprep.subr.mxu0 %v5500
    %v5502 = vand.u32 %v4756, 4294901760
    %v5503 = vsub.f32 %v4756, %v5502
    %5504 = vmatpush2.msra.mxu0 %v5503
    %v5505 = vand.u32 %v4753, 4294901760
    %v5506 = vsub.f32 %v4753, %v5505
    %5507 = vmatprep.subr.mxu0 %v5506
    %v5508 = vand.u32 %v4752, 4294901760
    %v5509 = vsub.f32 %v4752, %v5508
    %5510 = vmatpush2.msra.mxu0 %v5509
    %v5511 = vand.u32 %v4749, 4294901760
    %v5512 = vsub.f32 %v4749, %v5511
    %5513 = vmatprep.subr.mxu0 %v5512
    %v5514 = vand.u32 %v4748, 4294901760
    %v5515 = vsub.f32 %v4748, %v5514
    %5516 = vmatpush2.msra.mxu0 %v5515
    %v5517 = vand.u32 %v4745, 4294901760
    %v5518 = vsub.f32 %v4745, %v5517
    %5519 = vmatprep.subr.mxu0 %v5518
    %v5520 = vand.u32 %v4744, 4294901760
    %v5521 = vsub.f32 %v4744, %v5520
    %5522 = vmatpush2.msra.mxu0 %v5521
    %v5523 = vand.u32 %v4741, 4294901760
    %v5524 = vsub.f32 %v4741, %v5523
    %5525 = vmatprep.subr.mxu0 %v5524
    %v5526 = vand.u32 %v4740, 4294901760
    %v5527 = vsub.f32 %v4740, %v5526
    %5528 = vmatpush2.msra.mxu0 %v5527
    %v5529 = vand.u32 %v4737, 4294901760
    %v5530 = vsub.f32 %v4737, %v5529
    %5531 = vmatprep.subr.mxu0 %v5530
    %v5532 = vand.u32 %v4736, 4294901760
    %v5533 = vsub.f32 %v4736, %v5532
    %5534 = vmatpush2.msra.mxu0 %v5533
    %v5535 = vand.u32 %v4733, 4294901760
    %v5536 = vsub.f32 %v4733, %v5535
    %5537 = vmatprep.subr.mxu0 %v5536
    %v5538 = vand.u32 %v4732, 4294901760
    %v5539 = vsub.f32 %v4732, %v5538
    %5540 = vmatpush2.msra.mxu0 %v5539
    %v5541 = vand.u32 %v4729, 4294901760
    %v5542 = vsub.f32 %v4729, %v5541
    %5543 = vmatprep.subr.mxu0 %v5542
    %v5544 = vand.u32 %v4728, 4294901760
    %v5545 = vsub.f32 %v4728, %v5544
    %5546 = vmatpush2.msra.mxu0 %v5545
    %v5547 = vand.u32 %v4725, 4294901760
    %v5548 = vsub.f32 %v4725, %v5547
    %5549 = vmatprep.subr.mxu0 %v5548
    %v5550 = vand.u32 %v4724, 4294901760
    %v5551 = vsub.f32 %v4724, %v5550
    %5552 = vmatpush2.msra.mxu0 %v5551
    %v5553 = vand.u32 %v4658, 4294901760
    %v5554 = vsub.f32 %v4658, %v5553
    %5555 = vmatprep.mubr.f32.mxu0 %v5554
    %v5556 = vand.u32 %v4657, 4294901760
    %v5557 = vsub.f32 %v4657, %v5556
    %5558 = vmatmul.mubr.f32.gmra.mxu0 %v5557
    %v5559 = vpop.f32.mrf.mxu0
    %v5560 = vadd.f32 %v5357, %v5559
    %v5561 = vpop.f32.mrf.mxu0
    %v5562 = vadd.f32 %v5359, %v5561
    %5563 = vdwg.mxu0
    %v5564 = vand.u32 %v4721, 4294901760
    %5565 = vmatprep.subr.mxu0 %v5564
    %v5566 = vand.u32 %v4720, 4294901760
    %5567 = vmatpush1.msra.mxu0 %v5566
    %v5568 = vand.u32 %v4717, 4294901760
    %5569 = vmatprep.subr.mxu0 %v5568
    %v5570 = vand.u32 %v4716, 4294901760
    %5571 = vmatpush1.msra.mxu0 %v5570
    %v5572 = vand.u32 %v4713, 4294901760
    %5573 = vmatprep.subr.mxu0 %v5572
    %v5574 = vand.u32 %v4712, 4294901760
    %5575 = vmatpush1.msra.mxu0 %v5574
    %v5576 = vand.u32 %v4709, 4294901760
    %5577 = vmatprep.subr.mxu0 %v5576
    %v5578 = vand.u32 %v4708, 4294901760
    %5579 = vmatpush1.msra.mxu0 %v5578
    %v5580 = vand.u32 %v4705, 4294901760
    %5581 = vmatprep.subr.mxu0 %v5580
    %v5582 = vand.u32 %v4704, 4294901760
    %5583 = vmatpush1.msra.mxu0 %v5582
    %v5584 = vand.u32 %v4701, 4294901760
    %5585 = vmatprep.subr.mxu0 %v5584
    %v5586 = vand.u32 %v4700, 4294901760
    %5587 = vmatpush1.msra.mxu0 %v5586
    %v5588 = vand.u32 %v4697, 4294901760
    %5589 = vmatprep.subr.mxu0 %v5588
    %v5590 = vand.u32 %v4696, 4294901760
    %5591 = vmatpush1.msra.mxu0 %v5590
    %v5592 = vand.u32 %v4693, 4294901760
    %5593 = vmatprep.subr.mxu0 %v5592
    %v5594 = vand.u32 %v4692, 4294901760
    %5595 = vmatpush1.msra.mxu0 %v5594
    %v5596 = vand.u32 %v4689, 4294901760
    %5597 = vmatprep.subr.mxu0 %v5596
    %v5598 = vand.u32 %v4688, 4294901760
    %5599 = vmatpush1.msra.mxu0 %v5598
    %v5600 = vand.u32 %v4685, 4294901760
    %5601 = vmatprep.subr.mxu0 %v5600
    %v5602 = vand.u32 %v4684, 4294901760
    %5603 = vmatpush1.msra.mxu0 %v5602
    %v5604 = vand.u32 %v4681, 4294901760
    %5605 = vmatprep.subr.mxu0 %v5604
    %v5606 = vand.u32 %v4680, 4294901760
    %5607 = vmatpush1.msra.mxu0 %v5606
    %v5608 = vand.u32 %v4677, 4294901760
    %5609 = vmatprep.subr.mxu0 %v5608
    %v5610 = vand.u32 %v4676, 4294901760
    %5611 = vmatpush1.msra.mxu0 %v5610
    %v5612 = vand.u32 %v4673, 4294901760
    %5613 = vmatprep.subr.mxu0 %v5612
    %v5614 = vand.u32 %v4672, 4294901760
    %5615 = vmatpush1.msra.mxu0 %v5614
    %v5616 = vand.u32 %v4669, 4294901760
    %5617 = vmatprep.subr.mxu0 %v5616
    %v5618 = vand.u32 %v4668, 4294901760
    %5619 = vmatpush1.msra.mxu0 %v5618
    %v5620 = vand.u32 %v4665, 4294901760
    %5621 = vmatprep.subr.mxu0 %v5620
    %v5622 = vand.u32 %v4664, 4294901760
    %5623 = vmatpush1.msra.mxu0 %v5622
    %v5624 = vand.u32 %v4661, 4294901760
    %5625 = vmatprep.subr.mxu0 %v5624
    %v5626 = vand.u32 %v4660, 4294901760
    %5627 = vmatpush1.msra.mxu0 %v5626
    %v5628 = vand.u32 %v4785, 4294901760
    %5629 = vmatprep.subr.mxu0 %v5628
    %v5630 = vand.u32 %v4784, 4294901760
    %5631 = vmatpush2.msra.mxu0 %v5630
    %v5632 = vand.u32 %v4781, 4294901760
    %5633 = vmatprep.subr.mxu0 %v5632
    %v5634 = vand.u32 %v4780, 4294901760
    %5635 = vmatpush2.msra.mxu0 %v5634
    %v5636 = vand.u32 %v4777, 4294901760
    %5637 = vmatprep.subr.mxu0 %v5636
    %v5638 = vand.u32 %v4776, 4294901760
    %5639 = vmatpush2.msra.mxu0 %v5638
    %v5640 = vand.u32 %v4773, 4294901760
    %5641 = vmatprep.subr.mxu0 %v5640
    %v5642 = vand.u32 %v4772, 4294901760
    %5643 = vmatpush2.msra.mxu0 %v5642
    %v5644 = vand.u32 %v4769, 4294901760
    %5645 = vmatprep.subr.mxu0 %v5644
    %v5646 = vand.u32 %v4768, 4294901760
    %5647 = vmatpush2.msra.mxu0 %v5646
    %v5648 = vand.u32 %v4765, 4294901760
    %5649 = vmatprep.subr.mxu0 %v5648
    %v5650 = vand.u32 %v4764, 4294901760
    %5651 = vmatpush2.msra.mxu0 %v5650
    %v5652 = vand.u32 %v4761, 4294901760
    %5653 = vmatprep.subr.mxu0 %v5652
    %v5654 = vand.u32 %v4760, 4294901760
    %5655 = vmatpush2.msra.mxu0 %v5654
    %v5656 = vand.u32 %v4757, 4294901760
    %5657 = vmatprep.subr.mxu0 %v5656
    %v5658 = vand.u32 %v4756, 4294901760
    %5659 = vmatpush2.msra.mxu0 %v5658
    %v5660 = vand.u32 %v4753, 4294901760
    %5661 = vmatprep.subr.mxu0 %v5660
    %v5662 = vand.u32 %v4752, 4294901760
    %5663 = vmatpush2.msra.mxu0 %v5662
    %v5664 = vand.u32 %v4749, 4294901760
    %5665 = vmatprep.subr.mxu0 %v5664
    %v5666 = vand.u32 %v4748, 4294901760
    %5667 = vmatpush2.msra.mxu0 %v5666
    %v5668 = vand.u32 %v4745, 4294901760
    %5669 = vmatprep.subr.mxu0 %v5668
    %v5670 = vand.u32 %v4744, 4294901760
    %5671 = vmatpush2.msra.mxu0 %v5670
    %v5672 = vand.u32 %v4741, 4294901760
    %5673 = vmatprep.subr.mxu0 %v5672
    %v5674 = vand.u32 %v4740, 4294901760
    %5675 = vmatpush2.msra.mxu0 %v5674
    %v5676 = vand.u32 %v4737, 4294901760
    %5677 = vmatprep.subr.mxu0 %v5676
    %v5678 = vand.u32 %v4736, 4294901760
    %5679 = vmatpush2.msra.mxu0 %v5678
    %v5680 = vand.u32 %v4733, 4294901760
    %5681 = vmatprep.subr.mxu0 %v5680
    %v5682 = vand.u32 %v4732, 4294901760
    %5683 = vmatpush2.msra.mxu0 %v5682
    %v5684 = vand.u32 %v4729, 4294901760
    %5685 = vmatprep.subr.mxu0 %v5684
    %v5686 = vand.u32 %v4728, 4294901760
    %5687 = vmatpush2.msra.mxu0 %v5686
    %v5688 = vand.u32 %v4725, 4294901760
    %5689 = vmatprep.subr.mxu0 %v5688
    %v5690 = vand.u32 %v4724, 4294901760
    %5691 = vmatpush2.msra.mxu0 %v5690
    %v5692 = vand.u32 %v4658, 4294901760
    %v5693 = vsub.f32 %v4658, %v5692
    %v5694 = vand.u32 %v5693, 4294901760
    %5695 = vmatprep.mubr.f32.mxu0 %v5694
    %v5696 = vand.u32 %v4657, 4294901760
    %v5697 = vsub.f32 %v4657, %v5696
    %v5698 = vand.u32 %v5697, 4294901760
    %5699 = vmatmul.mubr.f32.gmra.mxu0 %v5698
    %v5700 = vpop.f32.mrf.mxu0
    %v5701 = vadd.f32 %v5560, %v5700
    %v5702 = vpop.f32.mrf.mxu0
    %v5703 = vadd.f32 %v5562, %v5702
    %5704 = vdwg.mxu0
    %v5705 = vand.u32 %v4721, 4294901760
    %v5706 = vsub.f32 %v4721, %v5705
    %v5707 = vand.u32 %v5706, 4294901760
    %5708 = vmatprep.subr.mxu0 %v5707
    %v5709 = vand.u32 %v4720, 4294901760
    %v5710 = vsub.f32 %v4720, %v5709
    %v5711 = vand.u32 %v5710, 4294901760
    %5712 = vmatpush1.msra.mxu0 %v5711
    %v5713 = vand.u32 %v4717, 4294901760
    %v5714 = vsub.f32 %v4717, %v5713
    %v5715 = vand.u32 %v5714, 4294901760
    %5716 = vmatprep.subr.mxu0 %v5715
    %v5717 = vand.u32 %v4716, 4294901760
    %v5718 = vsub.f32 %v4716, %v5717
    %v5719 = vand.u32 %v5718, 4294901760
    %5720 = vmatpush1.msra.mxu0 %v5719
    %v5721 = vand.u32 %v4713, 4294901760
    %v5722 = vsub.f32 %v4713, %v5721
    %v5723 = vand.u32 %v5722, 4294901760
    %5724 = vmatprep.subr.mxu0 %v5723
    %v5725 = vand.u32 %v4712, 4294901760
    %v5726 = vsub.f32 %v4712, %v5725
    %v5727 = vand.u32 %v5726, 4294901760
    %5728 = vmatpush1.msra.mxu0 %v5727
    %v5729 = vand.u32 %v4709, 4294901760
    %v5730 = vsub.f32 %v4709, %v5729
    %v5731 = vand.u32 %v5730, 4294901760
    %5732 = vmatprep.subr.mxu0 %v5731
    %v5733 = vand.u32 %v4708, 4294901760
    %v5734 = vsub.f32 %v4708, %v5733
    %v5735 = vand.u32 %v5734, 4294901760
    %5736 = vmatpush1.msra.mxu0 %v5735
    %v5737 = vand.u32 %v4705, 4294901760
    %v5738 = vsub.f32 %v4705, %v5737
    %v5739 = vand.u32 %v5738, 4294901760
    %5740 = vmatprep.subr.mxu0 %v5739
    %v5741 = vand.u32 %v4704, 4294901760
    %v5742 = vsub.f32 %v4704, %v5741
    %v5743 = vand.u32 %v5742, 4294901760
    %5744 = vmatpush1.msra.mxu0 %v5743
    %v5745 = vand.u32 %v4701, 4294901760
    %v5746 = vsub.f32 %v4701, %v5745
    %v5747 = vand.u32 %v5746, 4294901760
    %5748 = vmatprep.subr.mxu0 %v5747
    %v5749 = vand.u32 %v4700, 4294901760
    %v5750 = vsub.f32 %v4700, %v5749
    %v5751 = vand.u32 %v5750, 4294901760
    %5752 = vmatpush1.msra.mxu0 %v5751
    %v5753 = vand.u32 %v4697, 4294901760
    %v5754 = vsub.f32 %v4697, %v5753
    %v5755 = vand.u32 %v5754, 4294901760
    %5756 = vmatprep.subr.mxu0 %v5755
    %v5757 = vand.u32 %v4696, 4294901760
    %v5758 = vsub.f32 %v4696, %v5757
    %v5759 = vand.u32 %v5758, 4294901760
    %5760 = vmatpush1.msra.mxu0 %v5759
    %v5761 = vand.u32 %v4693, 4294901760
    %v5762 = vsub.f32 %v4693, %v5761
    %v5763 = vand.u32 %v5762, 4294901760
    %5764 = vmatprep.subr.mxu0 %v5763
    %v5765 = vand.u32 %v4692, 4294901760
    %v5766 = vsub.f32 %v4692, %v5765
    %v5767 = vand.u32 %v5766, 4294901760
    %5768 = vmatpush1.msra.mxu0 %v5767
    %v5769 = vand.u32 %v4689, 4294901760
    %v5770 = vsub.f32 %v4689, %v5769
    %v5771 = vand.u32 %v5770, 4294901760
    %5772 = vmatprep.subr.mxu0 %v5771
    %v5773 = vand.u32 %v4688, 4294901760
    %v5774 = vsub.f32 %v4688, %v5773
    %v5775 = vand.u32 %v5774, 4294901760
    %5776 = vmatpush1.msra.mxu0 %v5775
    %v5777 = vand.u32 %v4685, 4294901760
    %v5778 = vsub.f32 %v4685, %v5777
    %v5779 = vand.u32 %v5778, 4294901760
    %5780 = vmatprep.subr.mxu0 %v5779
    %v5781 = vand.u32 %v4684, 4294901760
    %v5782 = vsub.f32 %v4684, %v5781
    %v5783 = vand.u32 %v5782, 4294901760
    %5784 = vmatpush1.msra.mxu0 %v5783
    %v5785 = vand.u32 %v4681, 4294901760
    %v5786 = vsub.f32 %v4681, %v5785
    %v5787 = vand.u32 %v5786, 4294901760
    %5788 = vmatprep.subr.mxu0 %v5787
    %v5789 = vand.u32 %v4680, 4294901760
    %v5790 = vsub.f32 %v4680, %v5789
    %v5791 = vand.u32 %v5790, 4294901760
    %5792 = vmatpush1.msra.mxu0 %v5791
    %v5793 = vand.u32 %v4677, 4294901760
    %v5794 = vsub.f32 %v4677, %v5793
    %v5795 = vand.u32 %v5794, 4294901760
    %5796 = vmatprep.subr.mxu0 %v5795
    %v5797 = vand.u32 %v4676, 4294901760
    %v5798 = vsub.f32 %v4676, %v5797
    %v5799 = vand.u32 %v5798, 4294901760
    %5800 = vmatpush1.msra.mxu0 %v5799
    %v5801 = vand.u32 %v4673, 4294901760
    %v5802 = vsub.f32 %v4673, %v5801
    %v5803 = vand.u32 %v5802, 4294901760
    %5804 = vmatprep.subr.mxu0 %v5803
    %v5805 = vand.u32 %v4672, 4294901760
    %v5806 = vsub.f32 %v4672, %v5805
    %v5807 = vand.u32 %v5806, 4294901760
    %5808 = vmatpush1.msra.mxu0 %v5807
    %v5809 = vand.u32 %v4669, 4294901760
    %v5810 = vsub.f32 %v4669, %v5809
    %v5811 = vand.u32 %v5810, 4294901760
    %5812 = vmatprep.subr.mxu0 %v5811
    %v5813 = vand.u32 %v4668, 4294901760
    %v5814 = vsub.f32 %v4668, %v5813
    %v5815 = vand.u32 %v5814, 4294901760
    %5816 = vmatpush1.msra.mxu0 %v5815
    %v5817 = vand.u32 %v4665, 4294901760
    %v5818 = vsub.f32 %v4665, %v5817
    %v5819 = vand.u32 %v5818, 4294901760
    %5820 = vmatprep.subr.mxu0 %v5819
    %v5821 = vand.u32 %v4664, 4294901760
    %v5822 = vsub.f32 %v4664, %v5821
    %v5823 = vand.u32 %v5822, 4294901760
    %5824 = vmatpush1.msra.mxu0 %v5823
    %v5825 = vand.u32 %v4661, 4294901760
    %v5826 = vsub.f32 %v4661, %v5825
    %v5827 = vand.u32 %v5826, 4294901760
    %5828 = vmatprep.subr.mxu0 %v5827
    %v5829 = vand.u32 %v4660, 4294901760
    %v5830 = vsub.f32 %v4660, %v5829
    %v5831 = vand.u32 %v5830, 4294901760
    %5832 = vmatpush1.msra.mxu0 %v5831
    %v5833 = vand.u32 %v4785, 4294901760
    %v5834 = vsub.f32 %v4785, %v5833
    %v5835 = vand.u32 %v5834, 4294901760
    %5836 = vmatprep.subr.mxu0 %v5835
    %v5837 = vand.u32 %v4784, 4294901760
    %v5838 = vsub.f32 %v4784, %v5837
    %v5839 = vand.u32 %v5838, 4294901760
    %5840 = vmatpush2.msra.mxu0 %v5839
    %v5841 = vand.u32 %v4781, 4294901760
    %v5842 = vsub.f32 %v4781, %v5841
    %v5843 = vand.u32 %v5842, 4294901760
    %5844 = vmatprep.subr.mxu0 %v5843
    %v5845 = vand.u32 %v4780, 4294901760
    %v5846 = vsub.f32 %v4780, %v5845
    %v5847 = vand.u32 %v5846, 4294901760
    %5848 = vmatpush2.msra.mxu0 %v5847
    %v5849 = vand.u32 %v4777, 4294901760
    %v5850 = vsub.f32 %v4777, %v5849
    %v5851 = vand.u32 %v5850, 4294901760
    %5852 = vmatprep.subr.mxu0 %v5851
    %v5853 = vand.u32 %v4776, 4294901760
    %v5854 = vsub.f32 %v4776, %v5853
    %v5855 = vand.u32 %v5854, 4294901760
    %5856 = vmatpush2.msra.mxu0 %v5855
    %v5857 = vand.u32 %v4773, 4294901760
    %v5858 = vsub.f32 %v4773, %v5857
    %v5859 = vand.u32 %v5858, 4294901760
    %5860 = vmatprep.subr.mxu0 %v5859
    %v5861 = vand.u32 %v4772, 4294901760
    %v5862 = vsub.f32 %v4772, %v5861
    %v5863 = vand.u32 %v5862, 4294901760
    %5864 = vmatpush2.msra.mxu0 %v5863
    %v5865 = vand.u32 %v4769, 4294901760
    %v5866 = vsub.f32 %v4769, %v5865
    %v5867 = vand.u32 %v5866, 4294901760
    %5868 = vmatprep.subr.mxu0 %v5867
    %v5869 = vand.u32 %v4768, 4294901760
    %v5870 = vsub.f32 %v4768, %v5869
    %v5871 = vand.u32 %v5870, 4294901760
    %5872 = vmatpush2.msra.mxu0 %v5871
    %v5873 = vand.u32 %v4765, 4294901760
    %v5874 = vsub.f32 %v4765, %v5873
    %v5875 = vand.u32 %v5874, 4294901760
    %5876 = vmatprep.subr.mxu0 %v5875
    %v5877 = vand.u32 %v4764, 4294901760
    %v5878 = vsub.f32 %v4764, %v5877
    %v5879 = vand.u32 %v5878, 4294901760
    %5880 = vmatpush2.msra.mxu0 %v5879
    %v5881 = vand.u32 %v4761, 4294901760
    %v5882 = vsub.f32 %v4761, %v5881
    %v5883 = vand.u32 %v5882, 4294901760
    %5884 = vmatprep.subr.mxu0 %v5883
    %v5885 = vand.u32 %v4760, 4294901760
    %v5886 = vsub.f32 %v4760, %v5885
    %v5887 = vand.u32 %v5886, 4294901760
    %5888 = vmatpush2.msra.mxu0 %v5887
    %v5889 = vand.u32 %v4757, 4294901760
    %v5890 = vsub.f32 %v4757, %v5889
    %v5891 = vand.u32 %v5890, 4294901760
    %5892 = vmatprep.subr.mxu0 %v5891
    %v5893 = vand.u32 %v4756, 4294901760
    %v5894 = vsub.f32 %v4756, %v5893
    %v5895 = vand.u32 %v5894, 4294901760
    %5896 = vmatpush2.msra.mxu0 %v5895
    %v5897 = vand.u32 %v4753, 4294901760
    %v5898 = vsub.f32 %v4753, %v5897
    %v5899 = vand.u32 %v5898, 4294901760
    %5900 = vmatprep.subr.mxu0 %v5899
    %v5901 = vand.u32 %v4752, 4294901760
    %v5902 = vsub.f32 %v4752, %v5901
    %v5903 = vand.u32 %v5902, 4294901760
    %5904 = vmatpush2.msra.mxu0 %v5903
    %v5905 = vand.u32 %v4749, 4294901760
    %v5906 = vsub.f32 %v4749, %v5905
    %v5907 = vand.u32 %v5906, 4294901760
    %5908 = vmatprep.subr.mxu0 %v5907
    %v5909 = vand.u32 %v4748, 4294901760
    %v5910 = vsub.f32 %v4748, %v5909
    %v5911 = vand.u32 %v5910, 4294901760
    %5912 = vmatpush2.msra.mxu0 %v5911
    %v5913 = vand.u32 %v4745, 4294901760
    %v5914 = vsub.f32 %v4745, %v5913
    %v5915 = vand.u32 %v5914, 4294901760
    %5916 = vmatprep.subr.mxu0 %v5915
    %v5917 = vand.u32 %v4744, 4294901760
    %v5918 = vsub.f32 %v4744, %v5917
    %v5919 = vand.u32 %v5918, 4294901760
    %5920 = vmatpush2.msra.mxu0 %v5919
    %v5921 = vand.u32 %v4741, 4294901760
    %v5922 = vsub.f32 %v4741, %v5921
    %v5923 = vand.u32 %v5922, 4294901760
    %5924 = vmatprep.subr.mxu0 %v5923
    %v5925 = vand.u32 %v4740, 4294901760
    %v5926 = vsub.f32 %v4740, %v5925
    %v5927 = vand.u32 %v5926, 4294901760
    %5928 = vmatpush2.msra.mxu0 %v5927
    %v5929 = vand.u32 %v4737, 4294901760
    %v5930 = vsub.f32 %v4737, %v5929
    %v5931 = vand.u32 %v5930, 4294901760
    %5932 = vmatprep.subr.mxu0 %v5931
    %v5933 = vand.u32 %v4736, 4294901760
    %v5934 = vsub.f32 %v4736, %v5933
    %v5935 = vand.u32 %v5934, 4294901760
    %5936 = vmatpush2.msra.mxu0 %v5935
    %v5937 = vand.u32 %v4733, 4294901760
    %v5938 = vsub.f32 %v4733, %v5937
    %v5939 = vand.u32 %v5938, 4294901760
    %5940 = vmatprep.subr.mxu0 %v5939
    %v5941 = vand.u32 %v4732, 4294901760
    %v5942 = vsub.f32 %v4732, %v5941
    %v5943 = vand.u32 %v5942, 4294901760
    %5944 = vmatpush2.msra.mxu0 %v5943
    %v5945 = vand.u32 %v4729, 4294901760
    %v5946 = vsub.f32 %v4729, %v5945
    %v5947 = vand.u32 %v5946, 4294901760
    %5948 = vmatprep.subr.mxu0 %v5947
    %v5949 = vand.u32 %v4728, 4294901760
    %v5950 = vsub.f32 %v4728, %v5949
    %v5951 = vand.u32 %v5950, 4294901760
    %5952 = vmatpush2.msra.mxu0 %v5951
    %v5953 = vand.u32 %v4725, 4294901760
    %v5954 = vsub.f32 %v4725, %v5953
    %v5955 = vand.u32 %v5954, 4294901760
    %5956 = vmatprep.subr.mxu0 %v5955
    %v5957 = vand.u32 %v4724, 4294901760
    %v5958 = vsub.f32 %v4724, %v5957
    %v5959 = vand.u32 %v5958, 4294901760
    %5960 = vmatpush2.msra.mxu0 %v5959
    %v5961 = vand.u32 %v4658, 4294901760
    %5962 = vmatprep.mubr.f32.mxu0 %v5961
    %v5963 = vand.u32 %v4657, 4294901760
    %5964 = vmatmul.mubr.f32.gmra.mxu0 %v5963
    %v5965 = vpop.f32.mrf.mxu0
    %v5966 = vadd.f32 %v5701, %v5965
    %v5967 = vpop.f32.mrf.mxu0
    %v5968 = vadd.f32 %v5703, %v5967
    %5969 = vdwg.mxu0
    %v5970 = vand.u32 %v4721, 4294901760
    %5971 = vmatprep.subr.mxu0 %v5970
    %v5972 = vand.u32 %v4720, 4294901760
    %5973 = vmatpush1.msra.mxu0 %v5972
    %v5974 = vand.u32 %v4717, 4294901760
    %5975 = vmatprep.subr.mxu0 %v5974
    %v5976 = vand.u32 %v4716, 4294901760
    %5977 = vmatpush1.msra.mxu0 %v5976
    %v5978 = vand.u32 %v4713, 4294901760
    %5979 = vmatprep.subr.mxu0 %v5978
    %v5980 = vand.u32 %v4712, 4294901760
    %5981 = vmatpush1.msra.mxu0 %v5980
    %v5982 = vand.u32 %v4709, 4294901760
    %5983 = vmatprep.subr.mxu0 %v5982
    %v5984 = vand.u32 %v4708, 4294901760
    %5985 = vmatpush1.msra.mxu0 %v5984
    %v5986 = vand.u32 %v4705, 4294901760
    %5987 = vmatprep.subr.mxu0 %v5986
    %v5988 = vand.u32 %v4704, 4294901760
    %5989 = vmatpush1.msra.mxu0 %v5988
    %v5990 = vand.u32 %v4701, 4294901760
    %5991 = vmatprep.subr.mxu0 %v5990
    %v5992 = vand.u32 %v4700, 4294901760
    %5993 = vmatpush1.msra.mxu0 %v5992
    %v5994 = vand.u32 %v4697, 4294901760
    %5995 = vmatprep.subr.mxu0 %v5994
    %v5996 = vand.u32 %v4696, 4294901760
    %5997 = vmatpush1.msra.mxu0 %v5996
    %v5998 = vand.u32 %v4693, 4294901760
    %5999 = vmatprep.subr.mxu0 %v5998
    %v6000 = vand.u32 %v4692, 4294901760
    %6001 = vmatpush1.msra.mxu0 %v6000
    %v6002 = vand.u32 %v4689, 4294901760
    %6003 = vmatprep.subr.mxu0 %v6002
    %v6004 = vand.u32 %v4688, 4294901760
    %6005 = vmatpush1.msra.mxu0 %v6004
    %v6006 = vand.u32 %v4685, 4294901760
    %6007 = vmatprep.subr.mxu0 %v6006
    %v6008 = vand.u32 %v4684, 4294901760
    %6009 = vmatpush1.msra.mxu0 %v6008
    %v6010 = vand.u32 %v4681, 4294901760
    %6011 = vmatprep.subr.mxu0 %v6010
    %v6012 = vand.u32 %v4680, 4294901760
    %6013 = vmatpush1.msra.mxu0 %v6012
    %v6014 = vand.u32 %v4677, 4294901760
    %6015 = vmatprep.subr.mxu0 %v6014
    %v6016 = vand.u32 %v4676, 4294901760
    %6017 = vmatpush1.msra.mxu0 %v6016
    %v6018 = vand.u32 %v4673, 4294901760
    %6019 = vmatprep.subr.mxu0 %v6018
    %v6020 = vand.u32 %v4672, 4294901760
    %6021 = vmatpush1.msra.mxu0 %v6020
    %v6022 = vand.u32 %v4669, 4294901760
    %6023 = vmatprep.subr.mxu0 %v6022
    %v6024 = vand.u32 %v4668, 4294901760
    %6025 = vmatpush1.msra.mxu0 %v6024
    %v6026 = vand.u32 %v4665, 4294901760
    %6027 = vmatprep.subr.mxu0 %v6026
    %v6028 = vand.u32 %v4664, 4294901760
    %6029 = vmatpush1.msra.mxu0 %v6028
    %v6030 = vand.u32 %v4661, 4294901760
    %6031 = vmatprep.subr.mxu0 %v6030
    %v6032 = vand.u32 %v4660, 4294901760
    %6033 = vmatpush1.msra.mxu0 %v6032
    %v6034 = vand.u32 %v4785, 4294901760
    %6035 = vmatprep.subr.mxu0 %v6034
    %v6036 = vand.u32 %v4784, 4294901760
    %6037 = vmatpush2.msra.mxu0 %v6036
    %v6038 = vand.u32 %v4781, 4294901760
    %6039 = vmatprep.subr.mxu0 %v6038
    %v6040 = vand.u32 %v4780, 4294901760
    %6041 = vmatpush2.msra.mxu0 %v6040
    %v6042 = vand.u32 %v4777, 4294901760
    %6043 = vmatprep.subr.mxu0 %v6042
    %v6044 = vand.u32 %v4776, 4294901760
    %6045 = vmatpush2.msra.mxu0 %v6044
    %v6046 = vand.u32 %v4773, 4294901760
    %6047 = vmatprep.subr.mxu0 %v6046
    %v6048 = vand.u32 %v4772, 4294901760
    %6049 = vmatpush2.msra.mxu0 %v6048
    %v6050 = vand.u32 %v4769, 4294901760
    %6051 = vmatprep.subr.mxu0 %v6050
    %v6052 = vand.u32 %v4768, 4294901760
    %6053 = vmatpush2.msra.mxu0 %v6052
    %v6054 = vand.u32 %v4765, 4294901760
    %6055 = vmatprep.subr.mxu0 %v6054
    %v6056 = vand.u32 %v4764, 4294901760
    %6057 = vmatpush2.msra.mxu0 %v6056
    %v6058 = vand.u32 %v4761, 4294901760
    %6059 = vmatprep.subr.mxu0 %v6058
    %v6060 = vand.u32 %v4760, 4294901760
    %6061 = vmatpush2.msra.mxu0 %v6060
    %v6062 = vand.u32 %v4757, 4294901760
    %6063 = vmatprep.subr.mxu0 %v6062
    %v6064 = vand.u32 %v4756, 4294901760
    %6065 = vmatpush2.msra.mxu0 %v6064
    %v6066 = vand.u32 %v4753, 4294901760
    %6067 = vmatprep.subr.mxu0 %v6066
    %v6068 = vand.u32 %v4752, 4294901760
    %6069 = vmatpush2.msra.mxu0 %v6068
    %v6070 = vand.u32 %v4749, 4294901760
    %6071 = vmatprep.subr.mxu0 %v6070
    %v6072 = vand.u32 %v4748, 4294901760
    %6073 = vmatpush2.msra.mxu0 %v6072
    %v6074 = vand.u32 %v4745, 4294901760
    %6075 = vmatprep.subr.mxu0 %v6074
    %v6076 = vand.u32 %v4744, 4294901760
    %6077 = vmatpush2.msra.mxu0 %v6076
    %v6078 = vand.u32 %v4741, 4294901760
    %6079 = vmatprep.subr.mxu0 %v6078
    %v6080 = vand.u32 %v4740, 4294901760
    %6081 = vmatpush2.msra.mxu0 %v6080
    %v6082 = vand.u32 %v4737, 4294901760
    %6083 = vmatprep.subr.mxu0 %v6082
    %v6084 = vand.u32 %v4736, 4294901760
    %6085 = vmatpush2.msra.mxu0 %v6084
    %v6086 = vand.u32 %v4733, 4294901760
    %6087 = vmatprep.subr.mxu0 %v6086
    %v6088 = vand.u32 %v4732, 4294901760
    %6089 = vmatpush2.msra.mxu0 %v6088
    %v6090 = vand.u32 %v4729, 4294901760
    %6091 = vmatprep.subr.mxu0 %v6090
    %v6092 = vand.u32 %v4728, 4294901760
    %6093 = vmatpush2.msra.mxu0 %v6092
    %v6094 = vand.u32 %v4725, 4294901760
    %6095 = vmatprep.subr.mxu0 %v6094
    %v6096 = vand.u32 %v4724, 4294901760
    %6097 = vmatpush2.msra.mxu0 %v6096
    %v6098 = vand.u32 %v4658, 4294901760
    %6099 = vmatprep.mubr.f32.mxu0 %v6098
    %v6100 = vand.u32 %v4657, 4294901760
    %6101 = vmatmul.mubr.f32.gmra.mxu0 %v6100
    %v6102 = vpop.f32.mrf.mxu0
    %v6103 = vadd.f32 %v5966, %v6102
    %v6104 = vpop.f32.mrf.mxu0
    %v6105 = vadd.f32 %v5968, %v6104
    %6106 = vdwg.mxu0
    %6107 = vmatprep.subr.mxu0 0.0
    %6108 = vmatpush1.msra.mxu0 0.0
    %6109 = vmatprep.subr.mxu0 0.0
    %6110 = vmatpush1.msra.mxu0 0.0
    %6111 = vmatprep.subr.mxu0 0.0
    %6112 = vmatpush1.msra.mxu0 0.0
    %6113 = vmatprep.subr.mxu0 0.0
    %6114 = vmatpush1.msra.mxu0 0.0
    %6115 = vmatprep.subr.mxu0 0.0
    %6116 = vmatpush1.msra.mxu0 0.0
    %6117 = vmatprep.subr.mxu0 0.0
    %6118 = vmatpush1.msra.mxu0 0.0
    %6119 = vmatprep.subr.mxu0 0.0
    %6120 = vmatpush1.msra.mxu0 0.0
    %6121 = vmatprep.subr.mxu0 0.0
    %6122 = vmatpush1.msra.mxu0 0.0
    %v6123 = vand.u32 %v4817, 4294901760
    %6124 = vmatprep.subr.mxu0 %v6123
    %v6125 = vand.u32 %v4816, 4294901760
    %6126 = vmatpush1.msra.mxu0 %v6125
    %v6127 = vand.u32 %v4813, 4294901760
    %6128 = vmatprep.subr.mxu0 %v6127
    %v6129 = vand.u32 %v4812, 4294901760
    %6130 = vmatpush1.msra.mxu0 %v6129
    %v6131 = vand.u32 %v4809, 4294901760
    %6132 = vmatprep.subr.mxu0 %v6131
    %v6133 = vand.u32 %v4808, 4294901760
    %6134 = vmatpush1.msra.mxu0 %v6133
    %v6135 = vand.u32 %v4805, 4294901760
    %6136 = vmatprep.subr.mxu0 %v6135
    %v6137 = vand.u32 %v4804, 4294901760
    %6138 = vmatpush1.msra.mxu0 %v6137
    %v6139 = vand.u32 %v4801, 4294901760
    %6140 = vmatprep.subr.mxu0 %v6139
    %v6141 = vand.u32 %v4800, 4294901760
    %6142 = vmatpush1.msra.mxu0 %v6141
    %v6143 = vand.u32 %v4797, 4294901760
    %6144 = vmatprep.subr.mxu0 %v6143
    %v6145 = vand.u32 %v4796, 4294901760
    %6146 = vmatpush1.msra.mxu0 %v6145
    %v6147 = vand.u32 %v4793, 4294901760
    %6148 = vmatprep.subr.mxu0 %v6147
    %v6149 = vand.u32 %v4792, 4294901760
    %6150 = vmatpush1.msra.mxu0 %v6149
    %v6151 = vand.u32 %v4789, 4294901760
    %6152 = vmatprep.subr.mxu0 %v6151
    %v6153 = vand.u32 %v4788, 4294901760
    %6154 = vmatpush1.msra.mxu0 %v6153
    %6155 = vmatprep.subr.mxu0 0.0
    %6156 = vmatpush2.msra.mxu0 0.0
    %6157 = vmatprep.subr.mxu0 0.0
    %6158 = vmatpush2.msra.mxu0 0.0
    %6159 = vmatprep.subr.mxu0 0.0
    %6160 = vmatpush2.msra.mxu0 0.0
    %6161 = vmatprep.subr.mxu0 0.0
    %6162 = vmatpush2.msra.mxu0 0.0
    %6163 = vmatprep.subr.mxu0 0.0
    %6164 = vmatpush2.msra.mxu0 0.0
    %6165 = vmatprep.subr.mxu0 0.0
    %6166 = vmatpush2.msra.mxu0 0.0
    %6167 = vmatprep.subr.mxu0 0.0
    %6168 = vmatpush2.msra.mxu0 0.0
    %6169 = vmatprep.subr.mxu0 0.0
    %6170 = vmatpush2.msra.mxu0 0.0
    %6171 = vmatprep.subr.mxu0 0.0
    %6172 = vmatpush2.msra.mxu0 0.0
    %6173 = vmatprep.subr.mxu0 0.0
    %6174 = vmatpush2.msra.mxu0 0.0
    %6175 = vmatprep.subr.mxu0 0.0
    %6176 = vmatpush2.msra.mxu0 0.0
    %6177 = vmatprep.subr.mxu0 0.0
    %6178 = vmatpush2.msra.mxu0 0.0
    %6179 = vmatprep.subr.mxu0 0.0
    %6180 = vmatpush2.msra.mxu0 0.0
    %6181 = vmatprep.subr.mxu0 0.0
    %6182 = vmatpush2.msra.mxu0 0.0
    %6183 = vmatprep.subr.mxu0 0.0
    %6184 = vmatpush2.msra.mxu0 0.0
    %6185 = vmatprep.subr.mxu0 0.0
    %6186 = vmatpush2.msra.mxu0 0.0
    %6187 = vmatprep.mubr.f32.mxu0 0.0
    %v6188 = vand.u32 %v4821, 4294901760
    %v6189 = vsub.f32 %v4821, %v6188
    %v6190 = vand.u32 %v6189, 4294901760
    %v6191 = vsub.f32 %v6189, %v6190
    %v6192 = vand.u32 %v6191, 4294901760
    %6193 = vmatmul.mubr.f32.gmra.mxu0 %v6192
    %v6194 = vpop.f32.mrf.mxu0
    %v6195 = vadd.f32 %v6103, %v6194
    %v6196 = vpop.f32.mrf.mxu0
    %v6197 = vadd.f32 %v6105, %v6196
    %6198 = vdwg.mxu0
    %6199 = vmatprep.subr.mxu0 0.0
    %6200 = vmatpush1.msra.mxu0 0.0
    %6201 = vmatprep.subr.mxu0 0.0
    %6202 = vmatpush1.msra.mxu0 0.0
    %6203 = vmatprep.subr.mxu0 0.0
    %6204 = vmatpush1.msra.mxu0 0.0
    %6205 = vmatprep.subr.mxu0 0.0
    %6206 = vmatpush1.msra.mxu0 0.0
    %6207 = vmatprep.subr.mxu0 0.0
    %6208 = vmatpush1.msra.mxu0 0.0
    %6209 = vmatprep.subr.mxu0 0.0
    %6210 = vmatpush1.msra.mxu0 0.0
    %6211 = vmatprep.subr.mxu0 0.0
    %6212 = vmatpush1.msra.mxu0 0.0
    %6213 = vmatprep.subr.mxu0 0.0
    %6214 = vmatpush1.msra.mxu0 0.0
    %v6215 = vand.u32 %v4817, 4294901760
    %v6216 = vsub.f32 %v4817, %v6215
    %v6217 = vand.u32 %v6216, 4294901760
    %v6218 = vsub.f32 %v6216, %v6217
    %v6219 = vand.u32 %v6218, 4294901760
    %6220 = vmatprep.subr.mxu0 %v6219
    %v6221 = vand.u32 %v4816, 4294901760
    %v6222 = vsub.f32 %v4816, %v6221
    %v6223 = vand.u32 %v6222, 4294901760
    %v6224 = vsub.f32 %v6222, %v6223
    %v6225 = vand.u32 %v6224, 4294901760
    %6226 = vmatpush1.msra.mxu0 %v6225
    %v6227 = vand.u32 %v4813, 4294901760
    %v6228 = vsub.f32 %v4813, %v6227
    %v6229 = vand.u32 %v6228, 4294901760
    %v6230 = vsub.f32 %v6228, %v6229
    %v6231 = vand.u32 %v6230, 4294901760
    %6232 = vmatprep.subr.mxu0 %v6231
    %v6233 = vand.u32 %v4812, 4294901760
    %v6234 = vsub.f32 %v4812, %v6233
    %v6235 = vand.u32 %v6234, 4294901760
    %v6236 = vsub.f32 %v6234, %v6235
    %v6237 = vand.u32 %v6236, 4294901760
    %6238 = vmatpush1.msra.mxu0 %v6237
    %v6239 = vand.u32 %v4809, 4294901760
    %v6240 = vsub.f32 %v4809, %v6239
    %v6241 = vand.u32 %v6240, 4294901760
    %v6242 = vsub.f32 %v6240, %v6241
    %v6243 = vand.u32 %v6242, 4294901760
    %6244 = vmatprep.subr.mxu0 %v6243
    %v6245 = vand.u32 %v4808, 4294901760
    %v6246 = vsub.f32 %v4808, %v6245
    %v6247 = vand.u32 %v6246, 4294901760
    %v6248 = vsub.f32 %v6246, %v6247
    %v6249 = vand.u32 %v6248, 4294901760
    %6250 = vmatpush1.msra.mxu0 %v6249
    %v6251 = vand.u32 %v4805, 4294901760
    %v6252 = vsub.f32 %v4805, %v6251
    %v6253 = vand.u32 %v6252, 4294901760
    %v6254 = vsub.f32 %v6252, %v6253
    %v6255 = vand.u32 %v6254, 4294901760
    %6256 = vmatprep.subr.mxu0 %v6255
    %v6257 = vand.u32 %v4804, 4294901760
    %v6258 = vsub.f32 %v4804, %v6257
    %v6259 = vand.u32 %v6258, 4294901760
    %v6260 = vsub.f32 %v6258, %v6259
    %v6261 = vand.u32 %v6260, 4294901760
    %6262 = vmatpush1.msra.mxu0 %v6261
    %v6263 = vand.u32 %v4801, 4294901760
    %v6264 = vsub.f32 %v4801, %v6263
    %v6265 = vand.u32 %v6264, 4294901760
    %v6266 = vsub.f32 %v6264, %v6265
    %v6267 = vand.u32 %v6266, 4294901760
    %6268 = vmatprep.subr.mxu0 %v6267
    %v6269 = vand.u32 %v4800, 4294901760
    %v6270 = vsub.f32 %v4800, %v6269
    %v6271 = vand.u32 %v6270, 4294901760
    %v6272 = vsub.f32 %v6270, %v6271
    %v6273 = vand.u32 %v6272, 4294901760
    %6274 = vmatpush1.msra.mxu0 %v6273
    %v6275 = vand.u32 %v4797, 4294901760
    %v6276 = vsub.f32 %v4797, %v6275
    %v6277 = vand.u32 %v6276, 4294901760
    %v6278 = vsub.f32 %v6276, %v6277
    %v6279 = vand.u32 %v6278, 4294901760
    %6280 = vmatprep.subr.mxu0 %v6279
    %v6281 = vand.u32 %v4796, 4294901760
    %v6282 = vsub.f32 %v4796, %v6281
    %v6283 = vand.u32 %v6282, 4294901760
    %v6284 = vsub.f32 %v6282, %v6283
    %v6285 = vand.u32 %v6284, 4294901760
    %6286 = vmatpush1.msra.mxu0 %v6285
    %v6287 = vand.u32 %v4793, 4294901760
    %v6288 = vsub.f32 %v4793, %v6287
    %v6289 = vand.u32 %v6288, 4294901760
    %v6290 = vsub.f32 %v6288, %v6289
    %v6291 = vand.u32 %v6290, 4294901760
    %6292 = vmatprep.subr.mxu0 %v6291
    %v6293 = vand.u32 %v4792, 4294901760
    %v6294 = vsub.f32 %v4792, %v6293
    %v6295 = vand.u32 %v6294, 4294901760
    %v6296 = vsub.f32 %v6294, %v6295
    %v6297 = vand.u32 %v6296, 4294901760
    %6298 = vmatpush1.msra.mxu0 %v6297
    %v6299 = vand.u32 %v4789, 4294901760
    %v6300 = vsub.f32 %v4789, %v6299
    %v6301 = vand.u32 %v6300, 4294901760
    %v6302 = vsub.f32 %v6300, %v6301
    %v6303 = vand.u32 %v6302, 4294901760
    %6304 = vmatprep.subr.mxu0 %v6303
    %v6305 = vand.u32 %v4788, 4294901760
    %v6306 = vsub.f32 %v4788, %v6305
    %v6307 = vand.u32 %v6306, 4294901760
    %v6308 = vsub.f32 %v6306, %v6307
    %v6309 = vand.u32 %v6308, 4294901760
    %6310 = vmatpush1.msra.mxu0 %v6309
    %6311 = vmatprep.subr.mxu0 0.0
    %6312 = vmatpush2.msra.mxu0 0.0
    %6313 = vmatprep.subr.mxu0 0.0
    %6314 = vmatpush2.msra.mxu0 0.0
    %6315 = vmatprep.subr.mxu0 0.0
    %6316 = vmatpush2.msra.mxu0 0.0
    %6317 = vmatprep.subr.mxu0 0.0
    %6318 = vmatpush2.msra.mxu0 0.0
    %6319 = vmatprep.subr.mxu0 0.0
    %6320 = vmatpush2.msra.mxu0 0.0
    %6321 = vmatprep.subr.mxu0 0.0
    %6322 = vmatpush2.msra.mxu0 0.0
    %6323 = vmatprep.subr.mxu0 0.0
    %6324 = vmatpush2.msra.mxu0 0.0
    %6325 = vmatprep.subr.mxu0 0.0
    %6326 = vmatpush2.msra.mxu0 0.0
    %6327 = vmatprep.subr.mxu0 0.0
    %6328 = vmatpush2.msra.mxu0 0.0
    %6329 = vmatprep.subr.mxu0 0.0
    %6330 = vmatpush2.msra.mxu0 0.0
    %6331 = vmatprep.subr.mxu0 0.0
    %6332 = vmatpush2.msra.mxu0 0.0
    %6333 = vmatprep.subr.mxu0 0.0
    %6334 = vmatpush2.msra.mxu0 0.0
    %6335 = vmatprep.subr.mxu0 0.0
    %6336 = vmatpush2.msra.mxu0 0.0
    %6337 = vmatprep.subr.mxu0 0.0
    %6338 = vmatpush2.msra.mxu0 0.0
    %6339 = vmatprep.subr.mxu0 0.0
    %6340 = vmatpush2.msra.mxu0 0.0
    %6341 = vmatprep.subr.mxu0 0.0
    %6342 = vmatpush2.msra.mxu0 0.0
    %6343 = vmatprep.mubr.f32.mxu0 0.0
    %v6344 = vand.u32 %v4821, 4294901760
    %6345 = vmatmul.mubr.f32.gmra.mxu0 %v6344
    %v6346 = vpop.f32.mrf.mxu0
    %v6347 = vadd.f32 %v6195, %v6346
    %v6348 = vpop.f32.mrf.mxu0
    %v6349 = vadd.f32 %v6197, %v6348
    %6350 = vdwg.mxu0
    %6351 = vmatprep.subr.mxu0 0.0
    %6352 = vmatpush1.msra.mxu0 0.0
    %6353 = vmatprep.subr.mxu0 0.0
    %6354 = vmatpush1.msra.mxu0 0.0
    %6355 = vmatprep.subr.mxu0 0.0
    %6356 = vmatpush1.msra.mxu0 0.0
    %6357 = vmatprep.subr.mxu0 0.0
    %6358 = vmatpush1.msra.mxu0 0.0
    %6359 = vmatprep.subr.mxu0 0.0
    %6360 = vmatpush1.msra.mxu0 0.0
    %6361 = vmatprep.subr.mxu0 0.0
    %6362 = vmatpush1.msra.mxu0 0.0
    %6363 = vmatprep.subr.mxu0 0.0
    %6364 = vmatpush1.msra.mxu0 0.0
    %6365 = vmatprep.subr.mxu0 0.0
    %6366 = vmatpush1.msra.mxu0 0.0
    %v6367 = vand.u32 %v4817, 4294901760
    %v6368 = vsub.f32 %v4817, %v6367
    %6369 = vmatprep.subr.mxu0 %v6368
    %v6370 = vand.u32 %v4816, 4294901760
    %v6371 = vsub.f32 %v4816, %v6370
    %6372 = vmatpush1.msra.mxu0 %v6371
    %v6373 = vand.u32 %v4813, 4294901760
    %v6374 = vsub.f32 %v4813, %v6373
    %6375 = vmatprep.subr.mxu0 %v6374
    %v6376 = vand.u32 %v4812, 4294901760
    %v6377 = vsub.f32 %v4812, %v6376
    %6378 = vmatpush1.msra.mxu0 %v6377
    %v6379 = vand.u32 %v4809, 4294901760
    %v6380 = vsub.f32 %v4809, %v6379
    %6381 = vmatprep.subr.mxu0 %v6380
    %v6382 = vand.u32 %v4808, 4294901760
    %v6383 = vsub.f32 %v4808, %v6382
    %6384 = vmatpush1.msra.mxu0 %v6383
    %v6385 = vand.u32 %v4805, 4294901760
    %v6386 = vsub.f32 %v4805, %v6385
    %6387 = vmatprep.subr.mxu0 %v6386
    %v6388 = vand.u32 %v4804, 4294901760
    %v6389 = vsub.f32 %v4804, %v6388
    %6390 = vmatpush1.msra.mxu0 %v6389
    %v6391 = vand.u32 %v4801, 4294901760
    %v6392 = vsub.f32 %v4801, %v6391
    %6393 = vmatprep.subr.mxu0 %v6392
    %v6394 = vand.u32 %v4800, 4294901760
    %v6395 = vsub.f32 %v4800, %v6394
    %6396 = vmatpush1.msra.mxu0 %v6395
    %v6397 = vand.u32 %v4797, 4294901760
    %v6398 = vsub.f32 %v4797, %v6397
    %6399 = vmatprep.subr.mxu0 %v6398
    %v6400 = vand.u32 %v4796, 4294901760
    %v6401 = vsub.f32 %v4796, %v6400
    %6402 = vmatpush1.msra.mxu0 %v6401
    %v6403 = vand.u32 %v4793, 4294901760
    %v6404 = vsub.f32 %v4793, %v6403
    %6405 = vmatprep.subr.mxu0 %v6404
    %v6406 = vand.u32 %v4792, 4294901760
    %v6407 = vsub.f32 %v4792, %v6406
    %6408 = vmatpush1.msra.mxu0 %v6407
    %v6409 = vand.u32 %v4789, 4294901760
    %v6410 = vsub.f32 %v4789, %v6409
    %6411 = vmatprep.subr.mxu0 %v6410
    %v6412 = vand.u32 %v4788, 4294901760
    %v6413 = vsub.f32 %v4788, %v6412
    %6414 = vmatpush1.msra.mxu0 %v6413
    %6415 = vmatprep.subr.mxu0 0.0
    %6416 = vmatpush2.msra.mxu0 0.0
    %6417 = vmatprep.subr.mxu0 0.0
    %6418 = vmatpush2.msra.mxu0 0.0
    %6419 = vmatprep.subr.mxu0 0.0
    %6420 = vmatpush2.msra.mxu0 0.0
    %6421 = vmatprep.subr.mxu0 0.0
    %6422 = vmatpush2.msra.mxu0 0.0
    %6423 = vmatprep.subr.mxu0 0.0
    %6424 = vmatpush2.msra.mxu0 0.0
    %6425 = vmatprep.subr.mxu0 0.0
    %6426 = vmatpush2.msra.mxu0 0.0
    %6427 = vmatprep.subr.mxu0 0.0
    %6428 = vmatpush2.msra.mxu0 0.0
    %6429 = vmatprep.subr.mxu0 0.0
    %6430 = vmatpush2.msra.mxu0 0.0
    %6431 = vmatprep.subr.mxu0 0.0
    %6432 = vmatpush2.msra.mxu0 0.0
    %6433 = vmatprep.subr.mxu0 0.0
    %6434 = vmatpush2.msra.mxu0 0.0
    %6435 = vmatprep.subr.mxu0 0.0
    %6436 = vmatpush2.msra.mxu0 0.0
    %6437 = vmatprep.subr.mxu0 0.0
    %6438 = vmatpush2.msra.mxu0 0.0
    %6439 = vmatprep.subr.mxu0 0.0
    %6440 = vmatpush2.msra.mxu0 0.0
    %6441 = vmatprep.subr.mxu0 0.0
    %6442 = vmatpush2.msra.mxu0 0.0
    %6443 = vmatprep.subr.mxu0 0.0
    %6444 = vmatpush2.msra.mxu0 0.0
    %6445 = vmatprep.subr.mxu0 0.0
    %6446 = vmatpush2.msra.mxu0 0.0
    %6447 = vmatprep.mubr.f32.mxu0 0.0
    %v6448 = vand.u32 %v4821, 4294901760
    %v6449 = vsub.f32 %v4821, %v6448
    %6450 = vmatmul.mubr.f32.gmra.mxu0 %v6449
    %v6451 = vpop.f32.mrf.mxu0
    %v6452 = vadd.f32 %v6347, %v6451
    %v6453 = vpop.f32.mrf.mxu0
    %v6454 = vadd.f32 %v6349, %v6453
    %6455 = vdwg.mxu0
    %6456 = vmatprep.subr.mxu0 0.0
    %6457 = vmatpush1.msra.mxu0 0.0
    %6458 = vmatprep.subr.mxu0 0.0
    %6459 = vmatpush1.msra.mxu0 0.0
    %6460 = vmatprep.subr.mxu0 0.0
    %6461 = vmatpush1.msra.mxu0 0.0
    %6462 = vmatprep.subr.mxu0 0.0
    %6463 = vmatpush1.msra.mxu0 0.0
    %6464 = vmatprep.subr.mxu0 0.0
    %6465 = vmatpush1.msra.mxu0 0.0
    %6466 = vmatprep.subr.mxu0 0.0
    %6467 = vmatpush1.msra.mxu0 0.0
    %6468 = vmatprep.subr.mxu0 0.0
    %6469 = vmatpush1.msra.mxu0 0.0
    %6470 = vmatprep.subr.mxu0 0.0
    %6471 = vmatpush1.msra.mxu0 0.0
    %v6472 = vand.u32 %v4817, 4294901760
    %6473 = vmatprep.subr.mxu0 %v6472
    %v6474 = vand.u32 %v4816, 4294901760
    %6475 = vmatpush1.msra.mxu0 %v6474
    %v6476 = vand.u32 %v4813, 4294901760
    %6477 = vmatprep.subr.mxu0 %v6476
    %v6478 = vand.u32 %v4812, 4294901760
    %6479 = vmatpush1.msra.mxu0 %v6478
    %v6480 = vand.u32 %v4809, 4294901760
    %6481 = vmatprep.subr.mxu0 %v6480
    %v6482 = vand.u32 %v4808, 4294901760
    %6483 = vmatpush1.msra.mxu0 %v6482
    %v6484 = vand.u32 %v4805, 4294901760
    %6485 = vmatprep.subr.mxu0 %v6484
    %v6486 = vand.u32 %v4804, 4294901760
    %6487 = vmatpush1.msra.mxu0 %v6486
    %v6488 = vand.u32 %v4801, 4294901760
    %6489 = vmatprep.subr.mxu0 %v6488
    %v6490 = vand.u32 %v4800, 4294901760
    %6491 = vmatpush1.msra.mxu0 %v6490
    %v6492 = vand.u32 %v4797, 4294901760
    %6493 = vmatprep.subr.mxu0 %v6492
    %v6494 = vand.u32 %v4796, 4294901760
    %6495 = vmatpush1.msra.mxu0 %v6494
    %v6496 = vand.u32 %v4793, 4294901760
    %6497 = vmatprep.subr.mxu0 %v6496
    %v6498 = vand.u32 %v4792, 4294901760
    %6499 = vmatpush1.msra.mxu0 %v6498
    %v6500 = vand.u32 %v4789, 4294901760
    %6501 = vmatprep.subr.mxu0 %v6500
    %v6502 = vand.u32 %v4788, 4294901760
    %6503 = vmatpush1.msra.mxu0 %v6502
    %6504 = vmatprep.subr.mxu0 0.0
    %6505 = vmatpush2.msra.mxu0 0.0
    %6506 = vmatprep.subr.mxu0 0.0
    %6507 = vmatpush2.msra.mxu0 0.0
    %6508 = vmatprep.subr.mxu0 0.0
    %6509 = vmatpush2.msra.mxu0 0.0
    %6510 = vmatprep.subr.mxu0 0.0
    %6511 = vmatpush2.msra.mxu0 0.0
    %6512 = vmatprep.subr.mxu0 0.0
    %6513 = vmatpush2.msra.mxu0 0.0
    %6514 = vmatprep.subr.mxu0 0.0
    %6515 = vmatpush2.msra.mxu0 0.0
    %6516 = vmatprep.subr.mxu0 0.0
    %6517 = vmatpush2.msra.mxu0 0.0
    %6518 = vmatprep.subr.mxu0 0.0
    %6519 = vmatpush2.msra.mxu0 0.0
    %6520 = vmatprep.subr.mxu0 0.0
    %6521 = vmatpush2.msra.mxu0 0.0
    %6522 = vmatprep.subr.mxu0 0.0
    %6523 = vmatpush2.msra.mxu0 0.0
    %6524 = vmatprep.subr.mxu0 0.0
    %6525 = vmatpush2.msra.mxu0 0.0
    %6526 = vmatprep.subr.mxu0 0.0
    %6527 = vmatpush2.msra.mxu0 0.0
    %6528 = vmatprep.subr.mxu0 0.0
    %6529 = vmatpush2.msra.mxu0 0.0
    %6530 = vmatprep.subr.mxu0 0.0
    %6531 = vmatpush2.msra.mxu0 0.0
    %6532 = vmatprep.subr.mxu0 0.0
    %6533 = vmatpush2.msra.mxu0 0.0
    %6534 = vmatprep.subr.mxu0 0.0
    %6535 = vmatpush2.msra.mxu0 0.0
    %6536 = vmatprep.mubr.f32.mxu0 0.0
    %v6537 = vand.u32 %v4821, 4294901760
    %v6538 = vsub.f32 %v4821, %v6537
    %v6539 = vand.u32 %v6538, 4294901760
    %6540 = vmatmul.mubr.f32.gmra.mxu0 %v6539
    %v6541 = vpop.f32.mrf.mxu0
    %v6542 = vadd.f32 %v6452, %v6541
    %v6543 = vpop.f32.mrf.mxu0
    %v6544 = vadd.f32 %v6454, %v6543
    %6545 = vdwg.mxu0
    %6546 = vmatprep.subr.mxu0 0.0
    %6547 = vmatpush1.msra.mxu0 0.0
    %6548 = vmatprep.subr.mxu0 0.0
    %6549 = vmatpush1.msra.mxu0 0.0
    %6550 = vmatprep.subr.mxu0 0.0
    %6551 = vmatpush1.msra.mxu0 0.0
    %6552 = vmatprep.subr.mxu0 0.0
    %6553 = vmatpush1.msra.mxu0 0.0
    %6554 = vmatprep.subr.mxu0 0.0
    %6555 = vmatpush1.msra.mxu0 0.0
    %6556 = vmatprep.subr.mxu0 0.0
    %6557 = vmatpush1.msra.mxu0 0.0
    %6558 = vmatprep.subr.mxu0 0.0
    %6559 = vmatpush1.msra.mxu0 0.0
    %6560 = vmatprep.subr.mxu0 0.0
    %6561 = vmatpush1.msra.mxu0 0.0
    %v6562 = vand.u32 %v4817, 4294901760
    %v6563 = vsub.f32 %v4817, %v6562
    %v6564 = vand.u32 %v6563, 4294901760
    %6565 = vmatprep.subr.mxu0 %v6564
    %v6566 = vand.u32 %v4816, 4294901760
    %v6567 = vsub.f32 %v4816, %v6566
    %v6568 = vand.u32 %v6567, 4294901760
    %6569 = vmatpush1.msra.mxu0 %v6568
    %v6570 = vand.u32 %v4813, 4294901760
    %v6571 = vsub.f32 %v4813, %v6570
    %v6572 = vand.u32 %v6571, 4294901760
    %6573 = vmatprep.subr.mxu0 %v6572
    %v6574 = vand.u32 %v4812, 4294901760
    %v6575 = vsub.f32 %v4812, %v6574
    %v6576 = vand.u32 %v6575, 4294901760
    %6577 = vmatpush1.msra.mxu0 %v6576
    %v6578 = vand.u32 %v4809, 4294901760
    %v6579 = vsub.f32 %v4809, %v6578
    %v6580 = vand.u32 %v6579, 4294901760
    %6581 = vmatprep.subr.mxu0 %v6580
    %v6582 = vand.u32 %v4808, 4294901760
    %v6583 = vsub.f32 %v4808, %v6582
    %v6584 = vand.u32 %v6583, 4294901760
    %6585 = vmatpush1.msra.mxu0 %v6584
    %v6586 = vand.u32 %v4805, 4294901760
    %v6587 = vsub.f32 %v4805, %v6586
    %v6588 = vand.u32 %v6587, 4294901760
    %6589 = vmatprep.subr.mxu0 %v6588
    %v6590 = vand.u32 %v4804, 4294901760
    %v6591 = vsub.f32 %v4804, %v6590
    %v6592 = vand.u32 %v6591, 4294901760
    %6593 = vmatpush1.msra.mxu0 %v6592
    %v6594 = vand.u32 %v4801, 4294901760
    %v6595 = vsub.f32 %v4801, %v6594
    %v6596 = vand.u32 %v6595, 4294901760
    %6597 = vmatprep.subr.mxu0 %v6596
    %v6598 = vand.u32 %v4800, 4294901760
    %v6599 = vsub.f32 %v4800, %v6598
    %v6600 = vand.u32 %v6599, 4294901760
    %6601 = vmatpush1.msra.mxu0 %v6600
    %v6602 = vand.u32 %v4797, 4294901760
    %v6603 = vsub.f32 %v4797, %v6602
    %v6604 = vand.u32 %v6603, 4294901760
    %6605 = vmatprep.subr.mxu0 %v6604
    %v6606 = vand.u32 %v4796, 4294901760
    %v6607 = vsub.f32 %v4796, %v6606
    %v6608 = vand.u32 %v6607, 4294901760
    %6609 = vmatpush1.msra.mxu0 %v6608
    %v6610 = vand.u32 %v4793, 4294901760
    %v6611 = vsub.f32 %v4793, %v6610
    %v6612 = vand.u32 %v6611, 4294901760
    %6613 = vmatprep.subr.mxu0 %v6612
    %v6614 = vand.u32 %v4792, 4294901760
    %v6615 = vsub.f32 %v4792, %v6614
    %v6616 = vand.u32 %v6615, 4294901760
    %6617 = vmatpush1.msra.mxu0 %v6616
    %v6618 = vand.u32 %v4789, 4294901760
    %v6619 = vsub.f32 %v4789, %v6618
    %v6620 = vand.u32 %v6619, 4294901760
    %6621 = vmatprep.subr.mxu0 %v6620
    %v6622 = vand.u32 %v4788, 4294901760
    %v6623 = vsub.f32 %v4788, %v6622
    %v6624 = vand.u32 %v6623, 4294901760
    %6625 = vmatpush1.msra.mxu0 %v6624
    %6626 = vmatprep.subr.mxu0 0.0
    %6627 = vmatpush2.msra.mxu0 0.0
    %6628 = vmatprep.subr.mxu0 0.0
    %6629 = vmatpush2.msra.mxu0 0.0
    %6630 = vmatprep.subr.mxu0 0.0
    %6631 = vmatpush2.msra.mxu0 0.0
    %6632 = vmatprep.subr.mxu0 0.0
    %6633 = vmatpush2.msra.mxu0 0.0
    %6634 = vmatprep.subr.mxu0 0.0
    %6635 = vmatpush2.msra.mxu0 0.0
    %6636 = vmatprep.subr.mxu0 0.0
    %6637 = vmatpush2.msra.mxu0 0.0
    %6638 = vmatprep.subr.mxu0 0.0
    %6639 = vmatpush2.msra.mxu0 0.0
    %6640 = vmatprep.subr.mxu0 0.0
    %6641 = vmatpush2.msra.mxu0 0.0
    %6642 = vmatprep.subr.mxu0 0.0
    %6643 = vmatpush2.msra.mxu0 0.0
    %6644 = vmatprep.subr.mxu0 0.0
    %6645 = vmatpush2.msra.mxu0 0.0
    %6646 = vmatprep.subr.mxu0 0.0
    %6647 = vmatpush2.msra.mxu0 0.0
    %6648 = vmatprep.subr.mxu0 0.0
    %6649 = vmatpush2.msra.mxu0 0.0
    %6650 = vmatprep.subr.mxu0 0.0
    %6651 = vmatpush2.msra.mxu0 0.0
    %6652 = vmatprep.subr.mxu0 0.0
    %6653 = vmatpush2.msra.mxu0 0.0
    %6654 = vmatprep.subr.mxu0 0.0
    %6655 = vmatpush2.msra.mxu0 0.0
    %6656 = vmatprep.subr.mxu0 0.0
    %6657 = vmatpush2.msra.mxu0 0.0
    %6658 = vmatprep.mubr.f32.mxu0 0.0
    %v6659 = vand.u32 %v4821, 4294901760
    %6660 = vmatmul.mubr.f32.gmra.mxu0 %v6659
    %v6661 = vpop.f32.mrf.mxu0
    %v6662 = vadd.f32 %v6542, %v6661
    %v6663 = vpop.f32.mrf.mxu0
    %v6664 = vadd.f32 %v6544, %v6663
    %6665 = vdwg.mxu0
    %6666 = vmatprep.subr.mxu0 0.0
    %6667 = vmatpush1.msra.mxu0 0.0
    %6668 = vmatprep.subr.mxu0 0.0
    %6669 = vmatpush1.msra.mxu0 0.0
    %6670 = vmatprep.subr.mxu0 0.0
    %6671 = vmatpush1.msra.mxu0 0.0
    %6672 = vmatprep.subr.mxu0 0.0
    %6673 = vmatpush1.msra.mxu0 0.0
    %6674 = vmatprep.subr.mxu0 0.0
    %6675 = vmatpush1.msra.mxu0 0.0
    %6676 = vmatprep.subr.mxu0 0.0
    %6677 = vmatpush1.msra.mxu0 0.0
    %6678 = vmatprep.subr.mxu0 0.0
    %6679 = vmatpush1.msra.mxu0 0.0
    %6680 = vmatprep.subr.mxu0 0.0
    %6681 = vmatpush1.msra.mxu0 0.0
    %v6682 = vand.u32 %v4817, 4294901760
    %6683 = vmatprep.subr.mxu0 %v6682
    %v6684 = vand.u32 %v4816, 4294901760
    %6685 = vmatpush1.msra.mxu0 %v6684
    %v6686 = vand.u32 %v4813, 4294901760
    %6687 = vmatprep.subr.mxu0 %v6686
    %v6688 = vand.u32 %v4812, 4294901760
    %6689 = vmatpush1.msra.mxu0 %v6688
    %v6690 = vand.u32 %v4809, 4294901760
    %6691 = vmatprep.subr.mxu0 %v6690
    %v6692 = vand.u32 %v4808, 4294901760
    %6693 = vmatpush1.msra.mxu0 %v6692
    %v6694 = vand.u32 %v4805, 4294901760
    %6695 = vmatprep.subr.mxu0 %v6694
    %v6696 = vand.u32 %v4804, 4294901760
    %6697 = vmatpush1.msra.mxu0 %v6696
    %v6698 = vand.u32 %v4801, 4294901760
    %6699 = vmatprep.subr.mxu0 %v6698
    %v6700 = vand.u32 %v4800, 4294901760
    %6701 = vmatpush1.msra.mxu0 %v6700
    %v6702 = vand.u32 %v4797, 4294901760
    %6703 = vmatprep.subr.mxu0 %v6702
    %v6704 = vand.u32 %v4796, 4294901760
    %6705 = vmatpush1.msra.mxu0 %v6704
    %v6706 = vand.u32 %v4793, 4294901760
    %6707 = vmatprep.subr.mxu0 %v6706
    %v6708 = vand.u32 %v4792, 4294901760
    %6709 = vmatpush1.msra.mxu0 %v6708
    %v6710 = vand.u32 %v4789, 4294901760
    %6711 = vmatprep.subr.mxu0 %v6710
    %v6712 = vand.u32 %v4788, 4294901760
    %6713 = vmatpush1.msra.mxu0 %v6712
    %6714 = vmatprep.subr.mxu0 0.0
    %6715 = vmatpush2.msra.mxu0 0.0
    %6716 = vmatprep.subr.mxu0 0.0
    %6717 = vmatpush2.msra.mxu0 0.0
    %6718 = vmatprep.subr.mxu0 0.0
    %6719 = vmatpush2.msra.mxu0 0.0
    %6720 = vmatprep.subr.mxu0 0.0
    %6721 = vmatpush2.msra.mxu0 0.0
    %6722 = vmatprep.subr.mxu0 0.0
    %6723 = vmatpush2.msra.mxu0 0.0
    %6724 = vmatprep.subr.mxu0 0.0
    %6725 = vmatpush2.msra.mxu0 0.0
    %6726 = vmatprep.subr.mxu0 0.0
    %6727 = vmatpush2.msra.mxu0 0.0
    %6728 = vmatprep.subr.mxu0 0.0
    %6729 = vmatpush2.msra.mxu0 0.0
    %6730 = vmatprep.subr.mxu0 0.0
    %6731 = vmatpush2.msra.mxu0 0.0
    %6732 = vmatprep.subr.mxu0 0.0
    %6733 = vmatpush2.msra.mxu0 0.0
    %6734 = vmatprep.subr.mxu0 0.0
    %6735 = vmatpush2.msra.mxu0 0.0
    %6736 = vmatprep.subr.mxu0 0.0
    %6737 = vmatpush2.msra.mxu0 0.0
    %6738 = vmatprep.subr.mxu0 0.0
    %6739 = vmatpush2.msra.mxu0 0.0
    %6740 = vmatprep.subr.mxu0 0.0
    %6741 = vmatpush2.msra.mxu0 0.0
    %6742 = vmatprep.subr.mxu0 0.0
    %6743 = vmatpush2.msra.mxu0 0.0
    %6744 = vmatprep.subr.mxu0 0.0
    %6745 = vmatpush2.msra.mxu0 0.0
    %6746 = vmatprep.mubr.f32.mxu0 0.0
    %v6747 = vand.u32 %v4821, 4294901760
    %6748 = vmatmul.mubr.f32.gmra.mxu0 %v6747
    %v6749 = vpop.f32.mrf.mxu0
    %v6750 = vadd.f32 %v6662, %v6749
    %v6751 = vpop.f32.mrf.mxu0
    %v6752 = vadd.f32 %v6664, %v6751
    %6753 = vdwg.mxu0
    %v6754 = vand.u32 %v4723, 4294901760
    %6755 = vmatprep.subr.mxu0 %v6754
    %v6756 = vand.u32 %v4722, 4294901760
    %6757 = vmatpush1.msra.mxu0 %v6756
    %v6758 = vand.u32 %v4719, 4294901760
    %6759 = vmatprep.subr.mxu0 %v6758
    %v6760 = vand.u32 %v4718, 4294901760
    %6761 = vmatpush1.msra.mxu0 %v6760
    %v6762 = vand.u32 %v4715, 4294901760
    %6763 = vmatprep.subr.mxu0 %v6762
    %v6764 = vand.u32 %v4714, 4294901760
    %6765 = vmatpush1.msra.mxu0 %v6764
    %v6766 = vand.u32 %v4711, 4294901760
    %6767 = vmatprep.subr.mxu0 %v6766
    %v6768 = vand.u32 %v4710, 4294901760
    %6769 = vmatpush1.msra.mxu0 %v6768
    %v6770 = vand.u32 %v4707, 4294901760
    %6771 = vmatprep.subr.mxu0 %v6770
    %v6772 = vand.u32 %v4706, 4294901760
    %6773 = vmatpush1.msra.mxu0 %v6772
    %v6774 = vand.u32 %v4703, 4294901760
    %6775 = vmatprep.subr.mxu0 %v6774
    %v6776 = vand.u32 %v4702, 4294901760
    %6777 = vmatpush1.msra.mxu0 %v6776
    %v6778 = vand.u32 %v4699, 4294901760
    %6779 = vmatprep.subr.mxu0 %v6778
    %v6780 = vand.u32 %v4698, 4294901760
    %6781 = vmatpush1.msra.mxu0 %v6780
    %v6782 = vand.u32 %v4695, 4294901760
    %6783 = vmatprep.subr.mxu0 %v6782
    %v6784 = vand.u32 %v4694, 4294901760
    %6785 = vmatpush1.msra.mxu0 %v6784
    %v6786 = vand.u32 %v4691, 4294901760
    %6787 = vmatprep.subr.mxu0 %v6786
    %v6788 = vand.u32 %v4690, 4294901760
    %6789 = vmatpush1.msra.mxu0 %v6788
    %v6790 = vand.u32 %v4687, 4294901760
    %6791 = vmatprep.subr.mxu0 %v6790
    %v6792 = vand.u32 %v4686, 4294901760
    %6793 = vmatpush1.msra.mxu0 %v6792
    %v6794 = vand.u32 %v4683, 4294901760
    %6795 = vmatprep.subr.mxu0 %v6794
    %v6796 = vand.u32 %v4682, 4294901760
    %6797 = vmatpush1.msra.mxu0 %v6796
    %v6798 = vand.u32 %v4679, 4294901760
    %6799 = vmatprep.subr.mxu0 %v6798
    %v6800 = vand.u32 %v4678, 4294901760
    %6801 = vmatpush1.msra.mxu0 %v6800
    %v6802 = vand.u32 %v4675, 4294901760
    %6803 = vmatprep.subr.mxu0 %v6802
    %v6804 = vand.u32 %v4674, 4294901760
    %6805 = vmatpush1.msra.mxu0 %v6804
    %v6806 = vand.u32 %v4671, 4294901760
    %6807 = vmatprep.subr.mxu0 %v6806
    %v6808 = vand.u32 %v4670, 4294901760
    %6809 = vmatpush1.msra.mxu0 %v6808
    %v6810 = vand.u32 %v4667, 4294901760
    %6811 = vmatprep.subr.mxu0 %v6810
    %v6812 = vand.u32 %v4666, 4294901760
    %6813 = vmatpush1.msra.mxu0 %v6812
    %v6814 = vand.u32 %v4663, 4294901760
    %6815 = vmatprep.subr.mxu0 %v6814
    %v6816 = vand.u32 %v4662, 4294901760
    %6817 = vmatpush1.msra.mxu0 %v6816
    %v6818 = vand.u32 %v4787, 4294901760
    %6819 = vmatprep.subr.mxu0 %v6818
    %v6820 = vand.u32 %v4786, 4294901760
    %6821 = vmatpush2.msra.mxu0 %v6820
    %v6822 = vand.u32 %v4783, 4294901760
    %6823 = vmatprep.subr.mxu0 %v6822
    %v6824 = vand.u32 %v4782, 4294901760
    %6825 = vmatpush2.msra.mxu0 %v6824
    %v6826 = vand.u32 %v4779, 4294901760
    %6827 = vmatprep.subr.mxu0 %v6826
    %v6828 = vand.u32 %v4778, 4294901760
    %6829 = vmatpush2.msra.mxu0 %v6828
    %v6830 = vand.u32 %v4775, 4294901760
    %6831 = vmatprep.subr.mxu0 %v6830
    %v6832 = vand.u32 %v4774, 4294901760
    %6833 = vmatpush2.msra.mxu0 %v6832
    %v6834 = vand.u32 %v4771, 4294901760
    %6835 = vmatprep.subr.mxu0 %v6834
    %v6836 = vand.u32 %v4770, 4294901760
    %6837 = vmatpush2.msra.mxu0 %v6836
    %v6838 = vand.u32 %v4767, 4294901760
    %6839 = vmatprep.subr.mxu0 %v6838
    %v6840 = vand.u32 %v4766, 4294901760
    %6841 = vmatpush2.msra.mxu0 %v6840
    %v6842 = vand.u32 %v4763, 4294901760
    %6843 = vmatprep.subr.mxu0 %v6842
    %v6844 = vand.u32 %v4762, 4294901760
    %6845 = vmatpush2.msra.mxu0 %v6844
    %v6846 = vand.u32 %v4759, 4294901760
    %6847 = vmatprep.subr.mxu0 %v6846
    %v6848 = vand.u32 %v4758, 4294901760
    %6849 = vmatpush2.msra.mxu0 %v6848
    %v6850 = vand.u32 %v4755, 4294901760
    %6851 = vmatprep.subr.mxu0 %v6850
    %v6852 = vand.u32 %v4754, 4294901760
    %6853 = vmatpush2.msra.mxu0 %v6852
    %v6854 = vand.u32 %v4751, 4294901760
    %6855 = vmatprep.subr.mxu0 %v6854
    %v6856 = vand.u32 %v4750, 4294901760
    %6857 = vmatpush2.msra.mxu0 %v6856
    %v6858 = vand.u32 %v4747, 4294901760
    %6859 = vmatprep.subr.mxu0 %v6858
    %v6860 = vand.u32 %v4746, 4294901760
    %6861 = vmatpush2.msra.mxu0 %v6860
    %v6862 = vand.u32 %v4743, 4294901760
    %6863 = vmatprep.subr.mxu0 %v6862
    %v6864 = vand.u32 %v4742, 4294901760
    %6865 = vmatpush2.msra.mxu0 %v6864
    %v6866 = vand.u32 %v4739, 4294901760
    %6867 = vmatprep.subr.mxu0 %v6866
    %v6868 = vand.u32 %v4738, 4294901760
    %6869 = vmatpush2.msra.mxu0 %v6868
    %v6870 = vand.u32 %v4735, 4294901760
    %6871 = vmatprep.subr.mxu0 %v6870
    %v6872 = vand.u32 %v4734, 4294901760
    %6873 = vmatpush2.msra.mxu0 %v6872
    %v6874 = vand.u32 %v4731, 4294901760
    %6875 = vmatprep.subr.mxu0 %v6874
    %v6876 = vand.u32 %v4730, 4294901760
    %6877 = vmatpush2.msra.mxu0 %v6876
    %v6878 = vand.u32 %v4727, 4294901760
    %6879 = vmatprep.subr.mxu0 %v6878
    %v6880 = vand.u32 %v4726, 4294901760
    %6881 = vmatpush2.msra.mxu0 %v6880
    %v6882 = vand.u32 %v4658, 4294901760
    %v6883 = vsub.f32 %v4658, %v6882
    %v6884 = vand.u32 %v6883, 4294901760
    %v6885 = vsub.f32 %v6883, %v6884
    %v6886 = vand.u32 %v6885, 4294901760
    %6887 = vmatprep.mubr.f32.mxu0 %v6886
    %v6888 = vand.u32 %v4657, 4294901760
    %v6889 = vsub.f32 %v4657, %v6888
    %v6890 = vand.u32 %v6889, 4294901760
    %v6891 = vsub.f32 %v6889, %v6890
    %v6892 = vand.u32 %v6891, 4294901760
    %6893 = vmatmul.mubr.f32.gmra.mxu0 %v6892
    %v6894 = vpop.f32.mrf.mxu0
    %v6895 = vadd.f32 0.0, %v6894
    %v6896 = vpop.f32.mrf.mxu0
    %v6897 = vadd.f32 0.0, %v6896
    %6898 = vdwg.mxu0
    %v6899 = vand.u32 %v4723, 4294901760
    %v6900 = vsub.f32 %v4723, %v6899
    %v6901 = vand.u32 %v6900, 4294901760
    %v6902 = vsub.f32 %v6900, %v6901
    %v6903 = vand.u32 %v6902, 4294901760
    %6904 = vmatprep.subr.mxu0 %v6903
    %v6905 = vand.u32 %v4722, 4294901760
    %v6906 = vsub.f32 %v4722, %v6905
    %v6907 = vand.u32 %v6906, 4294901760
    %v6908 = vsub.f32 %v6906, %v6907
    %v6909 = vand.u32 %v6908, 4294901760
    %6910 = vmatpush1.msra.mxu0 %v6909
    %v6911 = vand.u32 %v4719, 4294901760
    %v6912 = vsub.f32 %v4719, %v6911
    %v6913 = vand.u32 %v6912, 4294901760
    %v6914 = vsub.f32 %v6912, %v6913
    %v6915 = vand.u32 %v6914, 4294901760
    %6916 = vmatprep.subr.mxu0 %v6915
    %v6917 = vand.u32 %v4718, 4294901760
    %v6918 = vsub.f32 %v4718, %v6917
    %v6919 = vand.u32 %v6918, 4294901760
    %v6920 = vsub.f32 %v6918, %v6919
    %v6921 = vand.u32 %v6920, 4294901760
    %6922 = vmatpush1.msra.mxu0 %v6921
    %v6923 = vand.u32 %v4715, 4294901760
    %v6924 = vsub.f32 %v4715, %v6923
    %v6925 = vand.u32 %v6924, 4294901760
    %v6926 = vsub.f32 %v6924, %v6925
    %v6927 = vand.u32 %v6926, 4294901760
    %6928 = vmatprep.subr.mxu0 %v6927
    %v6929 = vand.u32 %v4714, 4294901760
    %v6930 = vsub.f32 %v4714, %v6929
    %v6931 = vand.u32 %v6930, 4294901760
    %v6932 = vsub.f32 %v6930, %v6931
    %v6933 = vand.u32 %v6932, 4294901760
    %6934 = vmatpush1.msra.mxu0 %v6933
    %v6935 = vand.u32 %v4711, 4294901760
    %v6936 = vsub.f32 %v4711, %v6935
    %v6937 = vand.u32 %v6936, 4294901760
    %v6938 = vsub.f32 %v6936, %v6937
    %v6939 = vand.u32 %v6938, 4294901760
    %6940 = vmatprep.subr.mxu0 %v6939
    %v6941 = vand.u32 %v4710, 4294901760
    %v6942 = vsub.f32 %v4710, %v6941
    %v6943 = vand.u32 %v6942, 4294901760
    %v6944 = vsub.f32 %v6942, %v6943
    %v6945 = vand.u32 %v6944, 4294901760
    %6946 = vmatpush1.msra.mxu0 %v6945
    %v6947 = vand.u32 %v4707, 4294901760
    %v6948 = vsub.f32 %v4707, %v6947
    %v6949 = vand.u32 %v6948, 4294901760
    %v6950 = vsub.f32 %v6948, %v6949
    %v6951 = vand.u32 %v6950, 4294901760
    %6952 = vmatprep.subr.mxu0 %v6951
    %v6953 = vand.u32 %v4706, 4294901760
    %v6954 = vsub.f32 %v4706, %v6953
    %v6955 = vand.u32 %v6954, 4294901760
    %v6956 = vsub.f32 %v6954, %v6955
    %v6957 = vand.u32 %v6956, 4294901760
    %6958 = vmatpush1.msra.mxu0 %v6957
    %v6959 = vand.u32 %v4703, 4294901760
    %v6960 = vsub.f32 %v4703, %v6959
    %v6961 = vand.u32 %v6960, 4294901760
    %v6962 = vsub.f32 %v6960, %v6961
    %v6963 = vand.u32 %v6962, 4294901760
    %6964 = vmatprep.subr.mxu0 %v6963
    %v6965 = vand.u32 %v4702, 4294901760
    %v6966 = vsub.f32 %v4702, %v6965
    %v6967 = vand.u32 %v6966, 4294901760
    %v6968 = vsub.f32 %v6966, %v6967
    %v6969 = vand.u32 %v6968, 4294901760
    %6970 = vmatpush1.msra.mxu0 %v6969
    %v6971 = vand.u32 %v4699, 4294901760
    %v6972 = vsub.f32 %v4699, %v6971
    %v6973 = vand.u32 %v6972, 4294901760
    %v6974 = vsub.f32 %v6972, %v6973
    %v6975 = vand.u32 %v6974, 4294901760
    %6976 = vmatprep.subr.mxu0 %v6975
    %v6977 = vand.u32 %v4698, 4294901760
    %v6978 = vsub.f32 %v4698, %v6977
    %v6979 = vand.u32 %v6978, 4294901760
    %v6980 = vsub.f32 %v6978, %v6979
    %v6981 = vand.u32 %v6980, 4294901760
    %6982 = vmatpush1.msra.mxu0 %v6981
    %v6983 = vand.u32 %v4695, 4294901760
    %v6984 = vsub.f32 %v4695, %v6983
    %v6985 = vand.u32 %v6984, 4294901760
    %v6986 = vsub.f32 %v6984, %v6985
    %v6987 = vand.u32 %v6986, 4294901760
    %6988 = vmatprep.subr.mxu0 %v6987
    %v6989 = vand.u32 %v4694, 4294901760
    %v6990 = vsub.f32 %v4694, %v6989
    %v6991 = vand.u32 %v6990, 4294901760
    %v6992 = vsub.f32 %v6990, %v6991
    %v6993 = vand.u32 %v6992, 4294901760
    %6994 = vmatpush1.msra.mxu0 %v6993
    %v6995 = vand.u32 %v4691, 4294901760
    %v6996 = vsub.f32 %v4691, %v6995
    %v6997 = vand.u32 %v6996, 4294901760
    %v6998 = vsub.f32 %v6996, %v6997
    %v6999 = vand.u32 %v6998, 4294901760
    %7000 = vmatprep.subr.mxu0 %v6999
    %v7001 = vand.u32 %v4690, 4294901760
    %v7002 = vsub.f32 %v4690, %v7001
    %v7003 = vand.u32 %v7002, 4294901760
    %v7004 = vsub.f32 %v7002, %v7003
    %v7005 = vand.u32 %v7004, 4294901760
    %7006 = vmatpush1.msra.mxu0 %v7005
    %v7007 = vand.u32 %v4687, 4294901760
    %v7008 = vsub.f32 %v4687, %v7007
    %v7009 = vand.u32 %v7008, 4294901760
    %v7010 = vsub.f32 %v7008, %v7009
    %v7011 = vand.u32 %v7010, 4294901760
    %7012 = vmatprep.subr.mxu0 %v7011
    %v7013 = vand.u32 %v4686, 4294901760
    %v7014 = vsub.f32 %v4686, %v7013
    %v7015 = vand.u32 %v7014, 4294901760
    %v7016 = vsub.f32 %v7014, %v7015
    %v7017 = vand.u32 %v7016, 4294901760
    %7018 = vmatpush1.msra.mxu0 %v7017
    %v7019 = vand.u32 %v4683, 4294901760
    %v7020 = vsub.f32 %v4683, %v7019
    %v7021 = vand.u32 %v7020, 4294901760
    %v7022 = vsub.f32 %v7020, %v7021
    %v7023 = vand.u32 %v7022, 4294901760
    %7024 = vmatprep.subr.mxu0 %v7023
    %v7025 = vand.u32 %v4682, 4294901760
    %v7026 = vsub.f32 %v4682, %v7025
    %v7027 = vand.u32 %v7026, 4294901760
    %v7028 = vsub.f32 %v7026, %v7027
    %v7029 = vand.u32 %v7028, 4294901760
    %7030 = vmatpush1.msra.mxu0 %v7029
    %v7031 = vand.u32 %v4679, 4294901760
    %v7032 = vsub.f32 %v4679, %v7031
    %v7033 = vand.u32 %v7032, 4294901760
    %v7034 = vsub.f32 %v7032, %v7033
    %v7035 = vand.u32 %v7034, 4294901760
    %7036 = vmatprep.subr.mxu0 %v7035
    %v7037 = vand.u32 %v4678, 4294901760
    %v7038 = vsub.f32 %v4678, %v7037
    %v7039 = vand.u32 %v7038, 4294901760
    %v7040 = vsub.f32 %v7038, %v7039
    %v7041 = vand.u32 %v7040, 4294901760
    %7042 = vmatpush1.msra.mxu0 %v7041
    %v7043 = vand.u32 %v4675, 4294901760
    %v7044 = vsub.f32 %v4675, %v7043
    %v7045 = vand.u32 %v7044, 4294901760
    %v7046 = vsub.f32 %v7044, %v7045
    %v7047 = vand.u32 %v7046, 4294901760
    %7048 = vmatprep.subr.mxu0 %v7047
    %v7049 = vand.u32 %v4674, 4294901760
    %v7050 = vsub.f32 %v4674, %v7049
    %v7051 = vand.u32 %v7050, 4294901760
    %v7052 = vsub.f32 %v7050, %v7051
    %v7053 = vand.u32 %v7052, 4294901760
    %7054 = vmatpush1.msra.mxu0 %v7053
    %v7055 = vand.u32 %v4671, 4294901760
    %v7056 = vsub.f32 %v4671, %v7055
    %v7057 = vand.u32 %v7056, 4294901760
    %v7058 = vsub.f32 %v7056, %v7057
    %v7059 = vand.u32 %v7058, 4294901760
    %7060 = vmatprep.subr.mxu0 %v7059
    %v7061 = vand.u32 %v4670, 4294901760
    %v7062 = vsub.f32 %v4670, %v7061
    %v7063 = vand.u32 %v7062, 4294901760
    %v7064 = vsub.f32 %v7062, %v7063
    %v7065 = vand.u32 %v7064, 4294901760
    %7066 = vmatpush1.msra.mxu0 %v7065
    %v7067 = vand.u32 %v4667, 4294901760
    %v7068 = vsub.f32 %v4667, %v7067
    %v7069 = vand.u32 %v7068, 4294901760
    %v7070 = vsub.f32 %v7068, %v7069
    %v7071 = vand.u32 %v7070, 4294901760
    %7072 = vmatprep.subr.mxu0 %v7071
    %v7073 = vand.u32 %v4666, 4294901760
    %v7074 = vsub.f32 %v4666, %v7073
    %v7075 = vand.u32 %v7074, 4294901760
    %v7076 = vsub.f32 %v7074, %v7075
    %v7077 = vand.u32 %v7076, 4294901760
    %7078 = vmatpush1.msra.mxu0 %v7077
    %v7079 = vand.u32 %v4663, 4294901760
    %v7080 = vsub.f32 %v4663, %v7079
    %v7081 = vand.u32 %v7080, 4294901760
    %v7082 = vsub.f32 %v7080, %v7081
    %v7083 = vand.u32 %v7082, 4294901760
    %7084 = vmatprep.subr.mxu0 %v7083
    %v7085 = vand.u32 %v4662, 4294901760
    %v7086 = vsub.f32 %v4662, %v7085
    %v7087 = vand.u32 %v7086, 4294901760
    %v7088 = vsub.f32 %v7086, %v7087
    %v7089 = vand.u32 %v7088, 4294901760
    %7090 = vmatpush1.msra.mxu0 %v7089
    %v7091 = vand.u32 %v4787, 4294901760
    %v7092 = vsub.f32 %v4787, %v7091
    %v7093 = vand.u32 %v7092, 4294901760
    %v7094 = vsub.f32 %v7092, %v7093
    %v7095 = vand.u32 %v7094, 4294901760
    %7096 = vmatprep.subr.mxu0 %v7095
    %v7097 = vand.u32 %v4786, 4294901760
    %v7098 = vsub.f32 %v4786, %v7097
    %v7099 = vand.u32 %v7098, 4294901760
    %v7100 = vsub.f32 %v7098, %v7099
    %v7101 = vand.u32 %v7100, 4294901760
    %7102 = vmatpush2.msra.mxu0 %v7101
    %v7103 = vand.u32 %v4783, 4294901760
    %v7104 = vsub.f32 %v4783, %v7103
    %v7105 = vand.u32 %v7104, 4294901760
    %v7106 = vsub.f32 %v7104, %v7105
    %v7107 = vand.u32 %v7106, 4294901760
    %7108 = vmatprep.subr.mxu0 %v7107
    %v7109 = vand.u32 %v4782, 4294901760
    %v7110 = vsub.f32 %v4782, %v7109
    %v7111 = vand.u32 %v7110, 4294901760
    %v7112 = vsub.f32 %v7110, %v7111
    %v7113 = vand.u32 %v7112, 4294901760
    %7114 = vmatpush2.msra.mxu0 %v7113
    %v7115 = vand.u32 %v4779, 4294901760
    %v7116 = vsub.f32 %v4779, %v7115
    %v7117 = vand.u32 %v7116, 4294901760
    %v7118 = vsub.f32 %v7116, %v7117
    %v7119 = vand.u32 %v7118, 4294901760
    %7120 = vmatprep.subr.mxu0 %v7119
    %v7121 = vand.u32 %v4778, 4294901760
    %v7122 = vsub.f32 %v4778, %v7121
    %v7123 = vand.u32 %v7122, 4294901760
    %v7124 = vsub.f32 %v7122, %v7123
    %v7125 = vand.u32 %v7124, 4294901760
    %7126 = vmatpush2.msra.mxu0 %v7125
    %v7127 = vand.u32 %v4775, 4294901760
    %v7128 = vsub.f32 %v4775, %v7127
    %v7129 = vand.u32 %v7128, 4294901760
    %v7130 = vsub.f32 %v7128, %v7129
    %v7131 = vand.u32 %v7130, 4294901760
    %7132 = vmatprep.subr.mxu0 %v7131
    %v7133 = vand.u32 %v4774, 4294901760
    %v7134 = vsub.f32 %v4774, %v7133
    %v7135 = vand.u32 %v7134, 4294901760
    %v7136 = vsub.f32 %v7134, %v7135
    %v7137 = vand.u32 %v7136, 4294901760
    %7138 = vmatpush2.msra.mxu0 %v7137
    %v7139 = vand.u32 %v4771, 4294901760
    %v7140 = vsub.f32 %v4771, %v7139
    %v7141 = vand.u32 %v7140, 4294901760
    %v7142 = vsub.f32 %v7140, %v7141
    %v7143 = vand.u32 %v7142, 4294901760
    %7144 = vmatprep.subr.mxu0 %v7143
    %v7145 = vand.u32 %v4770, 4294901760
    %v7146 = vsub.f32 %v4770, %v7145
    %v7147 = vand.u32 %v7146, 4294901760
    %v7148 = vsub.f32 %v7146, %v7147
    %v7149 = vand.u32 %v7148, 4294901760
    %7150 = vmatpush2.msra.mxu0 %v7149
    %v7151 = vand.u32 %v4767, 4294901760
    %v7152 = vsub.f32 %v4767, %v7151
    %v7153 = vand.u32 %v7152, 4294901760
    %v7154 = vsub.f32 %v7152, %v7153
    %v7155 = vand.u32 %v7154, 4294901760
    %7156 = vmatprep.subr.mxu0 %v7155
    %v7157 = vand.u32 %v4766, 4294901760
    %v7158 = vsub.f32 %v4766, %v7157
    %v7159 = vand.u32 %v7158, 4294901760
    %v7160 = vsub.f32 %v7158, %v7159
    %v7161 = vand.u32 %v7160, 4294901760
    %7162 = vmatpush2.msra.mxu0 %v7161
    %v7163 = vand.u32 %v4763, 4294901760
    %v7164 = vsub.f32 %v4763, %v7163
    %v7165 = vand.u32 %v7164, 4294901760
    %v7166 = vsub.f32 %v7164, %v7165
    %v7167 = vand.u32 %v7166, 4294901760
    %7168 = vmatprep.subr.mxu0 %v7167
    %v7169 = vand.u32 %v4762, 4294901760
    %v7170 = vsub.f32 %v4762, %v7169
    %v7171 = vand.u32 %v7170, 4294901760
    %v7172 = vsub.f32 %v7170, %v7171
    %v7173 = vand.u32 %v7172, 4294901760
    %7174 = vmatpush2.msra.mxu0 %v7173
    %v7175 = vand.u32 %v4759, 4294901760
    %v7176 = vsub.f32 %v4759, %v7175
    %v7177 = vand.u32 %v7176, 4294901760
    %v7178 = vsub.f32 %v7176, %v7177
    %v7179 = vand.u32 %v7178, 4294901760
    %7180 = vmatprep.subr.mxu0 %v7179
    %v7181 = vand.u32 %v4758, 4294901760
    %v7182 = vsub.f32 %v4758, %v7181
    %v7183 = vand.u32 %v7182, 4294901760
    %v7184 = vsub.f32 %v7182, %v7183
    %v7185 = vand.u32 %v7184, 4294901760
    %7186 = vmatpush2.msra.mxu0 %v7185
    %v7187 = vand.u32 %v4755, 4294901760
    %v7188 = vsub.f32 %v4755, %v7187
    %v7189 = vand.u32 %v7188, 4294901760
    %v7190 = vsub.f32 %v7188, %v7189
    %v7191 = vand.u32 %v7190, 4294901760
    %7192 = vmatprep.subr.mxu0 %v7191
    %v7193 = vand.u32 %v4754, 4294901760
    %v7194 = vsub.f32 %v4754, %v7193
    %v7195 = vand.u32 %v7194, 4294901760
    %v7196 = vsub.f32 %v7194, %v7195
    %v7197 = vand.u32 %v7196, 4294901760
    %7198 = vmatpush2.msra.mxu0 %v7197
    %v7199 = vand.u32 %v4751, 4294901760
    %v7200 = vsub.f32 %v4751, %v7199
    %v7201 = vand.u32 %v7200, 4294901760
    %v7202 = vsub.f32 %v7200, %v7201
    %v7203 = vand.u32 %v7202, 4294901760
    %7204 = vmatprep.subr.mxu0 %v7203
    %v7205 = vand.u32 %v4750, 4294901760
    %v7206 = vsub.f32 %v4750, %v7205
    %v7207 = vand.u32 %v7206, 4294901760
    %v7208 = vsub.f32 %v7206, %v7207
    %v7209 = vand.u32 %v7208, 4294901760
    %7210 = vmatpush2.msra.mxu0 %v7209
    %v7211 = vand.u32 %v4747, 4294901760
    %v7212 = vsub.f32 %v4747, %v7211
    %v7213 = vand.u32 %v7212, 4294901760
    %v7214 = vsub.f32 %v7212, %v7213
    %v7215 = vand.u32 %v7214, 4294901760
    %7216 = vmatprep.subr.mxu0 %v7215
    %v7217 = vand.u32 %v4746, 4294901760
    %v7218 = vsub.f32 %v4746, %v7217
    %v7219 = vand.u32 %v7218, 4294901760
    %v7220 = vsub.f32 %v7218, %v7219
    %v7221 = vand.u32 %v7220, 4294901760
    %7222 = vmatpush2.msra.mxu0 %v7221
    %v7223 = vand.u32 %v4743, 4294901760
    %v7224 = vsub.f32 %v4743, %v7223
    %v7225 = vand.u32 %v7224, 4294901760
    %v7226 = vsub.f32 %v7224, %v7225
    %v7227 = vand.u32 %v7226, 4294901760
    %7228 = vmatprep.subr.mxu0 %v7227
    %v7229 = vand.u32 %v4742, 4294901760
    %v7230 = vsub.f32 %v4742, %v7229
    %v7231 = vand.u32 %v7230, 4294901760
    %v7232 = vsub.f32 %v7230, %v7231
    %v7233 = vand.u32 %v7232, 4294901760
    %7234 = vmatpush2.msra.mxu0 %v7233
    %v7235 = vand.u32 %v4739, 4294901760
    %v7236 = vsub.f32 %v4739, %v7235
    %v7237 = vand.u32 %v7236, 4294901760
    %v7238 = vsub.f32 %v7236, %v7237
    %v7239 = vand.u32 %v7238, 4294901760
    %7240 = vmatprep.subr.mxu0 %v7239
    %v7241 = vand.u32 %v4738, 4294901760
    %v7242 = vsub.f32 %v4738, %v7241
    %v7243 = vand.u32 %v7242, 4294901760
    %v7244 = vsub.f32 %v7242, %v7243
    %v7245 = vand.u32 %v7244, 4294901760
    %7246 = vmatpush2.msra.mxu0 %v7245
    %v7247 = vand.u32 %v4735, 4294901760
    %v7248 = vsub.f32 %v4735, %v7247
    %v7249 = vand.u32 %v7248, 4294901760
    %v7250 = vsub.f32 %v7248, %v7249
    %v7251 = vand.u32 %v7250, 4294901760
    %7252 = vmatprep.subr.mxu0 %v7251
    %v7253 = vand.u32 %v4734, 4294901760
    %v7254 = vsub.f32 %v4734, %v7253
    %v7255 = vand.u32 %v7254, 4294901760
    %v7256 = vsub.f32 %v7254, %v7255
    %v7257 = vand.u32 %v7256, 4294901760
    %7258 = vmatpush2.msra.mxu0 %v7257
    %v7259 = vand.u32 %v4731, 4294901760
    %v7260 = vsub.f32 %v4731, %v7259
    %v7261 = vand.u32 %v7260, 4294901760
    %v7262 = vsub.f32 %v7260, %v7261
    %v7263 = vand.u32 %v7262, 4294901760
    %7264 = vmatprep.subr.mxu0 %v7263
    %v7265 = vand.u32 %v4730, 4294901760
    %v7266 = vsub.f32 %v4730, %v7265
    %v7267 = vand.u32 %v7266, 4294901760
    %v7268 = vsub.f32 %v7266, %v7267
    %v7269 = vand.u32 %v7268, 4294901760
    %7270 = vmatpush2.msra.mxu0 %v7269
    %v7271 = vand.u32 %v4727, 4294901760
    %v7272 = vsub.f32 %v4727, %v7271
    %v7273 = vand.u32 %v7272, 4294901760
    %v7274 = vsub.f32 %v7272, %v7273
    %v7275 = vand.u32 %v7274, 4294901760
    %7276 = vmatprep.subr.mxu0 %v7275
    %v7277 = vand.u32 %v4726, 4294901760
    %v7278 = vsub.f32 %v4726, %v7277
    %v7279 = vand.u32 %v7278, 4294901760
    %v7280 = vsub.f32 %v7278, %v7279
    %v7281 = vand.u32 %v7280, 4294901760
    %7282 = vmatpush2.msra.mxu0 %v7281
    %v7283 = vand.u32 %v4658, 4294901760
    %7284 = vmatprep.mubr.f32.mxu0 %v7283
    %v7285 = vand.u32 %v4657, 4294901760
    %7286 = vmatmul.mubr.f32.gmra.mxu0 %v7285
    %v7287 = vpop.f32.mrf.mxu0
    %v7288 = vadd.f32 %v6895, %v7287
    %v7289 = vpop.f32.mrf.mxu0
    %v7290 = vadd.f32 %v6897, %v7289
    %7291 = vdwg.mxu0
    %v7292 = vand.u32 %v4723, 4294901760
    %v7293 = vsub.f32 %v4723, %v7292
    %7294 = vmatprep.subr.mxu0 %v7293
    %v7295 = vand.u32 %v4722, 4294901760
    %v7296 = vsub.f32 %v4722, %v7295
    %7297 = vmatpush1.msra.mxu0 %v7296
    %v7298 = vand.u32 %v4719, 4294901760
    %v7299 = vsub.f32 %v4719, %v7298
    %7300 = vmatprep.subr.mxu0 %v7299
    %v7301 = vand.u32 %v4718, 4294901760
    %v7302 = vsub.f32 %v4718, %v7301
    %7303 = vmatpush1.msra.mxu0 %v7302
    %v7304 = vand.u32 %v4715, 4294901760
    %v7305 = vsub.f32 %v4715, %v7304
    %7306 = vmatprep.subr.mxu0 %v7305
    %v7307 = vand.u32 %v4714, 4294901760
    %v7308 = vsub.f32 %v4714, %v7307
    %7309 = vmatpush1.msra.mxu0 %v7308
    %v7310 = vand.u32 %v4711, 4294901760
    %v7311 = vsub.f32 %v4711, %v7310
    %7312 = vmatprep.subr.mxu0 %v7311
    %v7313 = vand.u32 %v4710, 4294901760
    %v7314 = vsub.f32 %v4710, %v7313
    %7315 = vmatpush1.msra.mxu0 %v7314
    %v7316 = vand.u32 %v4707, 4294901760
    %v7317 = vsub.f32 %v4707, %v7316
    %7318 = vmatprep.subr.mxu0 %v7317
    %v7319 = vand.u32 %v4706, 4294901760
    %v7320 = vsub.f32 %v4706, %v7319
    %7321 = vmatpush1.msra.mxu0 %v7320
    %v7322 = vand.u32 %v4703, 4294901760
    %v7323 = vsub.f32 %v4703, %v7322
    %7324 = vmatprep.subr.mxu0 %v7323
    %v7325 = vand.u32 %v4702, 4294901760
    %v7326 = vsub.f32 %v4702, %v7325
    %7327 = vmatpush1.msra.mxu0 %v7326
    %v7328 = vand.u32 %v4699, 4294901760
    %v7329 = vsub.f32 %v4699, %v7328
    %7330 = vmatprep.subr.mxu0 %v7329
    %v7331 = vand.u32 %v4698, 4294901760
    %v7332 = vsub.f32 %v4698, %v7331
    %7333 = vmatpush1.msra.mxu0 %v7332
    %v7334 = vand.u32 %v4695, 4294901760
    %v7335 = vsub.f32 %v4695, %v7334
    %7336 = vmatprep.subr.mxu0 %v7335
    %v7337 = vand.u32 %v4694, 4294901760
    %v7338 = vsub.f32 %v4694, %v7337
    %7339 = vmatpush1.msra.mxu0 %v7338
    %v7340 = vand.u32 %v4691, 4294901760
    %v7341 = vsub.f32 %v4691, %v7340
    %7342 = vmatprep.subr.mxu0 %v7341
    %v7343 = vand.u32 %v4690, 4294901760
    %v7344 = vsub.f32 %v4690, %v7343
    %7345 = vmatpush1.msra.mxu0 %v7344
    %v7346 = vand.u32 %v4687, 4294901760
    %v7347 = vsub.f32 %v4687, %v7346
    %7348 = vmatprep.subr.mxu0 %v7347
    %v7349 = vand.u32 %v4686, 4294901760
    %v7350 = vsub.f32 %v4686, %v7349
    %7351 = vmatpush1.msra.mxu0 %v7350
    %v7352 = vand.u32 %v4683, 4294901760
    %v7353 = vsub.f32 %v4683, %v7352
    %7354 = vmatprep.subr.mxu0 %v7353
    %v7355 = vand.u32 %v4682, 4294901760
    %v7356 = vsub.f32 %v4682, %v7355
    %7357 = vmatpush1.msra.mxu0 %v7356
    %v7358 = vand.u32 %v4679, 4294901760
    %v7359 = vsub.f32 %v4679, %v7358
    %7360 = vmatprep.subr.mxu0 %v7359
    %v7361 = vand.u32 %v4678, 4294901760
    %v7362 = vsub.f32 %v4678, %v7361
    %7363 = vmatpush1.msra.mxu0 %v7362
    %v7364 = vand.u32 %v4675, 4294901760
    %v7365 = vsub.f32 %v4675, %v7364
    %7366 = vmatprep.subr.mxu0 %v7365
    %v7367 = vand.u32 %v4674, 4294901760
    %v7368 = vsub.f32 %v4674, %v7367
    %7369 = vmatpush1.msra.mxu0 %v7368
    %v7370 = vand.u32 %v4671, 4294901760
    %v7371 = vsub.f32 %v4671, %v7370
    %7372 = vmatprep.subr.mxu0 %v7371
    %v7373 = vand.u32 %v4670, 4294901760
    %v7374 = vsub.f32 %v4670, %v7373
    %7375 = vmatpush1.msra.mxu0 %v7374
    %v7376 = vand.u32 %v4667, 4294901760
    %v7377 = vsub.f32 %v4667, %v7376
    %7378 = vmatprep.subr.mxu0 %v7377
    %v7379 = vand.u32 %v4666, 4294901760
    %v7380 = vsub.f32 %v4666, %v7379
    %7381 = vmatpush1.msra.mxu0 %v7380
    %v7382 = vand.u32 %v4663, 4294901760
    %v7383 = vsub.f32 %v4663, %v7382
    %7384 = vmatprep.subr.mxu0 %v7383
    %v7385 = vand.u32 %v4662, 4294901760
    %v7386 = vsub.f32 %v4662, %v7385
    %7387 = vmatpush1.msra.mxu0 %v7386
    %v7388 = vand.u32 %v4787, 4294901760
    %v7389 = vsub.f32 %v4787, %v7388
    %7390 = vmatprep.subr.mxu0 %v7389
    %v7391 = vand.u32 %v4786, 4294901760
    %v7392 = vsub.f32 %v4786, %v7391
    %7393 = vmatpush2.msra.mxu0 %v7392
    %v7394 = vand.u32 %v4783, 4294901760
    %v7395 = vsub.f32 %v4783, %v7394
    %7396 = vmatprep.subr.mxu0 %v7395
    %v7397 = vand.u32 %v4782, 4294901760
    %v7398 = vsub.f32 %v4782, %v7397
    %7399 = vmatpush2.msra.mxu0 %v7398
    %v7400 = vand.u32 %v4779, 4294901760
    %v7401 = vsub.f32 %v4779, %v7400
    %7402 = vmatprep.subr.mxu0 %v7401
    %v7403 = vand.u32 %v4778, 4294901760
    %v7404 = vsub.f32 %v4778, %v7403
    %7405 = vmatpush2.msra.mxu0 %v7404
    %v7406 = vand.u32 %v4775, 4294901760
    %v7407 = vsub.f32 %v4775, %v7406
    %7408 = vmatprep.subr.mxu0 %v7407
    %v7409 = vand.u32 %v4774, 4294901760
    %v7410 = vsub.f32 %v4774, %v7409
    %7411 = vmatpush2.msra.mxu0 %v7410
    %v7412 = vand.u32 %v4771, 4294901760
    %v7413 = vsub.f32 %v4771, %v7412
    %7414 = vmatprep.subr.mxu0 %v7413
    %v7415 = vand.u32 %v4770, 4294901760
    %v7416 = vsub.f32 %v4770, %v7415
    %7417 = vmatpush2.msra.mxu0 %v7416
    %v7418 = vand.u32 %v4767, 4294901760
    %v7419 = vsub.f32 %v4767, %v7418
    %7420 = vmatprep.subr.mxu0 %v7419
    %v7421 = vand.u32 %v4766, 4294901760
    %v7422 = vsub.f32 %v4766, %v7421
    %7423 = vmatpush2.msra.mxu0 %v7422
    %v7424 = vand.u32 %v4763, 4294901760
    %v7425 = vsub.f32 %v4763, %v7424
    %7426 = vmatprep.subr.mxu0 %v7425
    %v7427 = vand.u32 %v4762, 4294901760
    %v7428 = vsub.f32 %v4762, %v7427
    %7429 = vmatpush2.msra.mxu0 %v7428
    %v7430 = vand.u32 %v4759, 4294901760
    %v7431 = vsub.f32 %v4759, %v7430
    %7432 = vmatprep.subr.mxu0 %v7431
    %v7433 = vand.u32 %v4758, 4294901760
    %v7434 = vsub.f32 %v4758, %v7433
    %7435 = vmatpush2.msra.mxu0 %v7434
    %v7436 = vand.u32 %v4755, 4294901760
    %v7437 = vsub.f32 %v4755, %v7436
    %7438 = vmatprep.subr.mxu0 %v7437
    %v7439 = vand.u32 %v4754, 4294901760
    %v7440 = vsub.f32 %v4754, %v7439
    %7441 = vmatpush2.msra.mxu0 %v7440
    %v7442 = vand.u32 %v4751, 4294901760
    %v7443 = vsub.f32 %v4751, %v7442
    %7444 = vmatprep.subr.mxu0 %v7443
    %v7445 = vand.u32 %v4750, 4294901760
    %v7446 = vsub.f32 %v4750, %v7445
    %7447 = vmatpush2.msra.mxu0 %v7446
    %v7448 = vand.u32 %v4747, 4294901760
    %v7449 = vsub.f32 %v4747, %v7448
    %7450 = vmatprep.subr.mxu0 %v7449
    %v7451 = vand.u32 %v4746, 4294901760
    %v7452 = vsub.f32 %v4746, %v7451
    %7453 = vmatpush2.msra.mxu0 %v7452
    %v7454 = vand.u32 %v4743, 4294901760
    %v7455 = vsub.f32 %v4743, %v7454
    %7456 = vmatprep.subr.mxu0 %v7455
    %v7457 = vand.u32 %v4742, 4294901760
    %v7458 = vsub.f32 %v4742, %v7457
    %7459 = vmatpush2.msra.mxu0 %v7458
    %v7460 = vand.u32 %v4739, 4294901760
    %v7461 = vsub.f32 %v4739, %v7460
    %7462 = vmatprep.subr.mxu0 %v7461
    %v7463 = vand.u32 %v4738, 4294901760
    %v7464 = vsub.f32 %v4738, %v7463
    %7465 = vmatpush2.msra.mxu0 %v7464
    %v7466 = vand.u32 %v4735, 4294901760
    %v7467 = vsub.f32 %v4735, %v7466
    %7468 = vmatprep.subr.mxu0 %v7467
    %v7469 = vand.u32 %v4734, 4294901760
    %v7470 = vsub.f32 %v4734, %v7469
    %7471 = vmatpush2.msra.mxu0 %v7470
    %v7472 = vand.u32 %v4731, 4294901760
    %v7473 = vsub.f32 %v4731, %v7472
    %7474 = vmatprep.subr.mxu0 %v7473
    %v7475 = vand.u32 %v4730, 4294901760
    %v7476 = vsub.f32 %v4730, %v7475
    %7477 = vmatpush2.msra.mxu0 %v7476
    %v7478 = vand.u32 %v4727, 4294901760
    %v7479 = vsub.f32 %v4727, %v7478
    %7480 = vmatprep.subr.mxu0 %v7479
    %v7481 = vand.u32 %v4726, 4294901760
    %v7482 = vsub.f32 %v4726, %v7481
    %7483 = vmatpush2.msra.mxu0 %v7482
    %v7484 = vand.u32 %v4658, 4294901760
    %v7485 = vsub.f32 %v4658, %v7484
    %7486 = vmatprep.mubr.f32.mxu0 %v7485
    %v7487 = vand.u32 %v4657, 4294901760
    %v7488 = vsub.f32 %v4657, %v7487
    %7489 = vmatmul.mubr.f32.gmra.mxu0 %v7488
    %v7490 = vpop.f32.mrf.mxu0
    %v7491 = vadd.f32 %v7288, %v7490
    %v7492 = vpop.f32.mrf.mxu0
    %v7493 = vadd.f32 %v7290, %v7492
    %7494 = vdwg.mxu0
    %v7495 = vand.u32 %v4723, 4294901760
    %7496 = vmatprep.subr.mxu0 %v7495
    %v7497 = vand.u32 %v4722, 4294901760
    %7498 = vmatpush1.msra.mxu0 %v7497
    %v7499 = vand.u32 %v4719, 4294901760
    %7500 = vmatprep.subr.mxu0 %v7499
    %v7501 = vand.u32 %v4718, 4294901760
    %7502 = vmatpush1.msra.mxu0 %v7501
    %v7503 = vand.u32 %v4715, 4294901760
    %7504 = vmatprep.subr.mxu0 %v7503
    %v7505 = vand.u32 %v4714, 4294901760
    %7506 = vmatpush1.msra.mxu0 %v7505
    %v7507 = vand.u32 %v4711, 4294901760
    %7508 = vmatprep.subr.mxu0 %v7507
    %v7509 = vand.u32 %v4710, 4294901760
    %7510 = vmatpush1.msra.mxu0 %v7509
    %v7511 = vand.u32 %v4707, 4294901760
    %7512 = vmatprep.subr.mxu0 %v7511
    %v7513 = vand.u32 %v4706, 4294901760
    %7514 = vmatpush1.msra.mxu0 %v7513
    %v7515 = vand.u32 %v4703, 4294901760
    %7516 = vmatprep.subr.mxu0 %v7515
    %v7517 = vand.u32 %v4702, 4294901760
    %7518 = vmatpush1.msra.mxu0 %v7517
    %v7519 = vand.u32 %v4699, 4294901760
    %7520 = vmatprep.subr.mxu0 %v7519
    %v7521 = vand.u32 %v4698, 4294901760
    %7522 = vmatpush1.msra.mxu0 %v7521
    %v7523 = vand.u32 %v4695, 4294901760
    %7524 = vmatprep.subr.mxu0 %v7523
    %v7525 = vand.u32 %v4694, 4294901760
    %7526 = vmatpush1.msra.mxu0 %v7525
    %v7527 = vand.u32 %v4691, 4294901760
    %7528 = vmatprep.subr.mxu0 %v7527
    %v7529 = vand.u32 %v4690, 4294901760
    %7530 = vmatpush1.msra.mxu0 %v7529
    %v7531 = vand.u32 %v4687, 4294901760
    %7532 = vmatprep.subr.mxu0 %v7531
    %v7533 = vand.u32 %v4686, 4294901760
    %7534 = vmatpush1.msra.mxu0 %v7533
    %v7535 = vand.u32 %v4683, 4294901760
    %7536 = vmatprep.subr.mxu0 %v7535
    %v7537 = vand.u32 %v4682, 4294901760
    %7538 = vmatpush1.msra.mxu0 %v7537
    %v7539 = vand.u32 %v4679, 4294901760
    %7540 = vmatprep.subr.mxu0 %v7539
    %v7541 = vand.u32 %v4678, 4294901760
    %7542 = vmatpush1.msra.mxu0 %v7541
    %v7543 = vand.u32 %v4675, 4294901760
    %7544 = vmatprep.subr.mxu0 %v7543
    %v7545 = vand.u32 %v4674, 4294901760
    %7546 = vmatpush1.msra.mxu0 %v7545
    %v7547 = vand.u32 %v4671, 4294901760
    %7548 = vmatprep.subr.mxu0 %v7547
    %v7549 = vand.u32 %v4670, 4294901760
    %7550 = vmatpush1.msra.mxu0 %v7549
    %v7551 = vand.u32 %v4667, 4294901760
    %7552 = vmatprep.subr.mxu0 %v7551
    %v7553 = vand.u32 %v4666, 4294901760
    %7554 = vmatpush1.msra.mxu0 %v7553
    %v7555 = vand.u32 %v4663, 4294901760
    %7556 = vmatprep.subr.mxu0 %v7555
    %v7557 = vand.u32 %v4662, 4294901760
    %7558 = vmatpush1.msra.mxu0 %v7557
    %v7559 = vand.u32 %v4787, 4294901760
    %7560 = vmatprep.subr.mxu0 %v7559
    %v7561 = vand.u32 %v4786, 4294901760
    %7562 = vmatpush2.msra.mxu0 %v7561
    %v7563 = vand.u32 %v4783, 4294901760
    %7564 = vmatprep.subr.mxu0 %v7563
    %v7565 = vand.u32 %v4782, 4294901760
    %7566 = vmatpush2.msra.mxu0 %v7565
    %v7567 = vand.u32 %v4779, 4294901760
    %7568 = vmatprep.subr.mxu0 %v7567
    %v7569 = vand.u32 %v4778, 4294901760
    %7570 = vmatpush2.msra.mxu0 %v7569
    %v7571 = vand.u32 %v4775, 4294901760
    %7572 = vmatprep.subr.mxu0 %v7571
    %v7573 = vand.u32 %v4774, 4294901760
    %7574 = vmatpush2.msra.mxu0 %v7573
    %v7575 = vand.u32 %v4771, 4294901760
    %7576 = vmatprep.subr.mxu0 %v7575
    %v7577 = vand.u32 %v4770, 4294901760
    %7578 = vmatpush2.msra.mxu0 %v7577
    %v7579 = vand.u32 %v4767, 4294901760
    %7580 = vmatprep.subr.mxu0 %v7579
    %v7581 = vand.u32 %v4766, 4294901760
    %7582 = vmatpush2.msra.mxu0 %v7581
    %v7583 = vand.u32 %v4763, 4294901760
    %7584 = vmatprep.subr.mxu0 %v7583
    %v7585 = vand.u32 %v4762, 4294901760
    %7586 = vmatpush2.msra.mxu0 %v7585
    %v7587 = vand.u32 %v4759, 4294901760
    %7588 = vmatprep.subr.mxu0 %v7587
    %v7589 = vand.u32 %v4758, 4294901760
    %7590 = vmatpush2.msra.mxu0 %v7589
    %v7591 = vand.u32 %v4755, 4294901760
    %7592 = vmatprep.subr.mxu0 %v7591
    %v7593 = vand.u32 %v4754, 4294901760
    %7594 = vmatpush2.msra.mxu0 %v7593
    %v7595 = vand.u32 %v4751, 4294901760
    %7596 = vmatprep.subr.mxu0 %v7595
    %v7597 = vand.u32 %v4750, 4294901760
    %7598 = vmatpush2.msra.mxu0 %v7597
    %v7599 = vand.u32 %v4747, 4294901760
    %7600 = vmatprep.subr.mxu0 %v7599
    %v7601 = vand.u32 %v4746, 4294901760
    %7602 = vmatpush2.msra.mxu0 %v7601
    %v7603 = vand.u32 %v4743, 4294901760
    %7604 = vmatprep.subr.mxu0 %v7603
    %v7605 = vand.u32 %v4742, 4294901760
    %7606 = vmatpush2.msra.mxu0 %v7605
    %v7607 = vand.u32 %v4739, 4294901760
    %7608 = vmatprep.subr.mxu0 %v7607
    %v7609 = vand.u32 %v4738, 4294901760
    %7610 = vmatpush2.msra.mxu0 %v7609
    %v7611 = vand.u32 %v4735, 4294901760
    %7612 = vmatprep.subr.mxu0 %v7611
    %v7613 = vand.u32 %v4734, 4294901760
    %7614 = vmatpush2.msra.mxu0 %v7613
    %v7615 = vand.u32 %v4731, 4294901760
    %7616 = vmatprep.subr.mxu0 %v7615
    %v7617 = vand.u32 %v4730, 4294901760
    %7618 = vmatpush2.msra.mxu0 %v7617
    %v7619 = vand.u32 %v4727, 4294901760
    %7620 = vmatprep.subr.mxu0 %v7619
    %v7621 = vand.u32 %v4726, 4294901760
    %7622 = vmatpush2.msra.mxu0 %v7621
    %v7623 = vand.u32 %v4658, 4294901760
    %v7624 = vsub.f32 %v4658, %v7623
    %v7625 = vand.u32 %v7624, 4294901760
    %7626 = vmatprep.mubr.f32.mxu0 %v7625
    %v7627 = vand.u32 %v4657, 4294901760
    %v7628 = vsub.f32 %v4657, %v7627
    %v7629 = vand.u32 %v7628, 4294901760
    %7630 = vmatmul.mubr.f32.gmra.mxu0 %v7629
    %v7631 = vpop.f32.mrf.mxu0
    %v7632 = vadd.f32 %v7491, %v7631
    %v7633 = vpop.f32.mrf.mxu0
    %v7634 = vadd.f32 %v7493, %v7633
    %7635 = vdwg.mxu0
    %v7636 = vand.u32 %v4723, 4294901760
    %v7637 = vsub.f32 %v4723, %v7636
    %v7638 = vand.u32 %v7637, 4294901760
    %7639 = vmatprep.subr.mxu0 %v7638
    %v7640 = vand.u32 %v4722, 4294901760
    %v7641 = vsub.f32 %v4722, %v7640
    %v7642 = vand.u32 %v7641, 4294901760
    %7643 = vmatpush1.msra.mxu0 %v7642
    %v7644 = vand.u32 %v4719, 4294901760
    %v7645 = vsub.f32 %v4719, %v7644
    %v7646 = vand.u32 %v7645, 4294901760
    %7647 = vmatprep.subr.mxu0 %v7646
    %v7648 = vand.u32 %v4718, 4294901760
    %v7649 = vsub.f32 %v4718, %v7648
    %v7650 = vand.u32 %v7649, 4294901760
    %7651 = vmatpush1.msra.mxu0 %v7650
    %v7652 = vand.u32 %v4715, 4294901760
    %v7653 = vsub.f32 %v4715, %v7652
    %v7654 = vand.u32 %v7653, 4294901760
    %7655 = vmatprep.subr.mxu0 %v7654
    %v7656 = vand.u32 %v4714, 4294901760
    %v7657 = vsub.f32 %v4714, %v7656
    %v7658 = vand.u32 %v7657, 4294901760
    %7659 = vmatpush1.msra.mxu0 %v7658
    %v7660 = vand.u32 %v4711, 4294901760
    %v7661 = vsub.f32 %v4711, %v7660
    %v7662 = vand.u32 %v7661, 4294901760
    %7663 = vmatprep.subr.mxu0 %v7662
    %v7664 = vand.u32 %v4710, 4294901760
    %v7665 = vsub.f32 %v4710, %v7664
    %v7666 = vand.u32 %v7665, 4294901760
    %7667 = vmatpush1.msra.mxu0 %v7666
    %v7668 = vand.u32 %v4707, 4294901760
    %v7669 = vsub.f32 %v4707, %v7668
    %v7670 = vand.u32 %v7669, 4294901760
    %7671 = vmatprep.subr.mxu0 %v7670
    %v7672 = vand.u32 %v4706, 4294901760
    %v7673 = vsub.f32 %v4706, %v7672
    %v7674 = vand.u32 %v7673, 4294901760
    %7675 = vmatpush1.msra.mxu0 %v7674
    %v7676 = vand.u32 %v4703, 4294901760
    %v7677 = vsub.f32 %v4703, %v7676
    %v7678 = vand.u32 %v7677, 4294901760
    %7679 = vmatprep.subr.mxu0 %v7678
    %v7680 = vand.u32 %v4702, 4294901760
    %v7681 = vsub.f32 %v4702, %v7680
    %v7682 = vand.u32 %v7681, 4294901760
    %7683 = vmatpush1.msra.mxu0 %v7682
    %v7684 = vand.u32 %v4699, 4294901760
    %v7685 = vsub.f32 %v4699, %v7684
    %v7686 = vand.u32 %v7685, 4294901760
    %7687 = vmatprep.subr.mxu0 %v7686
    %v7688 = vand.u32 %v4698, 4294901760
    %v7689 = vsub.f32 %v4698, %v7688
    %v7690 = vand.u32 %v7689, 4294901760
    %7691 = vmatpush1.msra.mxu0 %v7690
    %v7692 = vand.u32 %v4695, 4294901760
    %v7693 = vsub.f32 %v4695, %v7692
    %v7694 = vand.u32 %v7693, 4294901760
    %7695 = vmatprep.subr.mxu0 %v7694
    %v7696 = vand.u32 %v4694, 4294901760
    %v7697 = vsub.f32 %v4694, %v7696
    %v7698 = vand.u32 %v7697, 4294901760
    %7699 = vmatpush1.msra.mxu0 %v7698
    %v7700 = vand.u32 %v4691, 4294901760
    %v7701 = vsub.f32 %v4691, %v7700
    %v7702 = vand.u32 %v7701, 4294901760
    %7703 = vmatprep.subr.mxu0 %v7702
    %v7704 = vand.u32 %v4690, 4294901760
    %v7705 = vsub.f32 %v4690, %v7704
    %v7706 = vand.u32 %v7705, 4294901760
    %7707 = vmatpush1.msra.mxu0 %v7706
    %v7708 = vand.u32 %v4687, 4294901760
    %v7709 = vsub.f32 %v4687, %v7708
    %v7710 = vand.u32 %v7709, 4294901760
    %7711 = vmatprep.subr.mxu0 %v7710
    %v7712 = vand.u32 %v4686, 4294901760
    %v7713 = vsub.f32 %v4686, %v7712
    %v7714 = vand.u32 %v7713, 4294901760
    %7715 = vmatpush1.msra.mxu0 %v7714
    %v7716 = vand.u32 %v4683, 4294901760
    %v7717 = vsub.f32 %v4683, %v7716
    %v7718 = vand.u32 %v7717, 4294901760
    %7719 = vmatprep.subr.mxu0 %v7718
    %v7720 = vand.u32 %v4682, 4294901760
    %v7721 = vsub.f32 %v4682, %v7720
    %v7722 = vand.u32 %v7721, 4294901760
    %7723 = vmatpush1.msra.mxu0 %v7722
    %v7724 = vand.u32 %v4679, 4294901760
    %v7725 = vsub.f32 %v4679, %v7724
    %v7726 = vand.u32 %v7725, 4294901760
    %7727 = vmatprep.subr.mxu0 %v7726
    %v7728 = vand.u32 %v4678, 4294901760
    %v7729 = vsub.f32 %v4678, %v7728
    %v7730 = vand.u32 %v7729, 4294901760
    %7731 = vmatpush1.msra.mxu0 %v7730
    %v7732 = vand.u32 %v4675, 4294901760
    %v7733 = vsub.f32 %v4675, %v7732
    %v7734 = vand.u32 %v7733, 4294901760
    %7735 = vmatprep.subr.mxu0 %v7734
    %v7736 = vand.u32 %v4674, 4294901760
    %v7737 = vsub.f32 %v4674, %v7736
    %v7738 = vand.u32 %v7737, 4294901760
    %7739 = vmatpush1.msra.mxu0 %v7738
    %v7740 = vand.u32 %v4671, 4294901760
    %v7741 = vsub.f32 %v4671, %v7740
    %v7742 = vand.u32 %v7741, 4294901760
    %7743 = vmatprep.subr.mxu0 %v7742
    %v7744 = vand.u32 %v4670, 4294901760
    %v7745 = vsub.f32 %v4670, %v7744
    %v7746 = vand.u32 %v7745, 4294901760
    %7747 = vmatpush1.msra.mxu0 %v7746
    %v7748 = vand.u32 %v4667, 4294901760
    %v7749 = vsub.f32 %v4667, %v7748
    %v7750 = vand.u32 %v7749, 4294901760
    %7751 = vmatprep.subr.mxu0 %v7750
    %v7752 = vand.u32 %v4666, 4294901760
    %v7753 = vsub.f32 %v4666, %v7752
    %v7754 = vand.u32 %v7753, 4294901760
    %7755 = vmatpush1.msra.mxu0 %v7754
    %v7756 = vand.u32 %v4663, 4294901760
    %v7757 = vsub.f32 %v4663, %v7756
    %v7758 = vand.u32 %v7757, 4294901760
    %7759 = vmatprep.subr.mxu0 %v7758
    %v7760 = vand.u32 %v4662, 4294901760
    %v7761 = vsub.f32 %v4662, %v7760
    %v7762 = vand.u32 %v7761, 4294901760
    %7763 = vmatpush1.msra.mxu0 %v7762
    %v7764 = vand.u32 %v4787, 4294901760
    %v7765 = vsub.f32 %v4787, %v7764
    %v7766 = vand.u32 %v7765, 4294901760
    %7767 = vmatprep.subr.mxu0 %v7766
    %v7768 = vand.u32 %v4786, 4294901760
    %v7769 = vsub.f32 %v4786, %v7768
    %v7770 = vand.u32 %v7769, 4294901760
    %7771 = vmatpush2.msra.mxu0 %v7770
    %v7772 = vand.u32 %v4783, 4294901760
    %v7773 = vsub.f32 %v4783, %v7772
    %v7774 = vand.u32 %v7773, 4294901760
    %7775 = vmatprep.subr.mxu0 %v7774
    %v7776 = vand.u32 %v4782, 4294901760
    %v7777 = vsub.f32 %v4782, %v7776
    %v7778 = vand.u32 %v7777, 4294901760
    %7779 = vmatpush2.msra.mxu0 %v7778
    %v7780 = vand.u32 %v4779, 4294901760
    %v7781 = vsub.f32 %v4779, %v7780
    %v7782 = vand.u32 %v7781, 4294901760
    %7783 = vmatprep.subr.mxu0 %v7782
    %v7784 = vand.u32 %v4778, 4294901760
    %v7785 = vsub.f32 %v4778, %v7784
    %v7786 = vand.u32 %v7785, 4294901760
    %7787 = vmatpush2.msra.mxu0 %v7786
    %v7788 = vand.u32 %v4775, 4294901760
    %v7789 = vsub.f32 %v4775, %v7788
    %v7790 = vand.u32 %v7789, 4294901760
    %7791 = vmatprep.subr.mxu0 %v7790
    %v7792 = vand.u32 %v4774, 4294901760
    %v7793 = vsub.f32 %v4774, %v7792
    %v7794 = vand.u32 %v7793, 4294901760
    %7795 = vmatpush2.msra.mxu0 %v7794
    %v7796 = vand.u32 %v4771, 4294901760
    %v7797 = vsub.f32 %v4771, %v7796
    %v7798 = vand.u32 %v7797, 4294901760
    %7799 = vmatprep.subr.mxu0 %v7798
    %v7800 = vand.u32 %v4770, 4294901760
    %v7801 = vsub.f32 %v4770, %v7800
    %v7802 = vand.u32 %v7801, 4294901760
    %7803 = vmatpush2.msra.mxu0 %v7802
    %v7804 = vand.u32 %v4767, 4294901760
    %v7805 = vsub.f32 %v4767, %v7804
    %v7806 = vand.u32 %v7805, 4294901760
    %7807 = vmatprep.subr.mxu0 %v7806
    %v7808 = vand.u32 %v4766, 4294901760
    %v7809 = vsub.f32 %v4766, %v7808
    %v7810 = vand.u32 %v7809, 4294901760
    %7811 = vmatpush2.msra.mxu0 %v7810
    %v7812 = vand.u32 %v4763, 4294901760
    %v7813 = vsub.f32 %v4763, %v7812
    %v7814 = vand.u32 %v7813, 4294901760
    %7815 = vmatprep.subr.mxu0 %v7814
    %v7816 = vand.u32 %v4762, 4294901760
    %v7817 = vsub.f32 %v4762, %v7816
    %v7818 = vand.u32 %v7817, 4294901760
    %7819 = vmatpush2.msra.mxu0 %v7818
    %v7820 = vand.u32 %v4759, 4294901760
    %v7821 = vsub.f32 %v4759, %v7820
    %v7822 = vand.u32 %v7821, 4294901760
    %7823 = vmatprep.subr.mxu0 %v7822
    %v7824 = vand.u32 %v4758, 4294901760
    %v7825 = vsub.f32 %v4758, %v7824
    %v7826 = vand.u32 %v7825, 4294901760
    %7827 = vmatpush2.msra.mxu0 %v7826
    %v7828 = vand.u32 %v4755, 4294901760
    %v7829 = vsub.f32 %v4755, %v7828
    %v7830 = vand.u32 %v7829, 4294901760
    %7831 = vmatprep.subr.mxu0 %v7830
    %v7832 = vand.u32 %v4754, 4294901760
    %v7833 = vsub.f32 %v4754, %v7832
    %v7834 = vand.u32 %v7833, 4294901760
    %7835 = vmatpush2.msra.mxu0 %v7834
    %v7836 = vand.u32 %v4751, 4294901760
    %v7837 = vsub.f32 %v4751, %v7836
    %v7838 = vand.u32 %v7837, 4294901760
    %7839 = vmatprep.subr.mxu0 %v7838
    %v7840 = vand.u32 %v4750, 4294901760
    %v7841 = vsub.f32 %v4750, %v7840
    %v7842 = vand.u32 %v7841, 4294901760
    %7843 = vmatpush2.msra.mxu0 %v7842
    %v7844 = vand.u32 %v4747, 4294901760
    %v7845 = vsub.f32 %v4747, %v7844
    %v7846 = vand.u32 %v7845, 4294901760
    %7847 = vmatprep.subr.mxu0 %v7846
    %v7848 = vand.u32 %v4746, 4294901760
    %v7849 = vsub.f32 %v4746, %v7848
    %v7850 = vand.u32 %v7849, 4294901760
    %7851 = vmatpush2.msra.mxu0 %v7850
    %v7852 = vand.u32 %v4743, 4294901760
    %v7853 = vsub.f32 %v4743, %v7852
    %v7854 = vand.u32 %v7853, 4294901760
    %7855 = vmatprep.subr.mxu0 %v7854
    %v7856 = vand.u32 %v4742, 4294901760
    %v7857 = vsub.f32 %v4742, %v7856
    %v7858 = vand.u32 %v7857, 4294901760
    %7859 = vmatpush2.msra.mxu0 %v7858
    %v7860 = vand.u32 %v4739, 4294901760
    %v7861 = vsub.f32 %v4739, %v7860
    %v7862 = vand.u32 %v7861, 4294901760
    %7863 = vmatprep.subr.mxu0 %v7862
    %v7864 = vand.u32 %v4738, 4294901760
    %v7865 = vsub.f32 %v4738, %v7864
    %v7866 = vand.u32 %v7865, 4294901760
    %7867 = vmatpush2.msra.mxu0 %v7866
    %v7868 = vand.u32 %v4735, 4294901760
    %v7869 = vsub.f32 %v4735, %v7868
    %v7870 = vand.u32 %v7869, 4294901760
    %7871 = vmatprep.subr.mxu0 %v7870
    %v7872 = vand.u32 %v4734, 4294901760
    %v7873 = vsub.f32 %v4734, %v7872
    %v7874 = vand.u32 %v7873, 4294901760
    %7875 = vmatpush2.msra.mxu0 %v7874
    %v7876 = vand.u32 %v4731, 4294901760
    %v7877 = vsub.f32 %v4731, %v7876
    %v7878 = vand.u32 %v7877, 4294901760
    %7879 = vmatprep.subr.mxu0 %v7878
    %v7880 = vand.u32 %v4730, 4294901760
    %v7881 = vsub.f32 %v4730, %v7880
    %v7882 = vand.u32 %v7881, 4294901760
    %7883 = vmatpush2.msra.mxu0 %v7882
    %v7884 = vand.u32 %v4727, 4294901760
    %v7885 = vsub.f32 %v4727, %v7884
    %v7886 = vand.u32 %v7885, 4294901760
    %7887 = vmatprep.subr.mxu0 %v7886
    %v7888 = vand.u32 %v4726, 4294901760
    %v7889 = vsub.f32 %v4726, %v7888
    %v7890 = vand.u32 %v7889, 4294901760
    %7891 = vmatpush2.msra.mxu0 %v7890
    %v7892 = vand.u32 %v4658, 4294901760
    %7893 = vmatprep.mubr.f32.mxu0 %v7892
    %v7894 = vand.u32 %v4657, 4294901760
    %7895 = vmatmul.mubr.f32.gmra.mxu0 %v7894
    %v7896 = vpop.f32.mrf.mxu0
    %v7897 = vadd.f32 %v7632, %v7896
    %v7898 = vpop.f32.mrf.mxu0
    %v7899 = vadd.f32 %v7634, %v7898
    %7900 = vdwg.mxu0
    %v7901 = vand.u32 %v4723, 4294901760
    %7902 = vmatprep.subr.mxu0 %v7901
    %v7903 = vand.u32 %v4722, 4294901760
    %7904 = vmatpush1.msra.mxu0 %v7903
    %v7905 = vand.u32 %v4719, 4294901760
    %7906 = vmatprep.subr.mxu0 %v7905
    %v7907 = vand.u32 %v4718, 4294901760
    %7908 = vmatpush1.msra.mxu0 %v7907
    %v7909 = vand.u32 %v4715, 4294901760
    %7910 = vmatprep.subr.mxu0 %v7909
    %v7911 = vand.u32 %v4714, 4294901760
    %7912 = vmatpush1.msra.mxu0 %v7911
    %v7913 = vand.u32 %v4711, 4294901760
    %7914 = vmatprep.subr.mxu0 %v7913
    %v7915 = vand.u32 %v4710, 4294901760
    %7916 = vmatpush1.msra.mxu0 %v7915
    %v7917 = vand.u32 %v4707, 4294901760
    %7918 = vmatprep.subr.mxu0 %v7917
    %v7919 = vand.u32 %v4706, 4294901760
    %7920 = vmatpush1.msra.mxu0 %v7919
    %v7921 = vand.u32 %v4703, 4294901760
    %7922 = vmatprep.subr.mxu0 %v7921
    %v7923 = vand.u32 %v4702, 4294901760
    %7924 = vmatpush1.msra.mxu0 %v7923
    %v7925 = vand.u32 %v4699, 4294901760
    %7926 = vmatprep.subr.mxu0 %v7925
    %v7927 = vand.u32 %v4698, 4294901760
    %7928 = vmatpush1.msra.mxu0 %v7927
    %v7929 = vand.u32 %v4695, 4294901760
    %7930 = vmatprep.subr.mxu0 %v7929
    %v7931 = vand.u32 %v4694, 4294901760
    %7932 = vmatpush1.msra.mxu0 %v7931
    %v7933 = vand.u32 %v4691, 4294901760
    %7934 = vmatprep.subr.mxu0 %v7933
    %v7935 = vand.u32 %v4690, 4294901760
    %7936 = vmatpush1.msra.mxu0 %v7935
    %v7937 = vand.u32 %v4687, 4294901760
    %7938 = vmatprep.subr.mxu0 %v7937
    %v7939 = vand.u32 %v4686, 4294901760
    %7940 = vmatpush1.msra.mxu0 %v7939
    %v7941 = vand.u32 %v4683, 4294901760
    %7942 = vmatprep.subr.mxu0 %v7941
    %v7943 = vand.u32 %v4682, 4294901760
    %7944 = vmatpush1.msra.mxu0 %v7943
    %v7945 = vand.u32 %v4679, 4294901760
    %7946 = vmatprep.subr.mxu0 %v7945
    %v7947 = vand.u32 %v4678, 4294901760
    %7948 = vmatpush1.msra.mxu0 %v7947
    %v7949 = vand.u32 %v4675, 4294901760
    %7950 = vmatprep.subr.mxu0 %v7949
    %v7951 = vand.u32 %v4674, 4294901760
    %7952 = vmatpush1.msra.mxu0 %v7951
    %v7953 = vand.u32 %v4671, 4294901760
    %7954 = vmatprep.subr.mxu0 %v7953
    %v7955 = vand.u32 %v4670, 4294901760
    %7956 = vmatpush1.msra.mxu0 %v7955
    %v7957 = vand.u32 %v4667, 4294901760
    %7958 = vmatprep.subr.mxu0 %v7957
    %v7959 = vand.u32 %v4666, 4294901760
    %7960 = vmatpush1.msra.mxu0 %v7959
    %v7961 = vand.u32 %v4663, 4294901760
    %7962 = vmatprep.subr.mxu0 %v7961
    %v7963 = vand.u32 %v4662, 4294901760
    %7964 = vmatpush1.msra.mxu0 %v7963
    %v7965 = vand.u32 %v4787, 4294901760
    %7966 = vmatprep.subr.mxu0 %v7965
    %v7967 = vand.u32 %v4786, 4294901760
    %7968 = vmatpush2.msra.mxu0 %v7967
    %v7969 = vand.u32 %v4783, 4294901760
    %7970 = vmatprep.subr.mxu0 %v7969
    %v7971 = vand.u32 %v4782, 4294901760
    %7972 = vmatpush2.msra.mxu0 %v7971
    %v7973 = vand.u32 %v4779, 4294901760
    %7974 = vmatprep.subr.mxu0 %v7973
    %v7975 = vand.u32 %v4778, 4294901760
    %7976 = vmatpush2.msra.mxu0 %v7975
    %v7977 = vand.u32 %v4775, 4294901760
    %7978 = vmatprep.subr.mxu0 %v7977
    %v7979 = vand.u32 %v4774, 4294901760
    %7980 = vmatpush2.msra.mxu0 %v7979
    %v7981 = vand.u32 %v4771, 4294901760
    %7982 = vmatprep.subr.mxu0 %v7981
    %v7983 = vand.u32 %v4770, 4294901760
    %7984 = vmatpush2.msra.mxu0 %v7983
    %v7985 = vand.u32 %v4767, 4294901760
    %7986 = vmatprep.subr.mxu0 %v7985
    %v7987 = vand.u32 %v4766, 4294901760
    %7988 = vmatpush2.msra.mxu0 %v7987
    %v7989 = vand.u32 %v4763, 4294901760
    %7990 = vmatprep.subr.mxu0 %v7989
    %v7991 = vand.u32 %v4762, 4294901760
    %7992 = vmatpush2.msra.mxu0 %v7991
    %v7993 = vand.u32 %v4759, 4294901760
    %7994 = vmatprep.subr.mxu0 %v7993
    %v7995 = vand.u32 %v4758, 4294901760
    %7996 = vmatpush2.msra.mxu0 %v7995
    %v7997 = vand.u32 %v4755, 4294901760
    %7998 = vmatprep.subr.mxu0 %v7997
    %v7999 = vand.u32 %v4754, 4294901760
    %8000 = vmatpush2.msra.mxu0 %v7999
    %v8001 = vand.u32 %v4751, 4294901760
    %8002 = vmatprep.subr.mxu0 %v8001
    %v8003 = vand.u32 %v4750, 4294901760
    %8004 = vmatpush2.msra.mxu0 %v8003
    %v8005 = vand.u32 %v4747, 4294901760
    %8006 = vmatprep.subr.mxu0 %v8005
    %v8007 = vand.u32 %v4746, 4294901760
    %8008 = vmatpush2.msra.mxu0 %v8007
    %v8009 = vand.u32 %v4743, 4294901760
    %8010 = vmatprep.subr.mxu0 %v8009
    %v8011 = vand.u32 %v4742, 4294901760
    %8012 = vmatpush2.msra.mxu0 %v8011
    %v8013 = vand.u32 %v4739, 4294901760
    %8014 = vmatprep.subr.mxu0 %v8013
    %v8015 = vand.u32 %v4738, 4294901760
    %8016 = vmatpush2.msra.mxu0 %v8015
    %v8017 = vand.u32 %v4735, 4294901760
    %8018 = vmatprep.subr.mxu0 %v8017
    %v8019 = vand.u32 %v4734, 4294901760
    %8020 = vmatpush2.msra.mxu0 %v8019
    %v8021 = vand.u32 %v4731, 4294901760
    %8022 = vmatprep.subr.mxu0 %v8021
    %v8023 = vand.u32 %v4730, 4294901760
    %8024 = vmatpush2.msra.mxu0 %v8023
    %v8025 = vand.u32 %v4727, 4294901760
    %8026 = vmatprep.subr.mxu0 %v8025
    %v8027 = vand.u32 %v4726, 4294901760
    %8028 = vmatpush2.msra.mxu0 %v8027
    %v8029 = vand.u32 %v4658, 4294901760
    %8030 = vmatprep.mubr.f32.mxu0 %v8029
    %v8031 = vand.u32 %v4657, 4294901760
    %8032 = vmatmul.mubr.f32.gmra.mxu0 %v8031
    %v8033 = vpop.f32.mrf.mxu0
    %v8034 = vadd.f32 %v7897, %v8033
    %v8035 = vpop.f32.mrf.mxu0
    %v8036 = vadd.f32 %v7899, %v8035
    %8037 = vdwg.mxu0
    %8038 = vmatprep.subr.mxu0 0.0
    %8039 = vmatpush1.msra.mxu0 0.0
    %8040 = vmatprep.subr.mxu0 0.0
    %8041 = vmatpush1.msra.mxu0 0.0
    %8042 = vmatprep.subr.mxu0 0.0
    %8043 = vmatpush1.msra.mxu0 0.0
    %8044 = vmatprep.subr.mxu0 0.0
    %8045 = vmatpush1.msra.mxu0 0.0
    %8046 = vmatprep.subr.mxu0 0.0
    %8047 = vmatpush1.msra.mxu0 0.0
    %8048 = vmatprep.subr.mxu0 0.0
    %8049 = vmatpush1.msra.mxu0 0.0
    %8050 = vmatprep.subr.mxu0 0.0
    %8051 = vmatpush1.msra.mxu0 0.0
    %8052 = vmatprep.subr.mxu0 0.0
    %8053 = vmatpush1.msra.mxu0 0.0
    %v8054 = vand.u32 %v4819, 4294901760
    %8055 = vmatprep.subr.mxu0 %v8054
    %v8056 = vand.u32 %v4818, 4294901760
    %8057 = vmatpush1.msra.mxu0 %v8056
    %v8058 = vand.u32 %v4815, 4294901760
    %8059 = vmatprep.subr.mxu0 %v8058
    %v8060 = vand.u32 %v4814, 4294901760
    %8061 = vmatpush1.msra.mxu0 %v8060
    %v8062 = vand.u32 %v4811, 4294901760
    %8063 = vmatprep.subr.mxu0 %v8062
    %v8064 = vand.u32 %v4810, 4294901760
    %8065 = vmatpush1.msra.mxu0 %v8064
    %v8066 = vand.u32 %v4807, 4294901760
    %8067 = vmatprep.subr.mxu0 %v8066
    %v8068 = vand.u32 %v4806, 4294901760
    %8069 = vmatpush1.msra.mxu0 %v8068
    %v8070 = vand.u32 %v4803, 4294901760
    %8071 = vmatprep.subr.mxu0 %v8070
    %v8072 = vand.u32 %v4802, 4294901760
    %8073 = vmatpush1.msra.mxu0 %v8072
    %v8074 = vand.u32 %v4799, 4294901760
    %8075 = vmatprep.subr.mxu0 %v8074
    %v8076 = vand.u32 %v4798, 4294901760
    %8077 = vmatpush1.msra.mxu0 %v8076
    %v8078 = vand.u32 %v4795, 4294901760
    %8079 = vmatprep.subr.mxu0 %v8078
    %v8080 = vand.u32 %v4794, 4294901760
    %8081 = vmatpush1.msra.mxu0 %v8080
    %v8082 = vand.u32 %v4791, 4294901760
    %8083 = vmatprep.subr.mxu0 %v8082
    %v8084 = vand.u32 %v4790, 4294901760
    %8085 = vmatpush1.msra.mxu0 %v8084
    %8086 = vmatprep.subr.mxu0 0.0
    %8087 = vmatpush2.msra.mxu0 0.0
    %8088 = vmatprep.subr.mxu0 0.0
    %8089 = vmatpush2.msra.mxu0 0.0
    %8090 = vmatprep.subr.mxu0 0.0
    %8091 = vmatpush2.msra.mxu0 0.0
    %8092 = vmatprep.subr.mxu0 0.0
    %8093 = vmatpush2.msra.mxu0 0.0
    %8094 = vmatprep.subr.mxu0 0.0
    %8095 = vmatpush2.msra.mxu0 0.0
    %8096 = vmatprep.subr.mxu0 0.0
    %8097 = vmatpush2.msra.mxu0 0.0
    %8098 = vmatprep.subr.mxu0 0.0
    %8099 = vmatpush2.msra.mxu0 0.0
    %8100 = vmatprep.subr.mxu0 0.0
    %8101 = vmatpush2.msra.mxu0 0.0
    %8102 = vmatprep.subr.mxu0 0.0
    %8103 = vmatpush2.msra.mxu0 0.0
    %8104 = vmatprep.subr.mxu0 0.0
    %8105 = vmatpush2.msra.mxu0 0.0
    %8106 = vmatprep.subr.mxu0 0.0
    %8107 = vmatpush2.msra.mxu0 0.0
    %8108 = vmatprep.subr.mxu0 0.0
    %8109 = vmatpush2.msra.mxu0 0.0
    %8110 = vmatprep.subr.mxu0 0.0
    %8111 = vmatpush2.msra.mxu0 0.0
    %8112 = vmatprep.subr.mxu0 0.0
    %8113 = vmatpush2.msra.mxu0 0.0
    %8114 = vmatprep.subr.mxu0 0.0
    %8115 = vmatpush2.msra.mxu0 0.0
    %8116 = vmatprep.subr.mxu0 0.0
    %8117 = vmatpush2.msra.mxu0 0.0
    %8118 = vmatprep.mubr.f32.mxu0 0.0
    %v8119 = vand.u32 %v4821, 4294901760
    %v8120 = vsub.f32 %v4821, %v8119
    %v8121 = vand.u32 %v8120, 4294901760
    %v8122 = vsub.f32 %v8120, %v8121
    %v8123 = vand.u32 %v8122, 4294901760
    %8124 = vmatmul.mubr.f32.gmra.mxu0 %v8123
    %v8125 = vpop.f32.mrf.mxu0
    %v8126 = vadd.f32 %v8034, %v8125
    %v8127 = vpop.f32.mrf.mxu0
    %v8128 = vadd.f32 %v8036, %v8127
    %8129 = vdwg.mxu0
    %8130 = vmatprep.subr.mxu0 0.0
    %8131 = vmatpush1.msra.mxu0 0.0
    %8132 = vmatprep.subr.mxu0 0.0
    %8133 = vmatpush1.msra.mxu0 0.0
    %8134 = vmatprep.subr.mxu0 0.0
    %8135 = vmatpush1.msra.mxu0 0.0
    %8136 = vmatprep.subr.mxu0 0.0
    %8137 = vmatpush1.msra.mxu0 0.0
    %8138 = vmatprep.subr.mxu0 0.0
    %8139 = vmatpush1.msra.mxu0 0.0
    %8140 = vmatprep.subr.mxu0 0.0
    %8141 = vmatpush1.msra.mxu0 0.0
    %8142 = vmatprep.subr.mxu0 0.0
    %8143 = vmatpush1.msra.mxu0 0.0
    %8144 = vmatprep.subr.mxu0 0.0
    %8145 = vmatpush1.msra.mxu0 0.0
    %v8146 = vand.u32 %v4819, 4294901760
    %v8147 = vsub.f32 %v4819, %v8146
    %v8148 = vand.u32 %v8147, 4294901760
    %v8149 = vsub.f32 %v8147, %v8148
    %v8150 = vand.u32 %v8149, 4294901760
    %8151 = vmatprep.subr.mxu0 %v8150
    %v8152 = vand.u32 %v4818, 4294901760
    %v8153 = vsub.f32 %v4818, %v8152
    %v8154 = vand.u32 %v8153, 4294901760
    %v8155 = vsub.f32 %v8153, %v8154
    %v8156 = vand.u32 %v8155, 4294901760
    %8157 = vmatpush1.msra.mxu0 %v8156
    %v8158 = vand.u32 %v4815, 4294901760
    %v8159 = vsub.f32 %v4815, %v8158
    %v8160 = vand.u32 %v8159, 4294901760
    %v8161 = vsub.f32 %v8159, %v8160
    %v8162 = vand.u32 %v8161, 4294901760
    %8163 = vmatprep.subr.mxu0 %v8162
    %v8164 = vand.u32 %v4814, 4294901760
    %v8165 = vsub.f32 %v4814, %v8164
    %v8166 = vand.u32 %v8165, 4294901760
    %v8167 = vsub.f32 %v8165, %v8166
    %v8168 = vand.u32 %v8167, 4294901760
    %8169 = vmatpush1.msra.mxu0 %v8168
    %v8170 = vand.u32 %v4811, 4294901760
    %v8171 = vsub.f32 %v4811, %v8170
    %v8172 = vand.u32 %v8171, 4294901760
    %v8173 = vsub.f32 %v8171, %v8172
    %v8174 = vand.u32 %v8173, 4294901760
    %8175 = vmatprep.subr.mxu0 %v8174
    %v8176 = vand.u32 %v4810, 4294901760
    %v8177 = vsub.f32 %v4810, %v8176
    %v8178 = vand.u32 %v8177, 4294901760
    %v8179 = vsub.f32 %v8177, %v8178
    %v8180 = vand.u32 %v8179, 4294901760
    %8181 = vmatpush1.msra.mxu0 %v8180
    %v8182 = vand.u32 %v4807, 4294901760
    %v8183 = vsub.f32 %v4807, %v8182
    %v8184 = vand.u32 %v8183, 4294901760
    %v8185 = vsub.f32 %v8183, %v8184
    %v8186 = vand.u32 %v8185, 4294901760
    %8187 = vmatprep.subr.mxu0 %v8186
    %v8188 = vand.u32 %v4806, 4294901760
    %v8189 = vsub.f32 %v4806, %v8188
    %v8190 = vand.u32 %v8189, 4294901760
    %v8191 = vsub.f32 %v8189, %v8190
    %v8192 = vand.u32 %v8191, 4294901760
    %8193 = vmatpush1.msra.mxu0 %v8192
    %v8194 = vand.u32 %v4803, 4294901760
    %v8195 = vsub.f32 %v4803, %v8194
    %v8196 = vand.u32 %v8195, 4294901760
    %v8197 = vsub.f32 %v8195, %v8196
    %v8198 = vand.u32 %v8197, 4294901760
    %8199 = vmatprep.subr.mxu0 %v8198
    %v8200 = vand.u32 %v4802, 4294901760
    %v8201 = vsub.f32 %v4802, %v8200
    %v8202 = vand.u32 %v8201, 4294901760
    %v8203 = vsub.f32 %v8201, %v8202
    %v8204 = vand.u32 %v8203, 4294901760
    %8205 = vmatpush1.msra.mxu0 %v8204
    %v8206 = vand.u32 %v4799, 4294901760
    %v8207 = vsub.f32 %v4799, %v8206
    %v8208 = vand.u32 %v8207, 4294901760
    %v8209 = vsub.f32 %v8207, %v8208
    %v8210 = vand.u32 %v8209, 4294901760
    %8211 = vmatprep.subr.mxu0 %v8210
    %v8212 = vand.u32 %v4798, 4294901760
    %v8213 = vsub.f32 %v4798, %v8212
    %v8214 = vand.u32 %v8213, 4294901760
    %v8215 = vsub.f32 %v8213, %v8214
    %v8216 = vand.u32 %v8215, 4294901760
    %8217 = vmatpush1.msra.mxu0 %v8216
    %v8218 = vand.u32 %v4795, 4294901760
    %v8219 = vsub.f32 %v4795, %v8218
    %v8220 = vand.u32 %v8219, 4294901760
    %v8221 = vsub.f32 %v8219, %v8220
    %v8222 = vand.u32 %v8221, 4294901760
    %8223 = vmatprep.subr.mxu0 %v8222
    %v8224 = vand.u32 %v4794, 4294901760
    %v8225 = vsub.f32 %v4794, %v8224
    %v8226 = vand.u32 %v8225, 4294901760
    %v8227 = vsub.f32 %v8225, %v8226
    %v8228 = vand.u32 %v8227, 4294901760
    %8229 = vmatpush1.msra.mxu0 %v8228
    %v8230 = vand.u32 %v4791, 4294901760
    %v8231 = vsub.f32 %v4791, %v8230
    %v8232 = vand.u32 %v8231, 4294901760
    %v8233 = vsub.f32 %v8231, %v8232
    %v8234 = vand.u32 %v8233, 4294901760
    %8235 = vmatprep.subr.mxu0 %v8234
    %v8236 = vand.u32 %v4790, 4294901760
    %v8237 = vsub.f32 %v4790, %v8236
    %v8238 = vand.u32 %v8237, 4294901760
    %v8239 = vsub.f32 %v8237, %v8238
    %v8240 = vand.u32 %v8239, 4294901760
    %8241 = vmatpush1.msra.mxu0 %v8240
    %8242 = vmatprep.subr.mxu0 0.0
    %8243 = vmatpush2.msra.mxu0 0.0
    %8244 = vmatprep.subr.mxu0 0.0
    %8245 = vmatpush2.msra.mxu0 0.0
    %8246 = vmatprep.subr.mxu0 0.0
    %8247 = vmatpush2.msra.mxu0 0.0
    %8248 = vmatprep.subr.mxu0 0.0
    %8249 = vmatpush2.msra.mxu0 0.0
    %8250 = vmatprep.subr.mxu0 0.0
    %8251 = vmatpush2.msra.mxu0 0.0
    %8252 = vmatprep.subr.mxu0 0.0
    %8253 = vmatpush2.msra.mxu0 0.0
    %8254 = vmatprep.subr.mxu0 0.0
    %8255 = vmatpush2.msra.mxu0 0.0
    %8256 = vmatprep.subr.mxu0 0.0
    %8257 = vmatpush2.msra.mxu0 0.0
    %8258 = vmatprep.subr.mxu0 0.0
    %8259 = vmatpush2.msra.mxu0 0.0
    %8260 = vmatprep.subr.mxu0 0.0
    %8261 = vmatpush2.msra.mxu0 0.0
    %8262 = vmatprep.subr.mxu0 0.0
    %8263 = vmatpush2.msra.mxu0 0.0
    %8264 = vmatprep.subr.mxu0 0.0
    %8265 = vmatpush2.msra.mxu0 0.0
    %8266 = vmatprep.subr.mxu0 0.0
    %8267 = vmatpush2.msra.mxu0 0.0
    %8268 = vmatprep.subr.mxu0 0.0
    %8269 = vmatpush2.msra.mxu0 0.0
    %8270 = vmatprep.subr.mxu0 0.0
    %8271 = vmatpush2.msra.mxu0 0.0
    %8272 = vmatprep.subr.mxu0 0.0
    %8273 = vmatpush2.msra.mxu0 0.0
    %8274 = vmatprep.mubr.f32.mxu0 0.0
    %v8275 = vand.u32 %v4821, 4294901760
    %8276 = vmatmul.mubr.f32.gmra.mxu0 %v8275
    %v8277 = vpop.f32.mrf.mxu0
    %v8278 = vadd.f32 %v8126, %v8277
    %v8279 = vpop.f32.mrf.mxu0
    %v8280 = vadd.f32 %v8128, %v8279
    %8281 = vdwg.mxu0
    %8282 = vmatprep.subr.mxu0 0.0
    %8283 = vmatpush1.msra.mxu0 0.0
    %8284 = vmatprep.subr.mxu0 0.0
    %8285 = vmatpush1.msra.mxu0 0.0
    %8286 = vmatprep.subr.mxu0 0.0
    %8287 = vmatpush1.msra.mxu0 0.0
    %8288 = vmatprep.subr.mxu0 0.0
    %8289 = vmatpush1.msra.mxu0 0.0
    %8290 = vmatprep.subr.mxu0 0.0
    %8291 = vmatpush1.msra.mxu0 0.0
    %8292 = vmatprep.subr.mxu0 0.0
    %8293 = vmatpush1.msra.mxu0 0.0
    %8294 = vmatprep.subr.mxu0 0.0
    %8295 = vmatpush1.msra.mxu0 0.0
    %8296 = vmatprep.subr.mxu0 0.0
    %8297 = vmatpush1.msra.mxu0 0.0
    %v8298 = vand.u32 %v4819, 4294901760
    %v8299 = vsub.f32 %v4819, %v8298
    %8300 = vmatprep.subr.mxu0 %v8299
    %v8301 = vand.u32 %v4818, 4294901760
    %v8302 = vsub.f32 %v4818, %v8301
    %8303 = vmatpush1.msra.mxu0 %v8302
    %v8304 = vand.u32 %v4815, 4294901760
    %v8305 = vsub.f32 %v4815, %v8304
    %8306 = vmatprep.subr.mxu0 %v8305
    %v8307 = vand.u32 %v4814, 4294901760
    %v8308 = vsub.f32 %v4814, %v8307
    %8309 = vmatpush1.msra.mxu0 %v8308
    %v8310 = vand.u32 %v4811, 4294901760
    %v8311 = vsub.f32 %v4811, %v8310
    %8312 = vmatprep.subr.mxu0 %v8311
    %v8313 = vand.u32 %v4810, 4294901760
    %v8314 = vsub.f32 %v4810, %v8313
    %8315 = vmatpush1.msra.mxu0 %v8314
    %v8316 = vand.u32 %v4807, 4294901760
    %v8317 = vsub.f32 %v4807, %v8316
    %8318 = vmatprep.subr.mxu0 %v8317
    %v8319 = vand.u32 %v4806, 4294901760
    %v8320 = vsub.f32 %v4806, %v8319
    %8321 = vmatpush1.msra.mxu0 %v8320
    %v8322 = vand.u32 %v4803, 4294901760
    %v8323 = vsub.f32 %v4803, %v8322
    %8324 = vmatprep.subr.mxu0 %v8323
    %v8325 = vand.u32 %v4802, 4294901760
    %v8326 = vsub.f32 %v4802, %v8325
    %8327 = vmatpush1.msra.mxu0 %v8326
    %v8328 = vand.u32 %v4799, 4294901760
    %v8329 = vsub.f32 %v4799, %v8328
    %8330 = vmatprep.subr.mxu0 %v8329
    %v8331 = vand.u32 %v4798, 4294901760
    %v8332 = vsub.f32 %v4798, %v8331
    %8333 = vmatpush1.msra.mxu0 %v8332
    %v8334 = vand.u32 %v4795, 4294901760
    %v8335 = vsub.f32 %v4795, %v8334
    %8336 = vmatprep.subr.mxu0 %v8335
    %v8337 = vand.u32 %v4794, 4294901760
    %v8338 = vsub.f32 %v4794, %v8337
    %8339 = vmatpush1.msra.mxu0 %v8338
    %v8340 = vand.u32 %v4791, 4294901760
    %v8341 = vsub.f32 %v4791, %v8340
    %8342 = vmatprep.subr.mxu0 %v8341
    %v8343 = vand.u32 %v4790, 4294901760
    %v8344 = vsub.f32 %v4790, %v8343
    %8345 = vmatpush1.msra.mxu0 %v8344
    %8346 = vmatprep.subr.mxu0 0.0
    %8347 = vmatpush2.msra.mxu0 0.0
    %8348 = vmatprep.subr.mxu0 0.0
    %8349 = vmatpush2.msra.mxu0 0.0
    %8350 = vmatprep.subr.mxu0 0.0
    %8351 = vmatpush2.msra.mxu0 0.0
    %8352 = vmatprep.subr.mxu0 0.0
    %8353 = vmatpush2.msra.mxu0 0.0
    %8354 = vmatprep.subr.mxu0 0.0
    %8355 = vmatpush2.msra.mxu0 0.0
    %8356 = vmatprep.subr.mxu0 0.0
    %8357 = vmatpush2.msra.mxu0 0.0
    %8358 = vmatprep.subr.mxu0 0.0
    %8359 = vmatpush2.msra.mxu0 0.0
    %8360 = vmatprep.subr.mxu0 0.0
    %8361 = vmatpush2.msra.mxu0 0.0
    %8362 = vmatprep.subr.mxu0 0.0
    %8363 = vmatpush2.msra.mxu0 0.0
    %8364 = vmatprep.subr.mxu0 0.0
    %8365 = vmatpush2.msra.mxu0 0.0
    %8366 = vmatprep.subr.mxu0 0.0
    %8367 = vmatpush2.msra.mxu0 0.0
    %8368 = vmatprep.subr.mxu0 0.0
    %8369 = vmatpush2.msra.mxu0 0.0
    %8370 = vmatprep.subr.mxu0 0.0
    %8371 = vmatpush2.msra.mxu0 0.0
    %8372 = vmatprep.subr.mxu0 0.0
    %8373 = vmatpush2.msra.mxu0 0.0
    %8374 = vmatprep.subr.mxu0 0.0
    %8375 = vmatpush2.msra.mxu0 0.0
    %8376 = vmatprep.subr.mxu0 0.0
    %8377 = vmatpush2.msra.mxu0 0.0
    %8378 = vmatprep.mubr.f32.mxu0 0.0
    %v8379 = vand.u32 %v4821, 4294901760
    %v8380 = vsub.f32 %v4821, %v8379
    %8381 = vmatmul.mubr.f32.gmra.mxu0 %v8380
    %v8382 = vpop.f32.mrf.mxu0
    %v8383 = vadd.f32 %v8278, %v8382
    %v8384 = vpop.f32.mrf.mxu0
    %v8385 = vadd.f32 %v8280, %v8384
    %8386 = vdwg.mxu0
    %8387 = vmatprep.subr.mxu0 0.0
    %8388 = vmatpush1.msra.mxu0 0.0
    %8389 = vmatprep.subr.mxu0 0.0
    %8390 = vmatpush1.msra.mxu0 0.0
    %8391 = vmatprep.subr.mxu0 0.0
    %8392 = vmatpush1.msra.mxu0 0.0
    %8393 = vmatprep.subr.mxu0 0.0
    %8394 = vmatpush1.msra.mxu0 0.0
    %8395 = vmatprep.subr.mxu0 0.0
    %8396 = vmatpush1.msra.mxu0 0.0
    %8397 = vmatprep.subr.mxu0 0.0
    %8398 = vmatpush1.msra.mxu0 0.0
    %8399 = vmatprep.subr.mxu0 0.0
    %8400 = vmatpush1.msra.mxu0 0.0
    %8401 = vmatprep.subr.mxu0 0.0
    %8402 = vmatpush1.msra.mxu0 0.0
    %v8403 = vand.u32 %v4819, 4294901760
    %8404 = vmatprep.subr.mxu0 %v8403
    %v8405 = vand.u32 %v4818, 4294901760
    %8406 = vmatpush1.msra.mxu0 %v8405
    %v8407 = vand.u32 %v4815, 4294901760
    %8408 = vmatprep.subr.mxu0 %v8407
    %v8409 = vand.u32 %v4814, 4294901760
    %8410 = vmatpush1.msra.mxu0 %v8409
    %v8411 = vand.u32 %v4811, 4294901760
    %8412 = vmatprep.subr.mxu0 %v8411
    %v8413 = vand.u32 %v4810, 4294901760
    %8414 = vmatpush1.msra.mxu0 %v8413
    %v8415 = vand.u32 %v4807, 4294901760
    %8416 = vmatprep.subr.mxu0 %v8415
    %v8417 = vand.u32 %v4806, 4294901760
    %8418 = vmatpush1.msra.mxu0 %v8417
    %v8419 = vand.u32 %v4803, 4294901760
    %8420 = vmatprep.subr.mxu0 %v8419
    %v8421 = vand.u32 %v4802, 4294901760
    %8422 = vmatpush1.msra.mxu0 %v8421
    %v8423 = vand.u32 %v4799, 4294901760
    %8424 = vmatprep.subr.mxu0 %v8423
    %v8425 = vand.u32 %v4798, 4294901760
    %8426 = vmatpush1.msra.mxu0 %v8425
    %v8427 = vand.u32 %v4795, 4294901760
    %8428 = vmatprep.subr.mxu0 %v8427
    %v8429 = vand.u32 %v4794, 4294901760
    %8430 = vmatpush1.msra.mxu0 %v8429
    %v8431 = vand.u32 %v4791, 4294901760
    %8432 = vmatprep.subr.mxu0 %v8431
    %v8433 = vand.u32 %v4790, 4294901760
    %8434 = vmatpush1.msra.mxu0 %v8433
    %8435 = vmatprep.subr.mxu0 0.0
    %8436 = vmatpush2.msra.mxu0 0.0
    %8437 = vmatprep.subr.mxu0 0.0
    %8438 = vmatpush2.msra.mxu0 0.0
    %8439 = vmatprep.subr.mxu0 0.0
    %8440 = vmatpush2.msra.mxu0 0.0
    %8441 = vmatprep.subr.mxu0 0.0
    %8442 = vmatpush2.msra.mxu0 0.0
    %8443 = vmatprep.subr.mxu0 0.0
    %8444 = vmatpush2.msra.mxu0 0.0
    %8445 = vmatprep.subr.mxu0 0.0
    %8446 = vmatpush2.msra.mxu0 0.0
    %8447 = vmatprep.subr.mxu0 0.0
    %8448 = vmatpush2.msra.mxu0 0.0
    %8449 = vmatprep.subr.mxu0 0.0
    %8450 = vmatpush2.msra.mxu0 0.0
    %8451 = vmatprep.subr.mxu0 0.0
    %8452 = vmatpush2.msra.mxu0 0.0
    %8453 = vmatprep.subr.mxu0 0.0
    %8454 = vmatpush2.msra.mxu0 0.0
    %8455 = vmatprep.subr.mxu0 0.0
    %8456 = vmatpush2.msra.mxu0 0.0
    %8457 = vmatprep.subr.mxu0 0.0
    %8458 = vmatpush2.msra.mxu0 0.0
    %8459 = vmatprep.subr.mxu0 0.0
    %8460 = vmatpush2.msra.mxu0 0.0
    %8461 = vmatprep.subr.mxu0 0.0
    %8462 = vmatpush2.msra.mxu0 0.0
    %8463 = vmatprep.subr.mxu0 0.0
    %8464 = vmatpush2.msra.mxu0 0.0
    %8465 = vmatprep.subr.mxu0 0.0
    %8466 = vmatpush2.msra.mxu0 0.0
    %8467 = vmatprep.mubr.f32.mxu0 0.0
    %v8468 = vand.u32 %v4821, 4294901760
    %v8469 = vsub.f32 %v4821, %v8468
    %v8470 = vand.u32 %v8469, 4294901760
    %8471 = vmatmul.mubr.f32.gmra.mxu0 %v8470
    %v8472 = vpop.f32.mrf.mxu0
    %v8473 = vadd.f32 %v8383, %v8472
    %v8474 = vpop.f32.mrf.mxu0
    %v8475 = vadd.f32 %v8385, %v8474
    %8476 = vdwg.mxu0
    %8477 = vmatprep.subr.mxu0 0.0
    %8478 = vmatpush1.msra.mxu0 0.0
    %8479 = vmatprep.subr.mxu0 0.0
    %8480 = vmatpush1.msra.mxu0 0.0
    %8481 = vmatprep.subr.mxu0 0.0
    %8482 = vmatpush1.msra.mxu0 0.0
    %8483 = vmatprep.subr.mxu0 0.0
    %8484 = vmatpush1.msra.mxu0 0.0
    %8485 = vmatprep.subr.mxu0 0.0
    %8486 = vmatpush1.msra.mxu0 0.0
    %8487 = vmatprep.subr.mxu0 0.0
    %8488 = vmatpush1.msra.mxu0 0.0
    %8489 = vmatprep.subr.mxu0 0.0
    %8490 = vmatpush1.msra.mxu0 0.0
    %8491 = vmatprep.subr.mxu0 0.0
    %8492 = vmatpush1.msra.mxu0 0.0
    %v8493 = vand.u32 %v4819, 4294901760
    %v8494 = vsub.f32 %v4819, %v8493
    %v8495 = vand.u32 %v8494, 4294901760
    %8496 = vmatprep.subr.mxu0 %v8495
    %v8497 = vand.u32 %v4818, 4294901760
    %v8498 = vsub.f32 %v4818, %v8497
    %v8499 = vand.u32 %v8498, 4294901760
    %8500 = vmatpush1.msra.mxu0 %v8499
    %v8501 = vand.u32 %v4815, 4294901760
    %v8502 = vsub.f32 %v4815, %v8501
    %v8503 = vand.u32 %v8502, 4294901760
    %8504 = vmatprep.subr.mxu0 %v8503
    %v8505 = vand.u32 %v4814, 4294901760
    %v8506 = vsub.f32 %v4814, %v8505
    %v8507 = vand.u32 %v8506, 4294901760
    %8508 = vmatpush1.msra.mxu0 %v8507
    %v8509 = vand.u32 %v4811, 4294901760
    %v8510 = vsub.f32 %v4811, %v8509
    %v8511 = vand.u32 %v8510, 4294901760
    %8512 = vmatprep.subr.mxu0 %v8511
    %v8513 = vand.u32 %v4810, 4294901760
    %v8514 = vsub.f32 %v4810, %v8513
    %v8515 = vand.u32 %v8514, 4294901760
    %8516 = vmatpush1.msra.mxu0 %v8515
    %v8517 = vand.u32 %v4807, 4294901760
    %v8518 = vsub.f32 %v4807, %v8517
    %v8519 = vand.u32 %v8518, 4294901760
    %8520 = vmatprep.subr.mxu0 %v8519
    %v8521 = vand.u32 %v4806, 4294901760
    %v8522 = vsub.f32 %v4806, %v8521
    %v8523 = vand.u32 %v8522, 4294901760
    %8524 = vmatpush1.msra.mxu0 %v8523
    %v8525 = vand.u32 %v4803, 4294901760
    %v8526 = vsub.f32 %v4803, %v8525
    %v8527 = vand.u32 %v8526, 4294901760
    %8528 = vmatprep.subr.mxu0 %v8527
    %v8529 = vand.u32 %v4802, 4294901760
    %v8530 = vsub.f32 %v4802, %v8529
    %v8531 = vand.u32 %v8530, 4294901760
    %8532 = vmatpush1.msra.mxu0 %v8531
    %v8533 = vand.u32 %v4799, 4294901760
    %v8534 = vsub.f32 %v4799, %v8533
    %v8535 = vand.u32 %v8534, 4294901760
    %8536 = vmatprep.subr.mxu0 %v8535
    %v8537 = vand.u32 %v4798, 4294901760
    %v8538 = vsub.f32 %v4798, %v8537
    %v8539 = vand.u32 %v8538, 4294901760
    %8540 = vmatpush1.msra.mxu0 %v8539
    %v8541 = vand.u32 %v4795, 4294901760
    %v8542 = vsub.f32 %v4795, %v8541
    %v8543 = vand.u32 %v8542, 4294901760
    %8544 = vmatprep.subr.mxu0 %v8543
    %v8545 = vand.u32 %v4794, 4294901760
    %v8546 = vsub.f32 %v4794, %v8545
    %v8547 = vand.u32 %v8546, 4294901760
    %8548 = vmatpush1.msra.mxu0 %v8547
    %v8549 = vand.u32 %v4791, 4294901760
    %v8550 = vsub.f32 %v4791, %v8549
    %v8551 = vand.u32 %v8550, 4294901760
    %8552 = vmatprep.subr.mxu0 %v8551
    %v8553 = vand.u32 %v4790, 4294901760
    %v8554 = vsub.f32 %v4790, %v8553
    %v8555 = vand.u32 %v8554, 4294901760
    %8556 = vmatpush1.msra.mxu0 %v8555
    %8557 = vmatprep.subr.mxu0 0.0
    %8558 = vmatpush2.msra.mxu0 0.0
    %8559 = vmatprep.subr.mxu0 0.0
    %8560 = vmatpush2.msra.mxu0 0.0
    %8561 = vmatprep.subr.mxu0 0.0
    %8562 = vmatpush2.msra.mxu0 0.0
    %8563 = vmatprep.subr.mxu0 0.0
    %8564 = vmatpush2.msra.mxu0 0.0
    %8565 = vmatprep.subr.mxu0 0.0
    %8566 = vmatpush2.msra.mxu0 0.0
    %8567 = vmatprep.subr.mxu0 0.0
    %8568 = vmatpush2.msra.mxu0 0.0
    %8569 = vmatprep.subr.mxu0 0.0
    %8570 = vmatpush2.msra.mxu0 0.0
    %8571 = vmatprep.subr.mxu0 0.0
    %8572 = vmatpush2.msra.mxu0 0.0
    %8573 = vmatprep.subr.mxu0 0.0
    %8574 = vmatpush2.msra.mxu0 0.0
    %8575 = vmatprep.subr.mxu0 0.0
    %8576 = vmatpush2.msra.mxu0 0.0
    %8577 = vmatprep.subr.mxu0 0.0
    %8578 = vmatpush2.msra.mxu0 0.0
    %8579 = vmatprep.subr.mxu0 0.0
    %8580 = vmatpush2.msra.mxu0 0.0
    %8581 = vmatprep.subr.mxu0 0.0
    %8582 = vmatpush2.msra.mxu0 0.0
    %8583 = vmatprep.subr.mxu0 0.0
    %8584 = vmatpush2.msra.mxu0 0.0
    %8585 = vmatprep.subr.mxu0 0.0
    %8586 = vmatpush2.msra.mxu0 0.0
    %8587 = vmatprep.subr.mxu0 0.0
    %8588 = vmatpush2.msra.mxu0 0.0
    %8589 = vmatprep.mubr.f32.mxu0 0.0
    %v8590 = vand.u32 %v4821, 4294901760
    %8591 = vmatmul.mubr.f32.gmra.mxu0 %v8590
    %v8592 = vpop.f32.mrf.mxu0
    %v8593 = vadd.f32 %v8473, %v8592
    %v8594 = vpop.f32.mrf.mxu0
    %v8595 = vadd.f32 %v8475, %v8594
    %8596 = vdwg.mxu0
    %8597 = vmatprep.subr.mxu0 0.0
    %8598 = vmatpush1.msra.mxu0 0.0
    %8599 = vmatprep.subr.mxu0 0.0
    %8600 = vmatpush1.msra.mxu0 0.0
    %8601 = vmatprep.subr.mxu0 0.0
    %8602 = vmatpush1.msra.mxu0 0.0
    %8603 = vmatprep.subr.mxu0 0.0
    %8604 = vmatpush1.msra.mxu0 0.0
    %8605 = vmatprep.subr.mxu0 0.0
    %8606 = vmatpush1.msra.mxu0 0.0
    %8607 = vmatprep.subr.mxu0 0.0
    %8608 = vmatpush1.msra.mxu0 0.0
    %8609 = vmatprep.subr.mxu0 0.0
    %8610 = vmatpush1.msra.mxu0 0.0
    %8611 = vmatprep.subr.mxu0 0.0
    %8612 = vmatpush1.msra.mxu0 0.0
    %v8613 = vand.u32 %v4819, 4294901760
    %8614 = vmatprep.subr.mxu0 %v8613
    %v8615 = vand.u32 %v4818, 4294901760
    %8616 = vmatpush1.msra.mxu0 %v8615
    %v8617 = vand.u32 %v4815, 4294901760
    %8618 = vmatprep.subr.mxu0 %v8617
    %v8619 = vand.u32 %v4814, 4294901760
    %8620 = vmatpush1.msra.mxu0 %v8619
    %v8621 = vand.u32 %v4811, 4294901760
    %8622 = vmatprep.subr.mxu0 %v8621
    %v8623 = vand.u32 %v4810, 4294901760
    %8624 = vmatpush1.msra.mxu0 %v8623
    %v8625 = vand.u32 %v4807, 4294901760
    %8626 = vmatprep.subr.mxu0 %v8625
    %v8627 = vand.u32 %v4806, 4294901760
    %8628 = vmatpush1.msra.mxu0 %v8627
    %v8629 = vand.u32 %v4803, 4294901760
    %8630 = vmatprep.subr.mxu0 %v8629
    %v8631 = vand.u32 %v4802, 4294901760
    %8632 = vmatpush1.msra.mxu0 %v8631
    %v8633 = vand.u32 %v4799, 4294901760
    %8634 = vmatprep.subr.mxu0 %v8633
    %v8635 = vand.u32 %v4798, 4294901760
    %8636 = vmatpush1.msra.mxu0 %v8635
    %v8637 = vand.u32 %v4795, 4294901760
    %8638 = vmatprep.subr.mxu0 %v8637
    %v8639 = vand.u32 %v4794, 4294901760
    %8640 = vmatpush1.msra.mxu0 %v8639
    %v8641 = vand.u32 %v4791, 4294901760
    %8642 = vmatprep.subr.mxu0 %v8641
    %v8643 = vand.u32 %v4790, 4294901760
    %8644 = vmatpush1.msra.mxu0 %v8643
    %8645 = vmatprep.subr.mxu0 0.0
    %8646 = vmatpush2.msra.mxu0 0.0
    %8647 = vmatprep.subr.mxu0 0.0
    %8648 = vmatpush2.msra.mxu0 0.0
    %8649 = vmatprep.subr.mxu0 0.0
    %8650 = vmatpush2.msra.mxu0 0.0
    %8651 = vmatprep.subr.mxu0 0.0
    %8652 = vmatpush2.msra.mxu0 0.0
    %8653 = vmatprep.subr.mxu0 0.0
    %8654 = vmatpush2.msra.mxu0 0.0
    %8655 = vmatprep.subr.mxu0 0.0
    %8656 = vmatpush2.msra.mxu0 0.0
    %8657 = vmatprep.subr.mxu0 0.0
    %8658 = vmatpush2.msra.mxu0 0.0
    %8659 = vmatprep.subr.mxu0 0.0
    %8660 = vmatpush2.msra.mxu0 0.0
    %8661 = vmatprep.subr.mxu0 0.0
    %8662 = vmatpush2.msra.mxu0 0.0
    %8663 = vmatprep.subr.mxu0 0.0
    %8664 = vmatpush2.msra.mxu0 0.0
    %8665 = vmatprep.subr.mxu0 0.0
    %8666 = vmatpush2.msra.mxu0 0.0
    %8667 = vmatprep.subr.mxu0 0.0
    %8668 = vmatpush2.msra.mxu0 0.0
    %8669 = vmatprep.subr.mxu0 0.0
    %8670 = vmatpush2.msra.mxu0 0.0
    %8671 = vmatprep.subr.mxu0 0.0
    %8672 = vmatpush2.msra.mxu0 0.0
    %8673 = vmatprep.subr.mxu0 0.0
    %8674 = vmatpush2.msra.mxu0 0.0
    %8675 = vmatprep.subr.mxu0 0.0
    %8676 = vmatpush2.msra.mxu0 0.0
    %8677 = vmatprep.mubr.f32.mxu0 0.0
    %v8678 = vand.u32 %v4821, 4294901760
    %8679 = vmatmul.mubr.f32.gmra.mxu0 %v8678
    %v8680 = vpop.f32.mrf.mxu0
    %v8681 = vadd.f32 %v8593, %v8680
    %v8682 = vpop.f32.mrf.mxu0
    %v8683 = vadd.f32 %v8595, %v8682
    %8684 = vdwg.mxu0
    %v8685 = vld [vmem:[%s5] sm:$0xff]
    %8687 = vset.pattern.permute.xlu0 0
    %8688 = vperm.xlu0 %8687, %v8685
    %v8689 = vpop.permute.xlu0 %8688
    %v8691 = vmul.f32 %v6750, %v8689
    %v8692 = vmul.f32 %v6752, %v8689
    %v8693 = vmul.f32 %v8681, %v8689
    %v8694 = vmul.f32 %v8683, %v8689
    %v8695 = vld [vmem:[%s6] sm:$0xff]
    %8697 = vset.pattern.permute.xlu0 0
    %8698 = vperm.xlu0 %8697, %v8695
    %v8699 = vpop.permute.xlu0 %8698
    %v8701 = vadd.f32 %v8691, %v8699
    %v8702 = vadd.f32 %v8692, %v8699
    %v8703 = vadd.f32 %v8693, %v8699
    %v8704 = vadd.f32 %v8694, %v8699
    %vm8705 = vcmp.gt.f32.partialorder %v8701, 0.0
    %vm8706 = vcmp.gt.f32.partialorder %v8702, 0.0
    %vm8707 = vcmp.gt.f32.partialorder %v8703, 0.0
    %vm8708 = vcmp.gt.f32.partialorder %v8704, 0.0
    %v8709 = vmul.f32 %v8701, 0.2
    %v8710 = vmul.f32 %v8702, 0.2
    %v8711 = vmul.f32 %v8703, 0.2
    %v8712 = vmul.f32 %v8704, 0.2
    %v8713 = vsel %vm8705, %v8701, %v8709
    %v8714 = vsel %vm8706, %v8702, %v8710
    %v8715 = vsel %vm8707, %v8703, %v8711
    %v8716 = vsel %vm8708, %v8704, %v8712
    %8717 = vst [vmem:[#allocation4 + $0x8] sm:$0xff] %v8713
    %8718 = vst [vmem:[#allocation4 + $0x10] sm:$0xff] %v8714
    %8719 = vst [vmem:[#allocation4 + $0x18] sm:$0xff] %v8715
    %8720 = vst [vmem:[#allocation4 + $0x20] sm:$0xff] %v8716
    %v8721 = vld [vmem:[#allocation4 + $0x8] sm:$0xff]
    %v8722 = vld [vmem:[#allocation4 + $0x10] sm:$0xff]
    %v8723 = vld [vmem:[#allocation4 + $0x18] sm:$0xff]
    %v8724 = vld [vmem:[#allocation4 + $0x20] sm:$0xff]
    %v8725 = vld [vmem:[#allocation4 + $0x28] sm:$0xff]
    %8731 = vrot.lane.b32.xlu0 %v8721, 96
    %v8732 = vpop.permute.xlu0 %8731
    %8733 = vrot.lane.b32.xlu0 %v8722, 96
    %v8734 = vpop.permute.xlu0 %8733
    %8735 = vrot.lane.b32.xlu0 %v8723, 96
    %v8736 = vpop.permute.xlu0 %8735
    %8737 = vrot.lane.b32.xlu0 %v8724, 96
    %v8738 = vpop.permute.xlu0 %8737
    %8739 = vrot.lane.b32.xlu0 %v8725, 96
    %v8740 = vpop.permute.xlu0 %8739
    %v8741 = vsel %vm244, %v8732, %v8734
    %v8742 = vsel %vm244, %v8734, %v8736
    %v8743 = vsel %vm244, %v8736, %v8738
    %v8744 = vsel %vm244, %v8738, %v8740
    %v8749 = vmax.f32 %v8721, %v8741
    %v8750 = vmax.f32 %v8722, %v8742
    %v8751 = vmax.f32 %v8723, %v8743
    %v8752 = vmax.f32 %v8724, %v8744
    %8753 = vst [vmem:[#allocation13] sm:$0xff] %v8749
    %8754 = vst [vmem:[#allocation13 + $0x8] sm:$0xff] %v8750
    %8755 = vst [vmem:[#allocation13 + $0x10] sm:$0xff] %v8751
    %8756 = vst [vmem:[#allocation13 + $0x18] sm:$0xff] %v8752
    // Predicated region
    $region54: #{tpu_custom_call.1} parent=1 // pred_check
      _
    $region55: #{tpu_custom_call.1} parent=1 // pred_check_branch
      %8758 = sbr.rel (0) target = $region57
    $region56: #{tpu_custom_call.1} parent=1 // pred_region
      %s8760 = ssub.s32 512, 512
      %8761 = vsyncadd [#allocation7], %s8760
      %s8763 = sshll.u32 [#allocation13], 4
      %s8764 = int_to_ptr.vmem [resolvable:$true] %s8763
      %8766 = dma.vmem_to_hbm [thread:$0]  %s8764, 512, %s9, [#allocation7]
    $region57: #{tpu_custom_call.1} parent=1 // pred_fallthru
      _
    // Predicated region
    $region58: #{tpu_custom_call.1} parent=1 // pred_check
      _
    $region59: #{tpu_custom_call.1} parent=1 // pred_check_branch
      %8768 = sbr.rel (0) target = $region61
    $region60: #{tpu_custom_call.1} parent=1 // pred_region
      %8769 = dma.done [#allocation7], 512
    $region61: #{tpu_custom_call.1} parent=1 // pred_fallthru
      _
    %8770 = vsyncpa [#allocation6], 1
    %8771 = vsyncpa [#allocation9], 1
    %8772 = vsyncpa [#allocation12], 1
    %8773 = vsyncpa [#allocation7], 1

</llo_original>
